<compile_context>
chip_gen: v7x
topology: tpu7x:2x2x1
jax: 0.10.0
libtpu: 0.0.40
codegen_flags: <defaults>
</compile_context>

<pallas_src>
import math

import numpy as np
import jax
import jax.numpy as jnp
from jax.experimental import pallas as pl
from jax.experimental.pallas import tpu as pltpu

# --- model dimensions (small, consistent with the module) -------------------
FEATURE_DIM = 32       # CNNLSTM feature_dim (= hidden_dim passed in by Critic)
LSTM_DIM = 32          # LSTM hidden size / critic hidden_dim
AC_DIM = 4
IMG_H, IMG_W = 64, 48  # small demo size; the conv stack reduces to 1x1 spatial
CONV_CH = (3, 16, 32, 32)


# ------------------------------ geometry -------------------------------------

def _pool_hw(h, w):
    ho = (h + 2 - 3) // 2 + 1        # Conv2d k3 s2 p1
    wo = (w + 2 - 3) // 2 + 1
    return ho // 2, wo // 2          # MaxPool2d(2), floor


def conv_geometry(h, w):
    geoms = []
    for cin, cout in zip(CONV_CH[:-1], CONV_CH[1:]):
        hp, wp = _pool_hw(h, w)
        geoms.append(dict(H=h, W=w, Cin=cin, Cout=cout, Hp=hp, Wp=wp))
        h, w = hp, wp
    return geoms


# ------------------- conv -> block-Toeplitz GEMM weights ---------------------
#
# Activation block layout for a stage with input (N, H, W, Cin):
#   A[row, lane],  row  = i * N + n        (i = 4-row block of the PADDED input)
#                  lane = a * (W*Cin) + w * Cin + cin
#   where padded row 4*i + a maps to input row 4*i + a - 1 (zero outside).
# The stage computes, for pooled output row hp (rows ordered (hp, n)):
#   Z = A[0:Hp*N] @ Wlo + A[N:(Hp+1)*N] @ Whi          (both contiguous slices)
# with output columns (q, wp, cout), q = 2x2-pool quadrant; the pool is a max
# over the 4 column groups, then + bias, then ReLU (max/bias/ReLU commute).

def conv_to_toeplitz(w_kkio, bias, H, W):
    """w_kkio: (3, 3, Cin, Cout); bias: (Cout,).  Returns (Wlo, Whi, bias_tiled)."""
    w = np.asarray(w_kkio, np.float32)
    b = np.asarray(bias, np.float32).reshape(-1)
    cin, cout = w.shape[2], w.shape[3]
    hp, wp_n = _pool_hw(H, W)
    lin, lout = 4 * W * cin, 4 * wp_n * cout
    wlo = np.zeros((lin, lout), np.float32)
    whi = np.zeros((lin, lout), np.float32)
    for qi in range(2):
        for qj in range(2):
            q = 2 * qi + qj
            for di in range(3):
                o_r = 2 * qi + di                 # padded-row offset 0..4
                dst = wlo if o_r < 4 else whi     # o_r == 4 -> next row-block
                a = o_r % 4
                for dj in range(3):
                    o_c = 2 * qj + dj             # padded-col offset 0..4
                    for wp in range(wp_n):
                        w_in = 4 * wp + o_c - 1   # unpadded input column
                        if 0 <= w_in < W:
                            r0 = a * W * cin + w_in * cin
                            c0 = q * wp_n * cout + wp * cout
                            dst[r0:r0 + cin, c0:c0 + cout] += w[di, dj]
    bias_t = np.tile(b, wp_n)[None, :]
    return (jnp.asarray(wlo, jnp.bfloat16), jnp.asarray(whi, jnp.bfloat16),
            jnp.asarray(bias_t, jnp.float32))


# ---------------------------- in-kernel helpers -------------------------------

def _conv_pool_stage(a, wlo, whi, bias, n, hp, wp, cout):
    """Fused conv(k3,s2,p1) + bias + ReLU + maxpool2: two GEMMs + lane-group max."""
    m = hp * n
    z = jnp.dot(a[:m], wlo, preferred_element_type=jnp.float32)
    z = z + jnp.dot(a[n:m + n], whi, preferred_element_type=jnp.float32)
    g = wp * cout
    p = jnp.maximum(jnp.maximum(z[:, 0:g], z[:, g:2 * g]),
                    jnp.maximum(z[:, 2 * g:3 * g], z[:, 3 * g:4 * g]))
    return jnp.maximum(p + bias, 0.0)            # (Hp*N, Wp*Cout) f32


def _regroup_rows(p, n, hp, wp, cout, hp_next):
    """Pooled output (rows (hp, n), lanes (wp, c)) -> next stage's block layout.

    Only contiguous row slices, zero slabs and concatenations (no strides)."""
    pb = p.astype(jnp.bfloat16)
    zero = jnp.zeros((n, wp * cout), jnp.bfloat16)
    blocks = []
    for i in range(hp_next + 1):
        slabs = []
        for a in range(4):
            pr = 4 * i + a - 1                   # pooled row feeding padded row 4i+a
            slabs.append(pb[pr * n:(pr + 1) * n, :] if 0 <= pr < hp else zero)
        blocks.append(jnp.concatenate(slabs, axis=1))
    return jnp.concatenate(blocks, axis=0)


# ------------------------------ fused kernel ---------------------------------

def _make_critic_kernel(geoms, B, T, Hd):
    N = B * T
    g1, g2, g3 = geoms

    def kernel(a1_ref, ac_ref,
               w1lo_ref, w1hi_ref, b1_ref,
               w2lo_ref, w2hi_ref, b2_ref,
               w3lo_ref, w3hi_ref, b3_ref,
               fcw_ref, fcb_ref, lng_ref, lnb_ref,
               wih_ref, whh_ref, lstmb_ref,
               q1ws_ref, q1wa_ref, q1b_ref, q2w_ref, q2b_ref, q3w_ref, q3b_ref,
               q_ref, h_ref, c_ref):
        # --- CNN stack: 3 fused conv+pool stages, chained entirely in VMEM ---
        p1 = _conv_pool_stage(a1_ref[...], w1lo_ref[...], w1hi_ref[...], b1_ref[...],
                              N, g1["Hp"], g1["Wp"], g1["Cout"])
        a2 = _regroup_rows(p1, N, g1["Hp"], g1["Wp"], g1["Cout"], g2["Hp"])
        p2 = _conv_pool_stage(a2, w2lo_ref[...], w2hi_ref[...], b2_ref[...],
                              N, g2["Hp"], g2["Wp"], g2["Cout"])
        a3 = _regroup_rows(p2, N, g2["Hp"], g2["Wp"], g2["Cout"], g3["Hp"])
        p3 = _conv_pool_stage(a3, w3lo_ref[...], w3hi_ref[...], b3_ref[...],
                              N, g3["Hp"], g3["Wp"], g3["Cout"])
        # p3: (N, flat_dim) f32, frame rows ordered time-major (n = t*B + b).

        # --- fc + LayerNorm over all T*B frames at once (bf16 MXU, f32 accum) ---
        feat = jnp.dot(p3.astype(jnp.bfloat16), fcw_ref[...],
                       preferred_element_type=jnp.float32) + fcb_ref[...]
        mean = jnp.mean(feat, axis=-1, keepdims=True)
        var = jnp.mean((feat - mean) ** 2, axis=-1, keepdims=True)
        featn = (feat - mean) * jax.lax.rsqrt(var + 1e-5)
        featn = featn * lng_ref[...] + lnb_ref[...]

        # --- LSTM: input projection hoisted out of the time loop ---
        xproj = jnp.dot(featn.astype(jnp.bfloat16), wih_ref[...],
                        preferred_element_type=jnp.float32) + lstmb_ref[...]
        whh = whh_ref[...]
        h = jnp.zeros((B, Hd), jnp.float32)
        c = jnp.zeros((B, Hd), jnp.float32)
        # TODO(synk): switch to lax.fori_loop(..., unroll=True) + pl.ds if T grows.
        for t in range(T):
            gates = xproj[t * B:(t + 1) * B, :] + jnp.dot(
                h.astype(jnp.bfloat16), whh, preferred_element_type=jnp.float32)
            # Activate the full (B, 4H) value once, then slice the gate segments.
            sg = jax.nn.sigmoid(gates)
            th = jnp.tanh(gates)
            i_g = sg[:, 0 * Hd:1 * Hd]
            f_g = sg[:, 1 * Hd:2 * Hd]
            g_g = th[:, 2 * Hd:3 * Hd]
            o_g = sg[:, 3 * Hd:4 * Hd]
            c = f_g * c + i_g * g_g
            h = o_g * jnp.tanh(c)
        h_ref[...] = h
        c_ref[...] = c

        # --- critic MLP; cat([h, ac]) @ W1 as split matmuls (no lane concat) ---
        h1 = jnp.dot(h.astype(jnp.bfloat16), q1ws_ref[...],
                     preferred_element_type=jnp.float32)
        h1 = h1 + jnp.dot(ac_ref[...].astype(jnp.bfloat16), q1wa_ref[...],
                          preferred_element_type=jnp.float32)
        h1 = jnp.maximum(h1 + q1b_ref[...], 0.0)
        h2 = jnp.dot(h1.astype(jnp.bfloat16), q2w_ref[...],
                     preferred_element_type=jnp.float32)
        h2 = jnp.maximum(h2 + q2b_ref[...], 0.0)
        q = jnp.dot(h2.astype(jnp.bfloat16), q3w_ref[...],
                    preferred_element_type=jnp.float32) + q3b_ref[...]
        q_ref[...] = q

    return kernel


# ------------------------------- JAX wrapper ----------------------------------

def _full_spec(arr):
    nd = arr.ndim
    return pl.BlockSpec(arr.shape, lambda *_: (0,) * nd)


def critic_forward(params, seq, ac):
    """seq: (B, T, 3, H, W) float32 (NCHW per frame, as in PyTorch); ac: (B, AC_DIM)."""
    B, T, C, H, W = seq.shape
    N = B * T
    geoms = conv_geometry(H, W)
    g1, g3 = geoms[0], geoms[-1]
    assert g3["Hp"] == 1 and g3["Wp"] == 1, "conv stack must reduce to 1x1 spatial"

    # Frames ordered time-major (n = t*B + b) -> the LSTM reads contiguous
    # per-step row blocks in-kernel; NHWC.
    x = jnp.transpose(seq, (1, 0, 3, 4, 2)).reshape(N, H, W, C)

    # Stage-1 block layout (built once in JAX on the raw input): rows (block i,
    # frame n), lanes (a, w, cin); padded row 4*i + a = input row 4*i + a - 1.
    hp1 = g1["Hp"]
    xp = jnp.pad(x, ((0, 0), (1, 4 * (hp1 + 1) - (H + 1)), (0, 0), (0, 0)))
    a1 = xp.reshape(N, hp1 + 1, 4, W * C)
    a1 = jnp.transpose(a1, (1, 0, 2, 3)).reshape((hp1 + 1) * N, 4 * W * C)
    a1 = a1.astype(jnp.bfloat16)

    Hd = params["lstm_whh"].shape[0]
    args = (a1, ac,
            params["conv1_lo"], params["conv1_hi"], params["conv1_b"],
            params["conv2_lo"], params["conv2_hi"], params["conv2_b"],
            params["conv3_lo"], params["conv3_hi"], params["conv3_b"],
            params["fc_w"], params["fc_b"], params["ln_g"], params["ln_b"],
            params["lstm_wih"], params["lstm_whh"], params["lstm_b"],
            params["q1_ws"], params["q1_wa"], params["q1_b"],
            params["q2_w"], params["q2_b"], params["q3_w"], params["q3_b"])

    kernel = _make_critic_kernel(geoms, B, T, Hd)
    q, h, c = pl.pallas_call(
        kernel,
        out_shape=(jax.ShapeDtypeStruct((B, 1), jnp.float32),
                   jax.ShapeDtypeStruct((B, Hd), jnp.float32),
                   jax.ShapeDtypeStruct((B, Hd), jnp.float32)),
        grid=(1,),
        in_specs=[_full_spec(a) for a in args],
        out_specs=(pl.BlockSpec((B, 1), lambda i: (0, 0)),
                   pl.BlockSpec((B, Hd), lambda i: (0, 0)),
                   pl.BlockSpec((B, Hd), lambda i: (0, 0))),
        compiler_params=pltpu.CompilerParams(
            dimension_semantics=("arbitrary",),
            vmem_limit_bytes=32 * 1024 * 1024),
    )(*args)

    q_val = q[:, 0]
    hidden = (h[None, :, :], c[None, :, :])      # (1, B, H) each, like PyTorch
    return q_val, hidden


# ------------------------------ parameter init --------------------------------

def _uni(key, shape, fan_in):
    bound = 1.0 / math.sqrt(fan_in)
    return jax.random.uniform(key, shape, jnp.float32, -bound, bound)


def init_params(key):
    geoms = conv_geometry(IMG_H, IMG_W)
    flat_dim = geoms[-1]["Hp"] * geoms[-1]["Wp"] * geoms[-1]["Cout"]   # 32 for 64x48
    ks = iter(jax.random.split(key, 32))
    p = {}
    # Conv weights in (kh, kw, Cin, Cout) layout; packed once into bf16 Toeplitz
    # GEMM matrices (review item 8: no per-call weight converts).
    for idx, g in enumerate(geoms, start=1):
        fan = 9 * g["Cin"]
        w = _uni(next(ks), (3, 3, g["Cin"], g["Cout"]), fan)
        b = _uni(next(ks), (g["Cout"],), fan)
        lo, hi, bt = conv_to_toeplitz(w, b, g["H"], g["W"])
        p[f"conv{idx}_lo"], p[f"conv{idx}_hi"], p[f"conv{idx}_b"] = lo, hi, bt
    p["fc_w"] = _uni(next(ks), (flat_dim, FEATURE_DIM), flat_dim).astype(jnp.bfloat16)
    p["fc_b"] = _uni(next(ks), (1, FEATURE_DIM), flat_dim)
    p["ln_g"] = jnp.ones((1, FEATURE_DIM), jnp.float32)
    p["ln_b"] = jnp.zeros((1, FEATURE_DIM), jnp.float32)
    # LSTM (gate order i, f, g, o); bias = b_ih + b_hh.
    p["lstm_wih"] = _uni(next(ks), (FEATURE_DIM, 4 * LSTM_DIM), LSTM_DIM).astype(jnp.bfloat16)
    p["lstm_whh"] = _uni(next(ks), (LSTM_DIM, 4 * LSTM_DIM), LSTM_DIM).astype(jnp.bfloat16)
    p["lstm_b"] = (_uni(next(ks), (1, 4 * LSTM_DIM), LSTM_DIM)
                   + _uni(next(ks), (1, 4 * LSTM_DIM), LSTM_DIM))
    # Critic MLP: (H + ac) -> H -> H//2 -> 1; first layer stored pre-split.
    p["q1_ws"] = _uni(next(ks), (LSTM_DIM, LSTM_DIM), LSTM_DIM + AC_DIM).astype(jnp.bfloat16)
    p["q1_wa"] = _uni(next(ks), (AC_DIM, LSTM_DIM), LSTM_DIM + AC_DIM).astype(jnp.bfloat16)
    p["q1_b"] = _uni(next(ks), (1, LSTM_DIM), LSTM_DIM + AC_DIM)
    p["q2_w"] = _uni(next(ks), (LSTM_DIM, LSTM_DIM // 2), LSTM_DIM).astype(jnp.bfloat16)
    p["q2_b"] = _uni(next(ks), (1, LSTM_DIM // 2), LSTM_DIM)
    p["q3_w"] = _uni(next(ks), (LSTM_DIM // 2, 1), LSTM_DIM).astype(jnp.bfloat16)
    p["q3_b"] = _uni(next(ks), (1, 1), LSTM_DIM // 2)
    return p


# ----------------------------------- main --------------------------------------

if __name__ == "__main__":
    key = jax.random.PRNGKey(0)
    pkey, skey, akey = jax.random.split(key, 3)
    params = init_params(pkey)

    B, T = 2, 4
    seq = jax.random.normal(skey, (B, T, 3, IMG_H, IMG_W), jnp.float32)
    ac = jax.random.normal(akey, (B, AC_DIM), jnp.float32)

    q_val, hidden = jax.jit(critic_forward)(params, seq, ac)
    jax.block_until_ready((q_val, hidden))

    assert q_val.shape == (B,)
    assert hidden[0].shape == (1, B, LSTM_DIM) and hidden[1].shape == (1, B, LSTM_DIM)
    assert bool(jnp.all(jnp.isfinite(q_val)))
    assert bool(jnp.all(jnp.isfinite(hidden[0]))) and bool(jnp.all(jnp.isfinite(hidden[1])))
    print("KERNEL_OK")
</pallas_src>

<mosaic_0001>
module attributes {stable_mosaic.version = 11 : i64} {
  func.func @kernel(%arg0: i32, %arg1: memref<136x576xbf16, #tpu.memory_space<vmem>>, %arg2: memref<2x4xf32, #tpu.memory_space<vmem>>, %arg3: memref<576x768xbf16, #tpu.memory_space<vmem>>, %arg4: memref<576x768xbf16, #tpu.memory_space<vmem>>, %arg5: memref<1x192xf32, #tpu.memory_space<vmem>>, %arg6: memref<768x384xbf16, #tpu.memory_space<vmem>>, %arg7: memref<768x384xbf16, #tpu.memory_space<vmem>>, %arg8: memref<1x96xf32, #tpu.memory_space<vmem>>, %arg9: memref<384x128xbf16, #tpu.memory_space<vmem>>, %arg10: memref<384x128xbf16, #tpu.memory_space<vmem>>, %arg11: memref<1x32xf32, #tpu.memory_space<vmem>>, %arg12: memref<32x32xbf16, #tpu.memory_space<vmem>>, %arg13: memref<1x32xf32, #tpu.memory_space<vmem>>, %arg14: memref<1x32xf32, #tpu.memory_space<vmem>>, %arg15: memref<1x32xf32, #tpu.memory_space<vmem>>, %arg16: memref<32x128xbf16, #tpu.memory_space<vmem>>, %arg17: memref<32x128xbf16, #tpu.memory_space<vmem>>, %arg18: memref<1x128xf32, #tpu.memory_space<vmem>>, %arg19: memref<32x32xbf16, #tpu.memory_space<vmem>>, %arg20: memref<4x32xbf16, #tpu.memory_space<vmem>>, %arg21: memref<1x32xf32, #tpu.memory_space<vmem>>, %arg22: memref<32x16xbf16, #tpu.memory_space<vmem>>, %arg23: memref<1x16xf32, #tpu.memory_space<vmem>>, %arg24: memref<16x1xbf16, #tpu.memory_space<vmem>>, %arg25: memref<1x1xf32, #tpu.memory_space<vmem>>, %arg26: memref<2x1xf32, #tpu.memory_space<vmem>>, %arg27: memref<2x32xf32, #tpu.memory_space<vmem>>, %arg28: memref<2x32xf32, #tpu.memory_space<vmem>>) attributes {dimension_semantics = [#tpu.dimension_semantics<arbitrary>], iteration_bounds = array<i64: 1>, scalar_prefetch = 0 : i64, scratch_operands = 0 : i64, tpu.core_type = #tpu.core_type<tc>, window_params = [{pipeline_mode = #tpu.pipeline_mode<synchronous>, transform_indices = @transform_0, window_bounds = array<i64: 136, 576>}, {pipeline_mode = #tpu.pipeline_mode<synchronous>, transform_indices = @transform_1, window_bounds = array<i64: 2, 4>}, {pipeline_mode = #tpu.pipeline_mode<synchronous>, transform_indices = @transform_2, window_bounds = array<i64: 576, 768>}, {pipeline_mode = #tpu.pipeline_mode<synchronous>, transform_indices = @transform_3, window_bounds = array<i64: 576, 768>}, {pipeline_mode = #tpu.pipeline_mode<synchronous>, transform_indices = @transform_4, window_bounds = array<i64: 1, 192>}, {pipeline_mode = #tpu.pipeline_mode<synchronous>, transform_indices = @transform_5, window_bounds = array<i64: 768, 384>}, {pipeline_mode = #tpu.pipeline_mode<synchronous>, transform_indices = @transform_6, window_bounds = array<i64: 768, 384>}, {pipeline_mode = #tpu.pipeline_mode<synchronous>, transform_indices = @transform_7, window_bounds = array<i64: 1, 96>}, {pipeline_mode = #tpu.pipeline_mode<synchronous>, transform_indices = @transform_8, window_bounds = array<i64: 384, 128>}, {pipeline_mode = #tpu.pipeline_mode<synchronous>, transform_indices = @transform_9, window_bounds = array<i64: 384, 128>}, {pipeline_mode = #tpu.pipeline_mode<synchronous>, transform_indices = @transform_10, window_bounds = array<i64: 1, 32>}, {pipeline_mode = #tpu.pipeline_mode<synchronous>, transform_indices = @transform_11, window_bounds = array<i64: 32, 32>}, {pipeline_mode = #tpu.pipeline_mode<synchronous>, transform_indices = @transform_12, window_bounds = array<i64: 1, 32>}, {pipeline_mode = #tpu.pipeline_mode<synchronous>, transform_indices = @transform_13, window_bounds = array<i64: 1, 32>}, {pipeline_mode = #tpu.pipeline_mode<synchronous>, transform_indices = @transform_14, window_bounds = array<i64: 1, 32>}, {pipeline_mode = #tpu.pipeline_mode<synchronous>, transform_indices = @transform_15, window_bounds = array<i64: 32, 128>}, {pipeline_mode = #tpu.pipeline_mode<synchronous>, transform_indices = @transform_16, window_bounds = array<i64: 32, 128>}, {pipeline_mode = #tpu.pipeline_mode<synchronous>, transform_indices = @transform_17, window_bounds = array<i64: 1, 128>}, {pipeline_mode = #tpu.pipeline_mode<synchronous>, transform_indices = @transform_18, window_bounds = array<i64: 32, 32>}, {pipeline_mode = #tpu.pipeline_mode<synchronous>, transform_indices = @transform_19, window_bounds = array<i64: 4, 32>}, {pipeline_mode = #tpu.pipeline_mode<synchronous>, transform_indices = @transform_20, window_bounds = array<i64: 1, 32>}, {pipeline_mode = #tpu.pipeline_mode<synchronous>, transform_indices = @transform_21, window_bounds = array<i64: 32, 16>}, {pipeline_mode = #tpu.pipeline_mode<synchronous>, transform_indices = @transform_22, window_bounds = array<i64: 1, 16>}, {pipeline_mode = #tpu.pipeline_mode<synchronous>, transform_indices = @transform_23, window_bounds = array<i64: 16, 1>}, {pipeline_mode = #tpu.pipeline_mode<synchronous>, transform_indices = @transform_24, window_bounds = array<i64: 1, 1>}, {pipeline_mode = #tpu.pipeline_mode<synchronous>, transform_indices = @transform_25, window_bounds = array<i64: 2, 1>}, {pipeline_mode = #tpu.pipeline_mode<synchronous>, transform_indices = @transform_26, window_bounds = array<i64: 2, 32>}, {pipeline_mode = #tpu.pipeline_mode<synchronous>, transform_indices = @transform_27, window_bounds = array<i64: 2, 32>}]} {
    %c0 = arith.constant 0 : index
    %c0_0 = arith.constant 0 : index
    %0 = vector.load %arg1[%c0, %c0_0] : memref<136x576xbf16, #tpu.memory_space<vmem>>, vector<136x576xbf16>
    %c0_1 = arith.constant 0 : index
    %c0_2 = arith.constant 0 : index
    %1 = vector.load %arg3[%c0_1, %c0_2] : memref<576x768xbf16, #tpu.memory_space<vmem>>, vector<576x768xbf16>
    %c0_3 = arith.constant 0 : index
    %c0_4 = arith.constant 0 : index
    %2 = vector.load %arg4[%c0_3, %c0_4] : memref<576x768xbf16, #tpu.memory_space<vmem>>, vector<576x768xbf16>
    %c0_5 = arith.constant 0 : index
    %c0_6 = arith.constant 0 : index
    %3 = vector.load %arg5[%c0_5, %c0_6] : memref<1x192xf32, #tpu.memory_space<vmem>>, vector<1x192xf32>
    %4 = vector.extract_strided_slice %0 {offsets = [0, 0], sizes = [128, 576], strides = [1, 1]} : vector<136x576xbf16> to vector<128x576xbf16>
    %cst = arith.constant dense<0.000000e+00> : vector<128x768xf32>
    %5 = tpu.matmul %4, %1, %cst {dimension_numbers = #tpu.dot_dimension_numbers<[1], [0], [0], [1], [0, 0, 1, 1], [], []>} : vector<128x576xbf16>, vector<576x768xbf16>, vector<128x768xf32> -> vector<128x768xf32>
    %6 = vector.extract_strided_slice %0 {offsets = [8, 0], sizes = [128, 576], strides = [1, 1]} : vector<136x576xbf16> to vector<128x576xbf16>
    %cst_7 = arith.constant dense<0.000000e+00> : vector<128x768xf32>
    %7 = tpu.matmul %6, %2, %cst_7 {dimension_numbers = #tpu.dot_dimension_numbers<[1], [0], [0], [1], [0, 0, 1, 1], [], []>} : vector<128x576xbf16>, vector<576x768xbf16>, vector<128x768xf32> -> vector<128x768xf32>
    %8 = arith.addf %5, %7 : vector<128x768xf32>
    %9 = vector.extract_strided_slice %8 {offsets = [0, 0], sizes = [128, 192], strides = [1, 1]} : vector<128x768xf32> to vector<128x192xf32>
    %10 = vector.extract_strided_slice %8 {offsets = [0, 192], sizes = [128, 192], strides = [1, 1]} : vector<128x768xf32> to vector<128x192xf32>
    %11 = arith.maximumf %9, %10 : vector<128x192xf32>
    %12 = vector.extract_strided_slice %8 {offsets = [0, 384], sizes = [128, 192], strides = [1, 1]} : vector<128x768xf32> to vector<128x192xf32>
    %13 = vector.extract_strided_slice %8 {offsets = [0, 576], sizes = [128, 192], strides = [1, 1]} : vector<128x768xf32> to vector<128x192xf32>
    %14 = arith.maximumf %12, %13 : vector<128x192xf32>
    %15 = arith.maximumf %11, %14 : vector<128x192xf32>
    %16 = vector.broadcast %3 : vector<1x192xf32> to vector<128x192xf32>
    %17 = arith.addf %15, %16 : vector<128x192xf32>
    %cst_8 = arith.constant 0.000000e+00 : f32
    %18 = vector.broadcast %cst_8 : f32 to vector<128x192xf32>
    %19 = arith.maximumf %17, %18 : vector<128x192xf32>
    %20 = arith.truncf %19 : vector<128x192xf32> to vector<128x192xbf16>
    %cst_9 = arith.constant 0.000000e+00 : bf16
    %21 = vector.broadcast %cst_9 : bf16 to vector<8x192xbf16>
    %22 = vector.extract_strided_slice %20 {offsets = [0, 0], sizes = [8, 192], strides = [1, 1]} : vector<128x192xbf16> to vector<8x192xbf16>
    %23 = vector.extract_strided_slice %20 {offsets = [8, 0], sizes = [8, 192], strides = [1, 1]} : vector<128x192xbf16> to vector<8x192xbf16>
    %24 = vector.extract_strided_slice %20 {offsets = [16, 0], sizes = [8, 192], strides = [1, 1]} : vector<128x192xbf16> to vector<8x192xbf16>
    %25 = tpu.concatenate %21, %22, %23, %24 in 1 : vector<8x192xbf16>, vector<8x192xbf16>, vector<8x192xbf16>, vector<8x192xbf16> -> vector<8x768xbf16>
    %26 = vector.extract_strided_slice %20 {offsets = [24, 0], sizes = [8, 192], strides = [1, 1]} : vector<128x192xbf16> to vector<8x192xbf16>
    %27 = vector.extract_strided_slice %20 {offsets = [32, 0], sizes = [8, 192], strides = [1, 1]} : vector<128x192xbf16> to vector<8x192xbf16>
    %28 = vector.extract_strided_slice %20 {offsets = [40, 0], sizes = [8, 192], strides = [1, 1]} : vector<128x192xbf16> to vector<8x192xbf16>
    %29 = vector.extract_strided_slice %20 {offsets = [48, 0], sizes = [8, 192], strides = [1, 1]} : vector<128x192xbf16> to vector<8x192xbf16>
    %30 = tpu.concatenate %26, %27, %28, %29 in 1 : vector<8x192xbf16>, vector<8x192xbf16>, vector<8x192xbf16>, vector<8x192xbf16> -> vector<8x768xbf16>
    %31 = vector.extract_strided_slice %20 {offsets = [56, 0], sizes = [8, 192], strides = [1, 1]} : vector<128x192xbf16> to vector<8x192xbf16>
    %32 = vector.extract_strided_slice %20 {offsets = [64, 0], sizes = [8, 192], strides = [1, 1]} : vector<128x192xbf16> to vector<8x192xbf16>
    %33 = vector.extract_strided_slice %20 {offsets = [72, 0], sizes = [8, 192], strides = [1, 1]} : vector<128x192xbf16> to vector<8x192xbf16>
    %34 = vector.extract_strided_slice %20 {offsets = [80, 0], sizes = [8, 192], strides = [1, 1]} : vector<128x192xbf16> to vector<8x192xbf16>
    %35 = tpu.concatenate %31, %32, %33, %34 in 1 : vector<8x192xbf16>, vector<8x192xbf16>, vector<8x192xbf16>, vector<8x192xbf16> -> vector<8x768xbf16>
    %36 = vector.extract_strided_slice %20 {offsets = [88, 0], sizes = [8, 192], strides = [1, 1]} : vector<128x192xbf16> to vector<8x192xbf16>
    %37 = vector.extract_strided_slice %20 {offsets = [96, 0], sizes = [8, 192], strides = [1, 1]} : vector<128x192xbf16> to vector<8x192xbf16>
    %38 = vector.extract_strided_slice %20 {offsets = [104, 0], sizes = [8, 192], strides = [1, 1]} : vector<128x192xbf16> to vector<8x192xbf16>
    %39 = vector.extract_strided_slice %20 {offsets = [112, 0], sizes = [8, 192], strides = [1, 1]} : vector<128x192xbf16> to vector<8x192xbf16>
    %40 = tpu.concatenate %36, %37, %38, %39 in 1 : vector<8x192xbf16>, vector<8x192xbf16>, vector<8x192xbf16>, vector<8x192xbf16> -> vector<8x768xbf16>
    %41 = vector.extract_strided_slice %20 {offsets = [120, 0], sizes = [8, 192], strides = [1, 1]} : vector<128x192xbf16> to vector<8x192xbf16>
    %42 = tpu.concatenate %41, %21, %21, %21 in 1 : vector<8x192xbf16>, vector<8x192xbf16>, vector<8x192xbf16>, vector<8x192xbf16> -> vector<8x768xbf16>
    %43 = tpu.concatenate %25, %30, %35, %40, %42 in 0 : vector<8x768xbf16>, vector<8x768xbf16>, vector<8x768xbf16>, vector<8x768xbf16>, vector<8x768xbf16> -> vector<40x768xbf16>
    %c0_10 = arith.constant 0 : index
    %c0_11 = arith.constant 0 : index
    %44 = vector.load %arg6[%c0_10, %c0_11] : memref<768x384xbf16, #tpu.memory_space<vmem>>, vector<768x384xbf16>
    %c0_12 = arith.constant 0 : index
    %c0_13 = arith.constant 0 : index
    %45 = vector.load %arg7[%c0_12, %c0_13] : memref<768x384xbf16, #tpu.memory_space<vmem>>, vector<768x384xbf16>
    %c0_14 = arith.constant 0 : index
    %c0_15 = arith.constant 0 : index
    %46 = vector.load %arg8[%c0_14, %c0_15] : memref<1x96xf32, #tpu.memory_space<vmem>>, vector<1x96xf32>
    %47 = vector.extract_strided_slice %43 {offsets = [0, 0], sizes = [32, 768], strides = [1, 1]} : vector<40x768xbf16> to vector<32x768xbf16>
    %cst_16 = arith.constant dense<0.000000e+00> : vector<32x384xf32>
    %48 = tpu.matmul %47, %44, %cst_16 {dimension_numbers = #tpu.dot_dimension_numbers<[1], [0], [0], [1], [0, 0, 1, 1], [], []>} : vector<32x768xbf16>, vector<768x384xbf16>, vector<32x384xf32> -> vector<32x384xf32>
    %49 = vector.extract_strided_slice %43 {offsets = [8, 0], sizes = [32, 768], strides = [1, 1]} : vector<40x768xbf16> to vector<32x768xbf16>
    %cst_17 = arith.constant dense<0.000000e+00> : vector<32x384xf32>
    %50 = tpu.matmul %49, %45, %cst_17 {dimension_numbers = #tpu.dot_dimension_numbers<[1], [0], [0], [1], [0, 0, 1, 1], [], []>} : vector<32x768xbf16>, vector<768x384xbf16>, vector<32x384xf32> -> vector<32x384xf32>
    %51 = arith.addf %48, %50 : vector<32x384xf32>
    %52 = vector.extract_strided_slice %51 {offsets = [0, 0], sizes = [32, 96], strides = [1, 1]} : vector<32x384xf32> to vector<32x96xf32>
    %53 = vector.extract_strided_slice %51 {offsets = [0, 96], sizes = [32, 96], strides = [1, 1]} : vector<32x384xf32> to vector<32x96xf32>
    %54 = arith.maximumf %52, %53 : vector<32x96xf32>
    %55 = vector.extract_strided_slice %51 {offsets = [0, 192], sizes = [32, 96], strides = [1, 1]} : vector<32x384xf32> to vector<32x96xf32>
    %56 = vector.extract_strided_slice %51 {offsets = [0, 288], sizes = [32, 96], strides = [1, 1]} : vector<32x384xf32> to vector<32x96xf32>
    %57 = arith.maximumf %55, %56 : vector<32x96xf32>
    %58 = arith.maximumf %54, %57 : vector<32x96xf32>
    %59 = vector.broadcast %46 : vector<1x96xf32> to vector<32x96xf32>
    %60 = arith.addf %58, %59 : vector<32x96xf32>
    %cst_18 = arith.constant 0.000000e+00 : f32
    %61 = vector.broadcast %cst_18 : f32 to vector<32x96xf32>
    %62 = arith.maximumf %60, %61 : vector<32x96xf32>
    %63 = arith.truncf %62 : vector<32x96xf32> to vector<32x96xbf16>
    %cst_19 = arith.constant 0.000000e+00 : bf16
    %64 = vector.broadcast %cst_19 : bf16 to vector<8x96xbf16>
    %65 = vector.extract_strided_slice %63 {offsets = [0, 0], sizes = [8, 96], strides = [1, 1]} : vector<32x96xbf16> to vector<8x96xbf16>
    %66 = vector.extract_strided_slice %63 {offsets = [8, 0], sizes = [8, 96], strides = [1, 1]} : vector<32x96xbf16> to vector<8x96xbf16>
    %67 = vector.extract_strided_slice %63 {offsets = [16, 0], sizes = [8, 96], strides = [1, 1]} : vector<32x96xbf16> to vector<8x96xbf16>
    %68 = tpu.concatenate %64, %65, %66, %67 in 1 : vector<8x96xbf16>, vector<8x96xbf16>, vector<8x96xbf16>, vector<8x96xbf16> -> vector<8x384xbf16>
    %69 = vector.extract_strided_slice %63 {offsets = [24, 0], sizes = [8, 96], strides = [1, 1]} : vector<32x96xbf16> to vector<8x96xbf16>
    %70 = tpu.concatenate %69, %64, %64, %64 in 1 : vector<8x96xbf16>, vector<8x96xbf16>, vector<8x96xbf16>, vector<8x96xbf16> -> vector<8x384xbf16>
    %71 = tpu.concatenate %68, %70 in 0 : vector<8x384xbf16>, vector<8x384xbf16> -> vector<16x384xbf16>
    %c0_20 = arith.constant 0 : index
    %c0_21 = arith.constant 0 : index
    %72 = vector.load %arg9[%c0_20, %c0_21] : memref<384x128xbf16, #tpu.memory_space<vmem>>, vector<384x128xbf16>
    %c0_22 = arith.constant 0 : index
    %c0_23 = arith.constant 0 : index
    %73 = vector.load %arg10[%c0_22, %c0_23] : memref<384x128xbf16, #tpu.memory_space<vmem>>, vector<384x128xbf16>
    %c0_24 = arith.constant 0 : index
    %c0_25 = arith.constant 0 : index
    %74 = vector.load %arg11[%c0_24, %c0_25] : memref<1x32xf32, #tpu.memory_space<vmem>>, vector<1x32xf32>
    %75 = vector.extract_strided_slice %71 {offsets = [0, 0], sizes = [8, 384], strides = [1, 1]} : vector<16x384xbf16> to vector<8x384xbf16>
    %cst_26 = arith.constant dense<0.000000e+00> : vector<8x128xf32>
    %76 = tpu.matmul %75, %72, %cst_26 {dimension_numbers = #tpu.dot_dimension_numbers<[1], [0], [0], [1], [0, 0, 1, 1], [], []>} : vector<8x384xbf16>, vector<384x128xbf16>, vector<8x128xf32> -> vector<8x128xf32>
    %77 = vector.extract_strided_slice %71 {offsets = [8, 0], sizes = [8, 384], strides = [1, 1]} : vector<16x384xbf16> to vector<8x384xbf16>
    %cst_27 = arith.constant dense<0.000000e+00> : vector<8x128xf32>
    %78 = tpu.matmul %77, %73, %cst_27 {dimension_numbers = #tpu.dot_dimension_numbers<[1], [0], [0], [1], [0, 0, 1, 1], [], []>} : vector<8x384xbf16>, vector<384x128xbf16>, vector<8x128xf32> -> vector<8x128xf32>
    %79 = arith.addf %76, %78 : vector<8x128xf32>
    %80 = vector.extract_strided_slice %79 {offsets = [0, 0], sizes = [8, 32], strides = [1, 1]} : vector<8x128xf32> to vector<8x32xf32>
    %81 = vector.extract_strided_slice %79 {offsets = [0, 32], sizes = [8, 32], strides = [1, 1]} : vector<8x128xf32> to vector<8x32xf32>
    %82 = arith.maximumf %80, %81 : vector<8x32xf32>
    %83 = vector.extract_strided_slice %79 {offsets = [0, 64], sizes = [8, 32], strides = [1, 1]} : vector<8x128xf32> to vector<8x32xf32>
    %84 = vector.extract_strided_slice %79 {offsets = [0, 96], sizes = [8, 32], strides = [1, 1]} : vector<8x128xf32> to vector<8x32xf32>
    %85 = arith.maximumf %83, %84 : vector<8x32xf32>
    %86 = arith.maximumf %82, %85 : vector<8x32xf32>
    %87 = vector.broadcast %74 : vector<1x32xf32> to vector<8x32xf32>
    %88 = arith.addf %86, %87 : vector<8x32xf32>
    %cst_28 = arith.constant 0.000000e+00 : f32
    %89 = vector.broadcast %cst_28 : f32 to vector<8x32xf32>
    %90 = arith.maximumf %88, %89 : vector<8x32xf32>
    %91 = arith.truncf %90 : vector<8x32xf32> to vector<8x32xbf16>
    %c0_29 = arith.constant 0 : index
    %c0_30 = arith.constant 0 : index
    %92 = vector.load %arg12[%c0_29, %c0_30] : memref<32x32xbf16, #tpu.memory_space<vmem>>, vector<32x32xbf16>
    %cst_31 = arith.constant dense<0.000000e+00> : vector<8x32xf32>
    %93 = tpu.matmul %91, %92, %cst_31 {dimension_numbers = #tpu.dot_dimension_numbers<[1], [0], [0], [1], [0, 0, 1, 1], [], []>} : vector<8x32xbf16>, vector<32x32xbf16>, vector<8x32xf32> -> vector<8x32xf32>
    %c0_32 = arith.constant 0 : index
    %c0_33 = arith.constant 0 : index
    %94 = vector.load %arg13[%c0_32, %c0_33] : memref<1x32xf32, #tpu.memory_space<vmem>>, vector<1x32xf32>
    %95 = vector.broadcast %94 : vector<1x32xf32> to vector<8x32xf32>
    %96 = arith.addf %93, %95 : vector<8x32xf32>
    %cst_34 = arith.constant dense<0.000000e+00> : vector<8xf32>
    %97 = vector.multi_reduction <add>, %96, %cst_34 [1] : vector<8x32xf32> to vector<8xf32>
    %98 = vector.shape_cast %97 : vector<8xf32> to vector<8x1xf32>
    %cst_35 = arith.constant 3.200000e+01 : f32
    %99 = vector.broadcast %cst_35 : f32 to vector<8x1xf32>
    %100 = arith.divf %98, %99 : vector<8x1xf32>
    %101 = vector.broadcast %100 : vector<8x1xf32> to vector<8x32xf32>
    %102 = arith.subf %96, %101 : vector<8x32xf32>
    %103 = arith.mulf %102, %102 : vector<8x32xf32>
    %cst_36 = arith.constant dense<0.000000e+00> : vector<8xf32>
    %104 = vector.multi_reduction <add>, %103, %cst_36 [1] : vector<8x32xf32> to vector<8xf32>
    %105 = vector.shape_cast %104 : vector<8xf32> to vector<8x1xf32>
    %cst_37 = arith.constant 3.200000e+01 : f32
    %106 = vector.broadcast %cst_37 : f32 to vector<8x1xf32>
    %107 = arith.divf %105, %106 : vector<8x1xf32>
    %108 = vector.broadcast %100 : vector<8x1xf32> to vector<8x32xf32>
    %109 = arith.subf %96, %108 : vector<8x32xf32>
    %cst_38 = arith.constant 9.99999974E-6 : f32
    %110 = vector.broadcast %cst_38 : f32 to vector<8x1xf32>
    %111 = arith.addf %107, %110 : vector<8x1xf32>
    %112 = math.rsqrt %111 : vector<8x1xf32>
    %113 = vector.broadcast %112 : vector<8x1xf32> to vector<8x32xf32>
    %114 = arith.mulf %109, %113 : vector<8x32xf32>
    %c0_39 = arith.constant 0 : index
    %c0_40 = arith.constant 0 : index
    %115 = vector.load %arg14[%c0_39, %c0_40] : memref<1x32xf32, #tpu.memory_space<vmem>>, vector<1x32xf32>
    %116 = vector.broadcast %115 : vector<1x32xf32> to vector<8x32xf32>
    %117 = arith.mulf %114, %116 : vector<8x32xf32>
    %c0_41 = arith.constant 0 : index
    %c0_42 = arith.constant 0 : index
    %118 = vector.load %arg15[%c0_41, %c0_42] : memref<1x32xf32, #tpu.memory_space<vmem>>, vector<1x32xf32>
    %119 = vector.broadcast %118 : vector<1x32xf32> to vector<8x32xf32>
    %120 = arith.addf %117, %119 : vector<8x32xf32>
    %121 = arith.truncf %120 : vector<8x32xf32> to vector<8x32xbf16>
    %c0_43 = arith.constant 0 : index
    %c0_44 = arith.constant 0 : index
    %122 = vector.load %arg16[%c0_43, %c0_44] : memref<32x128xbf16, #tpu.memory_space<vmem>>, vector<32x128xbf16>
    %cst_45 = arith.constant dense<0.000000e+00> : vector<8x128xf32>
    %123 = tpu.matmul %121, %122, %cst_45 {dimension_numbers = #tpu.dot_dimension_numbers<[1], [0], [0], [1], [0, 0, 1, 1], [], []>} : vector<8x32xbf16>, vector<32x128xbf16>, vector<8x128xf32> -> vector<8x128xf32>
    %c0_46 = arith.constant 0 : index
    %c0_47 = arith.constant 0 : index
    %124 = vector.load %arg18[%c0_46, %c0_47] : memref<1x128xf32, #tpu.memory_space<vmem>>, vector<1x128xf32>
    %125 = vector.broadcast %124 : vector<1x128xf32> to vector<8x128xf32>
    %126 = arith.addf %123, %125 : vector<8x128xf32>
    %c0_48 = arith.constant 0 : index
    %c0_49 = arith.constant 0 : index
    %127 = vector.load %arg17[%c0_48, %c0_49] : memref<32x128xbf16, #tpu.memory_space<vmem>>, vector<32x128xbf16>
    %cst_50 = arith.constant 0.000000e+00 : f32
    %128 = vector.broadcast %cst_50 : f32 to vector<2x32xf32>
    %cst_51 = arith.constant 0.000000e+00 : f32
    %129 = vector.broadcast %cst_51 : f32 to vector<2x32xf32>
    %130 = vector.extract_strided_slice %126 {offsets = [0, 0], sizes = [2, 128], strides = [1, 1]} : vector<8x128xf32> to vector<2x128xf32>
    %131 = arith.truncf %128 : vector<2x32xf32> to vector<2x32xbf16>
    %cst_52 = arith.constant dense<0.000000e+00> : vector<2x128xf32>
    %132 = tpu.matmul %131, %127, %cst_52 {dimension_numbers = #tpu.dot_dimension_numbers<[1], [0], [0], [1], [0, 0, 1, 1], [], []>} : vector<2x32xbf16>, vector<32x128xbf16>, vector<2x128xf32> -> vector<2x128xf32>
    %133 = arith.addf %130, %132 : vector<2x128xf32>
    %134 = arith.negf %133 : vector<2x128xf32>
    %135 = math.exp %134 : vector<2x128xf32>
    %cst_53 = arith.constant 1.000000e+00 : f32
    %136 = vector.broadcast %cst_53 : f32 to vector<2x128xf32>
    %137 = arith.addf %136, %135 : vector<2x128xf32>
    %138 = arith.divf %136, %137 : vector<2x128xf32>
    %139 = math.tanh %133 : vector<2x128xf32>
    %140 = vector.extract_strided_slice %138 {offsets = [0, 0], sizes = [2, 32], strides = [1, 1]} : vector<2x128xf32> to vector<2x32xf32>
    %141 = vector.extract_strided_slice %138 {offsets = [0, 32], sizes = [2, 32], strides = [1, 1]} : vector<2x128xf32> to vector<2x32xf32>
    %142 = vector.extract_strided_slice %139 {offsets = [0, 64], sizes = [2, 32], strides = [1, 1]} : vector<2x128xf32> to vector<2x32xf32>
    %143 = vector.extract_strided_slice %138 {offsets = [0, 96], sizes = [2, 32], strides = [1, 1]} : vector<2x128xf32> to vector<2x32xf32>
    %144 = arith.mulf %141, %129 : vector<2x32xf32>
    %145 = arith.mulf %140, %142 : vector<2x32xf32>
    %146 = arith.addf %144, %145 : vector<2x32xf32>
    %147 = math.tanh %146 : vector<2x32xf32>
    %148 = arith.mulf %143, %147 : vector<2x32xf32>
    %149 = vector.extract_strided_slice %126 {offsets = [2, 0], sizes = [2, 128], strides = [1, 1]} : vector<8x128xf32> to vector<2x128xf32>
    %150 = arith.truncf %148 : vector<2x32xf32> to vector<2x32xbf16>
    %cst_54 = arith.constant dense<0.000000e+00> : vector<2x128xf32>
    %151 = tpu.matmul %150, %127, %cst_54 {dimension_numbers = #tpu.dot_dimension_numbers<[1], [0], [0], [1], [0, 0, 1, 1], [], []>} : vector<2x32xbf16>, vector<32x128xbf16>, vector<2x128xf32> -> vector<2x128xf32>
    %152 = arith.addf %149, %151 : vector<2x128xf32>
    %153 = arith.negf %152 : vector<2x128xf32>
    %154 = math.exp %153 : vector<2x128xf32>
    %cst_55 = arith.constant 1.000000e+00 : f32
    %155 = vector.broadcast %cst_55 : f32 to vector<2x128xf32>
    %156 = arith.addf %155, %154 : vector<2x128xf32>
    %157 = arith.divf %155, %156 : vector<2x128xf32>
    %158 = math.tanh %152 : vector<2x128xf32>
    %159 = vector.extract_strided_slice %157 {offsets = [0, 0], sizes = [2, 32], strides = [1, 1]} : vector<2x128xf32> to vector<2x32xf32>
    %160 = vector.extract_strided_slice %157 {offsets = [0, 32], sizes = [2, 32], strides = [1, 1]} : vector<2x128xf32> to vector<2x32xf32>
    %161 = vector.extract_strided_slice %158 {offsets = [0, 64], sizes = [2, 32], strides = [1, 1]} : vector<2x128xf32> to vector<2x32xf32>
    %162 = vector.extract_strided_slice %157 {offsets = [0, 96], sizes = [2, 32], strides = [1, 1]} : vector<2x128xf32> to vector<2x32xf32>
    %163 = arith.mulf %160, %146 : vector<2x32xf32>
    %164 = arith.mulf %159, %161 : vector<2x32xf32>
    %165 = arith.addf %163, %164 : vector<2x32xf32>
    %166 = math.tanh %165 : vector<2x32xf32>
    %167 = arith.mulf %162, %166 : vector<2x32xf32>
    %168 = vector.extract_strided_slice %126 {offsets = [4, 0], sizes = [2, 128], strides = [1, 1]} : vector<8x128xf32> to vector<2x128xf32>
    %169 = arith.truncf %167 : vector<2x32xf32> to vector<2x32xbf16>
    %cst_56 = arith.constant dense<0.000000e+00> : vector<2x128xf32>
    %170 = tpu.matmul %169, %127, %cst_56 {dimension_numbers = #tpu.dot_dimension_numbers<[1], [0], [0], [1], [0, 0, 1, 1], [], []>} : vector<2x32xbf16>, vector<32x128xbf16>, vector<2x128xf32> -> vector<2x128xf32>
    %171 = arith.addf %168, %170 : vector<2x128xf32>
    %172 = arith.negf %171 : vector<2x128xf32>
    %173 = math.exp %172 : vector<2x128xf32>
    %cst_57 = arith.constant 1.000000e+00 : f32
    %174 = vector.broadcast %cst_57 : f32 to vector<2x128xf32>
    %175 = arith.addf %174, %173 : vector<2x128xf32>
    %176 = arith.divf %174, %175 : vector<2x128xf32>
    %177 = math.tanh %171 : vector<2x128xf32>
    %178 = vector.extract_strided_slice %176 {offsets = [0, 0], sizes = [2, 32], strides = [1, 1]} : vector<2x128xf32> to vector<2x32xf32>
    %179 = vector.extract_strided_slice %176 {offsets = [0, 32], sizes = [2, 32], strides = [1, 1]} : vector<2x128xf32> to vector<2x32xf32>
    %180 = vector.extract_strided_slice %177 {offsets = [0, 64], sizes = [2, 32], strides = [1, 1]} : vector<2x128xf32> to vector<2x32xf32>
    %181 = vector.extract_strided_slice %176 {offsets = [0, 96], sizes = [2, 32], strides = [1, 1]} : vector<2x128xf32> to vector<2x32xf32>
    %182 = arith.mulf %179, %165 : vector<2x32xf32>
    %183 = arith.mulf %178, %180 : vector<2x32xf32>
    %184 = arith.addf %182, %183 : vector<2x32xf32>
    %185 = math.tanh %184 : vector<2x32xf32>
    %186 = arith.mulf %181, %185 : vector<2x32xf32>
    %187 = vector.extract_strided_slice %126 {offsets = [6, 0], sizes = [2, 128], strides = [1, 1]} : vector<8x128xf32> to vector<2x128xf32>
    %188 = arith.truncf %186 : vector<2x32xf32> to vector<2x32xbf16>
    %cst_58 = arith.constant dense<0.000000e+00> : vector<2x128xf32>
    %189 = tpu.matmul %188, %127, %cst_58 {dimension_numbers = #tpu.dot_dimension_numbers<[1], [0], [0], [1], [0, 0, 1, 1], [], []>} : vector<2x32xbf16>, vector<32x128xbf16>, vector<2x128xf32> -> vector<2x128xf32>
    %190 = arith.addf %187, %189 : vector<2x128xf32>
    %191 = arith.negf %190 : vector<2x128xf32>
    %192 = math.exp %191 : vector<2x128xf32>
    %cst_59 = arith.constant 1.000000e+00 : f32
    %193 = vector.broadcast %cst_59 : f32 to vector<2x128xf32>
    %194 = arith.addf %193, %192 : vector<2x128xf32>
    %195 = arith.divf %193, %194 : vector<2x128xf32>
    %196 = math.tanh %190 : vector<2x128xf32>
    %197 = vector.extract_strided_slice %195 {offsets = [0, 0], sizes = [2, 32], strides = [1, 1]} : vector<2x128xf32> to vector<2x32xf32>
    %198 = vector.extract_strided_slice %195 {offsets = [0, 32], sizes = [2, 32], strides = [1, 1]} : vector<2x128xf32> to vector<2x32xf32>
    %199 = vector.extract_strided_slice %196 {offsets = [0, 64], sizes = [2, 32], strides = [1, 1]} : vector<2x128xf32> to vector<2x32xf32>
    %200 = vector.extract_strided_slice %195 {offsets = [0, 96], sizes = [2, 32], strides = [1, 1]} : vector<2x128xf32> to vector<2x32xf32>
    %201 = arith.mulf %198, %184 : vector<2x32xf32>
    %202 = arith.mulf %197, %199 : vector<2x32xf32>
    %203 = arith.addf %201, %202 : vector<2x32xf32>
    %204 = math.tanh %203 : vector<2x32xf32>
    %205 = arith.mulf %200, %204 : vector<2x32xf32>
    %c0_60 = arith.constant 0 : index
    %c0_61 = arith.constant 0 : index
    %206 = vector.load %arg27[%c0_60, %c0_61] : memref<2x32xf32, #tpu.memory_space<vmem>>, vector<2x32xf32>
    tpu.vector_store %arg27[%c0_60, %c0_61], %205 {strides = array<i32>} : memref<2x32xf32, #tpu.memory_space<vmem>>, vector<2x32xf32>,
    %c0_62 = arith.constant 0 : index
    %c0_63 = arith.constant 0 : index
    %207 = vector.load %arg28[%c0_62, %c0_63] : memref<2x32xf32, #tpu.memory_space<vmem>>, vector<2x32xf32>
    tpu.vector_store %arg28[%c0_62, %c0_63], %203 {strides = array<i32>} : memref<2x32xf32, #tpu.memory_space<vmem>>, vector<2x32xf32>,
    %208 = arith.truncf %205 : vector<2x32xf32> to vector<2x32xbf16>
    %c0_64 = arith.constant 0 : index
    %c0_65 = arith.constant 0 : index
    %209 = vector.load %arg19[%c0_64, %c0_65] : memref<32x32xbf16, #tpu.memory_space<vmem>>, vector<32x32xbf16>
    %cst_66 = arith.constant dense<0.000000e+00> : vector<2x32xf32>
    %210 = tpu.matmul %208, %209, %cst_66 {dimension_numbers = #tpu.dot_dimension_numbers<[1], [0], [0], [1], [0, 0, 1, 1], [], []>} : vector<2x32xbf16>, vector<32x32xbf16>, vector<2x32xf32> -> vector<2x32xf32>
    %c0_67 = arith.constant 0 : index
    %c0_68 = arith.constant 0 : index
    %211 = vector.load %arg2[%c0_67, %c0_68] : memref<2x4xf32, #tpu.memory_space<vmem>>, vector<2x4xf32>
    %212 = arith.truncf %211 : vector<2x4xf32> to vector<2x4xbf16>
    %c0_69 = arith.constant 0 : index
    %c0_70 = arith.constant 0 : index
    %213 = vector.load %arg20[%c0_69, %c0_70] : memref<4x32xbf16, #tpu.memory_space<vmem>>, vector<4x32xbf16>
    %cst_71 = arith.constant dense<0.000000e+00> : vector<2x32xf32>
    %214 = tpu.matmul %212, %213, %cst_71 {dimension_numbers = #tpu.dot_dimension_numbers<[1], [0], [0], [1], [0, 0, 1, 1], [], []>} : vector<2x4xbf16>, vector<4x32xbf16>, vector<2x32xf32> -> vector<2x32xf32>
    %215 = arith.addf %210, %214 : vector<2x32xf32>
    %c0_72 = arith.constant 0 : index
    %c0_73 = arith.constant 0 : index
    %216 = vector.load %arg21[%c0_72, %c0_73] : memref<1x32xf32, #tpu.memory_space<vmem>>, vector<1x32xf32>
    %217 = vector.broadcast %216 : vector<1x32xf32> to vector<2x32xf32>
    %218 = arith.addf %215, %217 : vector<2x32xf32>
    %cst_74 = arith.constant 0.000000e+00 : f32
    %219 = vector.broadcast %cst_74 : f32 to vector<2x32xf32>
    %220 = arith.maximumf %218, %219 : vector<2x32xf32>
    %221 = arith.truncf %220 : vector<2x32xf32> to vector<2x32xbf16>
    %c0_75 = arith.constant 0 : index
    %c0_76 = arith.constant 0 : index
    %222 = vector.load %arg22[%c0_75, %c0_76] : memref<32x16xbf16, #tpu.memory_space<vmem>>, vector<32x16xbf16>
    %cst_77 = arith.constant dense<0.000000e+00> : vector<2x16xf32>
    %223 = tpu.matmul %221, %222, %cst_77 {dimension_numbers = #tpu.dot_dimension_numbers<[1], [0], [0], [1], [0, 0, 1, 1], [], []>} : vector<2x32xbf16>, vector<32x16xbf16>, vector<2x16xf32> -> vector<2x16xf32>
    %c0_78 = arith.constant 0 : index
    %c0_79 = arith.constant 0 : index
    %224 = vector.load %arg23[%c0_78, %c0_79] : memref<1x16xf32, #tpu.memory_space<vmem>>, vector<1x16xf32>
    %225 = vector.broadcast %224 : vector<1x16xf32> to vector<2x16xf32>
    %226 = arith.addf %223, %225 : vector<2x16xf32>
    %cst_80 = arith.constant 0.000000e+00 : f32
    %227 = vector.broadcast %cst_80 : f32 to vector<2x16xf32>
    %228 = arith.maximumf %226, %227 : vector<2x16xf32>
    %229 = arith.truncf %228 : vector<2x16xf32> to vector<2x16xbf16>
    %c0_81 = arith.constant 0 : index
    %c0_82 = arith.constant 0 : index
    %230 = vector.load %arg24[%c0_81, %c0_82] : memref<16x1xbf16, #tpu.memory_space<vmem>>, vector<16x1xbf16>
    %cst_83 = arith.constant dense<0.000000e+00> : vector<2x1xf32>
    %231 = tpu.matmul %229, %230, %cst_83 {dimension_numbers = #tpu.dot_dimension_numbers<[1], [0], [0], [1], [0, 0, 1, 1], [], []>} : vector<2x16xbf16>, vector<16x1xbf16>, vector<2x1xf32> -> vector<2x1xf32>
    %c0_84 = arith.constant 0 : index
    %c0_85 = arith.constant 0 : index
    %232 = vector.load %arg25[%c0_84, %c0_85] : memref<1x1xf32, #tpu.memory_space<vmem>>, vector<1x1xf32>
    %233 = vector.broadcast %232 : vector<1x1xf32> to vector<2x1xf32>
    %234 = arith.addf %231, %233 : vector<2x1xf32>
    %c0_86 = arith.constant 0 : index
    %c0_87 = arith.constant 0 : index
    %235 = vector.load %arg26[%c0_86, %c0_87] : memref<2x1xf32, #tpu.memory_space<vmem>>, vector<2x1xf32>
    tpu.vector_store %arg26[%c0_86, %c0_87], %234 {strides = array<i32>} : memref<2x1xf32, #tpu.memory_space<vmem>>, vector<2x1xf32>,
    return
  }
  func.func @transform_0(%arg0: i32) -> (i32, i32) {
    %c0_i32 = arith.constant 0 : i32
    %c0_i32_0 = arith.constant 0 : i32
    %c0_i32_1 = arith.constant 0 : i32
    return %c0_i32, %c0_i32_0 : i32, i32
  }
  func.func @transform_1(%arg0: i32) -> (i32, i32) {
    %c0_i32 = arith.constant 0 : i32
    %c0_i32_0 = arith.constant 0 : i32
    %c0_i32_1 = arith.constant 0 : i32
    return %c0_i32, %c0_i32_0 : i32, i32
  }
  func.func @transform_2(%arg0: i32) -> (i32, i32) {
    %c0_i32 = arith.constant 0 : i32
    %c0_i32_0 = arith.constant 0 : i32
    %c0_i32_1 = arith.constant 0 : i32
    return %c0_i32, %c0_i32_0 : i32, i32
  }
  func.func @transform_3(%arg0: i32) -> (i32, i32) {
    %c0_i32 = arith.constant 0 : i32
    %c0_i32_0 = arith.constant 0 : i32
    %c0_i32_1 = arith.constant 0 : i32
    return %c0_i32, %c0_i32_0 : i32, i32
  }
  func.func @transform_4(%arg0: i32) -> (i32, i32) {
    %c0_i32 = arith.constant 0 : i32
    %c0_i32_0 = arith.constant 0 : i32
    %c0_i32_1 = arith.constant 0 : i32
    return %c0_i32, %c0_i32_0 : i32, i32
  }
  func.func @transform_5(%arg0: i32) -> (i32, i32) {
    %c0_i32 = arith.constant 0 : i32
    %c0_i32_0 = arith.constant 0 : i32
    %c0_i32_1 = arith.constant 0 : i32
    return %c0_i32, %c0_i32_0 : i32, i32
  }
  func.func @transform_6(%arg0: i32) -> (i32, i32) {
    %c0_i32 = arith.constant 0 : i32
    %c0_i32_0 = arith.constant 0 : i32
    %c0_i32_1 = arith.constant 0 : i32
    return %c0_i32, %c0_i32_0 : i32, i32
  }
  func.func @transform_7(%arg0: i32) -> (i32, i32) {
    %c0_i32 = arith.constant 0 : i32
    %c0_i32_0 = arith.constant 0 : i32
    %c0_i32_1 = arith.constant 0 : i32
    return %c0_i32, %c0_i32_0 : i32, i32
  }
  func.func @transform_8(%arg0: i32) -> (i32, i32) {
    %c0_i32 = arith.constant 0 : i32
    %c0_i32_0 = arith.constant 0 : i32
    %c0_i32_1 = arith.constant 0 : i32
    return %c0_i32, %c0_i32_0 : i32, i32
  }
  func.func @transform_9(%arg0: i32) -> (i32, i32) {
    %c0_i32 = arith.constant 0 : i32
    %c0_i32_0 = arith.constant 0 : i32
    %c0_i32_1 = arith.constant 0 : i32
    return %c0_i32, %c0_i32_0 : i32, i32
  }
  func.func @transform_10(%arg0: i32) -> (i32, i32) {
    %c0_i32 = arith.constant 0 : i32
    %c0_i32_0 = arith.constant 0 : i32
    %c0_i32_1 = arith.constant 0 : i32
    return %c0_i32, %c0_i32_0 : i32, i32
  }
  func.func @transform_11(%arg0: i32) -> (i32, i32) {
    %c0_i32 = arith.constant 0 : i32
    %c0_i32_0 = arith.constant 0 : i32
    %c0_i32_1 = arith.constant 0 : i32
    return %c0_i32, %c0_i32_0 : i32, i32
  }
  func.func @transform_12(%arg0: i32) -> (i32, i32) {
    %c0_i32 = arith.constant 0 : i32
    %c0_i32_0 = arith.constant 0 : i32
    %c0_i32_1 = arith.constant 0 : i32
    return %c0_i32, %c0_i32_0 : i32, i32
  }
  func.func @transform_13(%arg0: i32) -> (i32, i32) {
    %c0_i32 = arith.constant 0 : i32
    %c0_i32_0 = arith.constant 0 : i32
    %c0_i32_1 = arith.constant 0 : i32
    return %c0_i32, %c0_i32_0 : i32, i32
  }
  func.func @transform_14(%arg0: i32) -> (i32, i32) {
    %c0_i32 = arith.constant 0 : i32
    %c0_i32_0 = arith.constant 0 : i32
    %c0_i32_1 = arith.constant 0 : i32
    return %c0_i32, %c0_i32_0 : i32, i32
  }
  func.func @transform_15(%arg0: i32) -> (i32, i32) {
    %c0_i32 = arith.constant 0 : i32
    %c0_i32_0 = arith.constant 0 : i32
    %c0_i32_1 = arith.constant 0 : i32
    return %c0_i32, %c0_i32_0 : i32, i32
  }
  func.func @transform_16(%arg0: i32) -> (i32, i32) {
    %c0_i32 = arith.constant 0 : i32
    %c0_i32_0 = arith.constant 0 : i32
    %c0_i32_1 = arith.constant 0 : i32
    return %c0_i32, %c0_i32_0 : i32, i32
  }
  func.func @transform_17(%arg0: i32) -> (i32, i32) {
    %c0_i32 = arith.constant 0 : i32
    %c0_i32_0 = arith.constant 0 : i32
    %c0_i32_1 = arith.constant 0 : i32
    return %c0_i32, %c0_i32_0 : i32, i32
  }
  func.func @transform_18(%arg0: i32) -> (i32, i32) {
    %c0_i32 = arith.constant 0 : i32
    %c0_i32_0 = arith.constant 0 : i32
    %c0_i32_1 = arith.constant 0 : i32
    return %c0_i32, %c0_i32_0 : i32, i32
  }
  func.func @transform_19(%arg0: i32) -> (i32, i32) {
    %c0_i32 = arith.constant 0 : i32
    %c0_i32_0 = arith.constant 0 : i32
    %c0_i32_1 = arith.constant 0 : i32
    return %c0_i32, %c0_i32_0 : i32, i32
  }
  func.func @transform_20(%arg0: i32) -> (i32, i32) {
    %c0_i32 = arith.constant 0 : i32
    %c0_i32_0 = arith.constant 0 : i32
    %c0_i32_1 = arith.constant 0 : i32
    return %c0_i32, %c0_i32_0 : i32, i32
  }
  func.func @transform_21(%arg0: i32) -> (i32, i32) {
    %c0_i32 = arith.constant 0 : i32
    %c0_i32_0 = arith.constant 0 : i32
    %c0_i32_1 = arith.constant 0 : i32
    return %c0_i32, %c0_i32_0 : i32, i32
  }
  func.func @transform_22(%arg0: i32) -> (i32, i32) {
    %c0_i32 = arith.constant 0 : i32
    %c0_i32_0 = arith.constant 0 : i32
    %c0_i32_1 = arith.constant 0 : i32
    return %c0_i32, %c0_i32_0 : i32, i32
  }
  func.func @transform_23(%arg0: i32) -> (i32, i32) {
    %c0_i32 = arith.constant 0 : i32
    %c0_i32_0 = arith.constant 0 : i32
    %c0_i32_1 = arith.constant 0 : i32
    return %c0_i32, %c0_i32_0 : i32, i32
  }
  func.func @transform_24(%arg0: i32) -> (i32, i32) {
    %c0_i32 = arith.constant 0 : i32
    %c0_i32_0 = arith.constant 0 : i32
    %c0_i32_1 = arith.constant 0 : i32
    return %c0_i32, %c0_i32_0 : i32, i32
  }
  func.func @transform_25(%arg0: i32) -> (i32, i32) {
    %c0_i32 = arith.constant 0 : i32
    %c0_i32_0 = arith.constant 0 : i32
    %c0_i32_1 = arith.constant 0 : i32
    return %c0_i32, %c0_i32_0 : i32, i32
  }
  func.func @transform_26(%arg0: i32) -> (i32, i32) {
    %c0_i32 = arith.constant 0 : i32
    %c0_i32_0 = arith.constant 0 : i32
    %c0_i32_1 = arith.constant 0 : i32
    return %c0_i32, %c0_i32_0 : i32, i32
  }
  func.func @transform_27(%arg0: i32) -> (i32, i32) {
    %c0_i32 = arith.constant 0 : i32
    %c0_i32_0 = arith.constant 0 : i32
    %c0_i32_1 = arith.constant 0 : i32
    return %c0_i32, %c0_i32_0 : i32, i32
  }
}

</mosaic_0001>

<llo_original>
// kernel: critic_forward.1
$region0: #{critic_forward.1}
  #allocation0 [shape = 'u32[]', space=smem, size = 0x4, offset = 0x4, fixed_abs, tag = 'smem constant byte address 0x4 - core index']
  #allocation1 [shape = 'u32[144,128]{1,0:T(1,128)}', space=vmem, size = 0x12000, scoped, tag = 'internal scratch']
  #allocation2 [shape = 'f32[1,1]{1,0:T(1,128)S(1)}', space=vmem, size = 0x200, scoped, tag = 'scoped memory for critic_forward.1']
  %s0 = inlined_call_operand.vmem [shape: bf16[136,576], index: 0, kind: input, shape index: {}]
  %s1 = inlined_call_operand.vmem [shape: f32[2,4], index: 1, kind: input, shape index: {}]
  %s2 = inlined_call_operand.vmem [shape: bf16[576,768], index: 2, kind: input, shape index: {}]
  %s3 = inlined_call_operand.vmem [shape: bf16[576,768], index: 3, kind: input, shape index: {}]
  %s4 = inlined_call_operand.vmem [shape: f32[1,192], index: 4, kind: input, shape index: {}]
  %s5 = inlined_call_operand.vmem [shape: bf16[768,384], index: 5, kind: input, shape index: {}]
  %s6 = inlined_call_operand.vmem [shape: bf16[768,384], index: 6, kind: input, shape index: {}]
  %s7 = inlined_call_operand.vmem [shape: f32[1,96], index: 7, kind: input, shape index: {}]
  %s8 = inlined_call_operand.vmem [shape: bf16[384,128], index: 8, kind: input, shape index: {}]
  %s9 = inlined_call_operand.vmem [shape: bf16[384,128], index: 9, kind: input, shape index: {}]
  %s10 = inlined_call_operand.vmem [shape: f32[1,32], index: 10, kind: input, shape index: {}]
  %s11 = inlined_call_operand.vmem [shape: bf16[32,32], index: 11, kind: input, shape index: {}]
  %s12 = inlined_call_operand.vmem [shape: f32[1,32], index: 12, kind: input, shape index: {}]
  %s13 = inlined_call_operand.vmem [shape: f32[1,32], index: 13, kind: input, shape index: {}]
  %s14 = inlined_call_operand.vmem [shape: f32[1,32], index: 14, kind: input, shape index: {}]
  %s15 = inlined_call_operand.vmem [shape: bf16[32,128], index: 15, kind: input, shape index: {}]
  %s16 = inlined_call_operand.vmem [shape: bf16[32,128], index: 16, kind: input, shape index: {}]
  %s17 = inlined_call_operand.vmem [shape: f32[1,128], index: 17, kind: input, shape index: {}]
  %s18 = inlined_call_operand.vmem [shape: bf16[32,32], index: 18, kind: input, shape index: {}]
  %s19 = inlined_call_operand.vmem [shape: bf16[4,32], index: 19, kind: input, shape index: {}]
  %s20 = inlined_call_operand.vmem [shape: f32[1,32], index: 20, kind: input, shape index: {}]
  %s21 = inlined_call_operand.vmem [shape: bf16[32,16], index: 21, kind: input, shape index: {}]
  %s22 = inlined_call_operand.vmem [shape: f32[1,16], index: 22, kind: input, shape index: {}]
  %s23 = inlined_call_operand.vmem [shape: bf16[16,1], index: 23, kind: input, shape index: {}]
  %s24 = inlined_call_operand.<no memory space> [shape: f32[1,1], index: 24, kind: input, shape index: {}]
  %s25 = inlined_call_operand.vmem [shape: f32[2,1], index: 25, kind: output, shape index: {0}]
  %s26 = inlined_call_operand.hbm [shape: f32[2,32], index: 26, kind: output, shape index: {1}]
  %s27 = inlined_call_operand.hbm [shape: f32[2,32], index: 27, kind: output, shape index: {2}]
  %28 = xla_tuple %s25, %s26, %s27
  %s29 = sld [smem:[#allocation0]]
  $region126: #{critic_forward.1} parent=0
    _
  %s31 = ssub.s32 1, %s29
  %s32 = scalar_select 0, %s31, %s29
  %v33 = vstv %s24
  %34 = vst [vmem:[#allocation2] sm:$0x1] %v33
  $region1: #{critic_forward.1} parent=0
    #allocation3 [shape = 'u8[1024]{0}', space=vmem, size = 0x400, scoped, tag = 'output window, operand 1, single buffered']
    #allocation4 [shape = 's32[1]{0}', space=sflag, size = 0x4, scoped, tag = 'scoped memory for critic_forward.1']
    #allocation5 [shape = 'u8[1024]{0}', space=vmem, size = 0x400, scoped, tag = 'output window, operand 2, single buffered']
    #allocation6 [shape = 's32[1]{0}', space=sflag, size = 0x4, scoped, tag = 'scoped memory for critic_forward.1']
    %35 = vsyncpa [#allocation4], 0
    %36 = vsyncpa [#allocation6], 0
    // Predicated region
    $region2: #{critic_forward.1} parent=1 // pred_check
      _
    $region3: #{critic_forward.1} parent=1 // pred_check_branch
      %38 = sbr.rel (0) target = $region5
    $region4: #{critic_forward.1} parent=1 // pred_region
      _
    $region5: #{critic_forward.1} parent=1 // pred_fallthru
      _
    // Predicated region
    $region6: #{critic_forward.1} parent=1 // pred_check
      _
    $region7: #{critic_forward.1} parent=1 // pred_check_branch
      %40 = sbr.rel (0) target = $region9
    $region8: #{critic_forward.1} parent=1 // pred_region
      _
    $region9: #{critic_forward.1} parent=1 // pred_fallthru
      _
    // Predicated region
    $region10: #{critic_forward.1} parent=1 // pred_check
      _
    $region11: #{critic_forward.1} parent=1 // pred_check_branch
      %42 = sbr.rel (0) target = $region13
    $region12: #{critic_forward.1} parent=1 // pred_region
      _
    $region13: #{critic_forward.1} parent=1 // pred_fallthru
      _
    // Predicated region
    $region14: #{critic_forward.1} parent=1 // pred_check
      _
    $region15: #{critic_forward.1} parent=1 // pred_check_branch
      %44 = sbr.rel (0) target = $region17
    $region16: #{critic_forward.1} parent=1 // pred_region
      _
    $region17: #{critic_forward.1} parent=1 // pred_fallthru
      _
    // Predicated region
    $region18: #{critic_forward.1} parent=1 // pred_check
      _
    $region19: #{critic_forward.1} parent=1 // pred_check_branch
      %46 = sbr.rel (0) target = $region21
    $region20: #{critic_forward.1} parent=1 // pred_region
      _
    $region21: #{critic_forward.1} parent=1 // pred_fallthru
      _
    // Predicated region
    $region22: #{critic_forward.1} parent=1 // pred_check
      _
    $region23: #{critic_forward.1} parent=1 // pred_check_branch
      %48 = sbr.rel (0) target = $region25
    $region24: #{critic_forward.1} parent=1 // pred_region
      _
    $region25: #{critic_forward.1} parent=1 // pred_fallthru
      _
    // Predicated region
    $region26: #{critic_forward.1} parent=1 // pred_check
      _
    $region27: #{critic_forward.1} parent=1 // pred_check_branch
      %50 = sbr.rel (0) target = $region29
    $region28: #{critic_forward.1} parent=1 // pred_region
      _
    $region29: #{critic_forward.1} parent=1 // pred_fallthru
      _
    // Predicated region
    $region30: #{critic_forward.1} parent=1 // pred_check
      _
    $region31: #{critic_forward.1} parent=1 // pred_check_branch
      %52 = sbr.rel (0) target = $region33
    $region32: #{critic_forward.1} parent=1 // pred_region
      _
    $region33: #{critic_forward.1} parent=1 // pred_fallthru
      _
    // Predicated region
    $region34: #{critic_forward.1} parent=1 // pred_check
      _
    $region35: #{critic_forward.1} parent=1 // pred_check_branch
      %54 = sbr.rel (0) target = $region37
    $region36: #{critic_forward.1} parent=1 // pred_region
      _
    $region37: #{critic_forward.1} parent=1 // pred_fallthru
      _
    // Predicated region
    $region38: #{critic_forward.1} parent=1 // pred_check
      _
    $region39: #{critic_forward.1} parent=1 // pred_check_branch
      %56 = sbr.rel (0) target = $region41
    $region40: #{critic_forward.1} parent=1 // pred_region
      _
    $region41: #{critic_forward.1} parent=1 // pred_fallthru
      _
    // Predicated region
    $region42: #{critic_forward.1} parent=1 // pred_check
      _
    $region43: #{critic_forward.1} parent=1 // pred_check_branch
      %58 = sbr.rel (0) target = $region45
    $region44: #{critic_forward.1} parent=1 // pred_region
      _
    $region45: #{critic_forward.1} parent=1 // pred_fallthru
      _
    // Predicated region
    $region46: #{critic_forward.1} parent=1 // pred_check
      _
    $region47: #{critic_forward.1} parent=1 // pred_check_branch
      %60 = sbr.rel (0) target = $region49
    $region48: #{critic_forward.1} parent=1 // pred_region
      _
    $region49: #{critic_forward.1} parent=1 // pred_fallthru
      _
    // Predicated region
    $region50: #{critic_forward.1} parent=1 // pred_check
      _
    $region51: #{critic_forward.1} parent=1 // pred_check_branch
      %62 = sbr.rel (0) target = $region53
    $region52: #{critic_forward.1} parent=1 // pred_region
      _
    $region53: #{critic_forward.1} parent=1 // pred_fallthru
      _
    // Predicated region
    $region54: #{critic_forward.1} parent=1 // pred_check
      _
    $region55: #{critic_forward.1} parent=1 // pred_check_branch
      %64 = sbr.rel (0) target = $region57
    $region56: #{critic_forward.1} parent=1 // pred_region
      _
    $region57: #{critic_forward.1} parent=1 // pred_fallthru
      _
    // Predicated region
    $region58: #{critic_forward.1} parent=1 // pred_check
      _
    $region59: #{critic_forward.1} parent=1 // pred_check_branch
      %66 = sbr.rel (0) target = $region61
    $region60: #{critic_forward.1} parent=1 // pred_region
      _
    $region61: #{critic_forward.1} parent=1 // pred_fallthru
      _
    // Predicated region
    $region62: #{critic_forward.1} parent=1 // pred_check
      _
    $region63: #{critic_forward.1} parent=1 // pred_check_branch
      %68 = sbr.rel (0) target = $region65
    $region64: #{critic_forward.1} parent=1 // pred_region
      _
    $region65: #{critic_forward.1} parent=1 // pred_fallthru
      _
    // Predicated region
    $region66: #{critic_forward.1} parent=1 // pred_check
      _
    $region67: #{critic_forward.1} parent=1 // pred_check_branch
      %70 = sbr.rel (0) target = $region69
    $region68: #{critic_forward.1} parent=1 // pred_region
      _
    $region69: #{critic_forward.1} parent=1 // pred_fallthru
      _
    // Predicated region
    $region70: #{critic_forward.1} parent=1 // pred_check
      _
    $region71: #{critic_forward.1} parent=1 // pred_check_branch
      %72 = sbr.rel (0) target = $region73
    $region72: #{critic_forward.1} parent=1 // pred_region
      _
    $region73: #{critic_forward.1} parent=1 // pred_fallthru
      _
    // Predicated region
    $region74: #{critic_forward.1} parent=1 // pred_check
      _
    $region75: #{critic_forward.1} parent=1 // pred_check_branch
      %74 = sbr.rel (0) target = $region77
    $region76: #{critic_forward.1} parent=1 // pred_region
      _
    $region77: #{critic_forward.1} parent=1 // pred_fallthru
      _
    // Predicated region
    $region78: #{critic_forward.1} parent=1 // pred_check
      _
    $region79: #{critic_forward.1} parent=1 // pred_check_branch
      %76 = sbr.rel (0) target = $region81
    $region80: #{critic_forward.1} parent=1 // pred_region
      _
    $region81: #{critic_forward.1} parent=1 // pred_fallthru
      _
    // Predicated region
    $region82: #{critic_forward.1} parent=1 // pred_check
      _
    $region83: #{critic_forward.1} parent=1 // pred_check_branch
      %78 = sbr.rel (0) target = $region85
    $region84: #{critic_forward.1} parent=1 // pred_region
      _
    $region85: #{critic_forward.1} parent=1 // pred_fallthru
      _
    // Predicated region
    $region86: #{critic_forward.1} parent=1 // pred_check
      _
    $region87: #{critic_forward.1} parent=1 // pred_check_branch
      %80 = sbr.rel (0) target = $region89
    $region88: #{critic_forward.1} parent=1 // pred_region
      _
    $region89: #{critic_forward.1} parent=1 // pred_fallthru
      _
    // Predicated region
    $region90: #{critic_forward.1} parent=1 // pred_check
      _
    $region91: #{critic_forward.1} parent=1 // pred_check_branch
      %82 = sbr.rel (0) target = $region93
    $region92: #{critic_forward.1} parent=1 // pred_region
      _
    $region93: #{critic_forward.1} parent=1 // pred_fallthru
      _
    // Predicated region
    $region94: #{critic_forward.1} parent=1 // pred_check
      _
    $region95: #{critic_forward.1} parent=1 // pred_check_branch
      %84 = sbr.rel (0) target = $region97
    $region96: #{critic_forward.1} parent=1 // pred_region
      _
    $region97: #{critic_forward.1} parent=1 // pred_fallthru
      _
    // Predicated region
    $region98: #{critic_forward.1} parent=1 // pred_check
      _
    $region99: #{critic_forward.1} parent=1 // pred_check_branch
      %86 = sbr.rel (0) target = $region101
    $region100: #{critic_forward.1} parent=1 // pred_region
      _
    $region101: #{critic_forward.1} parent=1 // pred_fallthru
      _
    %v88 = vld [vmem:[%s0] sm:$0xff]
    %v89 = vld [vmem:[%s0 + $0x8] sm:$0xff]
    %v90 = vld [vmem:[%s0 + $0x10] sm:$0xf]
    %v91 = vld [vmem:[%s0 + $0x14] sm:$0xff]
    %v92 = vld [vmem:[%s0 + $0x1c] sm:$0xff]
    %v93 = vld [vmem:[%s0 + $0x24] sm:$0xf]
    %v94 = vld [vmem:[%s0 + $0x28] sm:$0xff]
    %v95 = vld [vmem:[%s0 + $0x30] sm:$0xff]
    %v96 = vld [vmem:[%s0 + $0x38] sm:$0xf]
    %v97 = vld [vmem:[%s0 + $0x3c] sm:$0xff]
    %v98 = vld [vmem:[%s0 + $0x44] sm:$0xff]
    %v99 = vld [vmem:[%s0 + $0x4c] sm:$0xf]
    %v100 = vld [vmem:[%s0 + $0x50] sm:$0xff]
    %v101 = vld [vmem:[%s0 + $0x58] sm:$0xff]
    %v102 = vld [vmem:[%s0 + $0x60] sm:$0xf]
    %v103 = vld [vmem:[%s0 + $0x64] sm:$0xff]
    %v104 = vld [vmem:[%s0 + $0x6c] sm:$0xff]
    %v105 = vld [vmem:[%s0 + $0x74] sm:$0xf]
    %v106 = vld [vmem:[%s0 + $0x78] sm:$0xff]
    %v107 = vld [vmem:[%s0 + $0x80] sm:$0xff]
    %v108 = vld [vmem:[%s0 + $0x88] sm:$0xf]
    %v109 = vld [vmem:[%s0 + $0x8c] sm:$0xff]
    %v110 = vld [vmem:[%s0 + $0x94] sm:$0xff]
    %v111 = vld [vmem:[%s0 + $0x9c] sm:$0xf]
    %v112 = vld [vmem:[%s0 + $0xa0] sm:$0xff]
    %v113 = vld [vmem:[%s0 + $0xa8] sm:$0xff]
    %v114 = vld [vmem:[%s0 + $0xb0] sm:$0xf]
    %v115 = vld [vmem:[%s0 + $0xb4] sm:$0xff]
    %v116 = vld [vmem:[%s0 + $0xbc] sm:$0xff]
    %v117 = vld [vmem:[%s0 + $0xc4] sm:$0xf]
    %v118 = vld [vmem:[%s0 + $0xc8] sm:$0xff]
    %v119 = vld [vmem:[%s0 + $0xd0] sm:$0xff]
    %v120 = vld [vmem:[%s0 + $0xd8] sm:$0xf]
    %v121 = vld [vmem:[%s0 + $0xdc] sm:$0xff]
    %v122 = vld [vmem:[%s0 + $0xe4] sm:$0xff]
    %v123 = vld [vmem:[%s0 + $0xec] sm:$0xf]
    %v124 = vld [vmem:[%s0 + $0xf0] sm:$0xff]
    %v125 = vld [vmem:[%s0 + $0xf8] sm:$0xff]
    %v126 = vld [vmem:[%s0 + $0x100] sm:$0xf]
    %v127 = vld [vmem:[%s0 + $0x104] sm:$0xff]
    %v128 = vld [vmem:[%s0 + $0x10c] sm:$0xff]
    %v129 = vld [vmem:[%s0 + $0x114] sm:$0xf]
    %v130 = vld [vmem:[%s0 + $0x118] sm:$0xff]
    %v131 = vld [vmem:[%s0 + $0x120] sm:$0xff]
    %v132 = vld [vmem:[%s0 + $0x128] sm:$0xf]
    %v133 = vld [vmem:[%s0 + $0x12c] sm:$0xff]
    %v134 = vld [vmem:[%s0 + $0x134] sm:$0xff]
    %v135 = vld [vmem:[%s0 + $0x13c] sm:$0xf]
    %v136 = vld [vmem:[%s0 + $0x140] sm:$0xff]
    %v137 = vld [vmem:[%s0 + $0x148] sm:$0xff]
    %v138 = vld [vmem:[%s0 + $0x150] sm:$0xf]
    %v139 = vld [vmem:[%s2] sm:$0xff]
    %v140 = vld [vmem:[%s2 + $0x8] sm:$0xff]
    %v141 = vld [vmem:[%s2 + $0x10] sm:$0xff]
    %v142 = vld [vmem:[%s2 + $0x18] sm:$0xff]
    %v143 = vld [vmem:[%s2 + $0x20] sm:$0xff]
    %v144 = vld [vmem:[%s2 + $0x28] sm:$0xff]
    %v145 = vld [vmem:[%s2 + $0x30] sm:$0xff]
    %v146 = vld [vmem:[%s2 + $0x38] sm:$0xff]
    %v147 = vld [vmem:[%s2 + $0x40] sm:$0xff]
    %v148 = vld [vmem:[%s2 + $0x48] sm:$0xff]
    %v149 = vld [vmem:[%s2 + $0x50] sm:$0xff]
    %v150 = vld [vmem:[%s2 + $0x58] sm:$0xff]
    %v151 = vld [vmem:[%s2 + $0x60] sm:$0xff]
    %v152 = vld [vmem:[%s2 + $0x68] sm:$0xff]
    %v153 = vld [vmem:[%s2 + $0x70] sm:$0xff]
    %v154 = vld [vmem:[%s2 + $0x78] sm:$0xff]
    %v155 = vld [vmem:[%s2 + $0x80] sm:$0xff]
    %v156 = vld [vmem:[%s2 + $0x88] sm:$0xff]
    %v157 = vld [vmem:[%s2 + $0x90] sm:$0xff]
    %v158 = vld [vmem:[%s2 + $0x98] sm:$0xff]
    %v159 = vld [vmem:[%s2 + $0xa0] sm:$0xff]
    %v160 = vld [vmem:[%s2 + $0xa8] sm:$0xff]
    %v161 = vld [vmem:[%s2 + $0xb0] sm:$0xff]
    %v162 = vld [vmem:[%s2 + $0xb8] sm:$0xff]
    %v163 = vld [vmem:[%s2 + $0xc0] sm:$0xff]
    %v164 = vld [vmem:[%s2 + $0xc8] sm:$0xff]
    %v165 = vld [vmem:[%s2 + $0xd0] sm:$0xff]
    %v166 = vld [vmem:[%s2 + $0xd8] sm:$0xff]
    %v167 = vld [vmem:[%s2 + $0xe0] sm:$0xff]
    %v168 = vld [vmem:[%s2 + $0xe8] sm:$0xff]
    %v169 = vld [vmem:[%s2 + $0xf0] sm:$0xff]
    %v170 = vld [vmem:[%s2 + $0xf8] sm:$0xff]
    %v171 = vld [vmem:[%s2 + $0x100] sm:$0xff]
    %v172 = vld [vmem:[%s2 + $0x108] sm:$0xff]
    %v173 = vld [vmem:[%s2 + $0x110] sm:$0xff]
    %v174 = vld [vmem:[%s2 + $0x118] sm:$0xff]
    %v175 = vld [vmem:[%s2 + $0x120] sm:$0xff]
    %v176 = vld [vmem:[%s2 + $0x128] sm:$0xff]
    %v177 = vld [vmem:[%s2 + $0x130] sm:$0xff]
    %v178 = vld [vmem:[%s2 + $0x138] sm:$0xff]
    %v179 = vld [vmem:[%s2 + $0x140] sm:$0xff]
    %v180 = vld [vmem:[%s2 + $0x148] sm:$0xff]
    %v181 = vld [vmem:[%s2 + $0x150] sm:$0xff]
    %v182 = vld [vmem:[%s2 + $0x158] sm:$0xff]
    %v183 = vld [vmem:[%s2 + $0x160] sm:$0xff]
    %v184 = vld [vmem:[%s2 + $0x168] sm:$0xff]
    %v185 = vld [vmem:[%s2 + $0x170] sm:$0xff]
    %v186 = vld [vmem:[%s2 + $0x178] sm:$0xff]
    %v187 = vld [vmem:[%s2 + $0x180] sm:$0xff]
    %v188 = vld [vmem:[%s2 + $0x188] sm:$0xff]
    %v189 = vld [vmem:[%s2 + $0x190] sm:$0xff]
    %v190 = vld [vmem:[%s2 + $0x198] sm:$0xff]
    %v191 = vld [vmem:[%s2 + $0x1a0] sm:$0xff]
    %v192 = vld [vmem:[%s2 + $0x1a8] sm:$0xff]
    %v193 = vld [vmem:[%s2 + $0x1b0] sm:$0xff]
    %v194 = vld [vmem:[%s2 + $0x1b8] sm:$0xff]
    %v195 = vld [vmem:[%s2 + $0x1c0] sm:$0xff]
    %v196 = vld [vmem:[%s2 + $0x1c8] sm:$0xff]
    %v197 = vld [vmem:[%s2 + $0x1d0] sm:$0xff]
    %v198 = vld [vmem:[%s2 + $0x1d8] sm:$0xff]
    %v199 = vld [vmem:[%s2 + $0x1e0] sm:$0xff]
    %v200 = vld [vmem:[%s2 + $0x1e8] sm:$0xff]
    %v201 = vld [vmem:[%s2 + $0x1f0] sm:$0xff]
    %v202 = vld [vmem:[%s2 + $0x1f8] sm:$0xff]
    %v203 = vld [vmem:[%s2 + $0x200] sm:$0xff]
    %v204 = vld [vmem:[%s2 + $0x208] sm:$0xff]
    %v205 = vld [vmem:[%s2 + $0x210] sm:$0xff]
    %v206 = vld [vmem:[%s2 + $0x218] sm:$0xff]
    %v207 = vld [vmem:[%s2 + $0x220] sm:$0xff]
    %v208 = vld [vmem:[%s2 + $0x228] sm:$0xff]
    %v209 = vld [vmem:[%s2 + $0x230] sm:$0xff]
    %v210 = vld [vmem:[%s2 + $0x238] sm:$0xff]
    %v211 = vld [vmem:[%s2 + $0x240] sm:$0xff]
    %v212 = vld [vmem:[%s2 + $0x248] sm:$0xff]
    %v213 = vld [vmem:[%s2 + $0x250] sm:$0xff]
    %v214 = vld [vmem:[%s2 + $0x258] sm:$0xff]
    %v215 = vld [vmem:[%s2 + $0x260] sm:$0xff]
    %v216 = vld [vmem:[%s2 + $0x268] sm:$0xff]
    %v217 = vld [vmem:[%s2 + $0x270] sm:$0xff]
    %v218 = vld [vmem:[%s2 + $0x278] sm:$0xff]
    %v219 = vld [vmem:[%s2 + $0x280] sm:$0xff]
    %v220 = vld [vmem:[%s2 + $0x288] sm:$0xff]
    %v221 = vld [vmem:[%s2 + $0x290] sm:$0xff]
    %v222 = vld [vmem:[%s2 + $0x298] sm:$0xff]
    %v223 = vld [vmem:[%s2 + $0x2a0] sm:$0xff]
    %v224 = vld [vmem:[%s2 + $0x2a8] sm:$0xff]
    %v225 = vld [vmem:[%s2 + $0x2b0] sm:$0xff]
    %v226 = vld [vmem:[%s2 + $0x2b8] sm:$0xff]
    %v227 = vld [vmem:[%s2 + $0x2c0] sm:$0xff]
    %v228 = vld [vmem:[%s2 + $0x2c8] sm:$0xff]
    %v229 = vld [vmem:[%s2 + $0x2d0] sm:$0xff]
    %v230 = vld [vmem:[%s2 + $0x2d8] sm:$0xff]
    %v231 = vld [vmem:[%s2 + $0x2e0] sm:$0xff]
    %v232 = vld [vmem:[%s2 + $0x2e8] sm:$0xff]
    %v233 = vld [vmem:[%s2 + $0x2f0] sm:$0xff]
    %v234 = vld [vmem:[%s2 + $0x2f8] sm:$0xff]
    %v235 = vld [vmem:[%s2 + $0x300] sm:$0xff]
    %v236 = vld [vmem:[%s2 + $0x308] sm:$0xff]
    %v237 = vld [vmem:[%s2 + $0x310] sm:$0xff]
    %v238 = vld [vmem:[%s2 + $0x318] sm:$0xff]
    %v239 = vld [vmem:[%s2 + $0x320] sm:$0xff]
    %v240 = vld [vmem:[%s2 + $0x328] sm:$0xff]
    %v241 = vld [vmem:[%s2 + $0x330] sm:$0xff]
    %v242 = vld [vmem:[%s2 + $0x338] sm:$0xff]
    %v243 = vld [vmem:[%s2 + $0x340] sm:$0xff]
    %v244 = vld [vmem:[%s2 + $0x348] sm:$0xff]
    %v245 = vld [vmem:[%s2 + $0x350] sm:$0xff]
    %v246 = vld [vmem:[%s2 + $0x358] sm:$0xff]
    %v247 = vld [vmem:[%s2 + $0x360] sm:$0xff]
    %v248 = vld [vmem:[%s2 + $0x368] sm:$0xff]
    %v249 = vld [vmem:[%s2 + $0x370] sm:$0xff]
    %v250 = vld [vmem:[%s2 + $0x378] sm:$0xff]
    %v251 = vld [vmem:[%s2 + $0x380] sm:$0xff]
    %v252 = vld [vmem:[%s2 + $0x388] sm:$0xff]
    %v253 = vld [vmem:[%s2 + $0x390] sm:$0xff]
    %v254 = vld [vmem:[%s2 + $0x398] sm:$0xff]
    %v255 = vld [vmem:[%s2 + $0x3a0] sm:$0xff]
    %v256 = vld [vmem:[%s2 + $0x3a8] sm:$0xff]
    %v257 = vld [vmem:[%s2 + $0x3b0] sm:$0xff]
    %v258 = vld [vmem:[%s2 + $0x3b8] sm:$0xff]
    %v259 = vld [vmem:[%s2 + $0x3c0] sm:$0xff]
    %v260 = vld [vmem:[%s2 + $0x3c8] sm:$0xff]
    %v261 = vld [vmem:[%s2 + $0x3d0] sm:$0xff]
    %v262 = vld [vmem:[%s2 + $0x3d8] sm:$0xff]
    %v263 = vld [vmem:[%s2 + $0x3e0] sm:$0xff]
    %v264 = vld [vmem:[%s2 + $0x3e8] sm:$0xff]
    %v265 = vld [vmem:[%s2 + $0x3f0] sm:$0xff]
    %v266 = vld [vmem:[%s2 + $0x3f8] sm:$0xff]
    %v267 = vld [vmem:[%s2 + $0x400] sm:$0xff]
    %v268 = vld [vmem:[%s2 + $0x408] sm:$0xff]
    %v269 = vld [vmem:[%s2 + $0x410] sm:$0xff]
    %v270 = vld [vmem:[%s2 + $0x418] sm:$0xff]
    %v271 = vld [vmem:[%s2 + $0x420] sm:$0xff]
    %v272 = vld [vmem:[%s2 + $0x428] sm:$0xff]
    %v273 = vld [vmem:[%s2 + $0x430] sm:$0xff]
    %v274 = vld [vmem:[%s2 + $0x438] sm:$0xff]
    %v275 = vld [vmem:[%s2 + $0x440] sm:$0xff]
    %v276 = vld [vmem:[%s2 + $0x448] sm:$0xff]
    %v277 = vld [vmem:[%s2 + $0x450] sm:$0xff]
    %v278 = vld [vmem:[%s2 + $0x458] sm:$0xff]
    %v279 = vld [vmem:[%s2 + $0x460] sm:$0xff]
    %v280 = vld [vmem:[%s2 + $0x468] sm:$0xff]
    %v281 = vld [vmem:[%s2 + $0x470] sm:$0xff]
    %v282 = vld [vmem:[%s2 + $0x478] sm:$0xff]
    %v283 = vld [vmem:[%s2 + $0x480] sm:$0xff]
    %v284 = vld [vmem:[%s2 + $0x488] sm:$0xff]
    %v285 = vld [vmem:[%s2 + $0x490] sm:$0xff]
    %v286 = vld [vmem:[%s2 + $0x498] sm:$0xff]
    %v287 = vld [vmem:[%s2 + $0x4a0] sm:$0xff]
    %v288 = vld [vmem:[%s2 + $0x4a8] sm:$0xff]
    %v289 = vld [vmem:[%s2 + $0x4b0] sm:$0xff]
    %v290 = vld [vmem:[%s2 + $0x4b8] sm:$0xff]
    %v291 = vld [vmem:[%s2 + $0x4c0] sm:$0xff]
    %v292 = vld [vmem:[%s2 + $0x4c8] sm:$0xff]
    %v293 = vld [vmem:[%s2 + $0x4d0] sm:$0xff]
    %v294 = vld [vmem:[%s2 + $0x4d8] sm:$0xff]
    %v295 = vld [vmem:[%s2 + $0x4e0] sm:$0xff]
    %v296 = vld [vmem:[%s2 + $0x4e8] sm:$0xff]
    %v297 = vld [vmem:[%s2 + $0x4f0] sm:$0xff]
    %v298 = vld [vmem:[%s2 + $0x4f8] sm:$0xff]
    %v299 = vld [vmem:[%s2 + $0x500] sm:$0xff]
    %v300 = vld [vmem:[%s2 + $0x508] sm:$0xff]
    %v301 = vld [vmem:[%s2 + $0x510] sm:$0xff]
    %v302 = vld [vmem:[%s2 + $0x518] sm:$0xff]
    %v303 = vld [vmem:[%s2 + $0x520] sm:$0xff]
    %v304 = vld [vmem:[%s2 + $0x528] sm:$0xff]
    %v305 = vld [vmem:[%s2 + $0x530] sm:$0xff]
    %v306 = vld [vmem:[%s2 + $0x538] sm:$0xff]
    %v307 = vld [vmem:[%s2 + $0x540] sm:$0xff]
    %v308 = vld [vmem:[%s2 + $0x548] sm:$0xff]
    %v309 = vld [vmem:[%s2 + $0x550] sm:$0xff]
    %v310 = vld [vmem:[%s2 + $0x558] sm:$0xff]
    %v311 = vld [vmem:[%s2 + $0x560] sm:$0xff]
    %v312 = vld [vmem:[%s2 + $0x568] sm:$0xff]
    %v313 = vld [vmem:[%s2 + $0x570] sm:$0xff]
    %v314 = vld [vmem:[%s2 + $0x578] sm:$0xff]
    %v315 = vld [vmem:[%s2 + $0x580] sm:$0xff]
    %v316 = vld [vmem:[%s2 + $0x588] sm:$0xff]
    %v317 = vld [vmem:[%s2 + $0x590] sm:$0xff]
    %v318 = vld [vmem:[%s2 + $0x598] sm:$0xff]
    %v319 = vld [vmem:[%s2 + $0x5a0] sm:$0xff]
    %v320 = vld [vmem:[%s2 + $0x5a8] sm:$0xff]
    %v321 = vld [vmem:[%s2 + $0x5b0] sm:$0xff]
    %v322 = vld [vmem:[%s2 + $0x5b8] sm:$0xff]
    %v323 = vld [vmem:[%s2 + $0x5c0] sm:$0xff]
    %v324 = vld [vmem:[%s2 + $0x5c8] sm:$0xff]
    %v325 = vld [vmem:[%s2 + $0x5d0] sm:$0xff]
    %v326 = vld [vmem:[%s2 + $0x5d8] sm:$0xff]
    %v327 = vld [vmem:[%s2 + $0x5e0] sm:$0xff]
    %v328 = vld [vmem:[%s2 + $0x5e8] sm:$0xff]
    %v329 = vld [vmem:[%s2 + $0x5f0] sm:$0xff]
    %v330 = vld [vmem:[%s2 + $0x5f8] sm:$0xff]
    %v331 = vld [vmem:[%s2 + $0x600] sm:$0xff]
    %v332 = vld [vmem:[%s2 + $0x608] sm:$0xff]
    %v333 = vld [vmem:[%s2 + $0x610] sm:$0xff]
    %v334 = vld [vmem:[%s2 + $0x618] sm:$0xff]
    %v335 = vld [vmem:[%s2 + $0x620] sm:$0xff]
    %v336 = vld [vmem:[%s2 + $0x628] sm:$0xff]
    %v337 = vld [vmem:[%s2 + $0x630] sm:$0xff]
    %v338 = vld [vmem:[%s2 + $0x638] sm:$0xff]
    %v339 = vld [vmem:[%s2 + $0x640] sm:$0xff]
    %v340 = vld [vmem:[%s2 + $0x648] sm:$0xff]
    %v341 = vld [vmem:[%s2 + $0x650] sm:$0xff]
    %v342 = vld [vmem:[%s2 + $0x658] sm:$0xff]
    %v343 = vld [vmem:[%s2 + $0x660] sm:$0xff]
    %v344 = vld [vmem:[%s2 + $0x668] sm:$0xff]
    %v345 = vld [vmem:[%s2 + $0x670] sm:$0xff]
    %v346 = vld [vmem:[%s2 + $0x678] sm:$0xff]
    %v347 = vld [vmem:[%s2 + $0x680] sm:$0xff]
    %v348 = vld [vmem:[%s2 + $0x688] sm:$0xff]
    %v349 = vld [vmem:[%s2 + $0x690] sm:$0xff]
    %v350 = vld [vmem:[%s2 + $0x698] sm:$0xff]
    %v351 = vld [vmem:[%s2 + $0x6a0] sm:$0xff]
    %v352 = vld [vmem:[%s2 + $0x6a8] sm:$0xff]
    %v353 = vld [vmem:[%s2 + $0x6b0] sm:$0xff]
    %v354 = vld [vmem:[%s2 + $0x6b8] sm:$0xff]
    %v355 = vld [vmem:[%s3] sm:$0xff]
    %v356 = vld [vmem:[%s3 + $0x8] sm:$0xff]
    %v357 = vld [vmem:[%s3 + $0x10] sm:$0xff]
    %v358 = vld [vmem:[%s3 + $0x18] sm:$0xff]
    %v359 = vld [vmem:[%s3 + $0x20] sm:$0xff]
    %v360 = vld [vmem:[%s3 + $0x28] sm:$0xff]
    %v361 = vld [vmem:[%s3 + $0x30] sm:$0xff]
    %v362 = vld [vmem:[%s3 + $0x38] sm:$0xff]
    %v363 = vld [vmem:[%s3 + $0x40] sm:$0xff]
    %v364 = vld [vmem:[%s3 + $0x48] sm:$0xff]
    %v365 = vld [vmem:[%s3 + $0x50] sm:$0xff]
    %v366 = vld [vmem:[%s3 + $0x58] sm:$0xff]
    %v367 = vld [vmem:[%s3 + $0x60] sm:$0xff]
    %v368 = vld [vmem:[%s3 + $0x68] sm:$0xff]
    %v369 = vld [vmem:[%s3 + $0x70] sm:$0xff]
    %v370 = vld [vmem:[%s3 + $0x78] sm:$0xff]
    %v371 = vld [vmem:[%s3 + $0x80] sm:$0xff]
    %v372 = vld [vmem:[%s3 + $0x88] sm:$0xff]
    %v373 = vld [vmem:[%s3 + $0x90] sm:$0xff]
    %v374 = vld [vmem:[%s3 + $0x98] sm:$0xff]
    %v375 = vld [vmem:[%s3 + $0xa0] sm:$0xff]
    %v376 = vld [vmem:[%s3 + $0xa8] sm:$0xff]
    %v377 = vld [vmem:[%s3 + $0xb0] sm:$0xff]
    %v378 = vld [vmem:[%s3 + $0xb8] sm:$0xff]
    %v379 = vld [vmem:[%s3 + $0xc0] sm:$0xff]
    %v380 = vld [vmem:[%s3 + $0xc8] sm:$0xff]
    %v381 = vld [vmem:[%s3 + $0xd0] sm:$0xff]
    %v382 = vld [vmem:[%s3 + $0xd8] sm:$0xff]
    %v383 = vld [vmem:[%s3 + $0xe0] sm:$0xff]
    %v384 = vld [vmem:[%s3 + $0xe8] sm:$0xff]
    %v385 = vld [vmem:[%s3 + $0xf0] sm:$0xff]
    %v386 = vld [vmem:[%s3 + $0xf8] sm:$0xff]
    %v387 = vld [vmem:[%s3 + $0x100] sm:$0xff]
    %v388 = vld [vmem:[%s3 + $0x108] sm:$0xff]
    %v389 = vld [vmem:[%s3 + $0x110] sm:$0xff]
    %v390 = vld [vmem:[%s3 + $0x118] sm:$0xff]
    %v391 = vld [vmem:[%s3 + $0x120] sm:$0xff]
    %v392 = vld [vmem:[%s3 + $0x128] sm:$0xff]
    %v393 = vld [vmem:[%s3 + $0x130] sm:$0xff]
    %v394 = vld [vmem:[%s3 + $0x138] sm:$0xff]
    %v395 = vld [vmem:[%s3 + $0x140] sm:$0xff]
    %v396 = vld [vmem:[%s3 + $0x148] sm:$0xff]
    %v397 = vld [vmem:[%s3 + $0x150] sm:$0xff]
    %v398 = vld [vmem:[%s3 + $0x158] sm:$0xff]
    %v399 = vld [vmem:[%s3 + $0x160] sm:$0xff]
    %v400 = vld [vmem:[%s3 + $0x168] sm:$0xff]
    %v401 = vld [vmem:[%s3 + $0x170] sm:$0xff]
    %v402 = vld [vmem:[%s3 + $0x178] sm:$0xff]
    %v403 = vld [vmem:[%s3 + $0x180] sm:$0xff]
    %v404 = vld [vmem:[%s3 + $0x188] sm:$0xff]
    %v405 = vld [vmem:[%s3 + $0x190] sm:$0xff]
    %v406 = vld [vmem:[%s3 + $0x198] sm:$0xff]
    %v407 = vld [vmem:[%s3 + $0x1a0] sm:$0xff]
    %v408 = vld [vmem:[%s3 + $0x1a8] sm:$0xff]
    %v409 = vld [vmem:[%s3 + $0x1b0] sm:$0xff]
    %v410 = vld [vmem:[%s3 + $0x1b8] sm:$0xff]
    %v411 = vld [vmem:[%s3 + $0x1c0] sm:$0xff]
    %v412 = vld [vmem:[%s3 + $0x1c8] sm:$0xff]
    %v413 = vld [vmem:[%s3 + $0x1d0] sm:$0xff]
    %v414 = vld [vmem:[%s3 + $0x1d8] sm:$0xff]
    %v415 = vld [vmem:[%s3 + $0x1e0] sm:$0xff]
    %v416 = vld [vmem:[%s3 + $0x1e8] sm:$0xff]
    %v417 = vld [vmem:[%s3 + $0x1f0] sm:$0xff]
    %v418 = vld [vmem:[%s3 + $0x1f8] sm:$0xff]
    %v419 = vld [vmem:[%s3 + $0x200] sm:$0xff]
    %v420 = vld [vmem:[%s3 + $0x208] sm:$0xff]
    %v421 = vld [vmem:[%s3 + $0x210] sm:$0xff]
    %v422 = vld [vmem:[%s3 + $0x218] sm:$0xff]
    %v423 = vld [vmem:[%s3 + $0x220] sm:$0xff]
    %v424 = vld [vmem:[%s3 + $0x228] sm:$0xff]
    %v425 = vld [vmem:[%s3 + $0x230] sm:$0xff]
    %v426 = vld [vmem:[%s3 + $0x238] sm:$0xff]
    %v427 = vld [vmem:[%s3 + $0x240] sm:$0xff]
    %v428 = vld [vmem:[%s3 + $0x248] sm:$0xff]
    %v429 = vld [vmem:[%s3 + $0x250] sm:$0xff]
    %v430 = vld [vmem:[%s3 + $0x258] sm:$0xff]
    %v431 = vld [vmem:[%s3 + $0x260] sm:$0xff]
    %v432 = vld [vmem:[%s3 + $0x268] sm:$0xff]
    %v433 = vld [vmem:[%s3 + $0x270] sm:$0xff]
    %v434 = vld [vmem:[%s3 + $0x278] sm:$0xff]
    %v435 = vld [vmem:[%s3 + $0x280] sm:$0xff]
    %v436 = vld [vmem:[%s3 + $0x288] sm:$0xff]
    %v437 = vld [vmem:[%s3 + $0x290] sm:$0xff]
    %v438 = vld [vmem:[%s3 + $0x298] sm:$0xff]
    %v439 = vld [vmem:[%s3 + $0x2a0] sm:$0xff]
    %v440 = vld [vmem:[%s3 + $0x2a8] sm:$0xff]
    %v441 = vld [vmem:[%s3 + $0x2b0] sm:$0xff]
    %v442 = vld [vmem:[%s3 + $0x2b8] sm:$0xff]
    %v443 = vld [vmem:[%s3 + $0x2c0] sm:$0xff]
    %v444 = vld [vmem:[%s3 + $0x2c8] sm:$0xff]
    %v445 = vld [vmem:[%s3 + $0x2d0] sm:$0xff]
    %v446 = vld [vmem:[%s3 + $0x2d8] sm:$0xff]
    %v447 = vld [vmem:[%s3 + $0x2e0] sm:$0xff]
    %v448 = vld [vmem:[%s3 + $0x2e8] sm:$0xff]
    %v449 = vld [vmem:[%s3 + $0x2f0] sm:$0xff]
    %v450 = vld [vmem:[%s3 + $0x2f8] sm:$0xff]
    %v451 = vld [vmem:[%s3 + $0x300] sm:$0xff]
    %v452 = vld [vmem:[%s3 + $0x308] sm:$0xff]
    %v453 = vld [vmem:[%s3 + $0x310] sm:$0xff]
    %v454 = vld [vmem:[%s3 + $0x318] sm:$0xff]
    %v455 = vld [vmem:[%s3 + $0x320] sm:$0xff]
    %v456 = vld [vmem:[%s3 + $0x328] sm:$0xff]
    %v457 = vld [vmem:[%s3 + $0x330] sm:$0xff]
    %v458 = vld [vmem:[%s3 + $0x338] sm:$0xff]
    %v459 = vld [vmem:[%s3 + $0x340] sm:$0xff]
    %v460 = vld [vmem:[%s3 + $0x348] sm:$0xff]
    %v461 = vld [vmem:[%s3 + $0x350] sm:$0xff]
    %v462 = vld [vmem:[%s3 + $0x358] sm:$0xff]
    %v463 = vld [vmem:[%s3 + $0x360] sm:$0xff]
    %v464 = vld [vmem:[%s3 + $0x368] sm:$0xff]
    %v465 = vld [vmem:[%s3 + $0x370] sm:$0xff]
    %v466 = vld [vmem:[%s3 + $0x378] sm:$0xff]
    %v467 = vld [vmem:[%s3 + $0x380] sm:$0xff]
    %v468 = vld [vmem:[%s3 + $0x388] sm:$0xff]
    %v469 = vld [vmem:[%s3 + $0x390] sm:$0xff]
    %v470 = vld [vmem:[%s3 + $0x398] sm:$0xff]
    %v471 = vld [vmem:[%s3 + $0x3a0] sm:$0xff]
    %v472 = vld [vmem:[%s3 + $0x3a8] sm:$0xff]
    %v473 = vld [vmem:[%s3 + $0x3b0] sm:$0xff]
    %v474 = vld [vmem:[%s3 + $0x3b8] sm:$0xff]
    %v475 = vld [vmem:[%s3 + $0x3c0] sm:$0xff]
    %v476 = vld [vmem:[%s3 + $0x3c8] sm:$0xff]
    %v477 = vld [vmem:[%s3 + $0x3d0] sm:$0xff]
    %v478 = vld [vmem:[%s3 + $0x3d8] sm:$0xff]
    %v479 = vld [vmem:[%s3 + $0x3e0] sm:$0xff]
    %v480 = vld [vmem:[%s3 + $0x3e8] sm:$0xff]
    %v481 = vld [vmem:[%s3 + $0x3f0] sm:$0xff]
    %v482 = vld [vmem:[%s3 + $0x3f8] sm:$0xff]
    %v483 = vld [vmem:[%s3 + $0x400] sm:$0xff]
    %v484 = vld [vmem:[%s3 + $0x408] sm:$0xff]
    %v485 = vld [vmem:[%s3 + $0x410] sm:$0xff]
    %v486 = vld [vmem:[%s3 + $0x418] sm:$0xff]
    %v487 = vld [vmem:[%s3 + $0x420] sm:$0xff]
    %v488 = vld [vmem:[%s3 + $0x428] sm:$0xff]
    %v489 = vld [vmem:[%s3 + $0x430] sm:$0xff]
    %v490 = vld [vmem:[%s3 + $0x438] sm:$0xff]
    %v491 = vld [vmem:[%s3 + $0x440] sm:$0xff]
    %v492 = vld [vmem:[%s3 + $0x448] sm:$0xff]
    %v493 = vld [vmem:[%s3 + $0x450] sm:$0xff]
    %v494 = vld [vmem:[%s3 + $0x458] sm:$0xff]
    %v495 = vld [vmem:[%s3 + $0x460] sm:$0xff]
    %v496 = vld [vmem:[%s3 + $0x468] sm:$0xff]
    %v497 = vld [vmem:[%s3 + $0x470] sm:$0xff]
    %v498 = vld [vmem:[%s3 + $0x478] sm:$0xff]
    %v499 = vld [vmem:[%s3 + $0x480] sm:$0xff]
    %v500 = vld [vmem:[%s3 + $0x488] sm:$0xff]
    %v501 = vld [vmem:[%s3 + $0x490] sm:$0xff]
    %v502 = vld [vmem:[%s3 + $0x498] sm:$0xff]
    %v503 = vld [vmem:[%s3 + $0x4a0] sm:$0xff]
    %v504 = vld [vmem:[%s3 + $0x4a8] sm:$0xff]
    %v505 = vld [vmem:[%s3 + $0x4b0] sm:$0xff]
    %v506 = vld [vmem:[%s3 + $0x4b8] sm:$0xff]
    %v507 = vld [vmem:[%s3 + $0x4c0] sm:$0xff]
    %v508 = vld [vmem:[%s3 + $0x4c8] sm:$0xff]
    %v509 = vld [vmem:[%s3 + $0x4d0] sm:$0xff]
    %v510 = vld [vmem:[%s3 + $0x4d8] sm:$0xff]
    %v511 = vld [vmem:[%s3 + $0x4e0] sm:$0xff]
    %v512 = vld [vmem:[%s3 + $0x4e8] sm:$0xff]
    %v513 = vld [vmem:[%s3 + $0x4f0] sm:$0xff]
    %v514 = vld [vmem:[%s3 + $0x4f8] sm:$0xff]
    %v515 = vld [vmem:[%s3 + $0x500] sm:$0xff]
    %v516 = vld [vmem:[%s3 + $0x508] sm:$0xff]
    %v517 = vld [vmem:[%s3 + $0x510] sm:$0xff]
    %v518 = vld [vmem:[%s3 + $0x518] sm:$0xff]
    %v519 = vld [vmem:[%s3 + $0x520] sm:$0xff]
    %v520 = vld [vmem:[%s3 + $0x528] sm:$0xff]
    %v521 = vld [vmem:[%s3 + $0x530] sm:$0xff]
    %v522 = vld [vmem:[%s3 + $0x538] sm:$0xff]
    %v523 = vld [vmem:[%s3 + $0x540] sm:$0xff]
    %v524 = vld [vmem:[%s3 + $0x548] sm:$0xff]
    %v525 = vld [vmem:[%s3 + $0x550] sm:$0xff]
    %v526 = vld [vmem:[%s3 + $0x558] sm:$0xff]
    %v527 = vld [vmem:[%s3 + $0x560] sm:$0xff]
    %v528 = vld [vmem:[%s3 + $0x568] sm:$0xff]
    %v529 = vld [vmem:[%s3 + $0x570] sm:$0xff]
    %v530 = vld [vmem:[%s3 + $0x578] sm:$0xff]
    %v531 = vld [vmem:[%s3 + $0x580] sm:$0xff]
    %v532 = vld [vmem:[%s3 + $0x588] sm:$0xff]
    %v533 = vld [vmem:[%s3 + $0x590] sm:$0xff]
    %v534 = vld [vmem:[%s3 + $0x598] sm:$0xff]
    %v535 = vld [vmem:[%s3 + $0x5a0] sm:$0xff]
    %v536 = vld [vmem:[%s3 + $0x5a8] sm:$0xff]
    %v537 = vld [vmem:[%s3 + $0x5b0] sm:$0xff]
    %v538 = vld [vmem:[%s3 + $0x5b8] sm:$0xff]
    %v539 = vld [vmem:[%s3 + $0x5c0] sm:$0xff]
    %v540 = vld [vmem:[%s3 + $0x5c8] sm:$0xff]
    %v541 = vld [vmem:[%s3 + $0x5d0] sm:$0xff]
    %v542 = vld [vmem:[%s3 + $0x5d8] sm:$0xff]
    %v543 = vld [vmem:[%s3 + $0x5e0] sm:$0xff]
    %v544 = vld [vmem:[%s3 + $0x5e8] sm:$0xff]
    %v545 = vld [vmem:[%s3 + $0x5f0] sm:$0xff]
    %v546 = vld [vmem:[%s3 + $0x5f8] sm:$0xff]
    %v547 = vld [vmem:[%s3 + $0x600] sm:$0xff]
    %v548 = vld [vmem:[%s3 + $0x608] sm:$0xff]
    %v549 = vld [vmem:[%s3 + $0x610] sm:$0xff]
    %v550 = vld [vmem:[%s3 + $0x618] sm:$0xff]
    %v551 = vld [vmem:[%s3 + $0x620] sm:$0xff]
    %v552 = vld [vmem:[%s3 + $0x628] sm:$0xff]
    %v553 = vld [vmem:[%s3 + $0x630] sm:$0xff]
    %v554 = vld [vmem:[%s3 + $0x638] sm:$0xff]
    %v555 = vld [vmem:[%s3 + $0x640] sm:$0xff]
    %v556 = vld [vmem:[%s3 + $0x648] sm:$0xff]
    %v557 = vld [vmem:[%s3 + $0x650] sm:$0xff]
    %v558 = vld [vmem:[%s3 + $0x658] sm:$0xff]
    %v559 = vld [vmem:[%s3 + $0x660] sm:$0xff]
    %v560 = vld [vmem:[%s3 + $0x668] sm:$0xff]
    %v561 = vld [vmem:[%s3 + $0x670] sm:$0xff]
    %v562 = vld [vmem:[%s3 + $0x678] sm:$0xff]
    %v563 = vld [vmem:[%s3 + $0x680] sm:$0xff]
    %v564 = vld [vmem:[%s3 + $0x688] sm:$0xff]
    %v565 = vld [vmem:[%s3 + $0x690] sm:$0xff]
    %v566 = vld [vmem:[%s3 + $0x698] sm:$0xff]
    %v567 = vld [vmem:[%s3 + $0x6a0] sm:$0xff]
    %v568 = vld [vmem:[%s3 + $0x6a8] sm:$0xff]
    %v569 = vld [vmem:[%s3 + $0x6b0] sm:$0xff]
    %v570 = vld [vmem:[%s3 + $0x6b8] sm:$0xff]
    %v571 = vld [vmem:[%s4] sm:$0x3]
    %v620 = vunpack.c.l.b16 %v91
    %v621 = vunpack.c.h.b16 %v91
    %v622 = vunpack.c.l.b16 %v92
    %v623 = vunpack.c.h.b16 %v92
    %v624 = vunpack.c.l.b16 %v93
    %v625 = vunpack.c.l.b16 %v94
    %v626 = vunpack.c.h.b16 %v94
    %v627 = vunpack.c.l.b16 %v95
    %v628 = vunpack.c.h.b16 %v95
    %v629 = vunpack.c.l.b16 %v96
    %v630 = vunpack.c.l.b16 %v97
    %v631 = vunpack.c.h.b16 %v97
    %v632 = vunpack.c.l.b16 %v98
    %v633 = vunpack.c.h.b16 %v98
    %v634 = vunpack.c.l.b16 %v99
    %v635 = vunpack.c.l.b16 %v100
    %v636 = vunpack.c.h.b16 %v100
    %v637 = vunpack.c.l.b16 %v101
    %v638 = vunpack.c.h.b16 %v101
    %v639 = vunpack.c.l.b16 %v102
    %v640 = vunpack.c.l.b16 %v103
    %v641 = vunpack.c.h.b16 %v103
    %v642 = vunpack.c.l.b16 %v104
    %v643 = vunpack.c.h.b16 %v104
    %v644 = vunpack.c.l.b16 %v105
    %v645 = vunpack.c.l.b16 %v106
    %v646 = vunpack.c.h.b16 %v106
    %v647 = vunpack.c.l.b16 %v107
    %v648 = vunpack.c.h.b16 %v107
    %v649 = vunpack.c.l.b16 %v108
    %v650 = vunpack.c.l.b16 %v109
    %v651 = vunpack.c.h.b16 %v109
    %v652 = vunpack.c.l.b16 %v110
    %v653 = vunpack.c.h.b16 %v110
    %v654 = vunpack.c.l.b16 %v111
    %v655 = vunpack.c.l.b16 %v112
    %v656 = vunpack.c.h.b16 %v112
    %v657 = vunpack.c.l.b16 %v113
    %v658 = vunpack.c.h.b16 %v113
    %v659 = vunpack.c.l.b16 %v114
    %v660 = vunpack.c.l.b16 %v115
    %v661 = vunpack.c.h.b16 %v115
    %v662 = vunpack.c.l.b16 %v116
    %v663 = vunpack.c.h.b16 %v116
    %v664 = vunpack.c.l.b16 %v117
    %v665 = vunpack.c.l.b16 %v118
    %v666 = vunpack.c.h.b16 %v118
    %v667 = vunpack.c.l.b16 %v119
    %v668 = vunpack.c.h.b16 %v119
    %v669 = vunpack.c.l.b16 %v120
    %v670 = vunpack.c.l.b16 %v121
    %v671 = vunpack.c.h.b16 %v121
    %v672 = vunpack.c.l.b16 %v122
    %v673 = vunpack.c.h.b16 %v122
    %v674 = vunpack.c.l.b16 %v123
    %v675 = vunpack.c.l.b16 %v124
    %v676 = vunpack.c.h.b16 %v124
    %v677 = vunpack.c.l.b16 %v125
    %v678 = vunpack.c.h.b16 %v125
    %v679 = vunpack.c.l.b16 %v126
    %v680 = vunpack.c.l.b16 %v127
    %v681 = vunpack.c.h.b16 %v127
    %v682 = vunpack.c.l.b16 %v128
    %v683 = vunpack.c.h.b16 %v128
    %v684 = vunpack.c.l.b16 %v129
    %v685 = vunpack.c.l.b16 %v130
    %v686 = vunpack.c.h.b16 %v130
    %v687 = vunpack.c.l.b16 %v131
    %v688 = vunpack.c.h.b16 %v131
    %v689 = vunpack.c.l.b16 %v132
    %v690 = vunpack.c.l.b16 %v133
    %v691 = vunpack.c.h.b16 %v133
    %v692 = vunpack.c.l.b16 %v134
    %v693 = vunpack.c.h.b16 %v134
    %v694 = vunpack.c.l.b16 %v135
    %v695 = vunpack.c.l.b16 %v136
    %v696 = vunpack.c.h.b16 %v136
    %v697 = vunpack.c.l.b16 %v137
    %v698 = vunpack.c.h.b16 %v137
    %v699 = vunpack.c.l.b16 %v138
    %v700 = vpack.c.b16 %v625, %v620
    %v701 = vpack.c.b16 %v626, %v621
    %v702 = vpack.c.b16 %v627, %v622
    %v703 = vpack.c.b16 %v628, %v623
    %v704 = vpack.c.b16 %v629, %v624
    %v705 = vpack.c.b16 %v635, %v630
    %v706 = vpack.c.b16 %v636, %v631
    %v707 = vpack.c.b16 %v637, %v632
    %v708 = vpack.c.b16 %v638, %v633
    %v709 = vpack.c.b16 %v639, %v634
    %v710 = vpack.c.b16 %v645, %v640
    %v711 = vpack.c.b16 %v646, %v641
    %v712 = vpack.c.b16 %v647, %v642
    %v713 = vpack.c.b16 %v648, %v643
    %v714 = vpack.c.b16 %v649, %v644
    %v715 = vpack.c.b16 %v655, %v650
    %v716 = vpack.c.b16 %v656, %v651
    %v717 = vpack.c.b16 %v657, %v652
    %v718 = vpack.c.b16 %v658, %v653
    %v719 = vpack.c.b16 %v659, %v654
    %v720 = vpack.c.b16 %v665, %v660
    %v721 = vpack.c.b16 %v666, %v661
    %v722 = vpack.c.b16 %v667, %v662
    %v723 = vpack.c.b16 %v668, %v663
    %v724 = vpack.c.b16 %v669, %v664
    %v725 = vpack.c.b16 %v675, %v670
    %v726 = vpack.c.b16 %v676, %v671
    %v727 = vpack.c.b16 %v677, %v672
    %v728 = vpack.c.b16 %v678, %v673
    %v729 = vpack.c.b16 %v679, %v674
    %v730 = vpack.c.b16 %v685, %v680
    %v731 = vpack.c.b16 %v686, %v681
    %v732 = vpack.c.b16 %v687, %v682
    %v733 = vpack.c.b16 %v688, %v683
    %v734 = vpack.c.b16 %v689, %v684
    %v735 = vpack.c.b16 %v695, %v690
    %v736 = vpack.c.b16 %v696, %v691
    %v737 = vpack.c.b16 %v697, %v692
    %v738 = vpack.c.b16 %v698, %v693
    %v739 = vpack.c.b16 %v699, %v694
    %v988 = vunpack.c.l.b16 %v355
    %v989 = vunpack.c.h.b16 %v355
    %v990 = vunpack.c.l.b16 %v356
    %v991 = vunpack.c.h.b16 %v356
    %v992 = vunpack.c.l.b16 %v357
    %v993 = vunpack.c.h.b16 %v357
    %v994 = vunpack.c.l.b16 %v358
    %v995 = vunpack.c.h.b16 %v358
    %v996 = vunpack.c.l.b16 %v359
    %v997 = vunpack.c.h.b16 %v359
    %v998 = vunpack.c.l.b16 %v360
    %v999 = vunpack.c.h.b16 %v360
    %v1000 = vunpack.c.l.b16 %v361
    %v1001 = vunpack.c.h.b16 %v361
    %v1002 = vunpack.c.l.b16 %v362
    %v1003 = vunpack.c.h.b16 %v362
    %v1004 = vunpack.c.l.b16 %v363
    %v1005 = vunpack.c.h.b16 %v363
    %v1006 = vunpack.c.l.b16 %v364
    %v1007 = vunpack.c.h.b16 %v364
    %v1008 = vunpack.c.l.b16 %v365
    %v1009 = vunpack.c.h.b16 %v365
    %v1010 = vunpack.c.l.b16 %v366
    %v1011 = vunpack.c.h.b16 %v366
    %v1012 = vunpack.c.l.b16 %v367
    %v1013 = vunpack.c.h.b16 %v367
    %v1014 = vunpack.c.l.b16 %v368
    %v1015 = vunpack.c.h.b16 %v368
    %v1016 = vunpack.c.l.b16 %v369
    %v1017 = vunpack.c.h.b16 %v369
    %v1018 = vunpack.c.l.b16 %v370
    %v1019 = vunpack.c.h.b16 %v370
    %v1020 = vunpack.c.l.b16 %v371
    %v1021 = vunpack.c.h.b16 %v371
    %v1022 = vunpack.c.l.b16 %v372
    %v1023 = vunpack.c.h.b16 %v372
    %v1024 = vunpack.c.l.b16 %v373
    %v1025 = vunpack.c.h.b16 %v373
    %v1026 = vunpack.c.l.b16 %v374
    %v1027 = vunpack.c.h.b16 %v374
    %v1028 = vunpack.c.l.b16 %v375
    %v1029 = vunpack.c.h.b16 %v375
    %v1030 = vunpack.c.l.b16 %v376
    %v1031 = vunpack.c.h.b16 %v376
    %v1032 = vunpack.c.l.b16 %v377
    %v1033 = vunpack.c.h.b16 %v377
    %v1034 = vunpack.c.l.b16 %v378
    %v1035 = vunpack.c.h.b16 %v378
    %v1036 = vunpack.c.l.b16 %v379
    %v1037 = vunpack.c.h.b16 %v379
    %v1038 = vunpack.c.l.b16 %v380
    %v1039 = vunpack.c.h.b16 %v380
    %v1040 = vunpack.c.l.b16 %v381
    %v1041 = vunpack.c.h.b16 %v381
    %v1042 = vunpack.c.l.b16 %v382
    %v1043 = vunpack.c.h.b16 %v382
    %v1044 = vunpack.c.l.b16 %v383
    %v1045 = vunpack.c.h.b16 %v383
    %v1046 = vunpack.c.l.b16 %v384
    %v1047 = vunpack.c.h.b16 %v384
    %v1048 = vunpack.c.l.b16 %v385
    %v1049 = vunpack.c.h.b16 %v385
    %v1050 = vunpack.c.l.b16 %v386
    %v1051 = vunpack.c.h.b16 %v386
    %v1052 = vunpack.c.l.b16 %v387
    %v1053 = vunpack.c.h.b16 %v387
    %v1054 = vunpack.c.l.b16 %v388
    %v1055 = vunpack.c.h.b16 %v388
    %v1056 = vunpack.c.l.b16 %v389
    %v1057 = vunpack.c.h.b16 %v389
    %v1058 = vunpack.c.l.b16 %v390
    %v1059 = vunpack.c.h.b16 %v390
    %v1060 = vunpack.c.l.b16 %v391
    %v1061 = vunpack.c.h.b16 %v391
    %v1062 = vunpack.c.l.b16 %v392
    %v1063 = vunpack.c.h.b16 %v392
    %v1064 = vunpack.c.l.b16 %v393
    %v1065 = vunpack.c.h.b16 %v393
    %v1066 = vunpack.c.l.b16 %v394
    %v1067 = vunpack.c.h.b16 %v394
    %v1068 = vunpack.c.l.b16 %v395
    %v1069 = vunpack.c.h.b16 %v395
    %v1070 = vunpack.c.l.b16 %v396
    %v1071 = vunpack.c.h.b16 %v396
    %v1072 = vunpack.c.l.b16 %v397
    %v1073 = vunpack.c.h.b16 %v397
    %v1074 = vunpack.c.l.b16 %v398
    %v1075 = vunpack.c.h.b16 %v398
    %v1076 = vunpack.c.l.b16 %v399
    %v1077 = vunpack.c.h.b16 %v399
    %v1078 = vunpack.c.l.b16 %v400
    %v1079 = vunpack.c.h.b16 %v400
    %v1080 = vunpack.c.l.b16 %v401
    %v1081 = vunpack.c.h.b16 %v401
    %v1082 = vunpack.c.l.b16 %v402
    %v1083 = vunpack.c.h.b16 %v402
    %v1084 = vunpack.c.l.b16 %v403
    %v1085 = vunpack.c.h.b16 %v403
    %v1086 = vunpack.c.l.b16 %v404
    %v1087 = vunpack.c.h.b16 %v404
    %v1088 = vunpack.c.l.b16 %v405
    %v1089 = vunpack.c.h.b16 %v405
    %v1090 = vunpack.c.l.b16 %v406
    %v1091 = vunpack.c.h.b16 %v406
    %v1092 = vunpack.c.l.b16 %v407
    %v1093 = vunpack.c.h.b16 %v407
    %v1094 = vunpack.c.l.b16 %v408
    %v1095 = vunpack.c.h.b16 %v408
    %v1096 = vunpack.c.l.b16 %v409
    %v1097 = vunpack.c.h.b16 %v409
    %v1098 = vunpack.c.l.b16 %v410
    %v1099 = vunpack.c.h.b16 %v410
    %v1100 = vunpack.c.l.b16 %v411
    %v1101 = vunpack.c.h.b16 %v411
    %v1102 = vunpack.c.l.b16 %v412
    %v1103 = vunpack.c.h.b16 %v412
    %v1104 = vunpack.c.l.b16 %v413
    %v1105 = vunpack.c.h.b16 %v413
    %v1106 = vunpack.c.l.b16 %v414
    %v1107 = vunpack.c.h.b16 %v414
    %v1108 = vunpack.c.l.b16 %v415
    %v1109 = vunpack.c.h.b16 %v415
    %v1110 = vunpack.c.l.b16 %v416
    %v1111 = vunpack.c.h.b16 %v416
    %v1112 = vunpack.c.l.b16 %v417
    %v1113 = vunpack.c.h.b16 %v417
    %v1114 = vunpack.c.l.b16 %v418
    %v1115 = vunpack.c.h.b16 %v418
    %v1116 = vunpack.c.l.b16 %v419
    %v1117 = vunpack.c.h.b16 %v419
    %v1118 = vunpack.c.l.b16 %v420
    %v1119 = vunpack.c.h.b16 %v420
    %v1120 = vunpack.c.l.b16 %v421
    %v1121 = vunpack.c.h.b16 %v421
    %v1122 = vunpack.c.l.b16 %v422
    %v1123 = vunpack.c.h.b16 %v422
    %v1124 = vunpack.c.l.b16 %v423
    %v1125 = vunpack.c.h.b16 %v423
    %v1126 = vunpack.c.l.b16 %v424
    %v1127 = vunpack.c.h.b16 %v424
    %v1128 = vunpack.c.l.b16 %v425
    %v1129 = vunpack.c.h.b16 %v425
    %v1130 = vunpack.c.l.b16 %v426
    %v1131 = vunpack.c.h.b16 %v426
    %v1132 = vunpack.c.l.b16 %v427
    %v1133 = vunpack.c.h.b16 %v427
    %v1134 = vunpack.c.l.b16 %v428
    %v1135 = vunpack.c.h.b16 %v428
    %v1136 = vunpack.c.l.b16 %v429
    %v1137 = vunpack.c.h.b16 %v429
    %v1138 = vunpack.c.l.b16 %v430
    %v1139 = vunpack.c.h.b16 %v430
    %v1140 = vunpack.c.l.b16 %v431
    %v1141 = vunpack.c.h.b16 %v431
    %v1142 = vunpack.c.l.b16 %v432
    %v1143 = vunpack.c.h.b16 %v432
    %v1144 = vunpack.c.l.b16 %v433
    %v1145 = vunpack.c.h.b16 %v433
    %v1146 = vunpack.c.l.b16 %v434
    %v1147 = vunpack.c.h.b16 %v434
    %v1148 = vunpack.c.l.b16 %v435
    %v1149 = vunpack.c.h.b16 %v435
    %v1150 = vunpack.c.l.b16 %v436
    %v1151 = vunpack.c.h.b16 %v436
    %v1152 = vunpack.c.l.b16 %v437
    %v1153 = vunpack.c.h.b16 %v437
    %v1154 = vunpack.c.l.b16 %v438
    %v1155 = vunpack.c.h.b16 %v438
    %v1156 = vunpack.c.l.b16 %v439
    %v1157 = vunpack.c.h.b16 %v439
    %v1158 = vunpack.c.l.b16 %v440
    %v1159 = vunpack.c.h.b16 %v440
    %v1160 = vunpack.c.l.b16 %v441
    %v1161 = vunpack.c.h.b16 %v441
    %v1162 = vunpack.c.l.b16 %v442
    %v1163 = vunpack.c.h.b16 %v442
    %v1164 = vunpack.c.l.b16 %v443
    %v1165 = vunpack.c.h.b16 %v443
    %v1166 = vunpack.c.l.b16 %v444
    %v1167 = vunpack.c.h.b16 %v444
    %v1168 = vunpack.c.l.b16 %v445
    %v1169 = vunpack.c.h.b16 %v445
    %v1170 = vunpack.c.l.b16 %v446
    %v1171 = vunpack.c.h.b16 %v446
    %v1172 = vunpack.c.l.b16 %v447
    %v1173 = vunpack.c.h.b16 %v447
    %v1174 = vunpack.c.l.b16 %v448
    %v1175 = vunpack.c.h.b16 %v448
    %v1176 = vunpack.c.l.b16 %v449
    %v1177 = vunpack.c.h.b16 %v449
    %v1178 = vunpack.c.l.b16 %v450
    %v1179 = vunpack.c.h.b16 %v450
    %v1180 = vunpack.c.l.b16 %v451
    %v1181 = vunpack.c.h.b16 %v451
    %v1182 = vunpack.c.l.b16 %v452
    %v1183 = vunpack.c.h.b16 %v452
    %v1184 = vunpack.c.l.b16 %v453
    %v1185 = vunpack.c.h.b16 %v453
    %v1186 = vunpack.c.l.b16 %v454
    %v1187 = vunpack.c.h.b16 %v454
    %v1188 = vunpack.c.l.b16 %v455
    %v1189 = vunpack.c.h.b16 %v455
    %v1190 = vunpack.c.l.b16 %v456
    %v1191 = vunpack.c.h.b16 %v456
    %v1192 = vunpack.c.l.b16 %v457
    %v1193 = vunpack.c.h.b16 %v457
    %v1194 = vunpack.c.l.b16 %v458
    %v1195 = vunpack.c.h.b16 %v458
    %v1196 = vunpack.c.l.b16 %v459
    %v1197 = vunpack.c.h.b16 %v459
    %v1198 = vunpack.c.l.b16 %v460
    %v1199 = vunpack.c.h.b16 %v460
    %v1200 = vunpack.c.l.b16 %v461
    %v1201 = vunpack.c.h.b16 %v461
    %v1202 = vunpack.c.l.b16 %v462
    %v1203 = vunpack.c.h.b16 %v462
    %v1204 = vunpack.c.l.b16 %v463
    %v1205 = vunpack.c.h.b16 %v463
    %v1206 = vunpack.c.l.b16 %v464
    %v1207 = vunpack.c.h.b16 %v464
    %v1208 = vunpack.c.l.b16 %v465
    %v1209 = vunpack.c.h.b16 %v465
    %v1210 = vunpack.c.l.b16 %v466
    %v1211 = vunpack.c.h.b16 %v466
    %v1212 = vunpack.c.l.b16 %v467
    %v1213 = vunpack.c.h.b16 %v467
    %v1214 = vunpack.c.l.b16 %v468
    %v1215 = vunpack.c.h.b16 %v468
    %v1216 = vunpack.c.l.b16 %v469
    %v1217 = vunpack.c.h.b16 %v469
    %v1218 = vunpack.c.l.b16 %v470
    %v1219 = vunpack.c.h.b16 %v470
    %v1220 = vunpack.c.l.b16 %v471
    %v1221 = vunpack.c.h.b16 %v471
    %v1222 = vunpack.c.l.b16 %v472
    %v1223 = vunpack.c.h.b16 %v472
    %v1224 = vunpack.c.l.b16 %v473
    %v1225 = vunpack.c.h.b16 %v473
    %v1226 = vunpack.c.l.b16 %v474
    %v1227 = vunpack.c.h.b16 %v474
    %v1228 = vunpack.c.l.b16 %v475
    %v1229 = vunpack.c.h.b16 %v475
    %v1230 = vunpack.c.l.b16 %v476
    %v1231 = vunpack.c.h.b16 %v476
    %v1232 = vunpack.c.l.b16 %v477
    %v1233 = vunpack.c.h.b16 %v477
    %v1234 = vunpack.c.l.b16 %v478
    %v1235 = vunpack.c.h.b16 %v478
    %v1236 = vunpack.c.l.b16 %v479
    %v1237 = vunpack.c.h.b16 %v479
    %v1238 = vunpack.c.l.b16 %v480
    %v1239 = vunpack.c.h.b16 %v480
    %v1240 = vunpack.c.l.b16 %v481
    %v1241 = vunpack.c.h.b16 %v481
    %v1242 = vunpack.c.l.b16 %v482
    %v1243 = vunpack.c.h.b16 %v482
    %v1244 = vunpack.c.l.b16 %v483
    %v1245 = vunpack.c.h.b16 %v483
    %v1246 = vunpack.c.l.b16 %v484
    %v1247 = vunpack.c.h.b16 %v484
    %v1248 = vunpack.c.l.b16 %v485
    %v1249 = vunpack.c.h.b16 %v485
    %v1250 = vunpack.c.l.b16 %v486
    %v1251 = vunpack.c.h.b16 %v486
    %v1252 = vunpack.c.l.b16 %v487
    %v1253 = vunpack.c.h.b16 %v487
    %v1254 = vunpack.c.l.b16 %v488
    %v1255 = vunpack.c.h.b16 %v488
    %v1256 = vunpack.c.l.b16 %v489
    %v1257 = vunpack.c.h.b16 %v489
    %v1258 = vunpack.c.l.b16 %v490
    %v1259 = vunpack.c.h.b16 %v490
    %v1260 = vunpack.c.l.b16 %v491
    %v1261 = vunpack.c.h.b16 %v491
    %v1262 = vunpack.c.l.b16 %v492
    %v1263 = vunpack.c.h.b16 %v492
    %v1264 = vunpack.c.l.b16 %v493
    %v1265 = vunpack.c.h.b16 %v493
    %v1266 = vunpack.c.l.b16 %v494
    %v1267 = vunpack.c.h.b16 %v494
    %v1268 = vunpack.c.l.b16 %v495
    %v1269 = vunpack.c.h.b16 %v495
    %v1270 = vunpack.c.l.b16 %v496
    %v1271 = vunpack.c.h.b16 %v496
    %v1272 = vunpack.c.l.b16 %v497
    %v1273 = vunpack.c.h.b16 %v497
    %v1274 = vunpack.c.l.b16 %v498
    %v1275 = vunpack.c.h.b16 %v498
    %v1276 = vunpack.c.l.b16 %v499
    %v1277 = vunpack.c.h.b16 %v499
    %v1278 = vunpack.c.l.b16 %v500
    %v1279 = vunpack.c.h.b16 %v500
    %v1280 = vunpack.c.l.b16 %v501
    %v1281 = vunpack.c.h.b16 %v501
    %v1282 = vunpack.c.l.b16 %v502
    %v1283 = vunpack.c.h.b16 %v502
    %v1284 = vunpack.c.l.b16 %v503
    %v1285 = vunpack.c.h.b16 %v503
    %v1286 = vunpack.c.l.b16 %v504
    %v1287 = vunpack.c.h.b16 %v504
    %v1288 = vunpack.c.l.b16 %v505
    %v1289 = vunpack.c.h.b16 %v505
    %v1290 = vunpack.c.l.b16 %v506
    %v1291 = vunpack.c.h.b16 %v506
    %v1292 = vunpack.c.l.b16 %v507
    %v1293 = vunpack.c.h.b16 %v507
    %v1294 = vunpack.c.l.b16 %v508
    %v1295 = vunpack.c.h.b16 %v508
    %v1296 = vunpack.c.l.b16 %v509
    %v1297 = vunpack.c.h.b16 %v509
    %v1298 = vunpack.c.l.b16 %v510
    %v1299 = vunpack.c.h.b16 %v510
    %v1300 = vunpack.c.l.b16 %v511
    %v1301 = vunpack.c.h.b16 %v511
    %v1302 = vunpack.c.l.b16 %v512
    %v1303 = vunpack.c.h.b16 %v512
    %v1304 = vunpack.c.l.b16 %v513
    %v1305 = vunpack.c.h.b16 %v513
    %v1306 = vunpack.c.l.b16 %v514
    %v1307 = vunpack.c.h.b16 %v514
    %v1308 = vunpack.c.l.b16 %v515
    %v1309 = vunpack.c.h.b16 %v515
    %v1310 = vunpack.c.l.b16 %v516
    %v1311 = vunpack.c.h.b16 %v516
    %v1312 = vunpack.c.l.b16 %v517
    %v1313 = vunpack.c.h.b16 %v517
    %v1314 = vunpack.c.l.b16 %v518
    %v1315 = vunpack.c.h.b16 %v518
    %v1316 = vunpack.c.l.b16 %v519
    %v1317 = vunpack.c.h.b16 %v519
    %v1318 = vunpack.c.l.b16 %v520
    %v1319 = vunpack.c.h.b16 %v520
    %v1320 = vunpack.c.l.b16 %v521
    %v1321 = vunpack.c.h.b16 %v521
    %v1322 = vunpack.c.l.b16 %v522
    %v1323 = vunpack.c.h.b16 %v522
    %v1324 = vunpack.c.l.b16 %v523
    %v1325 = vunpack.c.h.b16 %v523
    %v1326 = vunpack.c.l.b16 %v524
    %v1327 = vunpack.c.h.b16 %v524
    %v1328 = vunpack.c.l.b16 %v525
    %v1329 = vunpack.c.h.b16 %v525
    %v1330 = vunpack.c.l.b16 %v526
    %v1331 = vunpack.c.h.b16 %v526
    %v1332 = vunpack.c.l.b16 %v527
    %v1333 = vunpack.c.h.b16 %v527
    %v1334 = vunpack.c.l.b16 %v528
    %v1335 = vunpack.c.h.b16 %v528
    %v1336 = vunpack.c.l.b16 %v529
    %v1337 = vunpack.c.h.b16 %v529
    %v1338 = vunpack.c.l.b16 %v530
    %v1339 = vunpack.c.h.b16 %v530
    %v1340 = vunpack.c.l.b16 %v531
    %v1341 = vunpack.c.h.b16 %v531
    %v1342 = vunpack.c.l.b16 %v532
    %v1343 = vunpack.c.h.b16 %v532
    %v1344 = vunpack.c.l.b16 %v533
    %v1345 = vunpack.c.h.b16 %v533
    %v1346 = vunpack.c.l.b16 %v534
    %v1347 = vunpack.c.h.b16 %v534
    %v1348 = vunpack.c.l.b16 %v535
    %v1349 = vunpack.c.h.b16 %v535
    %v1350 = vunpack.c.l.b16 %v536
    %v1351 = vunpack.c.h.b16 %v536
    %v1352 = vunpack.c.l.b16 %v537
    %v1353 = vunpack.c.h.b16 %v537
    %v1354 = vunpack.c.l.b16 %v538
    %v1355 = vunpack.c.h.b16 %v538
    %v1356 = vunpack.c.l.b16 %v539
    %v1357 = vunpack.c.h.b16 %v539
    %v1358 = vunpack.c.l.b16 %v540
    %v1359 = vunpack.c.h.b16 %v540
    %v1360 = vunpack.c.l.b16 %v541
    %v1361 = vunpack.c.h.b16 %v541
    %v1362 = vunpack.c.l.b16 %v542
    %v1363 = vunpack.c.h.b16 %v542
    %v1364 = vunpack.c.l.b16 %v543
    %v1365 = vunpack.c.h.b16 %v543
    %v1366 = vunpack.c.l.b16 %v544
    %v1367 = vunpack.c.h.b16 %v544
    %v1368 = vunpack.c.l.b16 %v545
    %v1369 = vunpack.c.h.b16 %v545
    %v1370 = vunpack.c.l.b16 %v546
    %v1371 = vunpack.c.h.b16 %v546
    %v1372 = vunpack.c.l.b16 %v547
    %v1373 = vunpack.c.h.b16 %v547
    %v1374 = vunpack.c.l.b16 %v548
    %v1375 = vunpack.c.h.b16 %v548
    %v1376 = vunpack.c.l.b16 %v549
    %v1377 = vunpack.c.h.b16 %v549
    %v1378 = vunpack.c.l.b16 %v550
    %v1379 = vunpack.c.h.b16 %v550
    %v1380 = vunpack.c.l.b16 %v551
    %v1381 = vunpack.c.h.b16 %v551
    %v1382 = vunpack.c.l.b16 %v552
    %v1383 = vunpack.c.h.b16 %v552
    %v1384 = vunpack.c.l.b16 %v553
    %v1385 = vunpack.c.h.b16 %v553
    %v1386 = vunpack.c.l.b16 %v554
    %v1387 = vunpack.c.h.b16 %v554
    %v1388 = vunpack.c.l.b16 %v555
    %v1389 = vunpack.c.h.b16 %v555
    %v1390 = vunpack.c.l.b16 %v556
    %v1391 = vunpack.c.h.b16 %v556
    %v1392 = vunpack.c.l.b16 %v557
    %v1393 = vunpack.c.h.b16 %v557
    %v1394 = vunpack.c.l.b16 %v558
    %v1395 = vunpack.c.h.b16 %v558
    %v1396 = vunpack.c.l.b16 %v559
    %v1397 = vunpack.c.h.b16 %v559
    %v1398 = vunpack.c.l.b16 %v560
    %v1399 = vunpack.c.h.b16 %v560
    %v1400 = vunpack.c.l.b16 %v561
    %v1401 = vunpack.c.h.b16 %v561
    %v1402 = vunpack.c.l.b16 %v562
    %v1403 = vunpack.c.h.b16 %v562
    %v1404 = vunpack.c.l.b16 %v563
    %v1405 = vunpack.c.h.b16 %v563
    %v1406 = vunpack.c.l.b16 %v564
    %v1407 = vunpack.c.h.b16 %v564
    %v1408 = vunpack.c.l.b16 %v565
    %v1409 = vunpack.c.h.b16 %v565
    %v1410 = vunpack.c.l.b16 %v566
    %v1411 = vunpack.c.h.b16 %v566
    %v1412 = vunpack.c.l.b16 %v567
    %v1413 = vunpack.c.h.b16 %v567
    %v1414 = vunpack.c.l.b16 %v568
    %v1415 = vunpack.c.h.b16 %v568
    %v1416 = vunpack.c.l.b16 %v569
    %v1417 = vunpack.c.h.b16 %v569
    %v1418 = vunpack.c.l.b16 %v570
    %v1419 = vunpack.c.h.b16 %v570
    %v1420 = vpack.c.b16 %v994, %v988
    %v1421 = vpack.c.b16 %v995, %v989
    %v1422 = vpack.c.b16 %v996, %v990
    %v1423 = vpack.c.b16 %v997, %v991
    %v1424 = vpack.c.b16 %v998, %v992
    %v1425 = vpack.c.b16 %v999, %v993
    %v1426 = vpack.c.b16 %v1006, %v1000
    %v1427 = vpack.c.b16 %v1007, %v1001
    %v1428 = vpack.c.b16 %v1008, %v1002
    %v1429 = vpack.c.b16 %v1009, %v1003
    %v1430 = vpack.c.b16 %v1010, %v1004
    %v1431 = vpack.c.b16 %v1011, %v1005
    %v1432 = vpack.c.b16 %v1018, %v1012
    %v1433 = vpack.c.b16 %v1019, %v1013
    %v1434 = vpack.c.b16 %v1020, %v1014
    %v1435 = vpack.c.b16 %v1021, %v1015
    %v1436 = vpack.c.b16 %v1022, %v1016
    %v1437 = vpack.c.b16 %v1023, %v1017
    %v1438 = vpack.c.b16 %v1030, %v1024
    %v1439 = vpack.c.b16 %v1031, %v1025
    %v1440 = vpack.c.b16 %v1032, %v1026
    %v1441 = vpack.c.b16 %v1033, %v1027
    %v1442 = vpack.c.b16 %v1034, %v1028
    %v1443 = vpack.c.b16 %v1035, %v1029
    %v1444 = vpack.c.b16 %v1042, %v1036
    %v1445 = vpack.c.b16 %v1043, %v1037
    %v1446 = vpack.c.b16 %v1044, %v1038
    %v1447 = vpack.c.b16 %v1045, %v1039
    %v1448 = vpack.c.b16 %v1046, %v1040
    %v1449 = vpack.c.b16 %v1047, %v1041
    %v1450 = vpack.c.b16 %v1054, %v1048
    %v1451 = vpack.c.b16 %v1055, %v1049
    %v1452 = vpack.c.b16 %v1056, %v1050
    %v1453 = vpack.c.b16 %v1057, %v1051
    %v1454 = vpack.c.b16 %v1058, %v1052
    %v1455 = vpack.c.b16 %v1059, %v1053
    %v1456 = vpack.c.b16 %v1066, %v1060
    %v1457 = vpack.c.b16 %v1067, %v1061
    %v1458 = vpack.c.b16 %v1068, %v1062
    %v1459 = vpack.c.b16 %v1069, %v1063
    %v1460 = vpack.c.b16 %v1070, %v1064
    %v1461 = vpack.c.b16 %v1071, %v1065
    %v1462 = vpack.c.b16 %v1078, %v1072
    %v1463 = vpack.c.b16 %v1079, %v1073
    %v1464 = vpack.c.b16 %v1080, %v1074
    %v1465 = vpack.c.b16 %v1081, %v1075
    %v1466 = vpack.c.b16 %v1082, %v1076
    %v1467 = vpack.c.b16 %v1083, %v1077
    %v1468 = vpack.c.b16 %v1090, %v1084
    %v1469 = vpack.c.b16 %v1091, %v1085
    %v1470 = vpack.c.b16 %v1092, %v1086
    %v1471 = vpack.c.b16 %v1093, %v1087
    %v1472 = vpack.c.b16 %v1094, %v1088
    %v1473 = vpack.c.b16 %v1095, %v1089
    %v1474 = vpack.c.b16 %v1102, %v1096
    %v1475 = vpack.c.b16 %v1103, %v1097
    %v1476 = vpack.c.b16 %v1104, %v1098
    %v1477 = vpack.c.b16 %v1105, %v1099
    %v1478 = vpack.c.b16 %v1106, %v1100
    %v1479 = vpack.c.b16 %v1107, %v1101
    %v1480 = vpack.c.b16 %v1114, %v1108
    %v1481 = vpack.c.b16 %v1115, %v1109
    %v1482 = vpack.c.b16 %v1116, %v1110
    %v1483 = vpack.c.b16 %v1117, %v1111
    %v1484 = vpack.c.b16 %v1118, %v1112
    %v1485 = vpack.c.b16 %v1119, %v1113
    %v1486 = vpack.c.b16 %v1126, %v1120
    %v1487 = vpack.c.b16 %v1127, %v1121
    %v1488 = vpack.c.b16 %v1128, %v1122
    %v1489 = vpack.c.b16 %v1129, %v1123
    %v1490 = vpack.c.b16 %v1130, %v1124
    %v1491 = vpack.c.b16 %v1131, %v1125
    %v1492 = vpack.c.b16 %v1138, %v1132
    %v1493 = vpack.c.b16 %v1139, %v1133
    %v1494 = vpack.c.b16 %v1140, %v1134
    %v1495 = vpack.c.b16 %v1141, %v1135
    %v1496 = vpack.c.b16 %v1142, %v1136
    %v1497 = vpack.c.b16 %v1143, %v1137
    %v1498 = vpack.c.b16 %v1150, %v1144
    %v1499 = vpack.c.b16 %v1151, %v1145
    %v1500 = vpack.c.b16 %v1152, %v1146
    %v1501 = vpack.c.b16 %v1153, %v1147
    %v1502 = vpack.c.b16 %v1154, %v1148
    %v1503 = vpack.c.b16 %v1155, %v1149
    %v1504 = vpack.c.b16 %v1162, %v1156
    %v1505 = vpack.c.b16 %v1163, %v1157
    %v1506 = vpack.c.b16 %v1164, %v1158
    %v1507 = vpack.c.b16 %v1165, %v1159
    %v1508 = vpack.c.b16 %v1166, %v1160
    %v1509 = vpack.c.b16 %v1167, %v1161
    %v1510 = vpack.c.b16 %v1174, %v1168
    %v1511 = vpack.c.b16 %v1175, %v1169
    %v1512 = vpack.c.b16 %v1176, %v1170
    %v1513 = vpack.c.b16 %v1177, %v1171
    %v1514 = vpack.c.b16 %v1178, %v1172
    %v1515 = vpack.c.b16 %v1179, %v1173
    %v1516 = vpack.c.b16 %v1186, %v1180
    %v1517 = vpack.c.b16 %v1187, %v1181
    %v1518 = vpack.c.b16 %v1188, %v1182
    %v1519 = vpack.c.b16 %v1189, %v1183
    %v1520 = vpack.c.b16 %v1190, %v1184
    %v1521 = vpack.c.b16 %v1191, %v1185
    %v1522 = vpack.c.b16 %v1198, %v1192
    %v1523 = vpack.c.b16 %v1199, %v1193
    %v1524 = vpack.c.b16 %v1200, %v1194
    %v1525 = vpack.c.b16 %v1201, %v1195
    %v1526 = vpack.c.b16 %v1202, %v1196
    %v1527 = vpack.c.b16 %v1203, %v1197
    %v1528 = vpack.c.b16 %v1210, %v1204
    %v1529 = vpack.c.b16 %v1211, %v1205
    %v1530 = vpack.c.b16 %v1212, %v1206
    %v1531 = vpack.c.b16 %v1213, %v1207
    %v1532 = vpack.c.b16 %v1214, %v1208
    %v1533 = vpack.c.b16 %v1215, %v1209
    %v1534 = vpack.c.b16 %v1222, %v1216
    %v1535 = vpack.c.b16 %v1223, %v1217
    %v1536 = vpack.c.b16 %v1224, %v1218
    %v1537 = vpack.c.b16 %v1225, %v1219
    %v1538 = vpack.c.b16 %v1226, %v1220
    %v1539 = vpack.c.b16 %v1227, %v1221
    %v1540 = vpack.c.b16 %v1234, %v1228
    %v1541 = vpack.c.b16 %v1235, %v1229
    %v1542 = vpack.c.b16 %v1236, %v1230
    %v1543 = vpack.c.b16 %v1237, %v1231
    %v1544 = vpack.c.b16 %v1238, %v1232
    %v1545 = vpack.c.b16 %v1239, %v1233
    %v1546 = vpack.c.b16 %v1246, %v1240
    %v1547 = vpack.c.b16 %v1247, %v1241
    %v1548 = vpack.c.b16 %v1248, %v1242
    %v1549 = vpack.c.b16 %v1249, %v1243
    %v1550 = vpack.c.b16 %v1250, %v1244
    %v1551 = vpack.c.b16 %v1251, %v1245
    %v1552 = vpack.c.b16 %v1258, %v1252
    %v1553 = vpack.c.b16 %v1259, %v1253
    %v1554 = vpack.c.b16 %v1260, %v1254
    %v1555 = vpack.c.b16 %v1261, %v1255
    %v1556 = vpack.c.b16 %v1262, %v1256
    %v1557 = vpack.c.b16 %v1263, %v1257
    %v1558 = vpack.c.b16 %v1270, %v1264
    %v1559 = vpack.c.b16 %v1271, %v1265
    %v1560 = vpack.c.b16 %v1272, %v1266
    %v1561 = vpack.c.b16 %v1273, %v1267
    %v1562 = vpack.c.b16 %v1274, %v1268
    %v1563 = vpack.c.b16 %v1275, %v1269
    %v1564 = vpack.c.b16 %v1282, %v1276
    %v1565 = vpack.c.b16 %v1283, %v1277
    %v1566 = vpack.c.b16 %v1284, %v1278
    %v1567 = vpack.c.b16 %v1285, %v1279
    %v1568 = vpack.c.b16 %v1286, %v1280
    %v1569 = vpack.c.b16 %v1287, %v1281
    %v1570 = vpack.c.b16 %v1294, %v1288
    %v1571 = vpack.c.b16 %v1295, %v1289
    %v1572 = vpack.c.b16 %v1296, %v1290
    %v1573 = vpack.c.b16 %v1297, %v1291
    %v1574 = vpack.c.b16 %v1298, %v1292
    %v1575 = vpack.c.b16 %v1299, %v1293
    %v1576 = vpack.c.b16 %v1306, %v1300
    %v1577 = vpack.c.b16 %v1307, %v1301
    %v1578 = vpack.c.b16 %v1308, %v1302
    %v1579 = vpack.c.b16 %v1309, %v1303
    %v1580 = vpack.c.b16 %v1310, %v1304
    %v1581 = vpack.c.b16 %v1311, %v1305
    %v1582 = vpack.c.b16 %v1318, %v1312
    %v1583 = vpack.c.b16 %v1319, %v1313
    %v1584 = vpack.c.b16 %v1320, %v1314
    %v1585 = vpack.c.b16 %v1321, %v1315
    %v1586 = vpack.c.b16 %v1322, %v1316
    %v1587 = vpack.c.b16 %v1323, %v1317
    %v1588 = vpack.c.b16 %v1330, %v1324
    %v1589 = vpack.c.b16 %v1331, %v1325
    %v1590 = vpack.c.b16 %v1332, %v1326
    %v1591 = vpack.c.b16 %v1333, %v1327
    %v1592 = vpack.c.b16 %v1334, %v1328
    %v1593 = vpack.c.b16 %v1335, %v1329
    %v1594 = vpack.c.b16 %v1342, %v1336
    %v1595 = vpack.c.b16 %v1343, %v1337
    %v1596 = vpack.c.b16 %v1344, %v1338
    %v1597 = vpack.c.b16 %v1345, %v1339
    %v1598 = vpack.c.b16 %v1346, %v1340
    %v1599 = vpack.c.b16 %v1347, %v1341
    %v1600 = vpack.c.b16 %v1354, %v1348
    %v1601 = vpack.c.b16 %v1355, %v1349
    %v1602 = vpack.c.b16 %v1356, %v1350
    %v1603 = vpack.c.b16 %v1357, %v1351
    %v1604 = vpack.c.b16 %v1358, %v1352
    %v1605 = vpack.c.b16 %v1359, %v1353
    %v1606 = vpack.c.b16 %v1366, %v1360
    %v1607 = vpack.c.b16 %v1367, %v1361
    %v1608 = vpack.c.b16 %v1368, %v1362
    %v1609 = vpack.c.b16 %v1369, %v1363
    %v1610 = vpack.c.b16 %v1370, %v1364
    %v1611 = vpack.c.b16 %v1371, %v1365
    %v1612 = vpack.c.b16 %v1378, %v1372
    %v1613 = vpack.c.b16 %v1379, %v1373
    %v1614 = vpack.c.b16 %v1380, %v1374
    %v1615 = vpack.c.b16 %v1381, %v1375
    %v1616 = vpack.c.b16 %v1382, %v1376
    %v1617 = vpack.c.b16 %v1383, %v1377
    %v1618 = vpack.c.b16 %v1390, %v1384
    %v1619 = vpack.c.b16 %v1391, %v1385
    %v1620 = vpack.c.b16 %v1392, %v1386
    %v1621 = vpack.c.b16 %v1393, %v1387
    %v1622 = vpack.c.b16 %v1394, %v1388
    %v1623 = vpack.c.b16 %v1395, %v1389
    %v1624 = vpack.c.b16 %v1402, %v1396
    %v1625 = vpack.c.b16 %v1403, %v1397
    %v1626 = vpack.c.b16 %v1404, %v1398
    %v1627 = vpack.c.b16 %v1405, %v1399
    %v1628 = vpack.c.b16 %v1406, %v1400
    %v1629 = vpack.c.b16 %v1407, %v1401
    %v1630 = vpack.c.b16 %v1414, %v1408
    %v1631 = vpack.c.b16 %v1415, %v1409
    %v1632 = vpack.c.b16 %v1416, %v1410
    %v1633 = vpack.c.b16 %v1417, %v1411
    %v1634 = vpack.c.b16 %v1418, %v1412
    %v1635 = vpack.c.b16 %v1419, %v1413
    %vm1852 = vcmask 523264
    %v1854 = vsel %vm1852, %v704, 0
    %v1857 = vsel %vm1852, %v709, 0
    %v1860 = vsel %vm1852, %v714, 0
    %v1863 = vsel %vm1852, %v719, 0
    %v1866 = vsel %vm1852, %v724, 0
    %v1869 = vsel %vm1852, %v729, 0
    %v1872 = vsel %vm1852, %v734, 0
    %v1875 = vsel %vm1852, %v739, 0
    %1877 = vmatprep.subr.bf16.mxu0 %v1421
    %1878 = vmatpush1.bf16.msra.mxu0 %v1420
    %1879 = vmatprep.subr.bf16.mxu0 %v1427
    %1880 = vmatpush1.bf16.msra.mxu0 %v1426
    %1881 = vmatprep.subr.bf16.mxu0 %v1433
    %1882 = vmatpush1.bf16.msra.mxu0 %v1432
    %1883 = vmatprep.subr.bf16.mxu0 %v1439
    %1884 = vmatpush1.bf16.msra.mxu0 %v1438
    %1885 = vmatprep.subr.bf16.mxu0 %v1445
    %1886 = vmatpush1.bf16.msra.mxu0 %v1444
    %1887 = vmatprep.subr.bf16.mxu0 %v1451
    %1888 = vmatpush1.bf16.msra.mxu0 %v1450
    %1889 = vmatprep.subr.bf16.mxu0 %v1457
    %1890 = vmatpush1.bf16.msra.mxu0 %v1456
    %1891 = vmatprep.subr.bf16.mxu0 %v1463
    %1892 = vmatpush1.bf16.msra.mxu0 %v1462
    %1893 = vmatprep.subr.bf16.mxu0 %v1469
    %1894 = vmatpush1.bf16.msra.mxu0 %v1468
    %1895 = vmatprep.subr.bf16.mxu0 %v1475
    %1896 = vmatpush1.bf16.msra.mxu0 %v1474
    %1897 = vmatprep.subr.bf16.mxu0 %v1481
    %1898 = vmatpush1.bf16.msra.mxu0 %v1480
    %1899 = vmatprep.subr.bf16.mxu0 %v1487
    %1900 = vmatpush1.bf16.msra.mxu0 %v1486
    %1901 = vmatprep.subr.bf16.mxu0 %v1493
    %1902 = vmatpush1.bf16.msra.mxu0 %v1492
    %1903 = vmatprep.subr.bf16.mxu0 %v1499
    %1904 = vmatpush1.bf16.msra.mxu0 %v1498
    %1905 = vmatprep.subr.bf16.mxu0 %v1505
    %1906 = vmatpush1.bf16.msra.mxu0 %v1504
    %1907 = vmatprep.subr.bf16.mxu0 %v1511
    %1908 = vmatpush1.bf16.msra.mxu0 %v1510
    %1909 = vmatprep.mubr.bf16.mxu0 %v701
    %1910 = vmatmul.mubr.bf16.gmra.mrb[0].mxu0 %v700
    %v1911 = vpop.f32.mrb[0].mxu0
    %v1912 = vadd.f32 0.0, %v1911
    %v1913 = vpop.f32.mrb[0].mxu0
    %v1914 = vadd.f32 0.0, %v1913
    %v1915 = vpop.f32.mrb[0].mxu0
    %v1916 = vadd.f32 0.0, %v1915
    %v1917 = vpop.f32.mrb[0].mxu0
    %v1918 = vadd.f32 0.0, %v1917
    %1919 = vmatprep.mubr.bf16.mxu0 %v706
    %1920 = vmatmul.mubr.bf16.gmra.mrb[0].mxu0 %v705
    %v1921 = vpop.f32.mrb[0].mxu0
    %v1922 = vadd.f32 0.0, %v1921
    %v1923 = vpop.f32.mrb[0].mxu0
    %v1924 = vadd.f32 0.0, %v1923
    %v1925 = vpop.f32.mrb[0].mxu0
    %v1926 = vadd.f32 0.0, %v1925
    %v1927 = vpop.f32.mrb[0].mxu0
    %v1928 = vadd.f32 0.0, %v1927
    %1929 = vmatprep.mubr.bf16.mxu0 %v711
    %1930 = vmatmul.mubr.bf16.gmra.mrb[0].mxu0 %v710
    %v1931 = vpop.f32.mrb[0].mxu0
    %v1932 = vadd.f32 0.0, %v1931
    %v1933 = vpop.f32.mrb[0].mxu0
    %v1934 = vadd.f32 0.0, %v1933
    %v1935 = vpop.f32.mrb[0].mxu0
    %v1936 = vadd.f32 0.0, %v1935
    %v1937 = vpop.f32.mrb[0].mxu0
    %v1938 = vadd.f32 0.0, %v1937
    %1939 = vmatprep.mubr.bf16.mxu0 %v716
    %1940 = vmatmul.mubr.bf16.gmra.mrb[0].mxu0 %v715
    %v1941 = vpop.f32.mrb[0].mxu0
    %v1942 = vadd.f32 0.0, %v1941
    %v1943 = vpop.f32.mrb[0].mxu0
    %v1944 = vadd.f32 0.0, %v1943
    %v1945 = vpop.f32.mrb[0].mxu0
    %v1946 = vadd.f32 0.0, %v1945
    %v1947 = vpop.f32.mrb[0].mxu0
    %v1948 = vadd.f32 0.0, %v1947
    %1949 = vmatprep.mubr.bf16.mxu0 %v721
    %1950 = vmatmul.mubr.bf16.gmra.mrb[0].mxu0 %v720
    %v1951 = vpop.f32.mrb[0].mxu0
    %v1952 = vadd.f32 0.0, %v1951
    %v1953 = vpop.f32.mrb[0].mxu0
    %v1954 = vadd.f32 0.0, %v1953
    %v1955 = vpop.f32.mrb[0].mxu0
    %v1956 = vadd.f32 0.0, %v1955
    %v1957 = vpop.f32.mrb[0].mxu0
    %v1958 = vadd.f32 0.0, %v1957
    %1959 = vmatprep.mubr.bf16.mxu0 %v726
    %1960 = vmatmul.mubr.bf16.gmra.mrb[0].mxu0 %v725
    %v1961 = vpop.f32.mrb[0].mxu0
    %v1962 = vadd.f32 0.0, %v1961
    %v1963 = vpop.f32.mrb[0].mxu0
    %v1964 = vadd.f32 0.0, %v1963
    %v1965 = vpop.f32.mrb[0].mxu0
    %v1966 = vadd.f32 0.0, %v1965
    %v1967 = vpop.f32.mrb[0].mxu0
    %v1968 = vadd.f32 0.0, %v1967
    %1969 = vmatprep.mubr.bf16.mxu0 %v731
    %1970 = vmatmul.mubr.bf16.gmra.mrb[0].mxu0 %v730
    %v1971 = vpop.f32.mrb[0].mxu0
    %v1972 = vadd.f32 0.0, %v1971
    %v1973 = vpop.f32.mrb[0].mxu0
    %v1974 = vadd.f32 0.0, %v1973
    %v1975 = vpop.f32.mrb[0].mxu0
    %v1976 = vadd.f32 0.0, %v1975
    %v1977 = vpop.f32.mrb[0].mxu0
    %v1978 = vadd.f32 0.0, %v1977
    %1979 = vmatprep.mubr.bf16.mxu0 %v736
    %1980 = vmatmul.mubr.bf16.gmra.mrb[0].mxu0 %v735
    %v1981 = vpop.f32.mrb[0].mxu0
    %v1982 = vadd.f32 0.0, %v1981
    %v1983 = vpop.f32.mrb[0].mxu0
    %v1984 = vadd.f32 0.0, %v1983
    %v1985 = vpop.f32.mrb[0].mxu0
    %v1986 = vadd.f32 0.0, %v1985
    %v1987 = vpop.f32.mrb[0].mxu0
    %v1988 = vadd.f32 0.0, %v1987
    %1989 = vdwg.mxu0
    %1990 = vmatprep.subr.bf16.mxu0 %v1517
    %1991 = vmatpush1.bf16.msra.mxu0 %v1516
    %1992 = vmatprep.subr.bf16.mxu0 %v1523
    %1993 = vmatpush1.bf16.msra.mxu0 %v1522
    %1994 = vmatprep.subr.bf16.mxu0 %v1529
    %1995 = vmatpush1.bf16.msra.mxu0 %v1528
    %1996 = vmatprep.subr.bf16.mxu0 %v1535
    %1997 = vmatpush1.bf16.msra.mxu0 %v1534
    %1998 = vmatprep.subr.bf16.mxu0 %v1541
    %1999 = vmatpush1.bf16.msra.mxu0 %v1540
    %2000 = vmatprep.subr.bf16.mxu0 %v1547
    %2001 = vmatpush1.bf16.msra.mxu0 %v1546
    %2002 = vmatprep.subr.bf16.mxu0 %v1553
    %2003 = vmatpush1.bf16.msra.mxu0 %v1552
    %2004 = vmatprep.subr.bf16.mxu0 %v1559
    %2005 = vmatpush1.bf16.msra.mxu0 %v1558
    %2006 = vmatprep.subr.bf16.mxu0 %v1565
    %2007 = vmatpush1.bf16.msra.mxu0 %v1564
    %2008 = vmatprep.subr.bf16.mxu0 %v1571
    %2009 = vmatpush1.bf16.msra.mxu0 %v1570
    %2010 = vmatprep.subr.bf16.mxu0 %v1577
    %2011 = vmatpush1.bf16.msra.mxu0 %v1576
    %2012 = vmatprep.subr.bf16.mxu0 %v1583
    %2013 = vmatpush1.bf16.msra.mxu0 %v1582
    %2014 = vmatprep.subr.bf16.mxu0 %v1589
    %2015 = vmatpush1.bf16.msra.mxu0 %v1588
    %2016 = vmatprep.subr.bf16.mxu0 %v1595
    %2017 = vmatpush1.bf16.msra.mxu0 %v1594
    %2018 = vmatprep.subr.bf16.mxu0 %v1601
    %2019 = vmatpush1.bf16.msra.mxu0 %v1600
    %2020 = vmatprep.subr.bf16.mxu0 %v1607
    %2021 = vmatpush1.bf16.msra.mxu0 %v1606
    %2022 = vmatprep.mubr.bf16.mxu0 %v703
    %2023 = vmatmul.mubr.bf16.gmra.mrb[0].mxu0 %v702
    %v2024 = vpop.f32.mrb[0].mxu0
    %v2025 = vadd.f32 %v1912, %v2024
    %v2026 = vpop.f32.mrb[0].mxu0
    %v2027 = vadd.f32 %v1914, %v2026
    %v2028 = vpop.f32.mrb[0].mxu0
    %v2029 = vadd.f32 %v1916, %v2028
    %v2030 = vpop.f32.mrb[0].mxu0
    %v2031 = vadd.f32 %v1918, %v2030
    %2032 = vmatprep.mubr.bf16.mxu0 %v708
    %2033 = vmatmul.mubr.bf16.gmra.mrb[0].mxu0 %v707
    %v2034 = vpop.f32.mrb[0].mxu0
    %v2035 = vadd.f32 %v1922, %v2034
    %v2036 = vpop.f32.mrb[0].mxu0
    %v2037 = vadd.f32 %v1924, %v2036
    %v2038 = vpop.f32.mrb[0].mxu0
    %v2039 = vadd.f32 %v1926, %v2038
    %v2040 = vpop.f32.mrb[0].mxu0
    %v2041 = vadd.f32 %v1928, %v2040
    %2042 = vmatprep.mubr.bf16.mxu0 %v713
    %2043 = vmatmul.mubr.bf16.gmra.mrb[0].mxu0 %v712
    %v2044 = vpop.f32.mrb[0].mxu0
    %v2045 = vadd.f32 %v1932, %v2044
    %v2046 = vpop.f32.mrb[0].mxu0
    %v2047 = vadd.f32 %v1934, %v2046
    %v2048 = vpop.f32.mrb[0].mxu0
    %v2049 = vadd.f32 %v1936, %v2048
    %v2050 = vpop.f32.mrb[0].mxu0
    %v2051 = vadd.f32 %v1938, %v2050
    %2052 = vmatprep.mubr.bf16.mxu0 %v718
    %2053 = vmatmul.mubr.bf16.gmra.mrb[0].mxu0 %v717
    %v2054 = vpop.f32.mrb[0].mxu0
    %v2055 = vadd.f32 %v1942, %v2054
    %v2056 = vpop.f32.mrb[0].mxu0
    %v2057 = vadd.f32 %v1944, %v2056
    %v2058 = vpop.f32.mrb[0].mxu0
    %v2059 = vadd.f32 %v1946, %v2058
    %v2060 = vpop.f32.mrb[0].mxu0
    %v2061 = vadd.f32 %v1948, %v2060
    %2062 = vmatprep.mubr.bf16.mxu0 %v723
    %2063 = vmatmul.mubr.bf16.gmra.mrb[0].mxu0 %v722
    %v2064 = vpop.f32.mrb[0].mxu0
    %v2065 = vadd.f32 %v1952, %v2064
    %v2066 = vpop.f32.mrb[0].mxu0
    %v2067 = vadd.f32 %v1954, %v2066
    %v2068 = vpop.f32.mrb[0].mxu0
    %v2069 = vadd.f32 %v1956, %v2068
    %v2070 = vpop.f32.mrb[0].mxu0
    %v2071 = vadd.f32 %v1958, %v2070
    %2072 = vmatprep.mubr.bf16.mxu0 %v728
    %2073 = vmatmul.mubr.bf16.gmra.mrb[0].mxu0 %v727
    %v2074 = vpop.f32.mrb[0].mxu0
    %v2075 = vadd.f32 %v1962, %v2074
    %v2076 = vpop.f32.mrb[0].mxu0
    %v2077 = vadd.f32 %v1964, %v2076
    %v2078 = vpop.f32.mrb[0].mxu0
    %v2079 = vadd.f32 %v1966, %v2078
    %v2080 = vpop.f32.mrb[0].mxu0
    %v2081 = vadd.f32 %v1968, %v2080
    %2082 = vmatprep.mubr.bf16.mxu0 %v733
    %2083 = vmatmul.mubr.bf16.gmra.mrb[0].mxu0 %v732
    %v2084 = vpop.f32.mrb[0].mxu0
    %v2085 = vadd.f32 %v1972, %v2084
    %v2086 = vpop.f32.mrb[0].mxu0
    %v2087 = vadd.f32 %v1974, %v2086
    %v2088 = vpop.f32.mrb[0].mxu0
    %v2089 = vadd.f32 %v1976, %v2088
    %v2090 = vpop.f32.mrb[0].mxu0
    %v2091 = vadd.f32 %v1978, %v2090
    %2092 = vmatprep.mubr.bf16.mxu0 %v738
    %2093 = vmatmul.mubr.bf16.gmra.mrb[0].mxu0 %v737
    %v2094 = vpop.f32.mrb[0].mxu0
    %v2095 = vadd.f32 %v1982, %v2094
    %v2096 = vpop.f32.mrb[0].mxu0
    %v2097 = vadd.f32 %v1984, %v2096
    %v2098 = vpop.f32.mrb[0].mxu0
    %v2099 = vadd.f32 %v1986, %v2098
    %v2100 = vpop.f32.mrb[0].mxu0
    %v2101 = vadd.f32 %v1988, %v2100
    %2102 = vdwg.mxu0
    %2103 = vmatprep.subr.bf16.mxu0 %v1613
    %2104 = vmatpush1.bf16.msra.mxu0 %v1612
    %2105 = vmatprep.subr.bf16.mxu0 %v1619
    %2106 = vmatpush1.bf16.msra.mxu0 %v1618
    %2107 = vmatprep.subr.bf16.mxu0 %v1625
    %2108 = vmatpush1.bf16.msra.mxu0 %v1624
    %2109 = vmatprep.subr.bf16.mxu0 %v1631
    %2110 = vmatpush1.bf16.msra.mxu0 %v1630
    %2111 = vmatprep.subr.bf16.mxu0 0
    %2112 = vmatpush1.bf16.msra.mxu0 0
    %2113 = vmatprep.subr.bf16.mxu0 0
    %2114 = vmatpush1.bf16.msra.mxu0 0
    %2115 = vmatprep.subr.bf16.mxu0 0
    %2116 = vmatpush1.bf16.msra.mxu0 0
    %2117 = vmatprep.subr.bf16.mxu0 0
    %2118 = vmatpush1.bf16.msra.mxu0 0
    %2119 = vmatprep.subr.bf16.mxu0 0
    %2120 = vmatpush1.bf16.msra.mxu0 0
    %2121 = vmatprep.subr.bf16.mxu0 0
    %2122 = vmatpush1.bf16.msra.mxu0 0
    %2123 = vmatprep.subr.bf16.mxu0 0
    %2124 = vmatpush1.bf16.msra.mxu0 0
    %2125 = vmatprep.subr.bf16.mxu0 0
    %2126 = vmatpush1.bf16.msra.mxu0 0
    %2127 = vmatprep.subr.bf16.mxu0 0
    %2128 = vmatpush1.bf16.msra.mxu0 0
    %2129 = vmatprep.subr.bf16.mxu0 0
    %2130 = vmatpush1.bf16.msra.mxu0 0
    %2131 = vmatprep.subr.bf16.mxu0 0
    %2132 = vmatpush1.bf16.msra.mxu0 0
    %2133 = vmatprep.subr.bf16.mxu0 0
    %2134 = vmatpush1.bf16.msra.mxu0 0
    %2135 = vmatprep.mubr.bf16.mxu0 0
    %2136 = vmatmul.mubr.bf16.gmra.mrb[0].mxu0 %v1854
    %v2137 = vpop.f32.mrb[0].mxu0
    %v2138 = vadd.f32 %v2025, %v2137
    %v2139 = vpop.f32.mrb[0].mxu0
    %v2140 = vadd.f32 %v2027, %v2139
    %v2141 = vpop.f32.mrb[0].mxu0
    %v2142 = vadd.f32 %v2029, %v2141
    %v2143 = vpop.f32.mrb[0].mxu0
    %v2144 = vadd.f32 %v2031, %v2143
    %2145 = vmatprep.mubr.bf16.mxu0 0
    %2146 = vmatmul.mubr.bf16.gmra.mrb[0].mxu0 %v1857
    %v2147 = vpop.f32.mrb[0].mxu0
    %v2148 = vadd.f32 %v2035, %v2147
    %v2149 = vpop.f32.mrb[0].mxu0
    %v2150 = vadd.f32 %v2037, %v2149
    %v2151 = vpop.f32.mrb[0].mxu0
    %v2152 = vadd.f32 %v2039, %v2151
    %v2153 = vpop.f32.mrb[0].mxu0
    %v2154 = vadd.f32 %v2041, %v2153
    %2155 = vmatprep.mubr.bf16.mxu0 0
    %2156 = vmatmul.mubr.bf16.gmra.mrb[0].mxu0 %v1860
    %v2157 = vpop.f32.mrb[0].mxu0
    %v2158 = vadd.f32 %v2045, %v2157
    %v2159 = vpop.f32.mrb[0].mxu0
    %v2160 = vadd.f32 %v2047, %v2159
    %v2161 = vpop.f32.mrb[0].mxu0
    %v2162 = vadd.f32 %v2049, %v2161
    %v2163 = vpop.f32.mrb[0].mxu0
    %v2164 = vadd.f32 %v2051, %v2163
    %2165 = vmatprep.mubr.bf16.mxu0 0
    %2166 = vmatmul.mubr.bf16.gmra.mrb[0].mxu0 %v1863
    %v2167 = vpop.f32.mrb[0].mxu0
    %v2168 = vadd.f32 %v2055, %v2167
    %v2169 = vpop.f32.mrb[0].mxu0
    %v2170 = vadd.f32 %v2057, %v2169
    %v2171 = vpop.f32.mrb[0].mxu0
    %v2172 = vadd.f32 %v2059, %v2171
    %v2173 = vpop.f32.mrb[0].mxu0
    %v2174 = vadd.f32 %v2061, %v2173
    %2175 = vmatprep.mubr.bf16.mxu0 0
    %2176 = vmatmul.mubr.bf16.gmra.mrb[0].mxu0 %v1866
    %v2177 = vpop.f32.mrb[0].mxu0
    %v2178 = vadd.f32 %v2065, %v2177
    %v2179 = vpop.f32.mrb[0].mxu0
    %v2180 = vadd.f32 %v2067, %v2179
    %v2181 = vpop.f32.mrb[0].mxu0
    %v2182 = vadd.f32 %v2069, %v2181
    %v2183 = vpop.f32.mrb[0].mxu0
    %v2184 = vadd.f32 %v2071, %v2183
    %2185 = vmatprep.mubr.bf16.mxu0 0
    %2186 = vmatmul.mubr.bf16.gmra.mrb[0].mxu0 %v1869
    %v2187 = vpop.f32.mrb[0].mxu0
    %v2188 = vadd.f32 %v2075, %v2187
    %v2189 = vpop.f32.mrb[0].mxu0
    %v2190 = vadd.f32 %v2077, %v2189
    %v2191 = vpop.f32.mrb[0].mxu0
    %v2192 = vadd.f32 %v2079, %v2191
    %v2193 = vpop.f32.mrb[0].mxu0
    %v2194 = vadd.f32 %v2081, %v2193
    %2195 = vmatprep.mubr.bf16.mxu0 0
    %2196 = vmatmul.mubr.bf16.gmra.mrb[0].mxu0 %v1872
    %v2197 = vpop.f32.mrb[0].mxu0
    %v2198 = vadd.f32 %v2085, %v2197
    %v2199 = vpop.f32.mrb[0].mxu0
    %v2200 = vadd.f32 %v2087, %v2199
    %v2201 = vpop.f32.mrb[0].mxu0
    %v2202 = vadd.f32 %v2089, %v2201
    %v2203 = vpop.f32.mrb[0].mxu0
    %v2204 = vadd.f32 %v2091, %v2203
    %2205 = vmatprep.mubr.bf16.mxu0 0
    %2206 = vmatmul.mubr.bf16.gmra.mrb[0].mxu0 %v1875
    %v2207 = vpop.f32.mrb[0].mxu0
    %v2208 = vadd.f32 %v2095, %v2207
    %v2209 = vpop.f32.mrb[0].mxu0
    %v2210 = vadd.f32 %v2097, %v2209
    %v2211 = vpop.f32.mrb[0].mxu0
    %v2212 = vadd.f32 %v2099, %v2211
    %v2213 = vpop.f32.mrb[0].mxu0
    %v2214 = vadd.f32 %v2101, %v2213
    %2215 = vdwg.mxu0
    %2216 = vmatprep.subr.bf16.mxu0 %v1423
    %2217 = vmatpush1.bf16.msra.mxu0 %v1422
    %2218 = vmatprep.subr.bf16.mxu0 %v1429
    %2219 = vmatpush1.bf16.msra.mxu0 %v1428
    %2220 = vmatprep.subr.bf16.mxu0 %v1435
    %2221 = vmatpush1.bf16.msra.mxu0 %v1434
    %2222 = vmatprep.subr.bf16.mxu0 %v1441
    %2223 = vmatpush1.bf16.msra.mxu0 %v1440
    %2224 = vmatprep.subr.bf16.mxu0 %v1447
    %2225 = vmatpush1.bf16.msra.mxu0 %v1446
    %2226 = vmatprep.subr.bf16.mxu0 %v1453
    %2227 = vmatpush1.bf16.msra.mxu0 %v1452
    %2228 = vmatprep.subr.bf16.mxu0 %v1459
    %2229 = vmatpush1.bf16.msra.mxu0 %v1458
    %2230 = vmatprep.subr.bf16.mxu0 %v1465
    %2231 = vmatpush1.bf16.msra.mxu0 %v1464
    %2232 = vmatprep.subr.bf16.mxu0 %v1471
    %2233 = vmatpush1.bf16.msra.mxu0 %v1470
    %2234 = vmatprep.subr.bf16.mxu0 %v1477
    %2235 = vmatpush1.bf16.msra.mxu0 %v1476
    %2236 = vmatprep.subr.bf16.mxu0 %v1483
    %2237 = vmatpush1.bf16.msra.mxu0 %v1482
    %2238 = vmatprep.subr.bf16.mxu0 %v1489
    %2239 = vmatpush1.bf16.msra.mxu0 %v1488
    %2240 = vmatprep.subr.bf16.mxu0 %v1495
    %2241 = vmatpush1.bf16.msra.mxu0 %v1494
    %2242 = vmatprep.subr.bf16.mxu0 %v1501
    %2243 = vmatpush1.bf16.msra.mxu0 %v1500
    %2244 = vmatprep.subr.bf16.mxu0 %v1507
    %2245 = vmatpush1.bf16.msra.mxu0 %v1506
    %2246 = vmatprep.subr.bf16.mxu0 %v1513
    %2247 = vmatpush1.bf16.msra.mxu0 %v1512
    %2248 = vmatprep.mubr.bf16.mxu0 %v701
    %2249 = vmatmul.mubr.bf16.gmra.mrb[0].mxu0 %v700
    %v2250 = vpop.f32.mrb[0].mxu0
    %v2251 = vadd.f32 0.0, %v2250
    %v2252 = vpop.f32.mrb[0].mxu0
    %v2253 = vadd.f32 0.0, %v2252
    %v2254 = vpop.f32.mrb[0].mxu0
    %v2255 = vadd.f32 0.0, %v2254
    %v2256 = vpop.f32.mrb[0].mxu0
    %v2257 = vadd.f32 0.0, %v2256
    %2258 = vmatprep.mubr.bf16.mxu0 %v706
    %2259 = vmatmul.mubr.bf16.gmra.mrb[0].mxu0 %v705
    %v2260 = vpop.f32.mrb[0].mxu0
    %v2261 = vadd.f32 0.0, %v2260
    %v2262 = vpop.f32.mrb[0].mxu0
    %v2263 = vadd.f32 0.0, %v2262
    %v2264 = vpop.f32.mrb[0].mxu0
    %v2265 = vadd.f32 0.0, %v2264
    %v2266 = vpop.f32.mrb[0].mxu0
    %v2267 = vadd.f32 0.0, %v2266
    %2268 = vmatprep.mubr.bf16.mxu0 %v711
    %2269 = vmatmul.mubr.bf16.gmra.mrb[0].mxu0 %v710
    %v2270 = vpop.f32.mrb[0].mxu0
    %v2271 = vadd.f32 0.0, %v2270
    %v2272 = vpop.f32.mrb[0].mxu0
    %v2273 = vadd.f32 0.0, %v2272
    %v2274 = vpop.f32.mrb[0].mxu0
    %v2275 = vadd.f32 0.0, %v2274
    %v2276 = vpop.f32.mrb[0].mxu0
    %v2277 = vadd.f32 0.0, %v2276
    %2278 = vmatprep.mubr.bf16.mxu0 %v716
    %2279 = vmatmul.mubr.bf16.gmra.mrb[0].mxu0 %v715
    %v2280 = vpop.f32.mrb[0].mxu0
    %v2281 = vadd.f32 0.0, %v2280
    %v2282 = vpop.f32.mrb[0].mxu0
    %v2283 = vadd.f32 0.0, %v2282
    %v2284 = vpop.f32.mrb[0].mxu0
    %v2285 = vadd.f32 0.0, %v2284
    %v2286 = vpop.f32.mrb[0].mxu0
    %v2287 = vadd.f32 0.0, %v2286
    %2288 = vmatprep.mubr.bf16.mxu0 %v721
    %2289 = vmatmul.mubr.bf16.gmra.mrb[0].mxu0 %v720
    %v2290 = vpop.f32.mrb[0].mxu0
    %v2291 = vadd.f32 0.0, %v2290
    %v2292 = vpop.f32.mrb[0].mxu0
    %v2293 = vadd.f32 0.0, %v2292
    %v2294 = vpop.f32.mrb[0].mxu0
    %v2295 = vadd.f32 0.0, %v2294
    %v2296 = vpop.f32.mrb[0].mxu0
    %v2297 = vadd.f32 0.0, %v2296
    %2298 = vmatprep.mubr.bf16.mxu0 %v726
    %2299 = vmatmul.mubr.bf16.gmra.mrb[0].mxu0 %v725
    %v2300 = vpop.f32.mrb[0].mxu0
    %v2301 = vadd.f32 0.0, %v2300
    %v2302 = vpop.f32.mrb[0].mxu0
    %v2303 = vadd.f32 0.0, %v2302
    %v2304 = vpop.f32.mrb[0].mxu0
    %v2305 = vadd.f32 0.0, %v2304
    %v2306 = vpop.f32.mrb[0].mxu0
    %v2307 = vadd.f32 0.0, %v2306
    %2308 = vmatprep.mubr.bf16.mxu0 %v731
    %2309 = vmatmul.mubr.bf16.gmra.mrb[0].mxu0 %v730
    %v2310 = vpop.f32.mrb[0].mxu0
    %v2311 = vadd.f32 0.0, %v2310
    %v2312 = vpop.f32.mrb[0].mxu0
    %v2313 = vadd.f32 0.0, %v2312
    %v2314 = vpop.f32.mrb[0].mxu0
    %v2315 = vadd.f32 0.0, %v2314
    %v2316 = vpop.f32.mrb[0].mxu0
    %v2317 = vadd.f32 0.0, %v2316
    %2318 = vmatprep.mubr.bf16.mxu0 %v736
    %2319 = vmatmul.mubr.bf16.gmra.mrb[0].mxu0 %v735
    %v2320 = vpop.f32.mrb[0].mxu0
    %v2321 = vadd.f32 0.0, %v2320
    %v2322 = vpop.f32.mrb[0].mxu0
    %v2323 = vadd.f32 0.0, %v2322
    %v2324 = vpop.f32.mrb[0].mxu0
    %v2325 = vadd.f32 0.0, %v2324
    %v2326 = vpop.f32.mrb[0].mxu0
    %v2327 = vadd.f32 0.0, %v2326
    %2328 = vdwg.mxu0
    %2329 = vmatprep.subr.bf16.mxu0 %v1519
    %2330 = vmatpush1.bf16.msra.mxu0 %v1518
    %2331 = vmatprep.subr.bf16.mxu0 %v1525
    %2332 = vmatpush1.bf16.msra.mxu0 %v1524
    %2333 = vmatprep.subr.bf16.mxu0 %v1531
    %2334 = vmatpush1.bf16.msra.mxu0 %v1530
    %2335 = vmatprep.subr.bf16.mxu0 %v1537
    %2336 = vmatpush1.bf16.msra.mxu0 %v1536
    %2337 = vmatprep.subr.bf16.mxu0 %v1543
    %2338 = vmatpush1.bf16.msra.mxu0 %v1542
    %2339 = vmatprep.subr.bf16.mxu0 %v1549
    %2340 = vmatpush1.bf16.msra.mxu0 %v1548
    %2341 = vmatprep.subr.bf16.mxu0 %v1555
    %2342 = vmatpush1.bf16.msra.mxu0 %v1554
    %2343 = vmatprep.subr.bf16.mxu0 %v1561
    %2344 = vmatpush1.bf16.msra.mxu0 %v1560
    %2345 = vmatprep.subr.bf16.mxu0 %v1567
    %2346 = vmatpush1.bf16.msra.mxu0 %v1566
    %2347 = vmatprep.subr.bf16.mxu0 %v1573
    %2348 = vmatpush1.bf16.msra.mxu0 %v1572
    %2349 = vmatprep.subr.bf16.mxu0 %v1579
    %2350 = vmatpush1.bf16.msra.mxu0 %v1578
    %2351 = vmatprep.subr.bf16.mxu0 %v1585
    %2352 = vmatpush1.bf16.msra.mxu0 %v1584
    %2353 = vmatprep.subr.bf16.mxu0 %v1591
    %2354 = vmatpush1.bf16.msra.mxu0 %v1590
    %2355 = vmatprep.subr.bf16.mxu0 %v1597
    %2356 = vmatpush1.bf16.msra.mxu0 %v1596
    %2357 = vmatprep.subr.bf16.mxu0 %v1603
    %2358 = vmatpush1.bf16.msra.mxu0 %v1602
    %2359 = vmatprep.subr.bf16.mxu0 %v1609
    %2360 = vmatpush1.bf16.msra.mxu0 %v1608
    %2361 = vmatprep.mubr.bf16.mxu0 %v703
    %2362 = vmatmul.mubr.bf16.gmra.mrb[0].mxu0 %v702
    %v2363 = vpop.f32.mrb[0].mxu0
    %v2364 = vadd.f32 %v2251, %v2363
    %v2365 = vpop.f32.mrb[0].mxu0
    %v2366 = vadd.f32 %v2253, %v2365
    %v2367 = vpop.f32.mrb[0].mxu0
    %v2368 = vadd.f32 %v2255, %v2367
    %v2369 = vpop.f32.mrb[0].mxu0
    %v2370 = vadd.f32 %v2257, %v2369
    %2371 = vmatprep.mubr.bf16.mxu0 %v708
    %2372 = vmatmul.mubr.bf16.gmra.mrb[0].mxu0 %v707
    %v2373 = vpop.f32.mrb[0].mxu0
    %v2374 = vadd.f32 %v2261, %v2373
    %v2375 = vpop.f32.mrb[0].mxu0
    %v2376 = vadd.f32 %v2263, %v2375
    %v2377 = vpop.f32.mrb[0].mxu0
    %v2378 = vadd.f32 %v2265, %v2377
    %v2379 = vpop.f32.mrb[0].mxu0
    %v2380 = vadd.f32 %v2267, %v2379
    %2381 = vmatprep.mubr.bf16.mxu0 %v713
    %2382 = vmatmul.mubr.bf16.gmra.mrb[0].mxu0 %v712
    %v2383 = vpop.f32.mrb[0].mxu0
    %v2384 = vadd.f32 %v2271, %v2383
    %v2385 = vpop.f32.mrb[0].mxu0
    %v2386 = vadd.f32 %v2273, %v2385
    %v2387 = vpop.f32.mrb[0].mxu0
    %v2388 = vadd.f32 %v2275, %v2387
    %v2389 = vpop.f32.mrb[0].mxu0
    %v2390 = vadd.f32 %v2277, %v2389
    %2391 = vmatprep.mubr.bf16.mxu0 %v718
    %2392 = vmatmul.mubr.bf16.gmra.mrb[0].mxu0 %v717
    %v2393 = vpop.f32.mrb[0].mxu0
    %v2394 = vadd.f32 %v2281, %v2393
    %v2395 = vpop.f32.mrb[0].mxu0
    %v2396 = vadd.f32 %v2283, %v2395
    %v2397 = vpop.f32.mrb[0].mxu0
    %v2398 = vadd.f32 %v2285, %v2397
    %v2399 = vpop.f32.mrb[0].mxu0
    %v2400 = vadd.f32 %v2287, %v2399
    %2401 = vmatprep.mubr.bf16.mxu0 %v723
    %2402 = vmatmul.mubr.bf16.gmra.mrb[0].mxu0 %v722
    %v2403 = vpop.f32.mrb[0].mxu0
    %v2404 = vadd.f32 %v2291, %v2403
    %v2405 = vpop.f32.mrb[0].mxu0
    %v2406 = vadd.f32 %v2293, %v2405
    %v2407 = vpop.f32.mrb[0].mxu0
    %v2408 = vadd.f32 %v2295, %v2407
    %v2409 = vpop.f32.mrb[0].mxu0
    %v2410 = vadd.f32 %v2297, %v2409
    %2411 = vmatprep.mubr.bf16.mxu0 %v728
    %2412 = vmatmul.mubr.bf16.gmra.mrb[0].mxu0 %v727
    %v2413 = vpop.f32.mrb[0].mxu0
    %v2414 = vadd.f32 %v2301, %v2413
    %v2415 = vpop.f32.mrb[0].mxu0
    %v2416 = vadd.f32 %v2303, %v2415
    %v2417 = vpop.f32.mrb[0].mxu0
    %v2418 = vadd.f32 %v2305, %v2417
    %v2419 = vpop.f32.mrb[0].mxu0
    %v2420 = vadd.f32 %v2307, %v2419
    %2421 = vmatprep.mubr.bf16.mxu0 %v733
    %2422 = vmatmul.mubr.bf16.gmra.mrb[0].mxu0 %v732
    %v2423 = vpop.f32.mrb[0].mxu0
    %v2424 = vadd.f32 %v2311, %v2423
    %v2425 = vpop.f32.mrb[0].mxu0
    %v2426 = vadd.f32 %v2313, %v2425
    %v2427 = vpop.f32.mrb[0].mxu0
    %v2428 = vadd.f32 %v2315, %v2427
    %v2429 = vpop.f32.mrb[0].mxu0
    %v2430 = vadd.f32 %v2317, %v2429
    %2431 = vmatprep.mubr.bf16.mxu0 %v738
    %2432 = vmatmul.mubr.bf16.gmra.mrb[0].mxu0 %v737
    %v2433 = vpop.f32.mrb[0].mxu0
    %v2434 = vadd.f32 %v2321, %v2433
    %v2435 = vpop.f32.mrb[0].mxu0
    %v2436 = vadd.f32 %v2323, %v2435
    %v2437 = vpop.f32.mrb[0].mxu0
    %v2438 = vadd.f32 %v2325, %v2437
    %v2439 = vpop.f32.mrb[0].mxu0
    %v2440 = vadd.f32 %v2327, %v2439
    %2441 = vdwg.mxu0
    %2442 = vmatprep.subr.bf16.mxu0 %v1615
    %2443 = vmatpush1.bf16.msra.mxu0 %v1614
    %2444 = vmatprep.subr.bf16.mxu0 %v1621
    %2445 = vmatpush1.bf16.msra.mxu0 %v1620
    %2446 = vmatprep.subr.bf16.mxu0 %v1627
    %2447 = vmatpush1.bf16.msra.mxu0 %v1626
    %2448 = vmatprep.subr.bf16.mxu0 %v1633
    %2449 = vmatpush1.bf16.msra.mxu0 %v1632
    %2450 = vmatprep.subr.bf16.mxu0 0
    %2451 = vmatpush1.bf16.msra.mxu0 0
    %2452 = vmatprep.subr.bf16.mxu0 0
    %2453 = vmatpush1.bf16.msra.mxu0 0
    %2454 = vmatprep.subr.bf16.mxu0 0
    %2455 = vmatpush1.bf16.msra.mxu0 0
    %2456 = vmatprep.subr.bf16.mxu0 0
    %2457 = vmatpush1.bf16.msra.mxu0 0
    %2458 = vmatprep.subr.bf16.mxu0 0
    %2459 = vmatpush1.bf16.msra.mxu0 0
    %2460 = vmatprep.subr.bf16.mxu0 0
    %2461 = vmatpush1.bf16.msra.mxu0 0
    %2462 = vmatprep.subr.bf16.mxu0 0
    %2463 = vmatpush1.bf16.msra.mxu0 0
    %2464 = vmatprep.subr.bf16.mxu0 0
    %2465 = vmatpush1.bf16.msra.mxu0 0
    %2466 = vmatprep.subr.bf16.mxu0 0
    %2467 = vmatpush1.bf16.msra.mxu0 0
    %2468 = vmatprep.subr.bf16.mxu0 0
    %2469 = vmatpush1.bf16.msra.mxu0 0
    %2470 = vmatprep.subr.bf16.mxu0 0
    %2471 = vmatpush1.bf16.msra.mxu0 0
    %2472 = vmatprep.subr.bf16.mxu0 0
    %2473 = vmatpush1.bf16.msra.mxu0 0
    %2474 = vmatprep.mubr.bf16.mxu0 0
    %2475 = vmatmul.mubr.bf16.gmra.mrb[0].mxu0 %v1854
    %v2476 = vpop.f32.mrb[0].mxu0
    %v2477 = vadd.f32 %v2364, %v2476
    %v2478 = vpop.f32.mrb[0].mxu0
    %v2479 = vadd.f32 %v2366, %v2478
    %v2480 = vpop.f32.mrb[0].mxu0
    %v2481 = vadd.f32 %v2368, %v2480
    %v2482 = vpop.f32.mrb[0].mxu0
    %v2483 = vadd.f32 %v2370, %v2482
    %2484 = vmatprep.mubr.bf16.mxu0 0
    %2485 = vmatmul.mubr.bf16.gmra.mrb[0].mxu0 %v1857
    %v2486 = vpop.f32.mrb[0].mxu0
    %v2487 = vadd.f32 %v2374, %v2486
    %v2488 = vpop.f32.mrb[0].mxu0
    %v2489 = vadd.f32 %v2376, %v2488
    %v2490 = vpop.f32.mrb[0].mxu0
    %v2491 = vadd.f32 %v2378, %v2490
    %v2492 = vpop.f32.mrb[0].mxu0
    %v2493 = vadd.f32 %v2380, %v2492
    %2494 = vmatprep.mubr.bf16.mxu0 0
    %2495 = vmatmul.mubr.bf16.gmra.mrb[0].mxu0 %v1860
    %v2496 = vpop.f32.mrb[0].mxu0
    %v2497 = vadd.f32 %v2384, %v2496
    %v2498 = vpop.f32.mrb[0].mxu0
    %v2499 = vadd.f32 %v2386, %v2498
    %v2500 = vpop.f32.mrb[0].mxu0
    %v2501 = vadd.f32 %v2388, %v2500
    %v2502 = vpop.f32.mrb[0].mxu0
    %v2503 = vadd.f32 %v2390, %v2502
    %2504 = vmatprep.mubr.bf16.mxu0 0
    %2505 = vmatmul.mubr.bf16.gmra.mrb[0].mxu0 %v1863
    %v2506 = vpop.f32.mrb[0].mxu0
    %v2507 = vadd.f32 %v2394, %v2506
    %v2508 = vpop.f32.mrb[0].mxu0
    %v2509 = vadd.f32 %v2396, %v2508
    %v2510 = vpop.f32.mrb[0].mxu0
    %v2511 = vadd.f32 %v2398, %v2510
    %v2512 = vpop.f32.mrb[0].mxu0
    %v2513 = vadd.f32 %v2400, %v2512
    %2514 = vmatprep.mubr.bf16.mxu0 0
    %2515 = vmatmul.mubr.bf16.gmra.mrb[0].mxu0 %v1866
    %v2516 = vpop.f32.mrb[0].mxu0
    %v2517 = vadd.f32 %v2404, %v2516
    %v2518 = vpop.f32.mrb[0].mxu0
    %v2519 = vadd.f32 %v2406, %v2518
    %v2520 = vpop.f32.mrb[0].mxu0
    %v2521 = vadd.f32 %v2408, %v2520
    %v2522 = vpop.f32.mrb[0].mxu0
    %v2523 = vadd.f32 %v2410, %v2522
    %2524 = vmatprep.mubr.bf16.mxu0 0
    %2525 = vmatmul.mubr.bf16.gmra.mrb[0].mxu0 %v1869
    %v2526 = vpop.f32.mrb[0].mxu0
    %v2527 = vadd.f32 %v2414, %v2526
    %v2528 = vpop.f32.mrb[0].mxu0
    %v2529 = vadd.f32 %v2416, %v2528
    %v2530 = vpop.f32.mrb[0].mxu0
    %v2531 = vadd.f32 %v2418, %v2530
    %v2532 = vpop.f32.mrb[0].mxu0
    %v2533 = vadd.f32 %v2420, %v2532
    %2534 = vmatprep.mubr.bf16.mxu0 0
    %2535 = vmatmul.mubr.bf16.gmra.mrb[0].mxu0 %v1872
    %v2536 = vpop.f32.mrb[0].mxu0
    %v2537 = vadd.f32 %v2424, %v2536
    %v2538 = vpop.f32.mrb[0].mxu0
    %v2539 = vadd.f32 %v2426, %v2538
    %v2540 = vpop.f32.mrb[0].mxu0
    %v2541 = vadd.f32 %v2428, %v2540
    %v2542 = vpop.f32.mrb[0].mxu0
    %v2543 = vadd.f32 %v2430, %v2542
    %2544 = vmatprep.mubr.bf16.mxu0 0
    %2545 = vmatmul.mubr.bf16.gmra.mrb[0].mxu0 %v1875
    %v2546 = vpop.f32.mrb[0].mxu0
    %v2547 = vadd.f32 %v2434, %v2546
    %v2548 = vpop.f32.mrb[0].mxu0
    %v2549 = vadd.f32 %v2436, %v2548
    %v2550 = vpop.f32.mrb[0].mxu0
    %v2551 = vadd.f32 %v2438, %v2550
    %v2552 = vpop.f32.mrb[0].mxu0
    %v2553 = vadd.f32 %v2440, %v2552
    %2554 = vdwg.mxu0
    %2555 = vmatprep.subr.bf16.mxu0 %v1425
    %2556 = vmatpush1.bf16.msra.mxu0 %v1424
    %2557 = vmatprep.subr.bf16.mxu0 %v1431
    %2558 = vmatpush1.bf16.msra.mxu0 %v1430
    %2559 = vmatprep.subr.bf16.mxu0 %v1437
    %2560 = vmatpush1.bf16.msra.mxu0 %v1436
    %2561 = vmatprep.subr.bf16.mxu0 %v1443
    %2562 = vmatpush1.bf16.msra.mxu0 %v1442
    %2563 = vmatprep.subr.bf16.mxu0 %v1449
    %2564 = vmatpush1.bf16.msra.mxu0 %v1448
    %2565 = vmatprep.subr.bf16.mxu0 %v1455
    %2566 = vmatpush1.bf16.msra.mxu0 %v1454
    %2567 = vmatprep.subr.bf16.mxu0 %v1461
    %2568 = vmatpush1.bf16.msra.mxu0 %v1460
    %2569 = vmatprep.subr.bf16.mxu0 %v1467
    %2570 = vmatpush1.bf16.msra.mxu0 %v1466
    %2571 = vmatprep.subr.bf16.mxu0 %v1473
    %2572 = vmatpush1.bf16.msra.mxu0 %v1472
    %2573 = vmatprep.subr.bf16.mxu0 %v1479
    %2574 = vmatpush1.bf16.msra.mxu0 %v1478
    %2575 = vmatprep.subr.bf16.mxu0 %v1485
    %2576 = vmatpush1.bf16.msra.mxu0 %v1484
    %2577 = vmatprep.subr.bf16.mxu0 %v1491
    %2578 = vmatpush1.bf16.msra.mxu0 %v1490
    %2579 = vmatprep.subr.bf16.mxu0 %v1497
    %2580 = vmatpush1.bf16.msra.mxu0 %v1496
    %2581 = vmatprep.subr.bf16.mxu0 %v1503
    %2582 = vmatpush1.bf16.msra.mxu0 %v1502
    %2583 = vmatprep.subr.bf16.mxu0 %v1509
    %2584 = vmatpush1.bf16.msra.mxu0 %v1508
    %2585 = vmatprep.subr.bf16.mxu0 %v1515
    %2586 = vmatpush1.bf16.msra.mxu0 %v1514
    %2587 = vmatprep.mubr.bf16.mxu0 %v701
    %2588 = vmatmul.mubr.bf16.gmra.mrb[0].mxu0 %v700
    %v2589 = vpop.f32.mrb[0].mxu0
    %v2590 = vadd.f32 0.0, %v2589
    %v2591 = vpop.f32.mrb[0].mxu0
    %v2592 = vadd.f32 0.0, %v2591
    %v2593 = vpop.f32.mrb[0].mxu0
    %v2594 = vadd.f32 0.0, %v2593
    %v2595 = vpop.f32.mrb[0].mxu0
    %v2596 = vadd.f32 0.0, %v2595
    %2597 = vmatprep.mubr.bf16.mxu0 %v706
    %2598 = vmatmul.mubr.bf16.gmra.mrb[0].mxu0 %v705
    %v2599 = vpop.f32.mrb[0].mxu0
    %v2600 = vadd.f32 0.0, %v2599
    %v2601 = vpop.f32.mrb[0].mxu0
    %v2602 = vadd.f32 0.0, %v2601
    %v2603 = vpop.f32.mrb[0].mxu0
    %v2604 = vadd.f32 0.0, %v2603
    %v2605 = vpop.f32.mrb[0].mxu0
    %v2606 = vadd.f32 0.0, %v2605
    %2607 = vmatprep.mubr.bf16.mxu0 %v711
    %2608 = vmatmul.mubr.bf16.gmra.mrb[0].mxu0 %v710
    %v2609 = vpop.f32.mrb[0].mxu0
    %v2610 = vadd.f32 0.0, %v2609
    %v2611 = vpop.f32.mrb[0].mxu0
    %v2612 = vadd.f32 0.0, %v2611
    %v2613 = vpop.f32.mrb[0].mxu0
    %v2614 = vadd.f32 0.0, %v2613
    %v2615 = vpop.f32.mrb[0].mxu0
    %v2616 = vadd.f32 0.0, %v2615
    %2617 = vmatprep.mubr.bf16.mxu0 %v716
    %2618 = vmatmul.mubr.bf16.gmra.mrb[0].mxu0 %v715
    %v2619 = vpop.f32.mrb[0].mxu0
    %v2620 = vadd.f32 0.0, %v2619
    %v2621 = vpop.f32.mrb[0].mxu0
    %v2622 = vadd.f32 0.0, %v2621
    %v2623 = vpop.f32.mrb[0].mxu0
    %v2624 = vadd.f32 0.0, %v2623
    %v2625 = vpop.f32.mrb[0].mxu0
    %v2626 = vadd.f32 0.0, %v2625
    %2627 = vmatprep.mubr.bf16.mxu0 %v721
    %2628 = vmatmul.mubr.bf16.gmra.mrb[0].mxu0 %v720
    %v2629 = vpop.f32.mrb[0].mxu0
    %v2630 = vadd.f32 0.0, %v2629
    %v2631 = vpop.f32.mrb[0].mxu0
    %v2632 = vadd.f32 0.0, %v2631
    %v2633 = vpop.f32.mrb[0].mxu0
    %v2634 = vadd.f32 0.0, %v2633
    %v2635 = vpop.f32.mrb[0].mxu0
    %v2636 = vadd.f32 0.0, %v2635
    %2637 = vmatprep.mubr.bf16.mxu0 %v726
    %2638 = vmatmul.mubr.bf16.gmra.mrb[0].mxu0 %v725
    %v2639 = vpop.f32.mrb[0].mxu0
    %v2640 = vadd.f32 0.0, %v2639
    %v2641 = vpop.f32.mrb[0].mxu0
    %v2642 = vadd.f32 0.0, %v2641
    %v2643 = vpop.f32.mrb[0].mxu0
    %v2644 = vadd.f32 0.0, %v2643
    %v2645 = vpop.f32.mrb[0].mxu0
    %v2646 = vadd.f32 0.0, %v2645
    %2647 = vmatprep.mubr.bf16.mxu0 %v731
    %2648 = vmatmul.mubr.bf16.gmra.mrb[0].mxu0 %v730
    %v2649 = vpop.f32.mrb[0].mxu0
    %v2650 = vadd.f32 0.0, %v2649
    %v2651 = vpop.f32.mrb[0].mxu0
    %v2652 = vadd.f32 0.0, %v2651
    %v2653 = vpop.f32.mrb[0].mxu0
    %v2654 = vadd.f32 0.0, %v2653
    %v2655 = vpop.f32.mrb[0].mxu0
    %v2656 = vadd.f32 0.0, %v2655
    %2657 = vmatprep.mubr.bf16.mxu0 %v736
    %2658 = vmatmul.mubr.bf16.gmra.mrb[0].mxu0 %v735
    %v2659 = vpop.f32.mrb[0].mxu0
    %v2660 = vadd.f32 0.0, %v2659
    %v2661 = vpop.f32.mrb[0].mxu0
    %v2662 = vadd.f32 0.0, %v2661
    %v2663 = vpop.f32.mrb[0].mxu0
    %v2664 = vadd.f32 0.0, %v2663
    %v2665 = vpop.f32.mrb[0].mxu0
    %v2666 = vadd.f32 0.0, %v2665
    %2667 = vdwg.mxu0
    %2668 = vmatprep.subr.bf16.mxu0 %v1521
    %2669 = vmatpush1.bf16.msra.mxu0 %v1520
    %2670 = vmatprep.subr.bf16.mxu0 %v1527
    %2671 = vmatpush1.bf16.msra.mxu0 %v1526
    %2672 = vmatprep.subr.bf16.mxu0 %v1533
    %2673 = vmatpush1.bf16.msra.mxu0 %v1532
    %2674 = vmatprep.subr.bf16.mxu0 %v1539
    %2675 = vmatpush1.bf16.msra.mxu0 %v1538
    %2676 = vmatprep.subr.bf16.mxu0 %v1545
    %2677 = vmatpush1.bf16.msra.mxu0 %v1544
    %2678 = vmatprep.subr.bf16.mxu0 %v1551
    %2679 = vmatpush1.bf16.msra.mxu0 %v1550
    %2680 = vmatprep.subr.bf16.mxu0 %v1557
    %2681 = vmatpush1.bf16.msra.mxu0 %v1556
    %2682 = vmatprep.subr.bf16.mxu0 %v1563
    %2683 = vmatpush1.bf16.msra.mxu0 %v1562
    %2684 = vmatprep.subr.bf16.mxu0 %v1569
    %2685 = vmatpush1.bf16.msra.mxu0 %v1568
    %2686 = vmatprep.subr.bf16.mxu0 %v1575
    %2687 = vmatpush1.bf16.msra.mxu0 %v1574
    %2688 = vmatprep.subr.bf16.mxu0 %v1581
    %2689 = vmatpush1.bf16.msra.mxu0 %v1580
    %2690 = vmatprep.subr.bf16.mxu0 %v1587
    %2691 = vmatpush1.bf16.msra.mxu0 %v1586
    %2692 = vmatprep.subr.bf16.mxu0 %v1593
    %2693 = vmatpush1.bf16.msra.mxu0 %v1592
    %2694 = vmatprep.subr.bf16.mxu0 %v1599
    %2695 = vmatpush1.bf16.msra.mxu0 %v1598
    %2696 = vmatprep.subr.bf16.mxu0 %v1605
    %2697 = vmatpush1.bf16.msra.mxu0 %v1604
    %2698 = vmatprep.subr.bf16.mxu0 %v1611
    %2699 = vmatpush1.bf16.msra.mxu0 %v1610
    %2700 = vmatprep.mubr.bf16.mxu0 %v703
    %2701 = vmatmul.mubr.bf16.gmra.mrb[0].mxu0 %v702
    %v2702 = vpop.f32.mrb[0].mxu0
    %v2703 = vadd.f32 %v2590, %v2702
    %v2704 = vpop.f32.mrb[0].mxu0
    %v2705 = vadd.f32 %v2592, %v2704
    %v2706 = vpop.f32.mrb[0].mxu0
    %v2707 = vadd.f32 %v2594, %v2706
    %v2708 = vpop.f32.mrb[0].mxu0
    %v2709 = vadd.f32 %v2596, %v2708
    %2710 = vmatprep.mubr.bf16.mxu0 %v708
    %2711 = vmatmul.mubr.bf16.gmra.mrb[0].mxu0 %v707
    %v2712 = vpop.f32.mrb[0].mxu0
    %v2713 = vadd.f32 %v2600, %v2712
    %v2714 = vpop.f32.mrb[0].mxu0
    %v2715 = vadd.f32 %v2602, %v2714
    %v2716 = vpop.f32.mrb[0].mxu0
    %v2717 = vadd.f32 %v2604, %v2716
    %v2718 = vpop.f32.mrb[0].mxu0
    %v2719 = vadd.f32 %v2606, %v2718
    %2720 = vmatprep.mubr.bf16.mxu0 %v713
    %2721 = vmatmul.mubr.bf16.gmra.mrb[0].mxu0 %v712
    %v2722 = vpop.f32.mrb[0].mxu0
    %v2723 = vadd.f32 %v2610, %v2722
    %v2724 = vpop.f32.mrb[0].mxu0
    %v2725 = vadd.f32 %v2612, %v2724
    %v2726 = vpop.f32.mrb[0].mxu0
    %v2727 = vadd.f32 %v2614, %v2726
    %v2728 = vpop.f32.mrb[0].mxu0
    %v2729 = vadd.f32 %v2616, %v2728
    %2730 = vmatprep.mubr.bf16.mxu0 %v718
    %2731 = vmatmul.mubr.bf16.gmra.mrb[0].mxu0 %v717
    %v2732 = vpop.f32.mrb[0].mxu0
    %v2733 = vadd.f32 %v2620, %v2732
    %v2734 = vpop.f32.mrb[0].mxu0
    %v2735 = vadd.f32 %v2622, %v2734
    %v2736 = vpop.f32.mrb[0].mxu0
    %v2737 = vadd.f32 %v2624, %v2736
    %v2738 = vpop.f32.mrb[0].mxu0
    %v2739 = vadd.f32 %v2626, %v2738
    %2740 = vmatprep.mubr.bf16.mxu0 %v723
    %2741 = vmatmul.mubr.bf16.gmra.mrb[0].mxu0 %v722
    %v2742 = vpop.f32.mrb[0].mxu0
    %v2743 = vadd.f32 %v2630, %v2742
    %v2744 = vpop.f32.mrb[0].mxu0
    %v2745 = vadd.f32 %v2632, %v2744
    %v2746 = vpop.f32.mrb[0].mxu0
    %v2747 = vadd.f32 %v2634, %v2746
    %v2748 = vpop.f32.mrb[0].mxu0
    %v2749 = vadd.f32 %v2636, %v2748
    %2750 = vmatprep.mubr.bf16.mxu0 %v728
    %2751 = vmatmul.mubr.bf16.gmra.mrb[0].mxu0 %v727
    %v2752 = vpop.f32.mrb[0].mxu0
    %v2753 = vadd.f32 %v2640, %v2752
    %v2754 = vpop.f32.mrb[0].mxu0
    %v2755 = vadd.f32 %v2642, %v2754
    %v2756 = vpop.f32.mrb[0].mxu0
    %v2757 = vadd.f32 %v2644, %v2756
    %v2758 = vpop.f32.mrb[0].mxu0
    %v2759 = vadd.f32 %v2646, %v2758
    %2760 = vmatprep.mubr.bf16.mxu0 %v733
    %2761 = vmatmul.mubr.bf16.gmra.mrb[0].mxu0 %v732
    %v2762 = vpop.f32.mrb[0].mxu0
    %v2763 = vadd.f32 %v2650, %v2762
    %v2764 = vpop.f32.mrb[0].mxu0
    %v2765 = vadd.f32 %v2652, %v2764
    %v2766 = vpop.f32.mrb[0].mxu0
    %v2767 = vadd.f32 %v2654, %v2766
    %v2768 = vpop.f32.mrb[0].mxu0
    %v2769 = vadd.f32 %v2656, %v2768
    %2770 = vmatprep.mubr.bf16.mxu0 %v738
    %2771 = vmatmul.mubr.bf16.gmra.mrb[0].mxu0 %v737
    %v2772 = vpop.f32.mrb[0].mxu0
    %v2773 = vadd.f32 %v2660, %v2772
    %v2774 = vpop.f32.mrb[0].mxu0
    %v2775 = vadd.f32 %v2662, %v2774
    %v2776 = vpop.f32.mrb[0].mxu0
    %v2777 = vadd.f32 %v2664, %v2776
    %v2778 = vpop.f32.mrb[0].mxu0
    %v2779 = vadd.f32 %v2666, %v2778
    %2780 = vdwg.mxu0
    %2781 = vmatprep.subr.bf16.mxu0 %v1617
    %2782 = vmatpush1.bf16.msra.mxu0 %v1616
    %2783 = vmatprep.subr.bf16.mxu0 %v1623
    %2784 = vmatpush1.bf16.msra.mxu0 %v1622
    %2785 = vmatprep.subr.bf16.mxu0 %v1629
    %2786 = vmatpush1.bf16.msra.mxu0 %v1628
    %2787 = vmatprep.subr.bf16.mxu0 %v1635
    %2788 = vmatpush1.bf16.msra.mxu0 %v1634
    %2789 = vmatprep.subr.bf16.mxu0 0
    %2790 = vmatpush1.bf16.msra.mxu0 0
    %2791 = vmatprep.subr.bf16.mxu0 0
    %2792 = vmatpush1.bf16.msra.mxu0 0
    %2793 = vmatprep.subr.bf16.mxu0 0
    %2794 = vmatpush1.bf16.msra.mxu0 0
    %2795 = vmatprep.subr.bf16.mxu0 0
    %2796 = vmatpush1.bf16.msra.mxu0 0
    %2797 = vmatprep.subr.bf16.mxu0 0
    %2798 = vmatpush1.bf16.msra.mxu0 0
    %2799 = vmatprep.subr.bf16.mxu0 0
    %2800 = vmatpush1.bf16.msra.mxu0 0
    %2801 = vmatprep.subr.bf16.mxu0 0
    %2802 = vmatpush1.bf16.msra.mxu0 0
    %2803 = vmatprep.subr.bf16.mxu0 0
    %2804 = vmatpush1.bf16.msra.mxu0 0
    %2805 = vmatprep.subr.bf16.mxu0 0
    %2806 = vmatpush1.bf16.msra.mxu0 0
    %2807 = vmatprep.subr.bf16.mxu0 0
    %2808 = vmatpush1.bf16.msra.mxu0 0
    %2809 = vmatprep.subr.bf16.mxu0 0
    %2810 = vmatpush1.bf16.msra.mxu0 0
    %2811 = vmatprep.subr.bf16.mxu0 0
    %2812 = vmatpush1.bf16.msra.mxu0 0
    %2813 = vmatprep.mubr.bf16.mxu0 0
    %2814 = vmatmul.mubr.bf16.gmra.mrb[0].mxu0 %v1854
    %v2815 = vpop.f32.mrb[0].mxu0
    %v2816 = vadd.f32 %v2703, %v2815
    %v2817 = vpop.f32.mrb[0].mxu0
    %v2818 = vadd.f32 %v2705, %v2817
    %v2819 = vpop.f32.mrb[0].mxu0
    %v2820 = vadd.f32 %v2707, %v2819
    %v2821 = vpop.f32.mrb[0].mxu0
    %v2822 = vadd.f32 %v2709, %v2821
    %2823 = vmatprep.mubr.bf16.mxu0 0
    %2824 = vmatmul.mubr.bf16.gmra.mrb[0].mxu0 %v1857
    %v2825 = vpop.f32.mrb[0].mxu0
    %v2826 = vadd.f32 %v2713, %v2825
    %v2827 = vpop.f32.mrb[0].mxu0
    %v2828 = vadd.f32 %v2715, %v2827
    %v2829 = vpop.f32.mrb[0].mxu0
    %v2830 = vadd.f32 %v2717, %v2829
    %v2831 = vpop.f32.mrb[0].mxu0
    %v2832 = vadd.f32 %v2719, %v2831
    %2833 = vmatprep.mubr.bf16.mxu0 0
    %2834 = vmatmul.mubr.bf16.gmra.mrb[0].mxu0 %v1860
    %v2835 = vpop.f32.mrb[0].mxu0
    %v2836 = vadd.f32 %v2723, %v2835
    %v2837 = vpop.f32.mrb[0].mxu0
    %v2838 = vadd.f32 %v2725, %v2837
    %v2839 = vpop.f32.mrb[0].mxu0
    %v2840 = vadd.f32 %v2727, %v2839
    %v2841 = vpop.f32.mrb[0].mxu0
    %v2842 = vadd.f32 %v2729, %v2841
    %2843 = vmatprep.mubr.bf16.mxu0 0
    %2844 = vmatmul.mubr.bf16.gmra.mrb[0].mxu0 %v1863
    %v2845 = vpop.f32.mrb[0].mxu0
    %v2846 = vadd.f32 %v2733, %v2845
    %v2847 = vpop.f32.mrb[0].mxu0
    %v2848 = vadd.f32 %v2735, %v2847
    %v2849 = vpop.f32.mrb[0].mxu0
    %v2850 = vadd.f32 %v2737, %v2849
    %v2851 = vpop.f32.mrb[0].mxu0
    %v2852 = vadd.f32 %v2739, %v2851
    %2853 = vmatprep.mubr.bf16.mxu0 0
    %2854 = vmatmul.mubr.bf16.gmra.mrb[0].mxu0 %v1866
    %v2855 = vpop.f32.mrb[0].mxu0
    %v2856 = vadd.f32 %v2743, %v2855
    %v2857 = vpop.f32.mrb[0].mxu0
    %v2858 = vadd.f32 %v2745, %v2857
    %v2859 = vpop.f32.mrb[0].mxu0
    %v2860 = vadd.f32 %v2747, %v2859
    %v2861 = vpop.f32.mrb[0].mxu0
    %v2862 = vadd.f32 %v2749, %v2861
    %2863 = vmatprep.mubr.bf16.mxu0 0
    %2864 = vmatmul.mubr.bf16.gmra.mrb[0].mxu0 %v1869
    %v2865 = vpop.f32.mrb[0].mxu0
    %v2866 = vadd.f32 %v2753, %v2865
    %v2867 = vpop.f32.mrb[0].mxu0
    %v2868 = vadd.f32 %v2755, %v2867
    %v2869 = vpop.f32.mrb[0].mxu0
    %v2870 = vadd.f32 %v2757, %v2869
    %v2871 = vpop.f32.mrb[0].mxu0
    %v2872 = vadd.f32 %v2759, %v2871
    %2873 = vmatprep.mubr.bf16.mxu0 0
    %2874 = vmatmul.mubr.bf16.gmra.mrb[0].mxu0 %v1872
    %v2875 = vpop.f32.mrb[0].mxu0
    %v2876 = vadd.f32 %v2763, %v2875
    %v2877 = vpop.f32.mrb[0].mxu0
    %v2878 = vadd.f32 %v2765, %v2877
    %v2879 = vpop.f32.mrb[0].mxu0
    %v2880 = vadd.f32 %v2767, %v2879
    %v2881 = vpop.f32.mrb[0].mxu0
    %v2882 = vadd.f32 %v2769, %v2881
    %2883 = vmatprep.mubr.bf16.mxu0 0
    %2884 = vmatmul.mubr.bf16.gmra.mrb[0].mxu0 %v1875
    %v2885 = vpop.f32.mrb[0].mxu0
    %v2886 = vadd.f32 %v2773, %v2885
    %v2887 = vpop.f32.mrb[0].mxu0
    %v2888 = vadd.f32 %v2775, %v2887
    %v2889 = vpop.f32.mrb[0].mxu0
    %v2890 = vadd.f32 %v2777, %v2889
    %v2891 = vpop.f32.mrb[0].mxu0
    %v2892 = vadd.f32 %v2779, %v2891
    %2893 = vdwg.mxu0
    %v2897 = vunpack.c.l.b16 %v88
    %v2898 = vunpack.c.h.b16 %v88
    %v2899 = vunpack.c.l.b16 %v89
    %v2900 = vunpack.c.h.b16 %v89
    %v2901 = vunpack.c.l.b16 %v90
    %v2902 = vpack.c.b16 %v620, %v2897
    %v2903 = vpack.c.b16 %v621, %v2898
    %v2904 = vpack.c.b16 %v622, %v2899
    %v2905 = vpack.c.b16 %v623, %v2900
    %v2906 = vpack.c.b16 %v624, %v2901
    %v2907 = vpack.c.b16 %v630, %v625
    %v2908 = vpack.c.b16 %v631, %v626
    %v2909 = vpack.c.b16 %v632, %v627
    %v2910 = vpack.c.b16 %v633, %v628
    %v2911 = vpack.c.b16 %v634, %v629
    %v2912 = vpack.c.b16 %v640, %v635
    %v2913 = vpack.c.b16 %v641, %v636
    %v2914 = vpack.c.b16 %v642, %v637
    %v2915 = vpack.c.b16 %v643, %v638
    %v2916 = vpack.c.b16 %v644, %v639
    %v2917 = vpack.c.b16 %v650, %v645
    %v2918 = vpack.c.b16 %v651, %v646
    %v2919 = vpack.c.b16 %v652, %v647
    %v2920 = vpack.c.b16 %v653, %v648
    %v2921 = vpack.c.b16 %v654, %v649
    %v2922 = vpack.c.b16 %v660, %v655
    %v2923 = vpack.c.b16 %v661, %v656
    %v2924 = vpack.c.b16 %v662, %v657
    %v2925 = vpack.c.b16 %v663, %v658
    %v2926 = vpack.c.b16 %v664, %v659
    %v2927 = vpack.c.b16 %v670, %v665
    %v2928 = vpack.c.b16 %v671, %v666
    %v2929 = vpack.c.b16 %v672, %v667
    %v2930 = vpack.c.b16 %v673, %v668
    %v2931 = vpack.c.b16 %v674, %v669
    %v2932 = vpack.c.b16 %v680, %v675
    %v2933 = vpack.c.b16 %v681, %v676
    %v2934 = vpack.c.b16 %v682, %v677
    %v2935 = vpack.c.b16 %v683, %v678
    %v2936 = vpack.c.b16 %v684, %v679
    %v2937 = vpack.c.b16 %v690, %v685
    %v2938 = vpack.c.b16 %v691, %v686
    %v2939 = vpack.c.b16 %v692, %v687
    %v2940 = vpack.c.b16 %v693, %v688
    %v2941 = vpack.c.b16 %v694, %v689
    %v3190 = vunpack.c.l.b16 %v139
    %v3191 = vunpack.c.h.b16 %v139
    %v3192 = vunpack.c.l.b16 %v140
    %v3193 = vunpack.c.h.b16 %v140
    %v3194 = vunpack.c.l.b16 %v141
    %v3195 = vunpack.c.h.b16 %v141
    %v3196 = vunpack.c.l.b16 %v142
    %v3197 = vunpack.c.h.b16 %v142
    %v3198 = vunpack.c.l.b16 %v143
    %v3199 = vunpack.c.h.b16 %v143
    %v3200 = vunpack.c.l.b16 %v144
    %v3201 = vunpack.c.h.b16 %v144
    %v3202 = vunpack.c.l.b16 %v145
    %v3203 = vunpack.c.h.b16 %v145
    %v3204 = vunpack.c.l.b16 %v146
    %v3205 = vunpack.c.h.b16 %v146
    %v3206 = vunpack.c.l.b16 %v147
    %v3207 = vunpack.c.h.b16 %v147
    %v3208 = vunpack.c.l.b16 %v148
    %v3209 = vunpack.c.h.b16 %v148
    %v3210 = vunpack.c.l.b16 %v149
    %v3211 = vunpack.c.h.b16 %v149
    %v3212 = vunpack.c.l.b16 %v150
    %v3213 = vunpack.c.h.b16 %v150
    %v3214 = vunpack.c.l.b16 %v151
    %v3215 = vunpack.c.h.b16 %v151
    %v3216 = vunpack.c.l.b16 %v152
    %v3217 = vunpack.c.h.b16 %v152
    %v3218 = vunpack.c.l.b16 %v153
    %v3219 = vunpack.c.h.b16 %v153
    %v3220 = vunpack.c.l.b16 %v154
    %v3221 = vunpack.c.h.b16 %v154
    %v3222 = vunpack.c.l.b16 %v155
    %v3223 = vunpack.c.h.b16 %v155
    %v3224 = vunpack.c.l.b16 %v156
    %v3225 = vunpack.c.h.b16 %v156
    %v3226 = vunpack.c.l.b16 %v157
    %v3227 = vunpack.c.h.b16 %v157
    %v3228 = vunpack.c.l.b16 %v158
    %v3229 = vunpack.c.h.b16 %v158
    %v3230 = vunpack.c.l.b16 %v159
    %v3231 = vunpack.c.h.b16 %v159
    %v3232 = vunpack.c.l.b16 %v160
    %v3233 = vunpack.c.h.b16 %v160
    %v3234 = vunpack.c.l.b16 %v161
    %v3235 = vunpack.c.h.b16 %v161
    %v3236 = vunpack.c.l.b16 %v162
    %v3237 = vunpack.c.h.b16 %v162
    %v3238 = vunpack.c.l.b16 %v163
    %v3239 = vunpack.c.h.b16 %v163
    %v3240 = vunpack.c.l.b16 %v164
    %v3241 = vunpack.c.h.b16 %v164
    %v3242 = vunpack.c.l.b16 %v165
    %v3243 = vunpack.c.h.b16 %v165
    %v3244 = vunpack.c.l.b16 %v166
    %v3245 = vunpack.c.h.b16 %v166
    %v3246 = vunpack.c.l.b16 %v167
    %v3247 = vunpack.c.h.b16 %v167
    %v3248 = vunpack.c.l.b16 %v168
    %v3249 = vunpack.c.h.b16 %v168
    %v3250 = vunpack.c.l.b16 %v169
    %v3251 = vunpack.c.h.b16 %v169
    %v3252 = vunpack.c.l.b16 %v170
    %v3253 = vunpack.c.h.b16 %v170
    %v3254 = vunpack.c.l.b16 %v171
    %v3255 = vunpack.c.h.b16 %v171
    %v3256 = vunpack.c.l.b16 %v172
    %v3257 = vunpack.c.h.b16 %v172
    %v3258 = vunpack.c.l.b16 %v173
    %v3259 = vunpack.c.h.b16 %v173
    %v3260 = vunpack.c.l.b16 %v174
    %v3261 = vunpack.c.h.b16 %v174
    %v3262 = vunpack.c.l.b16 %v175
    %v3263 = vunpack.c.h.b16 %v175
    %v3264 = vunpack.c.l.b16 %v176
    %v3265 = vunpack.c.h.b16 %v176
    %v3266 = vunpack.c.l.b16 %v177
    %v3267 = vunpack.c.h.b16 %v177
    %v3268 = vunpack.c.l.b16 %v178
    %v3269 = vunpack.c.h.b16 %v178
    %v3270 = vunpack.c.l.b16 %v179
    %v3271 = vunpack.c.h.b16 %v179
    %v3272 = vunpack.c.l.b16 %v180
    %v3273 = vunpack.c.h.b16 %v180
    %v3274 = vunpack.c.l.b16 %v181
    %v3275 = vunpack.c.h.b16 %v181
    %v3276 = vunpack.c.l.b16 %v182
    %v3277 = vunpack.c.h.b16 %v182
    %v3278 = vunpack.c.l.b16 %v183
    %v3279 = vunpack.c.h.b16 %v183
    %v3280 = vunpack.c.l.b16 %v184
    %v3281 = vunpack.c.h.b16 %v184
    %v3282 = vunpack.c.l.b16 %v185
    %v3283 = vunpack.c.h.b16 %v185
    %v3284 = vunpack.c.l.b16 %v186
    %v3285 = vunpack.c.h.b16 %v186
    %v3286 = vunpack.c.l.b16 %v187
    %v3287 = vunpack.c.h.b16 %v187
    %v3288 = vunpack.c.l.b16 %v188
    %v3289 = vunpack.c.h.b16 %v188
    %v3290 = vunpack.c.l.b16 %v189
    %v3291 = vunpack.c.h.b16 %v189
    %v3292 = vunpack.c.l.b16 %v190
    %v3293 = vunpack.c.h.b16 %v190
    %v3294 = vunpack.c.l.b16 %v191
    %v3295 = vunpack.c.h.b16 %v191
    %v3296 = vunpack.c.l.b16 %v192
    %v3297 = vunpack.c.h.b16 %v192
    %v3298 = vunpack.c.l.b16 %v193
    %v3299 = vunpack.c.h.b16 %v193
    %v3300 = vunpack.c.l.b16 %v194
    %v3301 = vunpack.c.h.b16 %v194
    %v3302 = vunpack.c.l.b16 %v195
    %v3303 = vunpack.c.h.b16 %v195
    %v3304 = vunpack.c.l.b16 %v196
    %v3305 = vunpack.c.h.b16 %v196
    %v3306 = vunpack.c.l.b16 %v197
    %v3307 = vunpack.c.h.b16 %v197
    %v3308 = vunpack.c.l.b16 %v198
    %v3309 = vunpack.c.h.b16 %v198
    %v3310 = vunpack.c.l.b16 %v199
    %v3311 = vunpack.c.h.b16 %v199
    %v3312 = vunpack.c.l.b16 %v200
    %v3313 = vunpack.c.h.b16 %v200
    %v3314 = vunpack.c.l.b16 %v201
    %v3315 = vunpack.c.h.b16 %v201
    %v3316 = vunpack.c.l.b16 %v202
    %v3317 = vunpack.c.h.b16 %v202
    %v3318 = vunpack.c.l.b16 %v203
    %v3319 = vunpack.c.h.b16 %v203
    %v3320 = vunpack.c.l.b16 %v204
    %v3321 = vunpack.c.h.b16 %v204
    %v3322 = vunpack.c.l.b16 %v205
    %v3323 = vunpack.c.h.b16 %v205
    %v3324 = vunpack.c.l.b16 %v206
    %v3325 = vunpack.c.h.b16 %v206
    %v3326 = vunpack.c.l.b16 %v207
    %v3327 = vunpack.c.h.b16 %v207
    %v3328 = vunpack.c.l.b16 %v208
    %v3329 = vunpack.c.h.b16 %v208
    %v3330 = vunpack.c.l.b16 %v209
    %v3331 = vunpack.c.h.b16 %v209
    %v3332 = vunpack.c.l.b16 %v210
    %v3333 = vunpack.c.h.b16 %v210
    %v3334 = vunpack.c.l.b16 %v211
    %v3335 = vunpack.c.h.b16 %v211
    %v3336 = vunpack.c.l.b16 %v212
    %v3337 = vunpack.c.h.b16 %v212
    %v3338 = vunpack.c.l.b16 %v213
    %v3339 = vunpack.c.h.b16 %v213
    %v3340 = vunpack.c.l.b16 %v214
    %v3341 = vunpack.c.h.b16 %v214
    %v3342 = vunpack.c.l.b16 %v215
    %v3343 = vunpack.c.h.b16 %v215
    %v3344 = vunpack.c.l.b16 %v216
    %v3345 = vunpack.c.h.b16 %v216
    %v3346 = vunpack.c.l.b16 %v217
    %v3347 = vunpack.c.h.b16 %v217
    %v3348 = vunpack.c.l.b16 %v218
    %v3349 = vunpack.c.h.b16 %v218
    %v3350 = vunpack.c.l.b16 %v219
    %v3351 = vunpack.c.h.b16 %v219
    %v3352 = vunpack.c.l.b16 %v220
    %v3353 = vunpack.c.h.b16 %v220
    %v3354 = vunpack.c.l.b16 %v221
    %v3355 = vunpack.c.h.b16 %v221
    %v3356 = vunpack.c.l.b16 %v222
    %v3357 = vunpack.c.h.b16 %v222
    %v3358 = vunpack.c.l.b16 %v223
    %v3359 = vunpack.c.h.b16 %v223
    %v3360 = vunpack.c.l.b16 %v224
    %v3361 = vunpack.c.h.b16 %v224
    %v3362 = vunpack.c.l.b16 %v225
    %v3363 = vunpack.c.h.b16 %v225
    %v3364 = vunpack.c.l.b16 %v226
    %v3365 = vunpack.c.h.b16 %v226
    %v3366 = vunpack.c.l.b16 %v227
    %v3367 = vunpack.c.h.b16 %v227
    %v3368 = vunpack.c.l.b16 %v228
    %v3369 = vunpack.c.h.b16 %v228
    %v3370 = vunpack.c.l.b16 %v229
    %v3371 = vunpack.c.h.b16 %v229
    %v3372 = vunpack.c.l.b16 %v230
    %v3373 = vunpack.c.h.b16 %v230
    %v3374 = vunpack.c.l.b16 %v231
    %v3375 = vunpack.c.h.b16 %v231
    %v3376 = vunpack.c.l.b16 %v232
    %v3377 = vunpack.c.h.b16 %v232
    %v3378 = vunpack.c.l.b16 %v233
    %v3379 = vunpack.c.h.b16 %v233
    %v3380 = vunpack.c.l.b16 %v234
    %v3381 = vunpack.c.h.b16 %v234
    %v3382 = vunpack.c.l.b16 %v235
    %v3383 = vunpack.c.h.b16 %v235
    %v3384 = vunpack.c.l.b16 %v236
    %v3385 = vunpack.c.h.b16 %v236
    %v3386 = vunpack.c.l.b16 %v237
    %v3387 = vunpack.c.h.b16 %v237
    %v3388 = vunpack.c.l.b16 %v238
    %v3389 = vunpack.c.h.b16 %v238
    %v3390 = vunpack.c.l.b16 %v239
    %v3391 = vunpack.c.h.b16 %v239
    %v3392 = vunpack.c.l.b16 %v240
    %v3393 = vunpack.c.h.b16 %v240
    %v3394 = vunpack.c.l.b16 %v241
    %v3395 = vunpack.c.h.b16 %v241
    %v3396 = vunpack.c.l.b16 %v242
    %v3397 = vunpack.c.h.b16 %v242
    %v3398 = vunpack.c.l.b16 %v243
    %v3399 = vunpack.c.h.b16 %v243
    %v3400 = vunpack.c.l.b16 %v244
    %v3401 = vunpack.c.h.b16 %v244
    %v3402 = vunpack.c.l.b16 %v245
    %v3403 = vunpack.c.h.b16 %v245
    %v3404 = vunpack.c.l.b16 %v246
    %v3405 = vunpack.c.h.b16 %v246
    %v3406 = vunpack.c.l.b16 %v247
    %v3407 = vunpack.c.h.b16 %v247
    %v3408 = vunpack.c.l.b16 %v248
    %v3409 = vunpack.c.h.b16 %v248
    %v3410 = vunpack.c.l.b16 %v249
    %v3411 = vunpack.c.h.b16 %v249
    %v3412 = vunpack.c.l.b16 %v250
    %v3413 = vunpack.c.h.b16 %v250
    %v3414 = vunpack.c.l.b16 %v251
    %v3415 = vunpack.c.h.b16 %v251
    %v3416 = vunpack.c.l.b16 %v252
    %v3417 = vunpack.c.h.b16 %v252
    %v3418 = vunpack.c.l.b16 %v253
    %v3419 = vunpack.c.h.b16 %v253
    %v3420 = vunpack.c.l.b16 %v254
    %v3421 = vunpack.c.h.b16 %v254
    %v3422 = vunpack.c.l.b16 %v255
    %v3423 = vunpack.c.h.b16 %v255
    %v3424 = vunpack.c.l.b16 %v256
    %v3425 = vunpack.c.h.b16 %v256
    %v3426 = vunpack.c.l.b16 %v257
    %v3427 = vunpack.c.h.b16 %v257
    %v3428 = vunpack.c.l.b16 %v258
    %v3429 = vunpack.c.h.b16 %v258
    %v3430 = vunpack.c.l.b16 %v259
    %v3431 = vunpack.c.h.b16 %v259
    %v3432 = vunpack.c.l.b16 %v260
    %v3433 = vunpack.c.h.b16 %v260
    %v3434 = vunpack.c.l.b16 %v261
    %v3435 = vunpack.c.h.b16 %v261
    %v3436 = vunpack.c.l.b16 %v262
    %v3437 = vunpack.c.h.b16 %v262
    %v3438 = vunpack.c.l.b16 %v263
    %v3439 = vunpack.c.h.b16 %v263
    %v3440 = vunpack.c.l.b16 %v264
    %v3441 = vunpack.c.h.b16 %v264
    %v3442 = vunpack.c.l.b16 %v265
    %v3443 = vunpack.c.h.b16 %v265
    %v3444 = vunpack.c.l.b16 %v266
    %v3445 = vunpack.c.h.b16 %v266
    %v3446 = vunpack.c.l.b16 %v267
    %v3447 = vunpack.c.h.b16 %v267
    %v3448 = vunpack.c.l.b16 %v268
    %v3449 = vunpack.c.h.b16 %v268
    %v3450 = vunpack.c.l.b16 %v269
    %v3451 = vunpack.c.h.b16 %v269
    %v3452 = vunpack.c.l.b16 %v270
    %v3453 = vunpack.c.h.b16 %v270
    %v3454 = vunpack.c.l.b16 %v271
    %v3455 = vunpack.c.h.b16 %v271
    %v3456 = vunpack.c.l.b16 %v272
    %v3457 = vunpack.c.h.b16 %v272
    %v3458 = vunpack.c.l.b16 %v273
    %v3459 = vunpack.c.h.b16 %v273
    %v3460 = vunpack.c.l.b16 %v274
    %v3461 = vunpack.c.h.b16 %v274
    %v3462 = vunpack.c.l.b16 %v275
    %v3463 = vunpack.c.h.b16 %v275
    %v3464 = vunpack.c.l.b16 %v276
    %v3465 = vunpack.c.h.b16 %v276
    %v3466 = vunpack.c.l.b16 %v277
    %v3467 = vunpack.c.h.b16 %v277
    %v3468 = vunpack.c.l.b16 %v278
    %v3469 = vunpack.c.h.b16 %v278
    %v3470 = vunpack.c.l.b16 %v279
    %v3471 = vunpack.c.h.b16 %v279
    %v3472 = vunpack.c.l.b16 %v280
    %v3473 = vunpack.c.h.b16 %v280
    %v3474 = vunpack.c.l.b16 %v281
    %v3475 = vunpack.c.h.b16 %v281
    %v3476 = vunpack.c.l.b16 %v282
    %v3477 = vunpack.c.h.b16 %v282
    %v3478 = vunpack.c.l.b16 %v283
    %v3479 = vunpack.c.h.b16 %v283
    %v3480 = vunpack.c.l.b16 %v284
    %v3481 = vunpack.c.h.b16 %v284
    %v3482 = vunpack.c.l.b16 %v285
    %v3483 = vunpack.c.h.b16 %v285
    %v3484 = vunpack.c.l.b16 %v286
    %v3485 = vunpack.c.h.b16 %v286
    %v3486 = vunpack.c.l.b16 %v287
    %v3487 = vunpack.c.h.b16 %v287
    %v3488 = vunpack.c.l.b16 %v288
    %v3489 = vunpack.c.h.b16 %v288
    %v3490 = vunpack.c.l.b16 %v289
    %v3491 = vunpack.c.h.b16 %v289
    %v3492 = vunpack.c.l.b16 %v290
    %v3493 = vunpack.c.h.b16 %v290
    %v3494 = vunpack.c.l.b16 %v291
    %v3495 = vunpack.c.h.b16 %v291
    %v3496 = vunpack.c.l.b16 %v292
    %v3497 = vunpack.c.h.b16 %v292
    %v3498 = vunpack.c.l.b16 %v293
    %v3499 = vunpack.c.h.b16 %v293
    %v3500 = vunpack.c.l.b16 %v294
    %v3501 = vunpack.c.h.b16 %v294
    %v3502 = vunpack.c.l.b16 %v295
    %v3503 = vunpack.c.h.b16 %v295
    %v3504 = vunpack.c.l.b16 %v296
    %v3505 = vunpack.c.h.b16 %v296
    %v3506 = vunpack.c.l.b16 %v297
    %v3507 = vunpack.c.h.b16 %v297
    %v3508 = vunpack.c.l.b16 %v298
    %v3509 = vunpack.c.h.b16 %v298
    %v3510 = vunpack.c.l.b16 %v299
    %v3511 = vunpack.c.h.b16 %v299
    %v3512 = vunpack.c.l.b16 %v300
    %v3513 = vunpack.c.h.b16 %v300
    %v3514 = vunpack.c.l.b16 %v301
    %v3515 = vunpack.c.h.b16 %v301
    %v3516 = vunpack.c.l.b16 %v302
    %v3517 = vunpack.c.h.b16 %v302
    %v3518 = vunpack.c.l.b16 %v303
    %v3519 = vunpack.c.h.b16 %v303
    %v3520 = vunpack.c.l.b16 %v304
    %v3521 = vunpack.c.h.b16 %v304
    %v3522 = vunpack.c.l.b16 %v305
    %v3523 = vunpack.c.h.b16 %v305
    %v3524 = vunpack.c.l.b16 %v306
    %v3525 = vunpack.c.h.b16 %v306
    %v3526 = vunpack.c.l.b16 %v307
    %v3527 = vunpack.c.h.b16 %v307
    %v3528 = vunpack.c.l.b16 %v308
    %v3529 = vunpack.c.h.b16 %v308
    %v3530 = vunpack.c.l.b16 %v309
    %v3531 = vunpack.c.h.b16 %v309
    %v3532 = vunpack.c.l.b16 %v310
    %v3533 = vunpack.c.h.b16 %v310
    %v3534 = vunpack.c.l.b16 %v311
    %v3535 = vunpack.c.h.b16 %v311
    %v3536 = vunpack.c.l.b16 %v312
    %v3537 = vunpack.c.h.b16 %v312
    %v3538 = vunpack.c.l.b16 %v313
    %v3539 = vunpack.c.h.b16 %v313
    %v3540 = vunpack.c.l.b16 %v314
    %v3541 = vunpack.c.h.b16 %v314
    %v3542 = vunpack.c.l.b16 %v315
    %v3543 = vunpack.c.h.b16 %v315
    %v3544 = vunpack.c.l.b16 %v316
    %v3545 = vunpack.c.h.b16 %v316
    %v3546 = vunpack.c.l.b16 %v317
    %v3547 = vunpack.c.h.b16 %v317
    %v3548 = vunpack.c.l.b16 %v318
    %v3549 = vunpack.c.h.b16 %v318
    %v3550 = vunpack.c.l.b16 %v319
    %v3551 = vunpack.c.h.b16 %v319
    %v3552 = vunpack.c.l.b16 %v320
    %v3553 = vunpack.c.h.b16 %v320
    %v3554 = vunpack.c.l.b16 %v321
    %v3555 = vunpack.c.h.b16 %v321
    %v3556 = vunpack.c.l.b16 %v322
    %v3557 = vunpack.c.h.b16 %v322
    %v3558 = vunpack.c.l.b16 %v323
    %v3559 = vunpack.c.h.b16 %v323
    %v3560 = vunpack.c.l.b16 %v324
    %v3561 = vunpack.c.h.b16 %v324
    %v3562 = vunpack.c.l.b16 %v325
    %v3563 = vunpack.c.h.b16 %v325
    %v3564 = vunpack.c.l.b16 %v326
    %v3565 = vunpack.c.h.b16 %v326
    %v3566 = vunpack.c.l.b16 %v327
    %v3567 = vunpack.c.h.b16 %v327
    %v3568 = vunpack.c.l.b16 %v328
    %v3569 = vunpack.c.h.b16 %v328
    %v3570 = vunpack.c.l.b16 %v329
    %v3571 = vunpack.c.h.b16 %v329
    %v3572 = vunpack.c.l.b16 %v330
    %v3573 = vunpack.c.h.b16 %v330
    %v3574 = vunpack.c.l.b16 %v331
    %v3575 = vunpack.c.h.b16 %v331
    %v3576 = vunpack.c.l.b16 %v332
    %v3577 = vunpack.c.h.b16 %v332
    %v3578 = vunpack.c.l.b16 %v333
    %v3579 = vunpack.c.h.b16 %v333
    %v3580 = vunpack.c.l.b16 %v334
    %v3581 = vunpack.c.h.b16 %v334
    %v3582 = vunpack.c.l.b16 %v335
    %v3583 = vunpack.c.h.b16 %v335
    %v3584 = vunpack.c.l.b16 %v336
    %v3585 = vunpack.c.h.b16 %v336
    %v3586 = vunpack.c.l.b16 %v337
    %v3587 = vunpack.c.h.b16 %v337
    %v3588 = vunpack.c.l.b16 %v338
    %v3589 = vunpack.c.h.b16 %v338
    %v3590 = vunpack.c.l.b16 %v339
    %v3591 = vunpack.c.h.b16 %v339
    %v3592 = vunpack.c.l.b16 %v340
    %v3593 = vunpack.c.h.b16 %v340
    %v3594 = vunpack.c.l.b16 %v341
    %v3595 = vunpack.c.h.b16 %v341
    %v3596 = vunpack.c.l.b16 %v342
    %v3597 = vunpack.c.h.b16 %v342
    %v3598 = vunpack.c.l.b16 %v343
    %v3599 = vunpack.c.h.b16 %v343
    %v3600 = vunpack.c.l.b16 %v344
    %v3601 = vunpack.c.h.b16 %v344
    %v3602 = vunpack.c.l.b16 %v345
    %v3603 = vunpack.c.h.b16 %v345
    %v3604 = vunpack.c.l.b16 %v346
    %v3605 = vunpack.c.h.b16 %v346
    %v3606 = vunpack.c.l.b16 %v347
    %v3607 = vunpack.c.h.b16 %v347
    %v3608 = vunpack.c.l.b16 %v348
    %v3609 = vunpack.c.h.b16 %v348
    %v3610 = vunpack.c.l.b16 %v349
    %v3611 = vunpack.c.h.b16 %v349
    %v3612 = vunpack.c.l.b16 %v350
    %v3613 = vunpack.c.h.b16 %v350
    %v3614 = vunpack.c.l.b16 %v351
    %v3615 = vunpack.c.h.b16 %v351
    %v3616 = vunpack.c.l.b16 %v352
    %v3617 = vunpack.c.h.b16 %v352
    %v3618 = vunpack.c.l.b16 %v353
    %v3619 = vunpack.c.h.b16 %v353
    %v3620 = vunpack.c.l.b16 %v354
    %v3621 = vunpack.c.h.b16 %v354
    %v3622 = vpack.c.b16 %v3196, %v3190
    %v3623 = vpack.c.b16 %v3197, %v3191
    %v3624 = vpack.c.b16 %v3198, %v3192
    %v3625 = vpack.c.b16 %v3199, %v3193
    %v3626 = vpack.c.b16 %v3200, %v3194
    %v3627 = vpack.c.b16 %v3201, %v3195
    %v3628 = vpack.c.b16 %v3208, %v3202
    %v3629 = vpack.c.b16 %v3209, %v3203
    %v3630 = vpack.c.b16 %v3210, %v3204
    %v3631 = vpack.c.b16 %v3211, %v3205
    %v3632 = vpack.c.b16 %v3212, %v3206
    %v3633 = vpack.c.b16 %v3213, %v3207
    %v3634 = vpack.c.b16 %v3220, %v3214
    %v3635 = vpack.c.b16 %v3221, %v3215
    %v3636 = vpack.c.b16 %v3222, %v3216
    %v3637 = vpack.c.b16 %v3223, %v3217
    %v3638 = vpack.c.b16 %v3224, %v3218
    %v3639 = vpack.c.b16 %v3225, %v3219
    %v3640 = vpack.c.b16 %v3232, %v3226
    %v3641 = vpack.c.b16 %v3233, %v3227
    %v3642 = vpack.c.b16 %v3234, %v3228
    %v3643 = vpack.c.b16 %v3235, %v3229
    %v3644 = vpack.c.b16 %v3236, %v3230
    %v3645 = vpack.c.b16 %v3237, %v3231
    %v3646 = vpack.c.b16 %v3244, %v3238
    %v3647 = vpack.c.b16 %v3245, %v3239
    %v3648 = vpack.c.b16 %v3246, %v3240
    %v3649 = vpack.c.b16 %v3247, %v3241
    %v3650 = vpack.c.b16 %v3248, %v3242
    %v3651 = vpack.c.b16 %v3249, %v3243
    %v3652 = vpack.c.b16 %v3256, %v3250
    %v3653 = vpack.c.b16 %v3257, %v3251
    %v3654 = vpack.c.b16 %v3258, %v3252
    %v3655 = vpack.c.b16 %v3259, %v3253
    %v3656 = vpack.c.b16 %v3260, %v3254
    %v3657 = vpack.c.b16 %v3261, %v3255
    %v3658 = vpack.c.b16 %v3268, %v3262
    %v3659 = vpack.c.b16 %v3269, %v3263
    %v3660 = vpack.c.b16 %v3270, %v3264
    %v3661 = vpack.c.b16 %v3271, %v3265
    %v3662 = vpack.c.b16 %v3272, %v3266
    %v3663 = vpack.c.b16 %v3273, %v3267
    %v3664 = vpack.c.b16 %v3280, %v3274
    %v3665 = vpack.c.b16 %v3281, %v3275
    %v3666 = vpack.c.b16 %v3282, %v3276
    %v3667 = vpack.c.b16 %v3283, %v3277
    %v3668 = vpack.c.b16 %v3284, %v3278
    %v3669 = vpack.c.b16 %v3285, %v3279
    %v3670 = vpack.c.b16 %v3292, %v3286
    %v3671 = vpack.c.b16 %v3293, %v3287
    %v3672 = vpack.c.b16 %v3294, %v3288
    %v3673 = vpack.c.b16 %v3295, %v3289
    %v3674 = vpack.c.b16 %v3296, %v3290
    %v3675 = vpack.c.b16 %v3297, %v3291
    %v3676 = vpack.c.b16 %v3304, %v3298
    %v3677 = vpack.c.b16 %v3305, %v3299
    %v3678 = vpack.c.b16 %v3306, %v3300
    %v3679 = vpack.c.b16 %v3307, %v3301
    %v3680 = vpack.c.b16 %v3308, %v3302
    %v3681 = vpack.c.b16 %v3309, %v3303
    %v3682 = vpack.c.b16 %v3316, %v3310
    %v3683 = vpack.c.b16 %v3317, %v3311
    %v3684 = vpack.c.b16 %v3318, %v3312
    %v3685 = vpack.c.b16 %v3319, %v3313
    %v3686 = vpack.c.b16 %v3320, %v3314
    %v3687 = vpack.c.b16 %v3321, %v3315
    %v3688 = vpack.c.b16 %v3328, %v3322
    %v3689 = vpack.c.b16 %v3329, %v3323
    %v3690 = vpack.c.b16 %v3330, %v3324
    %v3691 = vpack.c.b16 %v3331, %v3325
    %v3692 = vpack.c.b16 %v3332, %v3326
    %v3693 = vpack.c.b16 %v3333, %v3327
    %v3694 = vpack.c.b16 %v3340, %v3334
    %v3695 = vpack.c.b16 %v3341, %v3335
    %v3696 = vpack.c.b16 %v3342, %v3336
    %v3697 = vpack.c.b16 %v3343, %v3337
    %v3698 = vpack.c.b16 %v3344, %v3338
    %v3699 = vpack.c.b16 %v3345, %v3339
    %v3700 = vpack.c.b16 %v3352, %v3346
    %v3701 = vpack.c.b16 %v3353, %v3347
    %v3702 = vpack.c.b16 %v3354, %v3348
    %v3703 = vpack.c.b16 %v3355, %v3349
    %v3704 = vpack.c.b16 %v3356, %v3350
    %v3705 = vpack.c.b16 %v3357, %v3351
    %v3706 = vpack.c.b16 %v3364, %v3358
    %v3707 = vpack.c.b16 %v3365, %v3359
    %v3708 = vpack.c.b16 %v3366, %v3360
    %v3709 = vpack.c.b16 %v3367, %v3361
    %v3710 = vpack.c.b16 %v3368, %v3362
    %v3711 = vpack.c.b16 %v3369, %v3363
    %v3712 = vpack.c.b16 %v3376, %v3370
    %v3713 = vpack.c.b16 %v3377, %v3371
    %v3714 = vpack.c.b16 %v3378, %v3372
    %v3715 = vpack.c.b16 %v3379, %v3373
    %v3716 = vpack.c.b16 %v3380, %v3374
    %v3717 = vpack.c.b16 %v3381, %v3375
    %v3718 = vpack.c.b16 %v3388, %v3382
    %v3719 = vpack.c.b16 %v3389, %v3383
    %v3720 = vpack.c.b16 %v3390, %v3384
    %v3721 = vpack.c.b16 %v3391, %v3385
    %v3722 = vpack.c.b16 %v3392, %v3386
    %v3723 = vpack.c.b16 %v3393, %v3387
    %v3724 = vpack.c.b16 %v3400, %v3394
    %v3725 = vpack.c.b16 %v3401, %v3395
    %v3726 = vpack.c.b16 %v3402, %v3396
    %v3727 = vpack.c.b16 %v3403, %v3397
    %v3728 = vpack.c.b16 %v3404, %v3398
    %v3729 = vpack.c.b16 %v3405, %v3399
    %v3730 = vpack.c.b16 %v3412, %v3406
    %v3731 = vpack.c.b16 %v3413, %v3407
    %v3732 = vpack.c.b16 %v3414, %v3408
    %v3733 = vpack.c.b16 %v3415, %v3409
    %v3734 = vpack.c.b16 %v3416, %v3410
    %v3735 = vpack.c.b16 %v3417, %v3411
    %v3736 = vpack.c.b16 %v3424, %v3418
    %v3737 = vpack.c.b16 %v3425, %v3419
    %v3738 = vpack.c.b16 %v3426, %v3420
    %v3739 = vpack.c.b16 %v3427, %v3421
    %v3740 = vpack.c.b16 %v3428, %v3422
    %v3741 = vpack.c.b16 %v3429, %v3423
    %v3742 = vpack.c.b16 %v3436, %v3430
    %v3743 = vpack.c.b16 %v3437, %v3431
    %v3744 = vpack.c.b16 %v3438, %v3432
    %v3745 = vpack.c.b16 %v3439, %v3433
    %v3746 = vpack.c.b16 %v3440, %v3434
    %v3747 = vpack.c.b16 %v3441, %v3435
    %v3748 = vpack.c.b16 %v3448, %v3442
    %v3749 = vpack.c.b16 %v3449, %v3443
    %v3750 = vpack.c.b16 %v3450, %v3444
    %v3751 = vpack.c.b16 %v3451, %v3445
    %v3752 = vpack.c.b16 %v3452, %v3446
    %v3753 = vpack.c.b16 %v3453, %v3447
    %v3754 = vpack.c.b16 %v3460, %v3454
    %v3755 = vpack.c.b16 %v3461, %v3455
    %v3756 = vpack.c.b16 %v3462, %v3456
    %v3757 = vpack.c.b16 %v3463, %v3457
    %v3758 = vpack.c.b16 %v3464, %v3458
    %v3759 = vpack.c.b16 %v3465, %v3459
    %v3760 = vpack.c.b16 %v3472, %v3466
    %v3761 = vpack.c.b16 %v3473, %v3467
    %v3762 = vpack.c.b16 %v3474, %v3468
    %v3763 = vpack.c.b16 %v3475, %v3469
    %v3764 = vpack.c.b16 %v3476, %v3470
    %v3765 = vpack.c.b16 %v3477, %v3471
    %v3766 = vpack.c.b16 %v3484, %v3478
    %v3767 = vpack.c.b16 %v3485, %v3479
    %v3768 = vpack.c.b16 %v3486, %v3480
    %v3769 = vpack.c.b16 %v3487, %v3481
    %v3770 = vpack.c.b16 %v3488, %v3482
    %v3771 = vpack.c.b16 %v3489, %v3483
    %v3772 = vpack.c.b16 %v3496, %v3490
    %v3773 = vpack.c.b16 %v3497, %v3491
    %v3774 = vpack.c.b16 %v3498, %v3492
    %v3775 = vpack.c.b16 %v3499, %v3493
    %v3776 = vpack.c.b16 %v3500, %v3494
    %v3777 = vpack.c.b16 %v3501, %v3495
    %v3778 = vpack.c.b16 %v3508, %v3502
    %v3779 = vpack.c.b16 %v3509, %v3503
    %v3780 = vpack.c.b16 %v3510, %v3504
    %v3781 = vpack.c.b16 %v3511, %v3505
    %v3782 = vpack.c.b16 %v3512, %v3506
    %v3783 = vpack.c.b16 %v3513, %v3507
    %v3784 = vpack.c.b16 %v3520, %v3514
    %v3785 = vpack.c.b16 %v3521, %v3515
    %v3786 = vpack.c.b16 %v3522, %v3516
    %v3787 = vpack.c.b16 %v3523, %v3517
    %v3788 = vpack.c.b16 %v3524, %v3518
    %v3789 = vpack.c.b16 %v3525, %v3519
    %v3790 = vpack.c.b16 %v3532, %v3526
    %v3791 = vpack.c.b16 %v3533, %v3527
    %v3792 = vpack.c.b16 %v3534, %v3528
    %v3793 = vpack.c.b16 %v3535, %v3529
    %v3794 = vpack.c.b16 %v3536, %v3530
    %v3795 = vpack.c.b16 %v3537, %v3531
    %v3796 = vpack.c.b16 %v3544, %v3538
    %v3797 = vpack.c.b16 %v3545, %v3539
    %v3798 = vpack.c.b16 %v3546, %v3540
    %v3799 = vpack.c.b16 %v3547, %v3541
    %v3800 = vpack.c.b16 %v3548, %v3542
    %v3801 = vpack.c.b16 %v3549, %v3543
    %v3802 = vpack.c.b16 %v3556, %v3550
    %v3803 = vpack.c.b16 %v3557, %v3551
    %v3804 = vpack.c.b16 %v3558, %v3552
    %v3805 = vpack.c.b16 %v3559, %v3553
    %v3806 = vpack.c.b16 %v3560, %v3554
    %v3807 = vpack.c.b16 %v3561, %v3555
    %v3808 = vpack.c.b16 %v3568, %v3562
    %v3809 = vpack.c.b16 %v3569, %v3563
    %v3810 = vpack.c.b16 %v3570, %v3564
    %v3811 = vpack.c.b16 %v3571, %v3565
    %v3812 = vpack.c.b16 %v3572, %v3566
    %v3813 = vpack.c.b16 %v3573, %v3567
    %v3814 = vpack.c.b16 %v3580, %v3574
    %v3815 = vpack.c.b16 %v3581, %v3575
    %v3816 = vpack.c.b16 %v3582, %v3576
    %v3817 = vpack.c.b16 %v3583, %v3577
    %v3818 = vpack.c.b16 %v3584, %v3578
    %v3819 = vpack.c.b16 %v3585, %v3579
    %v3820 = vpack.c.b16 %v3592, %v3586
    %v3821 = vpack.c.b16 %v3593, %v3587
    %v3822 = vpack.c.b16 %v3594, %v3588
    %v3823 = vpack.c.b16 %v3595, %v3589
    %v3824 = vpack.c.b16 %v3596, %v3590
    %v3825 = vpack.c.b16 %v3597, %v3591
    %v3826 = vpack.c.b16 %v3604, %v3598
    %v3827 = vpack.c.b16 %v3605, %v3599
    %v3828 = vpack.c.b16 %v3606, %v3600
    %v3829 = vpack.c.b16 %v3607, %v3601
    %v3830 = vpack.c.b16 %v3608, %v3602
    %v3831 = vpack.c.b16 %v3609, %v3603
    %v3832 = vpack.c.b16 %v3616, %v3610
    %v3833 = vpack.c.b16 %v3617, %v3611
    %v3834 = vpack.c.b16 %v3618, %v3612
    %v3835 = vpack.c.b16 %v3619, %v3613
    %v3836 = vpack.c.b16 %v3620, %v3614
    %v3837 = vpack.c.b16 %v3621, %v3615
    %v4055 = vsel %vm1852, %v2906, 0
    %v4058 = vsel %vm1852, %v2911, 0
    %v4061 = vsel %vm1852, %v2916, 0
    %v4064 = vsel %vm1852, %v2921, 0
    %v4067 = vsel %vm1852, %v2926, 0
    %v4070 = vsel %vm1852, %v2931, 0
    %v4073 = vsel %vm1852, %v2936, 0
    %v4076 = vsel %vm1852, %v2941, 0
    %4078 = vmatprep.subr.bf16.mxu0 %v3623
    %4079 = vmatpush1.bf16.msra.mxu0 %v3622
    %4080 = vmatprep.subr.bf16.mxu0 %v3629
    %4081 = vmatpush1.bf16.msra.mxu0 %v3628
    %4082 = vmatprep.subr.bf16.mxu0 %v3635
    %4083 = vmatpush1.bf16.msra.mxu0 %v3634
    %4084 = vmatprep.subr.bf16.mxu0 %v3641
    %4085 = vmatpush1.bf16.msra.mxu0 %v3640
    %4086 = vmatprep.subr.bf16.mxu0 %v3647
    %4087 = vmatpush1.bf16.msra.mxu0 %v3646
    %4088 = vmatprep.subr.bf16.mxu0 %v3653
    %4089 = vmatpush1.bf16.msra.mxu0 %v3652
    %4090 = vmatprep.subr.bf16.mxu0 %v3659
    %4091 = vmatpush1.bf16.msra.mxu0 %v3658
    %4092 = vmatprep.subr.bf16.mxu0 %v3665
    %4093 = vmatpush1.bf16.msra.mxu0 %v3664
    %4094 = vmatprep.subr.bf16.mxu0 %v3671
    %4095 = vmatpush1.bf16.msra.mxu0 %v3670
    %4096 = vmatprep.subr.bf16.mxu0 %v3677
    %4097 = vmatpush1.bf16.msra.mxu0 %v3676
    %4098 = vmatprep.subr.bf16.mxu0 %v3683
    %4099 = vmatpush1.bf16.msra.mxu0 %v3682
    %4100 = vmatprep.subr.bf16.mxu0 %v3689
    %4101 = vmatpush1.bf16.msra.mxu0 %v3688
    %4102 = vmatprep.subr.bf16.mxu0 %v3695
    %4103 = vmatpush1.bf16.msra.mxu0 %v3694
    %4104 = vmatprep.subr.bf16.mxu0 %v3701
    %4105 = vmatpush1.bf16.msra.mxu0 %v3700
    %4106 = vmatprep.subr.bf16.mxu0 %v3707
    %4107 = vmatpush1.bf16.msra.mxu0 %v3706
    %4108 = vmatprep.subr.bf16.mxu0 %v3713
    %4109 = vmatpush1.bf16.msra.mxu0 %v3712
    %4110 = vmatprep.mubr.bf16.mxu0 %v2903
    %4111 = vmatmul.mubr.bf16.gmra.mrb[0].mxu0 %v2902
    %v4112 = vpop.f32.mrb[0].mxu0
    %v4113 = vadd.f32 %v2138, %v4112
    %v4114 = vpop.f32.mrb[0].mxu0
    %v4115 = vadd.f32 %v2140, %v4114
    %v4116 = vpop.f32.mrb[0].mxu0
    %v4117 = vadd.f32 %v2142, %v4116
    %v4118 = vpop.f32.mrb[0].mxu0
    %v4119 = vadd.f32 %v2144, %v4118
    %4120 = vmatprep.mubr.bf16.mxu0 %v2908
    %4121 = vmatmul.mubr.bf16.gmra.mrb[0].mxu0 %v2907
    %v4122 = vpop.f32.mrb[0].mxu0
    %v4123 = vadd.f32 %v2148, %v4122
    %v4124 = vpop.f32.mrb[0].mxu0
    %v4125 = vadd.f32 %v2150, %v4124
    %v4126 = vpop.f32.mrb[0].mxu0
    %v4127 = vadd.f32 %v2152, %v4126
    %v4128 = vpop.f32.mrb[0].mxu0
    %v4129 = vadd.f32 %v2154, %v4128
    %4130 = vmatprep.mubr.bf16.mxu0 %v2913
    %4131 = vmatmul.mubr.bf16.gmra.mrb[0].mxu0 %v2912
    %v4132 = vpop.f32.mrb[0].mxu0
    %v4133 = vadd.f32 %v2158, %v4132
    %v4134 = vpop.f32.mrb[0].mxu0
    %v4135 = vadd.f32 %v2160, %v4134
    %v4136 = vpop.f32.mrb[0].mxu0
    %v4137 = vadd.f32 %v2162, %v4136
    %v4138 = vpop.f32.mrb[0].mxu0
    %v4139 = vadd.f32 %v2164, %v4138
    %4140 = vmatprep.mubr.bf16.mxu0 %v2918
    %4141 = vmatmul.mubr.bf16.gmra.mrb[0].mxu0 %v2917
    %v4142 = vpop.f32.mrb[0].mxu0
    %v4143 = vadd.f32 %v2168, %v4142
    %v4144 = vpop.f32.mrb[0].mxu0
    %v4145 = vadd.f32 %v2170, %v4144
    %v4146 = vpop.f32.mrb[0].mxu0
    %v4147 = vadd.f32 %v2172, %v4146
    %v4148 = vpop.f32.mrb[0].mxu0
    %v4149 = vadd.f32 %v2174, %v4148
    %4150 = vmatprep.mubr.bf16.mxu0 %v2923
    %4151 = vmatmul.mubr.bf16.gmra.mrb[0].mxu0 %v2922
    %v4152 = vpop.f32.mrb[0].mxu0
    %v4153 = vadd.f32 %v2178, %v4152
    %v4154 = vpop.f32.mrb[0].mxu0
    %v4155 = vadd.f32 %v2180, %v4154
    %v4156 = vpop.f32.mrb[0].mxu0
    %v4157 = vadd.f32 %v2182, %v4156
    %v4158 = vpop.f32.mrb[0].mxu0
    %v4159 = vadd.f32 %v2184, %v4158
    %4160 = vmatprep.mubr.bf16.mxu0 %v2928
    %4161 = vmatmul.mubr.bf16.gmra.mrb[0].mxu0 %v2927
    %v4162 = vpop.f32.mrb[0].mxu0
    %v4163 = vadd.f32 %v2188, %v4162
    %v4164 = vpop.f32.mrb[0].mxu0
    %v4165 = vadd.f32 %v2190, %v4164
    %v4166 = vpop.f32.mrb[0].mxu0
    %v4167 = vadd.f32 %v2192, %v4166
    %v4168 = vpop.f32.mrb[0].mxu0
    %v4169 = vadd.f32 %v2194, %v4168
    %4170 = vmatprep.mubr.bf16.mxu0 %v2933
    %4171 = vmatmul.mubr.bf16.gmra.mrb[0].mxu0 %v2932
    %v4172 = vpop.f32.mrb[0].mxu0
    %v4173 = vadd.f32 %v2198, %v4172
    %v4174 = vpop.f32.mrb[0].mxu0
    %v4175 = vadd.f32 %v2200, %v4174
    %v4176 = vpop.f32.mrb[0].mxu0
    %v4177 = vadd.f32 %v2202, %v4176
    %v4178 = vpop.f32.mrb[0].mxu0
    %v4179 = vadd.f32 %v2204, %v4178
    %4180 = vmatprep.mubr.bf16.mxu0 %v2938
    %4181 = vmatmul.mubr.bf16.gmra.mrb[0].mxu0 %v2937
    %v4182 = vpop.f32.mrb[0].mxu0
    %v4183 = vadd.f32 %v2208, %v4182
    %v4184 = vpop.f32.mrb[0].mxu0
    %v4185 = vadd.f32 %v2210, %v4184
    %v4186 = vpop.f32.mrb[0].mxu0
    %v4187 = vadd.f32 %v2212, %v4186
    %v4188 = vpop.f32.mrb[0].mxu0
    %v4189 = vadd.f32 %v2214, %v4188
    %4190 = vdwg.mxu0
    %4191 = vmatprep.subr.bf16.mxu0 %v3719
    %4192 = vmatpush1.bf16.msra.mxu0 %v3718
    %4193 = vmatprep.subr.bf16.mxu0 %v3725
    %4194 = vmatpush1.bf16.msra.mxu0 %v3724
    %4195 = vmatprep.subr.bf16.mxu0 %v3731
    %4196 = vmatpush1.bf16.msra.mxu0 %v3730
    %4197 = vmatprep.subr.bf16.mxu0 %v3737
    %4198 = vmatpush1.bf16.msra.mxu0 %v3736
    %4199 = vmatprep.subr.bf16.mxu0 %v3743
    %4200 = vmatpush1.bf16.msra.mxu0 %v3742
    %4201 = vmatprep.subr.bf16.mxu0 %v3749
    %4202 = vmatpush1.bf16.msra.mxu0 %v3748
    %4203 = vmatprep.subr.bf16.mxu0 %v3755
    %4204 = vmatpush1.bf16.msra.mxu0 %v3754
    %4205 = vmatprep.subr.bf16.mxu0 %v3761
    %4206 = vmatpush1.bf16.msra.mxu0 %v3760
    %4207 = vmatprep.subr.bf16.mxu0 %v3767
    %4208 = vmatpush1.bf16.msra.mxu0 %v3766
    %4209 = vmatprep.subr.bf16.mxu0 %v3773
    %4210 = vmatpush1.bf16.msra.mxu0 %v3772
    %4211 = vmatprep.subr.bf16.mxu0 %v3779
    %4212 = vmatpush1.bf16.msra.mxu0 %v3778
    %4213 = vmatprep.subr.bf16.mxu0 %v3785
    %4214 = vmatpush1.bf16.msra.mxu0 %v3784
    %4215 = vmatprep.subr.bf16.mxu0 %v3791
    %4216 = vmatpush1.bf16.msra.mxu0 %v3790
    %4217 = vmatprep.subr.bf16.mxu0 %v3797
    %4218 = vmatpush1.bf16.msra.mxu0 %v3796
    %4219 = vmatprep.subr.bf16.mxu0 %v3803
    %4220 = vmatpush1.bf16.msra.mxu0 %v3802
    %4221 = vmatprep.subr.bf16.mxu0 %v3809
    %4222 = vmatpush1.bf16.msra.mxu0 %v3808
    %4223 = vmatprep.mubr.bf16.mxu0 %v2905
    %4224 = vmatmul.mubr.bf16.gmra.mrb[0].mxu0 %v2904
    %v4225 = vpop.f32.mrb[0].mxu0
    %v4226 = vadd.f32 %v4113, %v4225
    %v4227 = vpop.f32.mrb[0].mxu0
    %v4228 = vadd.f32 %v4115, %v4227
    %v4229 = vpop.f32.mrb[0].mxu0
    %v4230 = vadd.f32 %v4117, %v4229
    %v4231 = vpop.f32.mrb[0].mxu0
    %v4232 = vadd.f32 %v4119, %v4231
    %4233 = vmatprep.mubr.bf16.mxu0 %v2910
    %4234 = vmatmul.mubr.bf16.gmra.mrb[0].mxu0 %v2909
    %v4235 = vpop.f32.mrb[0].mxu0
    %v4236 = vadd.f32 %v4123, %v4235
    %v4237 = vpop.f32.mrb[0].mxu0
    %v4238 = vadd.f32 %v4125, %v4237
    %v4239 = vpop.f32.mrb[0].mxu0
    %v4240 = vadd.f32 %v4127, %v4239
    %v4241 = vpop.f32.mrb[0].mxu0
    %v4242 = vadd.f32 %v4129, %v4241
    %4243 = vmatprep.mubr.bf16.mxu0 %v2915
    %4244 = vmatmul.mubr.bf16.gmra.mrb[0].mxu0 %v2914
    %v4245 = vpop.f32.mrb[0].mxu0
    %v4246 = vadd.f32 %v4133, %v4245
    %v4247 = vpop.f32.mrb[0].mxu0
    %v4248 = vadd.f32 %v4135, %v4247
    %v4249 = vpop.f32.mrb[0].mxu0
    %v4250 = vadd.f32 %v4137, %v4249
    %v4251 = vpop.f32.mrb[0].mxu0
    %v4252 = vadd.f32 %v4139, %v4251
    %4253 = vmatprep.mubr.bf16.mxu0 %v2920
    %4254 = vmatmul.mubr.bf16.gmra.mrb[0].mxu0 %v2919
    %v4255 = vpop.f32.mrb[0].mxu0
    %v4256 = vadd.f32 %v4143, %v4255
    %v4257 = vpop.f32.mrb[0].mxu0
    %v4258 = vadd.f32 %v4145, %v4257
    %v4259 = vpop.f32.mrb[0].mxu0
    %v4260 = vadd.f32 %v4147, %v4259
    %v4261 = vpop.f32.mrb[0].mxu0
    %v4262 = vadd.f32 %v4149, %v4261
    %4263 = vmatprep.mubr.bf16.mxu0 %v2925
    %4264 = vmatmul.mubr.bf16.gmra.mrb[0].mxu0 %v2924
    %v4265 = vpop.f32.mrb[0].mxu0
    %v4266 = vadd.f32 %v4153, %v4265
    %v4267 = vpop.f32.mrb[0].mxu0
    %v4268 = vadd.f32 %v4155, %v4267
    %v4269 = vpop.f32.mrb[0].mxu0
    %v4270 = vadd.f32 %v4157, %v4269
    %v4271 = vpop.f32.mrb[0].mxu0
    %v4272 = vadd.f32 %v4159, %v4271
    %4273 = vmatprep.mubr.bf16.mxu0 %v2930
    %4274 = vmatmul.mubr.bf16.gmra.mrb[0].mxu0 %v2929
    %v4275 = vpop.f32.mrb[0].mxu0
    %v4276 = vadd.f32 %v4163, %v4275
    %v4277 = vpop.f32.mrb[0].mxu0
    %v4278 = vadd.f32 %v4165, %v4277
    %v4279 = vpop.f32.mrb[0].mxu0
    %v4280 = vadd.f32 %v4167, %v4279
    %v4281 = vpop.f32.mrb[0].mxu0
    %v4282 = vadd.f32 %v4169, %v4281
    %4283 = vmatprep.mubr.bf16.mxu0 %v2935
    %4284 = vmatmul.mubr.bf16.gmra.mrb[0].mxu0 %v2934
    %v4285 = vpop.f32.mrb[0].mxu0
    %v4286 = vadd.f32 %v4173, %v4285
    %v4287 = vpop.f32.mrb[0].mxu0
    %v4288 = vadd.f32 %v4175, %v4287
    %v4289 = vpop.f32.mrb[0].mxu0
    %v4290 = vadd.f32 %v4177, %v4289
    %v4291 = vpop.f32.mrb[0].mxu0
    %v4292 = vadd.f32 %v4179, %v4291
    %4293 = vmatprep.mubr.bf16.mxu0 %v2940
    %4294 = vmatmul.mubr.bf16.gmra.mrb[0].mxu0 %v2939
    %v4295 = vpop.f32.mrb[0].mxu0
    %v4296 = vadd.f32 %v4183, %v4295
    %v4297 = vpop.f32.mrb[0].mxu0
    %v4298 = vadd.f32 %v4185, %v4297
    %v4299 = vpop.f32.mrb[0].mxu0
    %v4300 = vadd.f32 %v4187, %v4299
    %v4301 = vpop.f32.mrb[0].mxu0
    %v4302 = vadd.f32 %v4189, %v4301
    %4303 = vdwg.mxu0
    %4304 = vmatprep.subr.bf16.mxu0 %v3815
    %4305 = vmatpush1.bf16.msra.mxu0 %v3814
    %4306 = vmatprep.subr.bf16.mxu0 %v3821
    %4307 = vmatpush1.bf16.msra.mxu0 %v3820
    %4308 = vmatprep.subr.bf16.mxu0 %v3827
    %4309 = vmatpush1.bf16.msra.mxu0 %v3826
    %4310 = vmatprep.subr.bf16.mxu0 %v3833
    %4311 = vmatpush1.bf16.msra.mxu0 %v3832
    %4312 = vmatprep.subr.bf16.mxu0 0
    %4313 = vmatpush1.bf16.msra.mxu0 0
    %4314 = vmatprep.subr.bf16.mxu0 0
    %4315 = vmatpush1.bf16.msra.mxu0 0
    %4316 = vmatprep.subr.bf16.mxu0 0
    %4317 = vmatpush1.bf16.msra.mxu0 0
    %4318 = vmatprep.subr.bf16.mxu0 0
    %4319 = vmatpush1.bf16.msra.mxu0 0
    %4320 = vmatprep.subr.bf16.mxu0 0
    %4321 = vmatpush1.bf16.msra.mxu0 0
    %4322 = vmatprep.subr.bf16.mxu0 0
    %4323 = vmatpush1.bf16.msra.mxu0 0
    %4324 = vmatprep.subr.bf16.mxu0 0
    %4325 = vmatpush1.bf16.msra.mxu0 0
    %4326 = vmatprep.subr.bf16.mxu0 0
    %4327 = vmatpush1.bf16.msra.mxu0 0
    %4328 = vmatprep.subr.bf16.mxu0 0
    %4329 = vmatpush1.bf16.msra.mxu0 0
    %4330 = vmatprep.subr.bf16.mxu0 0
    %4331 = vmatpush1.bf16.msra.mxu0 0
    %4332 = vmatprep.subr.bf16.mxu0 0
    %4333 = vmatpush1.bf16.msra.mxu0 0
    %4334 = vmatprep.subr.bf16.mxu0 0
    %4335 = vmatpush1.bf16.msra.mxu0 0
    %4336 = vmatprep.mubr.bf16.mxu0 0
    %4337 = vmatmul.mubr.bf16.gmra.mrb[0].mxu0 %v4055
    %v4338 = vpop.f32.mrb[0].mxu0
    %v4339 = vadd.f32 %v4226, %v4338
    %v4340 = vpop.f32.mrb[0].mxu0
    %v4341 = vadd.f32 %v4228, %v4340
    %v4342 = vpop.f32.mrb[0].mxu0
    %v4343 = vadd.f32 %v4230, %v4342
    %v4344 = vpop.f32.mrb[0].mxu0
    %v4345 = vadd.f32 %v4232, %v4344
    %4346 = vmatprep.mubr.bf16.mxu0 0
    %4347 = vmatmul.mubr.bf16.gmra.mrb[0].mxu0 %v4058
    %v4348 = vpop.f32.mrb[0].mxu0
    %v4349 = vadd.f32 %v4236, %v4348
    %v4350 = vpop.f32.mrb[0].mxu0
    %v4351 = vadd.f32 %v4238, %v4350
    %v4352 = vpop.f32.mrb[0].mxu0
    %v4353 = vadd.f32 %v4240, %v4352
    %v4354 = vpop.f32.mrb[0].mxu0
    %v4355 = vadd.f32 %v4242, %v4354
    %4356 = vmatprep.mubr.bf16.mxu0 0
    %4357 = vmatmul.mubr.bf16.gmra.mrb[0].mxu0 %v4061
    %v4358 = vpop.f32.mrb[0].mxu0
    %v4359 = vadd.f32 %v4246, %v4358
    %v4360 = vpop.f32.mrb[0].mxu0
    %v4361 = vadd.f32 %v4248, %v4360
    %v4362 = vpop.f32.mrb[0].mxu0
    %v4363 = vadd.f32 %v4250, %v4362
    %v4364 = vpop.f32.mrb[0].mxu0
    %v4365 = vadd.f32 %v4252, %v4364
    %4366 = vmatprep.mubr.bf16.mxu0 0
    %4367 = vmatmul.mubr.bf16.gmra.mrb[0].mxu0 %v4064
    %v4368 = vpop.f32.mrb[0].mxu0
    %v4369 = vadd.f32 %v4256, %v4368
    %v4370 = vpop.f32.mrb[0].mxu0
    %v4371 = vadd.f32 %v4258, %v4370
    %v4372 = vpop.f32.mrb[0].mxu0
    %v4373 = vadd.f32 %v4260, %v4372
    %v4374 = vpop.f32.mrb[0].mxu0
    %v4375 = vadd.f32 %v4262, %v4374
    %4376 = vmatprep.mubr.bf16.mxu0 0
    %4377 = vmatmul.mubr.bf16.gmra.mrb[0].mxu0 %v4067
    %v4378 = vpop.f32.mrb[0].mxu0
    %v4379 = vadd.f32 %v4266, %v4378
    %v4380 = vpop.f32.mrb[0].mxu0
    %v4381 = vadd.f32 %v4268, %v4380
    %v4382 = vpop.f32.mrb[0].mxu0
    %v4383 = vadd.f32 %v4270, %v4382
    %v4384 = vpop.f32.mrb[0].mxu0
    %v4385 = vadd.f32 %v4272, %v4384
    %4386 = vmatprep.mubr.bf16.mxu0 0
    %4387 = vmatmul.mubr.bf16.gmra.mrb[0].mxu0 %v4070
    %v4388 = vpop.f32.mrb[0].mxu0
    %v4389 = vadd.f32 %v4276, %v4388
    %v4390 = vpop.f32.mrb[0].mxu0
    %v4391 = vadd.f32 %v4278, %v4390
    %v4392 = vpop.f32.mrb[0].mxu0
    %v4393 = vadd.f32 %v4280, %v4392
    %v4394 = vpop.f32.mrb[0].mxu0
    %v4395 = vadd.f32 %v4282, %v4394
    %4396 = vmatprep.mubr.bf16.mxu0 0
    %4397 = vmatmul.mubr.bf16.gmra.mrb[0].mxu0 %v4073
    %v4398 = vpop.f32.mrb[0].mxu0
    %v4399 = vadd.f32 %v4286, %v4398
    %v4400 = vpop.f32.mrb[0].mxu0
    %v4401 = vadd.f32 %v4288, %v4400
    %v4402 = vpop.f32.mrb[0].mxu0
    %v4403 = vadd.f32 %v4290, %v4402
    %v4404 = vpop.f32.mrb[0].mxu0
    %v4405 = vadd.f32 %v4292, %v4404
    %4406 = vmatprep.mubr.bf16.mxu0 0
    %4407 = vmatmul.mubr.bf16.gmra.mrb[0].mxu0 %v4076
    %v4408 = vpop.f32.mrb[0].mxu0
    %v4409 = vadd.f32 %v4296, %v4408
    %v4410 = vpop.f32.mrb[0].mxu0
    %v4411 = vadd.f32 %v4298, %v4410
    %v4412 = vpop.f32.mrb[0].mxu0
    %v4413 = vadd.f32 %v4300, %v4412
    %v4414 = vpop.f32.mrb[0].mxu0
    %v4415 = vadd.f32 %v4302, %v4414
    %4416 = vdwg.mxu0
    %4417 = vmatprep.subr.bf16.mxu0 %v3625
    %4418 = vmatpush1.bf16.msra.mxu0 %v3624
    %4419 = vmatprep.subr.bf16.mxu0 %v3631
    %4420 = vmatpush1.bf16.msra.mxu0 %v3630
    %4421 = vmatprep.subr.bf16.mxu0 %v3637
    %4422 = vmatpush1.bf16.msra.mxu0 %v3636
    %4423 = vmatprep.subr.bf16.mxu0 %v3643
    %4424 = vmatpush1.bf16.msra.mxu0 %v3642
    %4425 = vmatprep.subr.bf16.mxu0 %v3649
    %4426 = vmatpush1.bf16.msra.mxu0 %v3648
    %4427 = vmatprep.subr.bf16.mxu0 %v3655
    %4428 = vmatpush1.bf16.msra.mxu0 %v3654
    %4429 = vmatprep.subr.bf16.mxu0 %v3661
    %4430 = vmatpush1.bf16.msra.mxu0 %v3660
    %4431 = vmatprep.subr.bf16.mxu0 %v3667
    %4432 = vmatpush1.bf16.msra.mxu0 %v3666
    %4433 = vmatprep.subr.bf16.mxu0 %v3673
    %4434 = vmatpush1.bf16.msra.mxu0 %v3672
    %4435 = vmatprep.subr.bf16.mxu0 %v3679
    %4436 = vmatpush1.bf16.msra.mxu0 %v3678
    %4437 = vmatprep.subr.bf16.mxu0 %v3685
    %4438 = vmatpush1.bf16.msra.mxu0 %v3684
    %4439 = vmatprep.subr.bf16.mxu0 %v3691
    %4440 = vmatpush1.bf16.msra.mxu0 %v3690
    %4441 = vmatprep.subr.bf16.mxu0 %v3697
    %4442 = vmatpush1.bf16.msra.mxu0 %v3696
    %4443 = vmatprep.subr.bf16.mxu0 %v3703
    %4444 = vmatpush1.bf16.msra.mxu0 %v3702
    %4445 = vmatprep.subr.bf16.mxu0 %v3709
    %4446 = vmatpush1.bf16.msra.mxu0 %v3708
    %4447 = vmatprep.subr.bf16.mxu0 %v3715
    %4448 = vmatpush1.bf16.msra.mxu0 %v3714
    %4449 = vmatprep.mubr.bf16.mxu0 %v2903
    %4450 = vmatmul.mubr.bf16.gmra.mrb[0].mxu0 %v2902
    %v4451 = vpop.f32.mrb[0].mxu0
    %v4452 = vadd.f32 %v2477, %v4451
    %v4453 = vpop.f32.mrb[0].mxu0
    %v4454 = vadd.f32 %v2479, %v4453
    %v4455 = vpop.f32.mrb[0].mxu0
    %v4456 = vadd.f32 %v2481, %v4455
    %v4457 = vpop.f32.mrb[0].mxu0
    %v4458 = vadd.f32 %v2483, %v4457
    %4459 = vmatprep.mubr.bf16.mxu0 %v2908
    %4460 = vmatmul.mubr.bf16.gmra.mrb[0].mxu0 %v2907
    %v4461 = vpop.f32.mrb[0].mxu0
    %v4462 = vadd.f32 %v2487, %v4461
    %v4463 = vpop.f32.mrb[0].mxu0
    %v4464 = vadd.f32 %v2489, %v4463
    %v4465 = vpop.f32.mrb[0].mxu0
    %v4466 = vadd.f32 %v2491, %v4465
    %v4467 = vpop.f32.mrb[0].mxu0
    %v4468 = vadd.f32 %v2493, %v4467
    %4469 = vmatprep.mubr.bf16.mxu0 %v2913
    %4470 = vmatmul.mubr.bf16.gmra.mrb[0].mxu0 %v2912
    %v4471 = vpop.f32.mrb[0].mxu0
    %v4472 = vadd.f32 %v2497, %v4471
    %v4473 = vpop.f32.mrb[0].mxu0
    %v4474 = vadd.f32 %v2499, %v4473
    %v4475 = vpop.f32.mrb[0].mxu0
    %v4476 = vadd.f32 %v2501, %v4475
    %v4477 = vpop.f32.mrb[0].mxu0
    %v4478 = vadd.f32 %v2503, %v4477
    %4479 = vmatprep.mubr.bf16.mxu0 %v2918
    %4480 = vmatmul.mubr.bf16.gmra.mrb[0].mxu0 %v2917
    %v4481 = vpop.f32.mrb[0].mxu0
    %v4482 = vadd.f32 %v2507, %v4481
    %v4483 = vpop.f32.mrb[0].mxu0
    %v4484 = vadd.f32 %v2509, %v4483
    %v4485 = vpop.f32.mrb[0].mxu0
    %v4486 = vadd.f32 %v2511, %v4485
    %v4487 = vpop.f32.mrb[0].mxu0
    %v4488 = vadd.f32 %v2513, %v4487
    %4489 = vmatprep.mubr.bf16.mxu0 %v2923
    %4490 = vmatmul.mubr.bf16.gmra.mrb[0].mxu0 %v2922
    %v4491 = vpop.f32.mrb[0].mxu0
    %v4492 = vadd.f32 %v2517, %v4491
    %v4493 = vpop.f32.mrb[0].mxu0
    %v4494 = vadd.f32 %v2519, %v4493
    %v4495 = vpop.f32.mrb[0].mxu0
    %v4496 = vadd.f32 %v2521, %v4495
    %v4497 = vpop.f32.mrb[0].mxu0
    %v4498 = vadd.f32 %v2523, %v4497
    %4499 = vmatprep.mubr.bf16.mxu0 %v2928
    %4500 = vmatmul.mubr.bf16.gmra.mrb[0].mxu0 %v2927
    %v4501 = vpop.f32.mrb[0].mxu0
    %v4502 = vadd.f32 %v2527, %v4501
    %v4503 = vpop.f32.mrb[0].mxu0
    %v4504 = vadd.f32 %v2529, %v4503
    %v4505 = vpop.f32.mrb[0].mxu0
    %v4506 = vadd.f32 %v2531, %v4505
    %v4507 = vpop.f32.mrb[0].mxu0
    %v4508 = vadd.f32 %v2533, %v4507
    %4509 = vmatprep.mubr.bf16.mxu0 %v2933
    %4510 = vmatmul.mubr.bf16.gmra.mrb[0].mxu0 %v2932
    %v4511 = vpop.f32.mrb[0].mxu0
    %v4512 = vadd.f32 %v2537, %v4511
    %v4513 = vpop.f32.mrb[0].mxu0
    %v4514 = vadd.f32 %v2539, %v4513
    %v4515 = vpop.f32.mrb[0].mxu0
    %v4516 = vadd.f32 %v2541, %v4515
    %v4517 = vpop.f32.mrb[0].mxu0
    %v4518 = vadd.f32 %v2543, %v4517
    %4519 = vmatprep.mubr.bf16.mxu0 %v2938
    %4520 = vmatmul.mubr.bf16.gmra.mrb[0].mxu0 %v2937
    %v4521 = vpop.f32.mrb[0].mxu0
    %v4522 = vadd.f32 %v2547, %v4521
    %v4523 = vpop.f32.mrb[0].mxu0
    %v4524 = vadd.f32 %v2549, %v4523
    %v4525 = vpop.f32.mrb[0].mxu0
    %v4526 = vadd.f32 %v2551, %v4525
    %v4527 = vpop.f32.mrb[0].mxu0
    %v4528 = vadd.f32 %v2553, %v4527
    %4529 = vdwg.mxu0
    %4530 = vmatprep.subr.bf16.mxu0 %v3721
    %4531 = vmatpush1.bf16.msra.mxu0 %v3720
    %4532 = vmatprep.subr.bf16.mxu0 %v3727
    %4533 = vmatpush1.bf16.msra.mxu0 %v3726
    %4534 = vmatprep.subr.bf16.mxu0 %v3733
    %4535 = vmatpush1.bf16.msra.mxu0 %v3732
    %4536 = vmatprep.subr.bf16.mxu0 %v3739
    %4537 = vmatpush1.bf16.msra.mxu0 %v3738
    %4538 = vmatprep.subr.bf16.mxu0 %v3745
    %4539 = vmatpush1.bf16.msra.mxu0 %v3744
    %4540 = vmatprep.subr.bf16.mxu0 %v3751
    %4541 = vmatpush1.bf16.msra.mxu0 %v3750
    %4542 = vmatprep.subr.bf16.mxu0 %v3757
    %4543 = vmatpush1.bf16.msra.mxu0 %v3756
    %4544 = vmatprep.subr.bf16.mxu0 %v3763
    %4545 = vmatpush1.bf16.msra.mxu0 %v3762
    %4546 = vmatprep.subr.bf16.mxu0 %v3769
    %4547 = vmatpush1.bf16.msra.mxu0 %v3768
    %4548 = vmatprep.subr.bf16.mxu0 %v3775
    %4549 = vmatpush1.bf16.msra.mxu0 %v3774
    %4550 = vmatprep.subr.bf16.mxu0 %v3781
    %4551 = vmatpush1.bf16.msra.mxu0 %v3780
    %4552 = vmatprep.subr.bf16.mxu0 %v3787
    %4553 = vmatpush1.bf16.msra.mxu0 %v3786
    %4554 = vmatprep.subr.bf16.mxu0 %v3793
    %4555 = vmatpush1.bf16.msra.mxu0 %v3792
    %4556 = vmatprep.subr.bf16.mxu0 %v3799
    %4557 = vmatpush1.bf16.msra.mxu0 %v3798
    %4558 = vmatprep.subr.bf16.mxu0 %v3805
    %4559 = vmatpush1.bf16.msra.mxu0 %v3804
    %4560 = vmatprep.subr.bf16.mxu0 %v3811
    %4561 = vmatpush1.bf16.msra.mxu0 %v3810
    %4562 = vmatprep.mubr.bf16.mxu0 %v2905
    %4563 = vmatmul.mubr.bf16.gmra.mrb[0].mxu0 %v2904
    %v4564 = vpop.f32.mrb[0].mxu0
    %v4565 = vadd.f32 %v4452, %v4564
    %v4566 = vpop.f32.mrb[0].mxu0
    %v4567 = vadd.f32 %v4454, %v4566
    %v4568 = vpop.f32.mrb[0].mxu0
    %v4569 = vadd.f32 %v4456, %v4568
    %v4570 = vpop.f32.mrb[0].mxu0
    %v4571 = vadd.f32 %v4458, %v4570
    %4572 = vmatprep.mubr.bf16.mxu0 %v2910
    %4573 = vmatmul.mubr.bf16.gmra.mrb[0].mxu0 %v2909
    %v4574 = vpop.f32.mrb[0].mxu0
    %v4575 = vadd.f32 %v4462, %v4574
    %v4576 = vpop.f32.mrb[0].mxu0
    %v4577 = vadd.f32 %v4464, %v4576
    %v4578 = vpop.f32.mrb[0].mxu0
    %v4579 = vadd.f32 %v4466, %v4578
    %v4580 = vpop.f32.mrb[0].mxu0
    %v4581 = vadd.f32 %v4468, %v4580
    %4582 = vmatprep.mubr.bf16.mxu0 %v2915
    %4583 = vmatmul.mubr.bf16.gmra.mrb[0].mxu0 %v2914
    %v4584 = vpop.f32.mrb[0].mxu0
    %v4585 = vadd.f32 %v4472, %v4584
    %v4586 = vpop.f32.mrb[0].mxu0
    %v4587 = vadd.f32 %v4474, %v4586
    %v4588 = vpop.f32.mrb[0].mxu0
    %v4589 = vadd.f32 %v4476, %v4588
    %v4590 = vpop.f32.mrb[0].mxu0
    %v4591 = vadd.f32 %v4478, %v4590
    %4592 = vmatprep.mubr.bf16.mxu0 %v2920
    %4593 = vmatmul.mubr.bf16.gmra.mrb[0].mxu0 %v2919
    %v4594 = vpop.f32.mrb[0].mxu0
    %v4595 = vadd.f32 %v4482, %v4594
    %v4596 = vpop.f32.mrb[0].mxu0
    %v4597 = vadd.f32 %v4484, %v4596
    %v4598 = vpop.f32.mrb[0].mxu0
    %v4599 = vadd.f32 %v4486, %v4598
    %v4600 = vpop.f32.mrb[0].mxu0
    %v4601 = vadd.f32 %v4488, %v4600
    %4602 = vmatprep.mubr.bf16.mxu0 %v2925
    %4603 = vmatmul.mubr.bf16.gmra.mrb[0].mxu0 %v2924
    %v4604 = vpop.f32.mrb[0].mxu0
    %v4605 = vadd.f32 %v4492, %v4604
    %v4606 = vpop.f32.mrb[0].mxu0
    %v4607 = vadd.f32 %v4494, %v4606
    %v4608 = vpop.f32.mrb[0].mxu0
    %v4609 = vadd.f32 %v4496, %v4608
    %v4610 = vpop.f32.mrb[0].mxu0
    %v4611 = vadd.f32 %v4498, %v4610
    %4612 = vmatprep.mubr.bf16.mxu0 %v2930
    %4613 = vmatmul.mubr.bf16.gmra.mrb[0].mxu0 %v2929
    %v4614 = vpop.f32.mrb[0].mxu0
    %v4615 = vadd.f32 %v4502, %v4614
    %v4616 = vpop.f32.mrb[0].mxu0
    %v4617 = vadd.f32 %v4504, %v4616
    %v4618 = vpop.f32.mrb[0].mxu0
    %v4619 = vadd.f32 %v4506, %v4618
    %v4620 = vpop.f32.mrb[0].mxu0
    %v4621 = vadd.f32 %v4508, %v4620
    %4622 = vmatprep.mubr.bf16.mxu0 %v2935
    %4623 = vmatmul.mubr.bf16.gmra.mrb[0].mxu0 %v2934
    %v4624 = vpop.f32.mrb[0].mxu0
    %v4625 = vadd.f32 %v4512, %v4624
    %v4626 = vpop.f32.mrb[0].mxu0
    %v4627 = vadd.f32 %v4514, %v4626
    %v4628 = vpop.f32.mrb[0].mxu0
    %v4629 = vadd.f32 %v4516, %v4628
    %v4630 = vpop.f32.mrb[0].mxu0
    %v4631 = vadd.f32 %v4518, %v4630
    %4632 = vmatprep.mubr.bf16.mxu0 %v2940
    %4633 = vmatmul.mubr.bf16.gmra.mrb[0].mxu0 %v2939
    %v4634 = vpop.f32.mrb[0].mxu0
    %v4635 = vadd.f32 %v4522, %v4634
    %v4636 = vpop.f32.mrb[0].mxu0
    %v4637 = vadd.f32 %v4524, %v4636
    %v4638 = vpop.f32.mrb[0].mxu0
    %v4639 = vadd.f32 %v4526, %v4638
    %v4640 = vpop.f32.mrb[0].mxu0
    %v4641 = vadd.f32 %v4528, %v4640
    %4642 = vdwg.mxu0
    %4643 = vmatprep.subr.bf16.mxu0 %v3817
    %4644 = vmatpush1.bf16.msra.mxu0 %v3816
    %4645 = vmatprep.subr.bf16.mxu0 %v3823
    %4646 = vmatpush1.bf16.msra.mxu0 %v3822
    %4647 = vmatprep.subr.bf16.mxu0 %v3829
    %4648 = vmatpush1.bf16.msra.mxu0 %v3828
    %4649 = vmatprep.subr.bf16.mxu0 %v3835
    %4650 = vmatpush1.bf16.msra.mxu0 %v3834
    %4651 = vmatprep.subr.bf16.mxu0 0
    %4652 = vmatpush1.bf16.msra.mxu0 0
    %4653 = vmatprep.subr.bf16.mxu0 0
    %4654 = vmatpush1.bf16.msra.mxu0 0
    %4655 = vmatprep.subr.bf16.mxu0 0
    %4656 = vmatpush1.bf16.msra.mxu0 0
    %4657 = vmatprep.subr.bf16.mxu0 0
    %4658 = vmatpush1.bf16.msra.mxu0 0
    %4659 = vmatprep.subr.bf16.mxu0 0
    %4660 = vmatpush1.bf16.msra.mxu0 0
    %4661 = vmatprep.subr.bf16.mxu0 0
    %4662 = vmatpush1.bf16.msra.mxu0 0
    %4663 = vmatprep.subr.bf16.mxu0 0
    %4664 = vmatpush1.bf16.msra.mxu0 0
    %4665 = vmatprep.subr.bf16.mxu0 0
    %4666 = vmatpush1.bf16.msra.mxu0 0
    %4667 = vmatprep.subr.bf16.mxu0 0
    %4668 = vmatpush1.bf16.msra.mxu0 0
    %4669 = vmatprep.subr.bf16.mxu0 0
    %4670 = vmatpush1.bf16.msra.mxu0 0
    %4671 = vmatprep.subr.bf16.mxu0 0
    %4672 = vmatpush1.bf16.msra.mxu0 0
    %4673 = vmatprep.subr.bf16.mxu0 0
    %4674 = vmatpush1.bf16.msra.mxu0 0
    %4675 = vmatprep.mubr.bf16.mxu0 0
    %4676 = vmatmul.mubr.bf16.gmra.mrb[0].mxu0 %v4055
    %v4677 = vpop.f32.mrb[0].mxu0
    %v4678 = vadd.f32 %v4565, %v4677
    %v4679 = vpop.f32.mrb[0].mxu0
    %v4680 = vadd.f32 %v4567, %v4679
    %v4681 = vpop.f32.mrb[0].mxu0
    %v4682 = vadd.f32 %v4569, %v4681
    %v4683 = vpop.f32.mrb[0].mxu0
    %v4684 = vadd.f32 %v4571, %v4683
    %4685 = vmatprep.mubr.bf16.mxu0 0
    %4686 = vmatmul.mubr.bf16.gmra.mrb[0].mxu0 %v4058
    %v4687 = vpop.f32.mrb[0].mxu0
    %v4688 = vadd.f32 %v4575, %v4687
    %v4689 = vpop.f32.mrb[0].mxu0
    %v4690 = vadd.f32 %v4577, %v4689
    %v4691 = vpop.f32.mrb[0].mxu0
    %v4692 = vadd.f32 %v4579, %v4691
    %v4693 = vpop.f32.mrb[0].mxu0
    %v4694 = vadd.f32 %v4581, %v4693
    %4695 = vmatprep.mubr.bf16.mxu0 0
    %4696 = vmatmul.mubr.bf16.gmra.mrb[0].mxu0 %v4061
    %v4697 = vpop.f32.mrb[0].mxu0
    %v4698 = vadd.f32 %v4585, %v4697
    %v4699 = vpop.f32.mrb[0].mxu0
    %v4700 = vadd.f32 %v4587, %v4699
    %v4701 = vpop.f32.mrb[0].mxu0
    %v4702 = vadd.f32 %v4589, %v4701
    %v4703 = vpop.f32.mrb[0].mxu0
    %v4704 = vadd.f32 %v4591, %v4703
    %4705 = vmatprep.mubr.bf16.mxu0 0
    %4706 = vmatmul.mubr.bf16.gmra.mrb[0].mxu0 %v4064
    %v4707 = vpop.f32.mrb[0].mxu0
    %v4708 = vadd.f32 %v4595, %v4707
    %v4709 = vpop.f32.mrb[0].mxu0
    %v4710 = vadd.f32 %v4597, %v4709
    %v4711 = vpop.f32.mrb[0].mxu0
    %v4712 = vadd.f32 %v4599, %v4711
    %v4713 = vpop.f32.mrb[0].mxu0
    %v4714 = vadd.f32 %v4601, %v4713
    %4715 = vmatprep.mubr.bf16.mxu0 0
    %4716 = vmatmul.mubr.bf16.gmra.mrb[0].mxu0 %v4067
    %v4717 = vpop.f32.mrb[0].mxu0
    %v4718 = vadd.f32 %v4605, %v4717
    %v4719 = vpop.f32.mrb[0].mxu0
    %v4720 = vadd.f32 %v4607, %v4719
    %v4721 = vpop.f32.mrb[0].mxu0
    %v4722 = vadd.f32 %v4609, %v4721
    %v4723 = vpop.f32.mrb[0].mxu0
    %v4724 = vadd.f32 %v4611, %v4723
    %4725 = vmatprep.mubr.bf16.mxu0 0
    %4726 = vmatmul.mubr.bf16.gmra.mrb[0].mxu0 %v4070
    %v4727 = vpop.f32.mrb[0].mxu0
    %v4728 = vadd.f32 %v4615, %v4727
    %v4729 = vpop.f32.mrb[0].mxu0
    %v4730 = vadd.f32 %v4617, %v4729
    %v4731 = vpop.f32.mrb[0].mxu0
    %v4732 = vadd.f32 %v4619, %v4731
    %v4733 = vpop.f32.mrb[0].mxu0
    %v4734 = vadd.f32 %v4621, %v4733
    %4735 = vmatprep.mubr.bf16.mxu0 0
    %4736 = vmatmul.mubr.bf16.gmra.mrb[0].mxu0 %v4073
    %v4737 = vpop.f32.mrb[0].mxu0
    %v4738 = vadd.f32 %v4625, %v4737
    %v4739 = vpop.f32.mrb[0].mxu0
    %v4740 = vadd.f32 %v4627, %v4739
    %v4741 = vpop.f32.mrb[0].mxu0
    %v4742 = vadd.f32 %v4629, %v4741
    %v4743 = vpop.f32.mrb[0].mxu0
    %v4744 = vadd.f32 %v4631, %v4743
    %4745 = vmatprep.mubr.bf16.mxu0 0
    %4746 = vmatmul.mubr.bf16.gmra.mrb[0].mxu0 %v4076
    %v4747 = vpop.f32.mrb[0].mxu0
    %v4748 = vadd.f32 %v4635, %v4747
    %v4749 = vpop.f32.mrb[0].mxu0
    %v4750 = vadd.f32 %v4637, %v4749
    %v4751 = vpop.f32.mrb[0].mxu0
    %v4752 = vadd.f32 %v4639, %v4751
    %v4753 = vpop.f32.mrb[0].mxu0
    %v4754 = vadd.f32 %v4641, %v4753
    %4755 = vdwg.mxu0
    %4756 = vmatprep.subr.bf16.mxu0 %v3627
    %4757 = vmatpush1.bf16.msra.mxu0 %v3626
    %4758 = vmatprep.subr.bf16.mxu0 %v3633
    %4759 = vmatpush1.bf16.msra.mxu0 %v3632
    %4760 = vmatprep.subr.bf16.mxu0 %v3639
    %4761 = vmatpush1.bf16.msra.mxu0 %v3638
    %4762 = vmatprep.subr.bf16.mxu0 %v3645
    %4763 = vmatpush1.bf16.msra.mxu0 %v3644
    %4764 = vmatprep.subr.bf16.mxu0 %v3651
    %4765 = vmatpush1.bf16.msra.mxu0 %v3650
    %4766 = vmatprep.subr.bf16.mxu0 %v3657
    %4767 = vmatpush1.bf16.msra.mxu0 %v3656
    %4768 = vmatprep.subr.bf16.mxu0 %v3663
    %4769 = vmatpush1.bf16.msra.mxu0 %v3662
    %4770 = vmatprep.subr.bf16.mxu0 %v3669
    %4771 = vmatpush1.bf16.msra.mxu0 %v3668
    %4772 = vmatprep.subr.bf16.mxu0 %v3675
    %4773 = vmatpush1.bf16.msra.mxu0 %v3674
    %4774 = vmatprep.subr.bf16.mxu0 %v3681
    %4775 = vmatpush1.bf16.msra.mxu0 %v3680
    %4776 = vmatprep.subr.bf16.mxu0 %v3687
    %4777 = vmatpush1.bf16.msra.mxu0 %v3686
    %4778 = vmatprep.subr.bf16.mxu0 %v3693
    %4779 = vmatpush1.bf16.msra.mxu0 %v3692
    %4780 = vmatprep.subr.bf16.mxu0 %v3699
    %4781 = vmatpush1.bf16.msra.mxu0 %v3698
    %4782 = vmatprep.subr.bf16.mxu0 %v3705
    %4783 = vmatpush1.bf16.msra.mxu0 %v3704
    %4784 = vmatprep.subr.bf16.mxu0 %v3711
    %4785 = vmatpush1.bf16.msra.mxu0 %v3710
    %4786 = vmatprep.subr.bf16.mxu0 %v3717
    %4787 = vmatpush1.bf16.msra.mxu0 %v3716
    %4788 = vmatprep.mubr.bf16.mxu0 %v2903
    %4789 = vmatmul.mubr.bf16.gmra.mrb[0].mxu0 %v2902
    %v4790 = vpop.f32.mrb[0].mxu0
    %v4791 = vadd.f32 %v2816, %v4790
    %v4792 = vpop.f32.mrb[0].mxu0
    %v4793 = vadd.f32 %v2818, %v4792
    %v4794 = vpop.f32.mrb[0].mxu0
    %v4795 = vadd.f32 %v2820, %v4794
    %v4796 = vpop.f32.mrb[0].mxu0
    %v4797 = vadd.f32 %v2822, %v4796
    %4798 = vmatprep.mubr.bf16.mxu0 %v2908
    %4799 = vmatmul.mubr.bf16.gmra.mrb[0].mxu0 %v2907
    %v4800 = vpop.f32.mrb[0].mxu0
    %v4801 = vadd.f32 %v2826, %v4800
    %v4802 = vpop.f32.mrb[0].mxu0
    %v4803 = vadd.f32 %v2828, %v4802
    %v4804 = vpop.f32.mrb[0].mxu0
    %v4805 = vadd.f32 %v2830, %v4804
    %v4806 = vpop.f32.mrb[0].mxu0
    %v4807 = vadd.f32 %v2832, %v4806
    %4808 = vmatprep.mubr.bf16.mxu0 %v2913
    %4809 = vmatmul.mubr.bf16.gmra.mrb[0].mxu0 %v2912
    %v4810 = vpop.f32.mrb[0].mxu0
    %v4811 = vadd.f32 %v2836, %v4810
    %v4812 = vpop.f32.mrb[0].mxu0
    %v4813 = vadd.f32 %v2838, %v4812
    %v4814 = vpop.f32.mrb[0].mxu0
    %v4815 = vadd.f32 %v2840, %v4814
    %v4816 = vpop.f32.mrb[0].mxu0
    %v4817 = vadd.f32 %v2842, %v4816
    %4818 = vmatprep.mubr.bf16.mxu0 %v2918
    %4819 = vmatmul.mubr.bf16.gmra.mrb[0].mxu0 %v2917
    %v4820 = vpop.f32.mrb[0].mxu0
    %v4821 = vadd.f32 %v2846, %v4820
    %v4822 = vpop.f32.mrb[0].mxu0
    %v4823 = vadd.f32 %v2848, %v4822
    %v4824 = vpop.f32.mrb[0].mxu0
    %v4825 = vadd.f32 %v2850, %v4824
    %v4826 = vpop.f32.mrb[0].mxu0
    %v4827 = vadd.f32 %v2852, %v4826
    %4828 = vmatprep.mubr.bf16.mxu0 %v2923
    %4829 = vmatmul.mubr.bf16.gmra.mrb[0].mxu0 %v2922
    %v4830 = vpop.f32.mrb[0].mxu0
    %v4831 = vadd.f32 %v2856, %v4830
    %v4832 = vpop.f32.mrb[0].mxu0
    %v4833 = vadd.f32 %v2858, %v4832
    %v4834 = vpop.f32.mrb[0].mxu0
    %v4835 = vadd.f32 %v2860, %v4834
    %v4836 = vpop.f32.mrb[0].mxu0
    %v4837 = vadd.f32 %v2862, %v4836
    %4838 = vmatprep.mubr.bf16.mxu0 %v2928
    %4839 = vmatmul.mubr.bf16.gmra.mrb[0].mxu0 %v2927
    %v4840 = vpop.f32.mrb[0].mxu0
    %v4841 = vadd.f32 %v2866, %v4840
    %v4842 = vpop.f32.mrb[0].mxu0
    %v4843 = vadd.f32 %v2868, %v4842
    %v4844 = vpop.f32.mrb[0].mxu0
    %v4845 = vadd.f32 %v2870, %v4844
    %v4846 = vpop.f32.mrb[0].mxu0
    %v4847 = vadd.f32 %v2872, %v4846
    %4848 = vmatprep.mubr.bf16.mxu0 %v2933
    %4849 = vmatmul.mubr.bf16.gmra.mrb[0].mxu0 %v2932
    %v4850 = vpop.f32.mrb[0].mxu0
    %v4851 = vadd.f32 %v2876, %v4850
    %v4852 = vpop.f32.mrb[0].mxu0
    %v4853 = vadd.f32 %v2878, %v4852
    %v4854 = vpop.f32.mrb[0].mxu0
    %v4855 = vadd.f32 %v2880, %v4854
    %v4856 = vpop.f32.mrb[0].mxu0
    %v4857 = vadd.f32 %v2882, %v4856
    %4858 = vmatprep.mubr.bf16.mxu0 %v2938
    %4859 = vmatmul.mubr.bf16.gmra.mrb[0].mxu0 %v2937
    %v4860 = vpop.f32.mrb[0].mxu0
    %v4861 = vadd.f32 %v2886, %v4860
    %v4862 = vpop.f32.mrb[0].mxu0
    %v4863 = vadd.f32 %v2888, %v4862
    %v4864 = vpop.f32.mrb[0].mxu0
    %v4865 = vadd.f32 %v2890, %v4864
    %v4866 = vpop.f32.mrb[0].mxu0
    %v4867 = vadd.f32 %v2892, %v4866
    %4868 = vdwg.mxu0
    %4869 = vmatprep.subr.bf16.mxu0 %v3723
    %4870 = vmatpush1.bf16.msra.mxu0 %v3722
    %4871 = vmatprep.subr.bf16.mxu0 %v3729
    %4872 = vmatpush1.bf16.msra.mxu0 %v3728
    %4873 = vmatprep.subr.bf16.mxu0 %v3735
    %4874 = vmatpush1.bf16.msra.mxu0 %v3734
    %4875 = vmatprep.subr.bf16.mxu0 %v3741
    %4876 = vmatpush1.bf16.msra.mxu0 %v3740
    %4877 = vmatprep.subr.bf16.mxu0 %v3747
    %4878 = vmatpush1.bf16.msra.mxu0 %v3746
    %4879 = vmatprep.subr.bf16.mxu0 %v3753
    %4880 = vmatpush1.bf16.msra.mxu0 %v3752
    %4881 = vmatprep.subr.bf16.mxu0 %v3759
    %4882 = vmatpush1.bf16.msra.mxu0 %v3758
    %4883 = vmatprep.subr.bf16.mxu0 %v3765
    %4884 = vmatpush1.bf16.msra.mxu0 %v3764
    %4885 = vmatprep.subr.bf16.mxu0 %v3771
    %4886 = vmatpush1.bf16.msra.mxu0 %v3770
    %4887 = vmatprep.subr.bf16.mxu0 %v3777
    %4888 = vmatpush1.bf16.msra.mxu0 %v3776
    %4889 = vmatprep.subr.bf16.mxu0 %v3783
    %4890 = vmatpush1.bf16.msra.mxu0 %v3782
    %4891 = vmatprep.subr.bf16.mxu0 %v3789
    %4892 = vmatpush1.bf16.msra.mxu0 %v3788
    %4893 = vmatprep.subr.bf16.mxu0 %v3795
    %4894 = vmatpush1.bf16.msra.mxu0 %v3794
    %4895 = vmatprep.subr.bf16.mxu0 %v3801
    %4896 = vmatpush1.bf16.msra.mxu0 %v3800
    %4897 = vmatprep.subr.bf16.mxu0 %v3807
    %4898 = vmatpush1.bf16.msra.mxu0 %v3806
    %4899 = vmatprep.subr.bf16.mxu0 %v3813
    %4900 = vmatpush1.bf16.msra.mxu0 %v3812
    %4901 = vmatprep.mubr.bf16.mxu0 %v2905
    %4902 = vmatmul.mubr.bf16.gmra.mrb[0].mxu0 %v2904
    %v4903 = vpop.f32.mrb[0].mxu0
    %v4904 = vadd.f32 %v4791, %v4903
    %v4905 = vpop.f32.mrb[0].mxu0
    %v4906 = vadd.f32 %v4793, %v4905
    %v4907 = vpop.f32.mrb[0].mxu0
    %v4908 = vadd.f32 %v4795, %v4907
    %v4909 = vpop.f32.mrb[0].mxu0
    %v4910 = vadd.f32 %v4797, %v4909
    %4911 = vmatprep.mubr.bf16.mxu0 %v2910
    %4912 = vmatmul.mubr.bf16.gmra.mrb[0].mxu0 %v2909
    %v4913 = vpop.f32.mrb[0].mxu0
    %v4914 = vadd.f32 %v4801, %v4913
    %v4915 = vpop.f32.mrb[0].mxu0
    %v4916 = vadd.f32 %v4803, %v4915
    %v4917 = vpop.f32.mrb[0].mxu0
    %v4918 = vadd.f32 %v4805, %v4917
    %v4919 = vpop.f32.mrb[0].mxu0
    %v4920 = vadd.f32 %v4807, %v4919
    %4921 = vmatprep.mubr.bf16.mxu0 %v2915
    %4922 = vmatmul.mubr.bf16.gmra.mrb[0].mxu0 %v2914
    %v4923 = vpop.f32.mrb[0].mxu0
    %v4924 = vadd.f32 %v4811, %v4923
    %v4925 = vpop.f32.mrb[0].mxu0
    %v4926 = vadd.f32 %v4813, %v4925
    %v4927 = vpop.f32.mrb[0].mxu0
    %v4928 = vadd.f32 %v4815, %v4927
    %v4929 = vpop.f32.mrb[0].mxu0
    %v4930 = vadd.f32 %v4817, %v4929
    %4931 = vmatprep.mubr.bf16.mxu0 %v2920
    %4932 = vmatmul.mubr.bf16.gmra.mrb[0].mxu0 %v2919
    %v4933 = vpop.f32.mrb[0].mxu0
    %v4934 = vadd.f32 %v4821, %v4933
    %v4935 = vpop.f32.mrb[0].mxu0
    %v4936 = vadd.f32 %v4823, %v4935
    %v4937 = vpop.f32.mrb[0].mxu0
    %v4938 = vadd.f32 %v4825, %v4937
    %v4939 = vpop.f32.mrb[0].mxu0
    %v4940 = vadd.f32 %v4827, %v4939
    %4941 = vmatprep.mubr.bf16.mxu0 %v2925
    %4942 = vmatmul.mubr.bf16.gmra.mrb[0].mxu0 %v2924
    %v4943 = vpop.f32.mrb[0].mxu0
    %v4944 = vadd.f32 %v4831, %v4943
    %v4945 = vpop.f32.mrb[0].mxu0
    %v4946 = vadd.f32 %v4833, %v4945
    %v4947 = vpop.f32.mrb[0].mxu0
    %v4948 = vadd.f32 %v4835, %v4947
    %v4949 = vpop.f32.mrb[0].mxu0
    %v4950 = vadd.f32 %v4837, %v4949
    %4951 = vmatprep.mubr.bf16.mxu0 %v2930
    %4952 = vmatmul.mubr.bf16.gmra.mrb[0].mxu0 %v2929
    %v4953 = vpop.f32.mrb[0].mxu0
    %v4954 = vadd.f32 %v4841, %v4953
    %v4955 = vpop.f32.mrb[0].mxu0
    %v4956 = vadd.f32 %v4843, %v4955
    %v4957 = vpop.f32.mrb[0].mxu0
    %v4958 = vadd.f32 %v4845, %v4957
    %v4959 = vpop.f32.mrb[0].mxu0
    %v4960 = vadd.f32 %v4847, %v4959
    %4961 = vmatprep.mubr.bf16.mxu0 %v2935
    %4962 = vmatmul.mubr.bf16.gmra.mrb[0].mxu0 %v2934
    %v4963 = vpop.f32.mrb[0].mxu0
    %v4964 = vadd.f32 %v4851, %v4963
    %v4965 = vpop.f32.mrb[0].mxu0
    %v4966 = vadd.f32 %v4853, %v4965
    %v4967 = vpop.f32.mrb[0].mxu0
    %v4968 = vadd.f32 %v4855, %v4967
    %v4969 = vpop.f32.mrb[0].mxu0
    %v4970 = vadd.f32 %v4857, %v4969
    %4971 = vmatprep.mubr.bf16.mxu0 %v2940
    %4972 = vmatmul.mubr.bf16.gmra.mrb[0].mxu0 %v2939
    %v4973 = vpop.f32.mrb[0].mxu0
    %v4974 = vadd.f32 %v4861, %v4973
    %v4975 = vpop.f32.mrb[0].mxu0
    %v4976 = vadd.f32 %v4863, %v4975
    %v4977 = vpop.f32.mrb[0].mxu0
    %v4978 = vadd.f32 %v4865, %v4977
    %v4979 = vpop.f32.mrb[0].mxu0
    %v4980 = vadd.f32 %v4867, %v4979
    %4981 = vdwg.mxu0
    %4982 = vmatprep.subr.bf16.mxu0 %v3819
    %4983 = vmatpush1.bf16.msra.mxu0 %v3818
    %4984 = vmatprep.subr.bf16.mxu0 %v3825
    %4985 = vmatpush1.bf16.msra.mxu0 %v3824
    %4986 = vmatprep.subr.bf16.mxu0 %v3831
    %4987 = vmatpush1.bf16.msra.mxu0 %v3830
    %4988 = vmatprep.subr.bf16.mxu0 %v3837
    %4989 = vmatpush1.bf16.msra.mxu0 %v3836
    %4990 = vmatprep.subr.bf16.mxu0 0
    %4991 = vmatpush1.bf16.msra.mxu0 0
    %4992 = vmatprep.subr.bf16.mxu0 0
    %4993 = vmatpush1.bf16.msra.mxu0 0
    %4994 = vmatprep.subr.bf16.mxu0 0
    %4995 = vmatpush1.bf16.msra.mxu0 0
    %4996 = vmatprep.subr.bf16.mxu0 0
    %4997 = vmatpush1.bf16.msra.mxu0 0
    %4998 = vmatprep.subr.bf16.mxu0 0
    %4999 = vmatpush1.bf16.msra.mxu0 0
    %5000 = vmatprep.subr.bf16.mxu0 0
    %5001 = vmatpush1.bf16.msra.mxu0 0
    %5002 = vmatprep.subr.bf16.mxu0 0
    %5003 = vmatpush1.bf16.msra.mxu0 0
    %5004 = vmatprep.subr.bf16.mxu0 0
    %5005 = vmatpush1.bf16.msra.mxu0 0
    %5006 = vmatprep.subr.bf16.mxu0 0
    %5007 = vmatpush1.bf16.msra.mxu0 0
    %5008 = vmatprep.subr.bf16.mxu0 0
    %5009 = vmatpush1.bf16.msra.mxu0 0
    %5010 = vmatprep.subr.bf16.mxu0 0
    %5011 = vmatpush1.bf16.msra.mxu0 0
    %5012 = vmatprep.subr.bf16.mxu0 0
    %5013 = vmatpush1.bf16.msra.mxu0 0
    %5014 = vmatprep.mubr.bf16.mxu0 0
    %5015 = vmatmul.mubr.bf16.gmra.mrb[0].mxu0 %v4055
    %v5016 = vpop.f32.mrb[0].mxu0
    %v5017 = vadd.f32 %v4904, %v5016
    %v5018 = vpop.f32.mrb[0].mxu0
    %v5019 = vadd.f32 %v4906, %v5018
    %v5020 = vpop.f32.mrb[0].mxu0
    %v5021 = vadd.f32 %v4908, %v5020
    %v5022 = vpop.f32.mrb[0].mxu0
    %v5023 = vadd.f32 %v4910, %v5022
    %5024 = vmatprep.mubr.bf16.mxu0 0
    %5025 = vmatmul.mubr.bf16.gmra.mrb[0].mxu0 %v4058
    %v5026 = vpop.f32.mrb[0].mxu0
    %v5027 = vadd.f32 %v4914, %v5026
    %v5028 = vpop.f32.mrb[0].mxu0
    %v5029 = vadd.f32 %v4916, %v5028
    %v5030 = vpop.f32.mrb[0].mxu0
    %v5031 = vadd.f32 %v4918, %v5030
    %v5032 = vpop.f32.mrb[0].mxu0
    %v5033 = vadd.f32 %v4920, %v5032
    %5034 = vmatprep.mubr.bf16.mxu0 0
    %5035 = vmatmul.mubr.bf16.gmra.mrb[0].mxu0 %v4061
    %v5036 = vpop.f32.mrb[0].mxu0
    %v5037 = vadd.f32 %v4924, %v5036
    %v5038 = vpop.f32.mrb[0].mxu0
    %v5039 = vadd.f32 %v4926, %v5038
    %v5040 = vpop.f32.mrb[0].mxu0
    %v5041 = vadd.f32 %v4928, %v5040
    %v5042 = vpop.f32.mrb[0].mxu0
    %v5043 = vadd.f32 %v4930, %v5042
    %5044 = vmatprep.mubr.bf16.mxu0 0
    %5045 = vmatmul.mubr.bf16.gmra.mrb[0].mxu0 %v4064
    %v5046 = vpop.f32.mrb[0].mxu0
    %v5047 = vadd.f32 %v4934, %v5046
    %v5048 = vpop.f32.mrb[0].mxu0
    %v5049 = vadd.f32 %v4936, %v5048
    %v5050 = vpop.f32.mrb[0].mxu0
    %v5051 = vadd.f32 %v4938, %v5050
    %v5052 = vpop.f32.mrb[0].mxu0
    %v5053 = vadd.f32 %v4940, %v5052
    %5054 = vmatprep.mubr.bf16.mxu0 0
    %5055 = vmatmul.mubr.bf16.gmra.mrb[0].mxu0 %v4067
    %v5056 = vpop.f32.mrb[0].mxu0
    %v5057 = vadd.f32 %v4944, %v5056
    %v5058 = vpop.f32.mrb[0].mxu0
    %v5059 = vadd.f32 %v4946, %v5058
    %v5060 = vpop.f32.mrb[0].mxu0
    %v5061 = vadd.f32 %v4948, %v5060
    %v5062 = vpop.f32.mrb[0].mxu0
    %v5063 = vadd.f32 %v4950, %v5062
    %5064 = vmatprep.mubr.bf16.mxu0 0
    %5065 = vmatmul.mubr.bf16.gmra.mrb[0].mxu0 %v4070
    %v5066 = vpop.f32.mrb[0].mxu0
    %v5067 = vadd.f32 %v4954, %v5066
    %v5068 = vpop.f32.mrb[0].mxu0
    %v5069 = vadd.f32 %v4956, %v5068
    %v5070 = vpop.f32.mrb[0].mxu0
    %v5071 = vadd.f32 %v4958, %v5070
    %v5072 = vpop.f32.mrb[0].mxu0
    %v5073 = vadd.f32 %v4960, %v5072
    %5074 = vmatprep.mubr.bf16.mxu0 0
    %5075 = vmatmul.mubr.bf16.gmra.mrb[0].mxu0 %v4073
    %v5076 = vpop.f32.mrb[0].mxu0
    %v5077 = vadd.f32 %v4964, %v5076
    %v5078 = vpop.f32.mrb[0].mxu0
    %v5079 = vadd.f32 %v4966, %v5078
    %v5080 = vpop.f32.mrb[0].mxu0
    %v5081 = vadd.f32 %v4968, %v5080
    %v5082 = vpop.f32.mrb[0].mxu0
    %v5083 = vadd.f32 %v4970, %v5082
    %5084 = vmatprep.mubr.bf16.mxu0 0
    %5085 = vmatmul.mubr.bf16.gmra.mrb[0].mxu0 %v4076
    %v5086 = vpop.f32.mrb[0].mxu0
    %v5087 = vadd.f32 %v4974, %v5086
    %v5088 = vpop.f32.mrb[0].mxu0
    %v5089 = vadd.f32 %v4976, %v5088
    %v5090 = vpop.f32.mrb[0].mxu0
    %v5091 = vadd.f32 %v4978, %v5090
    %v5092 = vpop.f32.mrb[0].mxu0
    %v5093 = vadd.f32 %v4980, %v5092
    %5094 = vdwg.mxu0
    %5127 = vrot.lane.b32.xlu0 %v4341, 64
    %v5128 = vpop.permute.xlu0 %5127
    %5129 = vrot.lane.b32.xlu0 %v4678, 64
    %v5130 = vpop.permute.xlu0 %5129
    %5131 = vrot.lane.b32.xlu0 %v4345, 64
    %v5132 = vpop.permute.xlu0 %5131
    %5133 = vrot.lane.b32.xlu0 %v4682, 64
    %v5134 = vpop.permute.xlu0 %5133
    %5135 = vrot.lane.b32.xlu0 %v4351, 64
    %v5136 = vpop.permute.xlu0 %5135
    %5137 = vrot.lane.b32.xlu0 %v4688, 64
    %v5138 = vpop.permute.xlu0 %5137
    %5139 = vrot.lane.b32.xlu0 %v4355, 64
    %v5140 = vpop.permute.xlu0 %5139
    %5141 = vrot.lane.b32.xlu0 %v4692, 64
    %v5142 = vpop.permute.xlu0 %5141
    %5143 = vrot.lane.b32.xlu0 %v4361, 64
    %v5144 = vpop.permute.xlu0 %5143
    %5145 = vrot.lane.b32.xlu0 %v4698, 64
    %v5146 = vpop.permute.xlu0 %5145
    %5147 = vrot.lane.b32.xlu0 %v4365, 64
    %v5148 = vpop.permute.xlu0 %5147
    %5149 = vrot.lane.b32.xlu0 %v4702, 64
    %v5150 = vpop.permute.xlu0 %5149
    %5151 = vrot.lane.b32.xlu0 %v4371, 64
    %v5152 = vpop.permute.xlu0 %5151
    %5153 = vrot.lane.b32.xlu0 %v4708, 64
    %v5154 = vpop.permute.xlu0 %5153
    %5155 = vrot.lane.b32.xlu0 %v4375, 64
    %v5156 = vpop.permute.xlu0 %5155
    %5157 = vrot.lane.b32.xlu0 %v4712, 64
    %v5158 = vpop.permute.xlu0 %5157
    %5159 = vrot.lane.b32.xlu0 %v4381, 64
    %v5160 = vpop.permute.xlu0 %5159
    %5161 = vrot.lane.b32.xlu0 %v4718, 64
    %v5162 = vpop.permute.xlu0 %5161
    %5163 = vrot.lane.b32.xlu0 %v4385, 64
    %v5164 = vpop.permute.xlu0 %5163
    %5165 = vrot.lane.b32.xlu0 %v4722, 64
    %v5166 = vpop.permute.xlu0 %5165
    %5167 = vrot.lane.b32.xlu0 %v4391, 64
    %v5168 = vpop.permute.xlu0 %5167
    %5169 = vrot.lane.b32.xlu0 %v4728, 64
    %v5170 = vpop.permute.xlu0 %5169
    %5171 = vrot.lane.b32.xlu0 %v4395, 64
    %v5172 = vpop.permute.xlu0 %5171
    %5173 = vrot.lane.b32.xlu0 %v4732, 64
    %v5174 = vpop.permute.xlu0 %5173
    %5175 = vrot.lane.b32.xlu0 %v4401, 64
    %v5176 = vpop.permute.xlu0 %5175
    %5177 = vrot.lane.b32.xlu0 %v4738, 64
    %v5178 = vpop.permute.xlu0 %5177
    %5179 = vrot.lane.b32.xlu0 %v4405, 64
    %v5180 = vpop.permute.xlu0 %5179
    %5181 = vrot.lane.b32.xlu0 %v4742, 64
    %v5182 = vpop.permute.xlu0 %5181
    %5183 = vrot.lane.b32.xlu0 %v4411, 64
    %v5184 = vpop.permute.xlu0 %5183
    %5185 = vrot.lane.b32.xlu0 %v4748, 64
    %v5186 = vpop.permute.xlu0 %5185
    %5187 = vrot.lane.b32.xlu0 %v4415, 64
    %v5188 = vpop.permute.xlu0 %5187
    %5189 = vrot.lane.b32.xlu0 %v4752, 64
    %v5190 = vpop.permute.xlu0 %5189
    %v5191 = vsel %vm1852, %v5128, %v5130
    %v5192 = vsel %vm1852, %v5132, %v5134
    %v5193 = vsel %vm1852, %v5136, %v5138
    %v5194 = vsel %vm1852, %v5140, %v5142
    %v5195 = vsel %vm1852, %v5144, %v5146
    %v5196 = vsel %vm1852, %v5148, %v5150
    %v5197 = vsel %vm1852, %v5152, %v5154
    %v5198 = vsel %vm1852, %v5156, %v5158
    %v5199 = vsel %vm1852, %v5160, %v5162
    %v5200 = vsel %vm1852, %v5164, %v5166
    %v5201 = vsel %vm1852, %v5168, %v5170
    %v5202 = vsel %vm1852, %v5172, %v5174
    %v5203 = vsel %vm1852, %v5176, %v5178
    %v5204 = vsel %vm1852, %v5180, %v5182
    %v5205 = vsel %vm1852, %v5184, %v5186
    %v5206 = vsel %vm1852, %v5188, %v5190
    %v5239 = vmax.f32 %v4339, %v5191
    %v5240 = vmax.f32 %v4341, %v5130
    %v5241 = vmax.f32 %v4343, %v5192
    %v5242 = vmax.f32 %v4345, %v5134
    %v5243 = vmax.f32 %v4349, %v5193
    %v5244 = vmax.f32 %v4351, %v5138
    %v5245 = vmax.f32 %v4353, %v5194
    %v5246 = vmax.f32 %v4355, %v5142
    %v5247 = vmax.f32 %v4359, %v5195
    %v5248 = vmax.f32 %v4361, %v5146
    %v5249 = vmax.f32 %v4363, %v5196
    %v5250 = vmax.f32 %v4365, %v5150
    %v5251 = vmax.f32 %v4369, %v5197
    %v5252 = vmax.f32 %v4371, %v5154
    %v5253 = vmax.f32 %v4373, %v5198
    %v5254 = vmax.f32 %v4375, %v5158
    %v5255 = vmax.f32 %v4379, %v5199
    %v5256 = vmax.f32 %v4381, %v5162
    %v5257 = vmax.f32 %v4383, %v5200
    %v5258 = vmax.f32 %v4385, %v5166
    %v5259 = vmax.f32 %v4389, %v5201
    %v5260 = vmax.f32 %v4391, %v5170
    %v5261 = vmax.f32 %v4393, %v5202
    %v5262 = vmax.f32 %v4395, %v5174
    %v5263 = vmax.f32 %v4399, %v5203
    %v5264 = vmax.f32 %v4401, %v5178
    %v5265 = vmax.f32 %v4403, %v5204
    %v5266 = vmax.f32 %v4405, %v5182
    %v5267 = vmax.f32 %v4409, %v5205
    %v5268 = vmax.f32 %v4411, %v5186
    %v5269 = vmax.f32 %v4413, %v5206
    %v5270 = vmax.f32 %v4415, %v5190
    %5303 = vrot.lane.b32.xlu0 %v5017, 64
    %v5304 = vpop.permute.xlu0 %5303
    %5305 = vrot.lane.b32.xlu0 %v5019, 64
    %v5306 = vpop.permute.xlu0 %5305
    %5307 = vrot.lane.b32.xlu0 %v5021, 64
    %v5308 = vpop.permute.xlu0 %5307
    %5309 = vrot.lane.b32.xlu0 %v5023, 64
    %v5310 = vpop.permute.xlu0 %5309
    %5311 = vrot.lane.b32.xlu0 %v5027, 64
    %v5312 = vpop.permute.xlu0 %5311
    %5313 = vrot.lane.b32.xlu0 %v5029, 64
    %v5314 = vpop.permute.xlu0 %5313
    %5315 = vrot.lane.b32.xlu0 %v5031, 64
    %v5316 = vpop.permute.xlu0 %5315
    %5317 = vrot.lane.b32.xlu0 %v5033, 64
    %v5318 = vpop.permute.xlu0 %5317
    %5319 = vrot.lane.b32.xlu0 %v5037, 64
    %v5320 = vpop.permute.xlu0 %5319
    %5321 = vrot.lane.b32.xlu0 %v5039, 64
    %v5322 = vpop.permute.xlu0 %5321
    %5323 = vrot.lane.b32.xlu0 %v5041, 64
    %v5324 = vpop.permute.xlu0 %5323
    %5325 = vrot.lane.b32.xlu0 %v5043, 64
    %v5326 = vpop.permute.xlu0 %5325
    %5327 = vrot.lane.b32.xlu0 %v5047, 64
    %v5328 = vpop.permute.xlu0 %5327
    %5329 = vrot.lane.b32.xlu0 %v5049, 64
    %v5330 = vpop.permute.xlu0 %5329
    %5331 = vrot.lane.b32.xlu0 %v5051, 64
    %v5332 = vpop.permute.xlu0 %5331
    %5333 = vrot.lane.b32.xlu0 %v5053, 64
    %v5334 = vpop.permute.xlu0 %5333
    %5335 = vrot.lane.b32.xlu0 %v5057, 64
    %v5336 = vpop.permute.xlu0 %5335
    %5337 = vrot.lane.b32.xlu0 %v5059, 64
    %v5338 = vpop.permute.xlu0 %5337
    %5339 = vrot.lane.b32.xlu0 %v5061, 64
    %v5340 = vpop.permute.xlu0 %5339
    %5341 = vrot.lane.b32.xlu0 %v5063, 64
    %v5342 = vpop.permute.xlu0 %5341
    %5343 = vrot.lane.b32.xlu0 %v5067, 64
    %v5344 = vpop.permute.xlu0 %5343
    %5345 = vrot.lane.b32.xlu0 %v5069, 64
    %v5346 = vpop.permute.xlu0 %5345
    %5347 = vrot.lane.b32.xlu0 %v5071, 64
    %v5348 = vpop.permute.xlu0 %5347
    %5349 = vrot.lane.b32.xlu0 %v5073, 64
    %v5350 = vpop.permute.xlu0 %5349
    %5351 = vrot.lane.b32.xlu0 %v5077, 64
    %v5352 = vpop.permute.xlu0 %5351
    %5353 = vrot.lane.b32.xlu0 %v5079, 64
    %v5354 = vpop.permute.xlu0 %5353
    %5355 = vrot.lane.b32.xlu0 %v5081, 64
    %v5356 = vpop.permute.xlu0 %5355
    %5357 = vrot.lane.b32.xlu0 %v5083, 64
    %v5358 = vpop.permute.xlu0 %5357
    %5359 = vrot.lane.b32.xlu0 %v5087, 64
    %v5360 = vpop.permute.xlu0 %5359
    %5361 = vrot.lane.b32.xlu0 %v5089, 64
    %v5362 = vpop.permute.xlu0 %5361
    %5363 = vrot.lane.b32.xlu0 %v5091, 64
    %v5364 = vpop.permute.xlu0 %5363
    %5365 = vrot.lane.b32.xlu0 %v5093, 64
    %v5366 = vpop.permute.xlu0 %5365
    %v5367 = vsel %vm1852, %v5304, %v5306
    %v5368 = vsel %vm1852, %v5308, %v5310
    %v5369 = vsel %vm1852, %v5312, %v5314
    %v5370 = vsel %vm1852, %v5316, %v5318
    %v5371 = vsel %vm1852, %v5320, %v5322
    %v5372 = vsel %vm1852, %v5324, %v5326
    %v5373 = vsel %vm1852, %v5328, %v5330
    %v5374 = vsel %vm1852, %v5332, %v5334
    %v5375 = vsel %vm1852, %v5336, %v5338
    %v5376 = vsel %vm1852, %v5340, %v5342
    %v5377 = vsel %vm1852, %v5344, %v5346
    %v5378 = vsel %vm1852, %v5348, %v5350
    %v5379 = vsel %vm1852, %v5352, %v5354
    %v5380 = vsel %vm1852, %v5356, %v5358
    %v5381 = vsel %vm1852, %v5360, %v5362
    %v5382 = vsel %vm1852, %v5364, %v5366
    %v5415 = vmax.f32 %v4680, %v5367
    %v5416 = vmax.f32 %v5017, %v5306
    %v5417 = vmax.f32 %v4684, %v5368
    %v5418 = vmax.f32 %v5021, %v5310
    %v5419 = vmax.f32 %v4690, %v5369
    %v5420 = vmax.f32 %v5027, %v5314
    %v5421 = vmax.f32 %v4694, %v5370
    %v5422 = vmax.f32 %v5031, %v5318
    %v5423 = vmax.f32 %v4700, %v5371
    %v5424 = vmax.f32 %v5037, %v5322
    %v5425 = vmax.f32 %v4704, %v5372
    %v5426 = vmax.f32 %v5041, %v5326
    %v5427 = vmax.f32 %v4710, %v5373
    %v5428 = vmax.f32 %v5047, %v5330
    %v5429 = vmax.f32 %v4714, %v5374
    %v5430 = vmax.f32 %v5051, %v5334
    %v5431 = vmax.f32 %v4720, %v5375
    %v5432 = vmax.f32 %v5057, %v5338
    %v5433 = vmax.f32 %v4724, %v5376
    %v5434 = vmax.f32 %v5061, %v5342
    %v5435 = vmax.f32 %v4730, %v5377
    %v5436 = vmax.f32 %v5067, %v5346
    %v5437 = vmax.f32 %v4734, %v5378
    %v5438 = vmax.f32 %v5071, %v5350
    %v5439 = vmax.f32 %v4740, %v5379
    %v5440 = vmax.f32 %v5077, %v5354
    %v5441 = vmax.f32 %v4744, %v5380
    %v5442 = vmax.f32 %v5081, %v5358
    %v5443 = vmax.f32 %v4750, %v5381
    %v5444 = vmax.f32 %v5087, %v5362
    %v5445 = vmax.f32 %v4754, %v5382
    %v5446 = vmax.f32 %v5091, %v5366
    %v5447 = vmax.f32 %v5239, %v5415
    %v5448 = vmax.f32 %v5240, %v5416
    %v5449 = vmax.f32 %v5241, %v5417
    %v5450 = vmax.f32 %v5242, %v5418
    %v5451 = vmax.f32 %v5243, %v5419
    %v5452 = vmax.f32 %v5244, %v5420
    %v5453 = vmax.f32 %v5245, %v5421
    %v5454 = vmax.f32 %v5246, %v5422
    %v5455 = vmax.f32 %v5247, %v5423
    %v5456 = vmax.f32 %v5248, %v5424
    %v5457 = vmax.f32 %v5249, %v5425
    %v5458 = vmax.f32 %v5250, %v5426
    %v5459 = vmax.f32 %v5251, %v5427
    %v5460 = vmax.f32 %v5252, %v5428
    %v5461 = vmax.f32 %v5253, %v5429
    %v5462 = vmax.f32 %v5254, %v5430
    %v5463 = vmax.f32 %v5255, %v5431
    %v5464 = vmax.f32 %v5256, %v5432
    %v5465 = vmax.f32 %v5257, %v5433
    %v5466 = vmax.f32 %v5258, %v5434
    %v5467 = vmax.f32 %v5259, %v5435
    %v5468 = vmax.f32 %v5260, %v5436
    %v5469 = vmax.f32 %v5261, %v5437
    %v5470 = vmax.f32 %v5262, %v5438
    %v5471 = vmax.f32 %v5263, %v5439
    %v5472 = vmax.f32 %v5264, %v5440
    %v5473 = vmax.f32 %v5265, %v5441
    %v5474 = vmax.f32 %v5266, %v5442
    %v5475 = vmax.f32 %v5267, %v5443
    %v5476 = vmax.f32 %v5268, %v5444
    %v5477 = vmax.f32 %v5269, %v5445
    %v5478 = vmax.f32 %v5270, %v5446
    %v5480 = vlaneseq
    %v5481 = vshrl.u32 %v5480, 7
    %v5482 = vsub.s32 0, %v5481
    %v5483 = vrot.slane %v571, %v5482
    %v5484 = vlaneseq
    %v5485 = vshrl.u32 %v5484, 7
    %v5486 = vsub.s32 1, %v5485
    %v5487 = vrot.slane %v571, %v5486
    %v5490 = vadd.f32 %v5447, %v5483
    %v5491 = vadd.f32 %v5448, %v5487
    %v5492 = vadd.f32 %v5449, %v5483
    %v5493 = vadd.f32 %v5450, %v5487
    %v5494 = vadd.f32 %v5451, %v5483
    %v5495 = vadd.f32 %v5452, %v5487
    %v5496 = vadd.f32 %v5453, %v5483
    %v5497 = vadd.f32 %v5454, %v5487
    %v5498 = vadd.f32 %v5455, %v5483
    %v5499 = vadd.f32 %v5456, %v5487
    %v5500 = vadd.f32 %v5457, %v5483
    %v5501 = vadd.f32 %v5458, %v5487
    %v5502 = vadd.f32 %v5459, %v5483
    %v5503 = vadd.f32 %v5460, %v5487
    %v5504 = vadd.f32 %v5461, %v5483
    %v5505 = vadd.f32 %v5462, %v5487
    %v5506 = vadd.f32 %v5463, %v5483
    %v5507 = vadd.f32 %v5464, %v5487
    %v5508 = vadd.f32 %v5465, %v5483
    %v5509 = vadd.f32 %v5466, %v5487
    %v5510 = vadd.f32 %v5467, %v5483
    %v5511 = vadd.f32 %v5468, %v5487
    %v5512 = vadd.f32 %v5469, %v5483
    %v5513 = vadd.f32 %v5470, %v5487
    %v5514 = vadd.f32 %v5471, %v5483
    %v5515 = vadd.f32 %v5472, %v5487
    %v5516 = vadd.f32 %v5473, %v5483
    %v5517 = vadd.f32 %v5474, %v5487
    %v5518 = vadd.f32 %v5475, %v5483
    %v5519 = vadd.f32 %v5476, %v5487
    %v5520 = vadd.f32 %v5477, %v5483
    %v5521 = vadd.f32 %v5478, %v5487
    %v5522 = vmax.f32 %v5490, 0.0
    %v5523 = vmax.f32 %v5491, 0.0
    %v5524 = vmax.f32 %v5492, 0.0
    %v5525 = vmax.f32 %v5493, 0.0
    %v5526 = vmax.f32 %v5494, 0.0
    %v5527 = vmax.f32 %v5495, 0.0
    %v5528 = vmax.f32 %v5496, 0.0
    %v5529 = vmax.f32 %v5497, 0.0
    %v5530 = vmax.f32 %v5498, 0.0
    %v5531 = vmax.f32 %v5499, 0.0
    %v5532 = vmax.f32 %v5500, 0.0
    %v5533 = vmax.f32 %v5501, 0.0
    %v5534 = vmax.f32 %v5502, 0.0
    %v5535 = vmax.f32 %v5503, 0.0
    %v5536 = vmax.f32 %v5504, 0.0
    %v5537 = vmax.f32 %v5505, 0.0
    %v5538 = vmax.f32 %v5506, 0.0
    %v5539 = vmax.f32 %v5507, 0.0
    %v5540 = vmax.f32 %v5508, 0.0
    %v5541 = vmax.f32 %v5509, 0.0
    %v5542 = vmax.f32 %v5510, 0.0
    %v5543 = vmax.f32 %v5511, 0.0
    %v5544 = vmax.f32 %v5512, 0.0
    %v5545 = vmax.f32 %v5513, 0.0
    %v5546 = vmax.f32 %v5514, 0.0
    %v5547 = vmax.f32 %v5515, 0.0
    %v5548 = vmax.f32 %v5516, 0.0
    %v5549 = vmax.f32 %v5517, 0.0
    %v5550 = vmax.f32 %v5518, 0.0
    %v5551 = vmax.f32 %v5519, 0.0
    %v5552 = vmax.f32 %v5520, 0.0
    %v5553 = vmax.f32 %v5521, 0.0
    %v5554 = vpack.c.bf16 %v5524, %v5522
    %v5555 = vpack.c.bf16 %v5525, %v5523
    %v5556 = vpack.c.bf16 %v5528, %v5526
    %v5557 = vpack.c.bf16 %v5529, %v5527
    %v5558 = vpack.c.bf16 %v5532, %v5530
    %v5559 = vpack.c.bf16 %v5533, %v5531
    %v5560 = vpack.c.bf16 %v5536, %v5534
    %v5561 = vpack.c.bf16 %v5537, %v5535
    %v5562 = vpack.c.bf16 %v5540, %v5538
    %v5563 = vpack.c.bf16 %v5541, %v5539
    %v5564 = vpack.c.bf16 %v5544, %v5542
    %v5565 = vpack.c.bf16 %v5545, %v5543
    %v5566 = vpack.c.bf16 %v5548, %v5546
    %v5567 = vpack.c.bf16 %v5549, %v5547
    %v5568 = vpack.c.bf16 %v5552, %v5550
    %v5569 = vpack.c.bf16 %v5553, %v5551
    %5572 = vrot.lane.b32.xlu0 %v5554, 64
    %v5573 = vpop.permute.xlu0 %5572
    %5574 = vrot.lane.b32.xlu0 %v5555, 64
    %v5575 = vpop.permute.xlu0 %5574
    %vm5576 = vcmask 523264
    %v5577 = vsel %vm5576, %v5573, %v5575
    %v5578 = vrot.slane %v5554, 4
    %v5579 = vrot.slane %v5555, 4
    %5582 = vrot.lane.b32.xlu0 %v5556, 64
    %v5583 = vpop.permute.xlu0 %5582
    %5584 = vrot.lane.b32.xlu0 %v5557, 64
    %v5585 = vpop.permute.xlu0 %5584
    %v5586 = vsel %vm5576, %v5583, %v5585
    %v5589 = vsel %vm1852, 0, %v5573
    %v5592 = vsel %vm1852, %v5579, %v5583
    %v5595 = vrot.slane %v5558, 4
    %v5596 = vrot.slane %v5559, 4
    %5597 = vrot.lane.b32.xlu0 %v5595, 64
    %v5598 = vpop.permute.xlu0 %5597
    %5599 = vrot.lane.b32.xlu0 %v5596, 64
    %v5600 = vpop.permute.xlu0 %5599
    %v5601 = vsel %vm5576, %v5598, %v5600
    %v5604 = vrot.slane %v5560, 4
    %v5605 = vrot.slane %v5561, 4
    %5606 = vrot.lane.b32.xlu0 %v5604, 64
    %v5607 = vpop.permute.xlu0 %5606
    %5608 = vrot.lane.b32.xlu0 %v5605, 64
    %v5609 = vpop.permute.xlu0 %5608
    %v5610 = vsel %vm5576, %v5607, %v5609
    %v5613 = vsel %vm1852, %v5557, %v5598
    %v5616 = vsel %vm1852, %v5559, %v5607
    %v5619 = vrot.slane %v5562, 4
    %v5620 = vrot.slane %v5563, 4
    %5621 = vrot.lane.b32.xlu0 %v5619, 64
    %v5622 = vpop.permute.xlu0 %5621
    %5623 = vrot.lane.b32.xlu0 %v5620, 64
    %v5624 = vpop.permute.xlu0 %5623
    %v5625 = vsel %vm5576, %v5622, %v5624
    %v5628 = vrot.slane %v5564, 4
    %v5629 = vrot.slane %v5565, 4
    %5630 = vrot.lane.b32.xlu0 %v5628, 64
    %v5631 = vpop.permute.xlu0 %5630
    %5632 = vrot.lane.b32.xlu0 %v5629, 64
    %v5633 = vpop.permute.xlu0 %5632
    %v5634 = vsel %vm5576, %v5631, %v5633
    %v5637 = vsel %vm1852, %v5561, %v5622
    %v5640 = vsel %vm1852, %v5563, %v5631
    %v5643 = vrot.slane %v5566, 4
    %v5644 = vrot.slane %v5567, 4
    %5645 = vrot.lane.b32.xlu0 %v5643, 64
    %v5646 = vpop.permute.xlu0 %5645
    %5647 = vrot.lane.b32.xlu0 %v5644, 64
    %v5648 = vpop.permute.xlu0 %5647
    %v5649 = vsel %vm5576, %v5646, %v5648
    %v5652 = vrot.slane %v5568, 4
    %v5653 = vrot.slane %v5569, 4
    %5654 = vrot.lane.b32.xlu0 %v5652, 64
    %v5655 = vpop.permute.xlu0 %5654
    %5656 = vrot.lane.b32.xlu0 %v5653, 64
    %v5657 = vpop.permute.xlu0 %5656
    %v5658 = vsel %vm5576, %v5655, %v5657
    %v5661 = vsel %vm1852, %v5565, %v5646
    %v5664 = vsel %vm1852, %v5567, %v5655
    %v5666 = vsel %vm1852, %v5569, 0
    %v5669 = vrot.slane %v5637, 4
    %v5670 = vrot.slane %v5625, 4
    %v5671 = vrot.slane %v5640, 4
    %v5672 = vrot.slane %v5634, 4
    %v5676 = vrot.slane %v5666, 4
    %v5677 = vrot.slane 0, 4
    %v5678 = vrot.slane 0, 4
    %vm5679 = vcmask 1043456
    %v5681 = vsel %vm5679, 0, %v5556
    %v5683 = vsel %vm5679, %v5589, %v5613
    %v5687 = vsel %vm5679, %v5577, %v5601
    %v5691 = vsel %vm5679, %v5578, %v5558
    %v5693 = vsel %vm5679, %v5592, %v5616
    %v5697 = vsel %vm5679, %v5586, %v5610
    %v5701 = vsel %vm5679, %v5604, %v5564
    %v5704 = vsel %vm5679, %v5669, %v5661
    %v5708 = vsel %vm5679, %v5670, %v5649
    %v5712 = vsel %vm5679, %v5619, %v5566
    %v5715 = vsel %vm5679, %v5671, %v5664
    %v5719 = vsel %vm5679, %v5672, %v5658
    %v5721 = vld [vmem:[%s5] sm:$0xff]
    %v5722 = vld [vmem:[%s5 + $0x8] sm:$0xf]
    %v5723 = vld [vmem:[%s5 + $0xc] sm:$0xff]
    %v5724 = vld [vmem:[%s5 + $0x14] sm:$0xf]
    %v5725 = vld [vmem:[%s5 + $0x18] sm:$0xff]
    %v5726 = vld [vmem:[%s5 + $0x20] sm:$0xf]
    %v5727 = vld [vmem:[%s5 + $0x24] sm:$0xff]
    %v5728 = vld [vmem:[%s5 + $0x2c] sm:$0xf]
    %v5729 = vld [vmem:[%s5 + $0x30] sm:$0xff]
    %v5730 = vld [vmem:[%s5 + $0x38] sm:$0xf]
    %v5731 = vld [vmem:[%s5 + $0x3c] sm:$0xff]
    %v5732 = vld [vmem:[%s5 + $0x44] sm:$0xf]
    %v5733 = vld [vmem:[%s5 + $0x48] sm:$0xff]
    %v5734 = vld [vmem:[%s5 + $0x50] sm:$0xf]
    %v5735 = vld [vmem:[%s5 + $0x54] sm:$0xff]
    %v5736 = vld [vmem:[%s5 + $0x5c] sm:$0xf]
    %v5737 = vld [vmem:[%s5 + $0x60] sm:$0xff]
    %v5738 = vld [vmem:[%s5 + $0x68] sm:$0xf]
    %v5739 = vld [vmem:[%s5 + $0x6c] sm:$0xff]
    %v5740 = vld [vmem:[%s5 + $0x74] sm:$0xf]
    %v5741 = vld [vmem:[%s5 + $0x78] sm:$0xff]
    %v5742 = vld [vmem:[%s5 + $0x80] sm:$0xf]
    %v5743 = vld [vmem:[%s5 + $0x84] sm:$0xff]
    %v5744 = vld [vmem:[%s5 + $0x8c] sm:$0xf]
    %v5745 = vld [vmem:[%s5 + $0x90] sm:$0xff]
    %v5746 = vld [vmem:[%s5 + $0x98] sm:$0xf]
    %v5747 = vld [vmem:[%s5 + $0x9c] sm:$0xff]
    %v5748 = vld [vmem:[%s5 + $0xa4] sm:$0xf]
    %v5749 = vld [vmem:[%s5 + $0xa8] sm:$0xff]
    %v5750 = vld [vmem:[%s5 + $0xb0] sm:$0xf]
    %v5751 = vld [vmem:[%s5 + $0xb4] sm:$0xff]
    %v5752 = vld [vmem:[%s5 + $0xbc] sm:$0xf]
    %v5753 = vld [vmem:[%s5 + $0xc0] sm:$0xff]
    %v5754 = vld [vmem:[%s5 + $0xc8] sm:$0xf]
    %v5755 = vld [vmem:[%s5 + $0xcc] sm:$0xff]
    %v5756 = vld [vmem:[%s5 + $0xd4] sm:$0xf]
    %v5757 = vld [vmem:[%s5 + $0xd8] sm:$0xff]
    %v5758 = vld [vmem:[%s5 + $0xe0] sm:$0xf]
    %v5759 = vld [vmem:[%s5 + $0xe4] sm:$0xff]
    %v5760 = vld [vmem:[%s5 + $0xec] sm:$0xf]
    %v5761 = vld [vmem:[%s5 + $0xf0] sm:$0xff]
    %v5762 = vld [vmem:[%s5 + $0xf8] sm:$0xf]
    %v5763 = vld [vmem:[%s5 + $0xfc] sm:$0xff]
    %v5764 = vld [vmem:[%s5 + $0x104] sm:$0xf]
    %v5765 = vld [vmem:[%s5 + $0x108] sm:$0xff]
    %v5766 = vld [vmem:[%s5 + $0x110] sm:$0xf]
    %v5767 = vld [vmem:[%s5 + $0x114] sm:$0xff]
    %v5768 = vld [vmem:[%s5 + $0x11c] sm:$0xf]
    %v5769 = vld [vmem:[%s5 + $0x120] sm:$0xff]
    %v5770 = vld [vmem:[%s5 + $0x128] sm:$0xf]
    %v5771 = vld [vmem:[%s5 + $0x12c] sm:$0xff]
    %v5772 = vld [vmem:[%s5 + $0x134] sm:$0xf]
    %v5773 = vld [vmem:[%s5 + $0x138] sm:$0xff]
    %v5774 = vld [vmem:[%s5 + $0x140] sm:$0xf]
    %v5775 = vld [vmem:[%s5 + $0x144] sm:$0xff]
    %v5776 = vld [vmem:[%s5 + $0x14c] sm:$0xf]
    %v5777 = vld [vmem:[%s5 + $0x150] sm:$0xff]
    %v5778 = vld [vmem:[%s5 + $0x158] sm:$0xf]
    %v5779 = vld [vmem:[%s5 + $0x15c] sm:$0xff]
    %v5780 = vld [vmem:[%s5 + $0x164] sm:$0xf]
    %v5781 = vld [vmem:[%s5 + $0x168] sm:$0xff]
    %v5782 = vld [vmem:[%s5 + $0x170] sm:$0xf]
    %v5783 = vld [vmem:[%s5 + $0x174] sm:$0xff]
    %v5784 = vld [vmem:[%s5 + $0x17c] sm:$0xf]
    %v5785 = vld [vmem:[%s5 + $0x180] sm:$0xff]
    %v5786 = vld [vmem:[%s5 + $0x188] sm:$0xf]
    %v5787 = vld [vmem:[%s5 + $0x18c] sm:$0xff]
    %v5788 = vld [vmem:[%s5 + $0x194] sm:$0xf]
    %v5789 = vld [vmem:[%s5 + $0x198] sm:$0xff]
    %v5790 = vld [vmem:[%s5 + $0x1a0] sm:$0xf]
    %v5791 = vld [vmem:[%s5 + $0x1a4] sm:$0xff]
    %v5792 = vld [vmem:[%s5 + $0x1ac] sm:$0xf]
    %v5793 = vld [vmem:[%s5 + $0x1b0] sm:$0xff]
    %v5794 = vld [vmem:[%s5 + $0x1b8] sm:$0xf]
    %v5795 = vld [vmem:[%s5 + $0x1bc] sm:$0xff]
    %v5796 = vld [vmem:[%s5 + $0x1c4] sm:$0xf]
    %v5797 = vld [vmem:[%s5 + $0x1c8] sm:$0xff]
    %v5798 = vld [vmem:[%s5 + $0x1d0] sm:$0xf]
    %v5799 = vld [vmem:[%s5 + $0x1d4] sm:$0xff]
    %v5800 = vld [vmem:[%s5 + $0x1dc] sm:$0xf]
    %v5801 = vld [vmem:[%s5 + $0x1e0] sm:$0xff]
    %v5802 = vld [vmem:[%s5 + $0x1e8] sm:$0xf]
    %v5803 = vld [vmem:[%s5 + $0x1ec] sm:$0xff]
    %v5804 = vld [vmem:[%s5 + $0x1f4] sm:$0xf]
    %v5805 = vld [vmem:[%s5 + $0x1f8] sm:$0xff]
    %v5806 = vld [vmem:[%s5 + $0x200] sm:$0xf]
    %v5807 = vld [vmem:[%s5 + $0x204] sm:$0xff]
    %v5808 = vld [vmem:[%s5 + $0x20c] sm:$0xf]
    %v5809 = vld [vmem:[%s5 + $0x210] sm:$0xff]
    %v5810 = vld [vmem:[%s5 + $0x218] sm:$0xf]
    %v5811 = vld [vmem:[%s5 + $0x21c] sm:$0xff]
    %v5812 = vld [vmem:[%s5 + $0x224] sm:$0xf]
    %v5813 = vld [vmem:[%s5 + $0x228] sm:$0xff]
    %v5814 = vld [vmem:[%s5 + $0x230] sm:$0xf]
    %v5815 = vld [vmem:[%s5 + $0x234] sm:$0xff]
    %v5816 = vld [vmem:[%s5 + $0x23c] sm:$0xf]
    %v5817 = vld [vmem:[%s5 + $0x240] sm:$0xff]
    %v5818 = vld [vmem:[%s5 + $0x248] sm:$0xf]
    %v5819 = vld [vmem:[%s5 + $0x24c] sm:$0xff]
    %v5820 = vld [vmem:[%s5 + $0x254] sm:$0xf]
    %v5821 = vld [vmem:[%s5 + $0x258] sm:$0xff]
    %v5822 = vld [vmem:[%s5 + $0x260] sm:$0xf]
    %v5823 = vld [vmem:[%s5 + $0x264] sm:$0xff]
    %v5824 = vld [vmem:[%s5 + $0x26c] sm:$0xf]
    %v5825 = vld [vmem:[%s5 + $0x270] sm:$0xff]
    %v5826 = vld [vmem:[%s5 + $0x278] sm:$0xf]
    %v5827 = vld [vmem:[%s5 + $0x27c] sm:$0xff]
    %v5828 = vld [vmem:[%s5 + $0x284] sm:$0xf]
    %v5829 = vld [vmem:[%s5 + $0x288] sm:$0xff]
    %v5830 = vld [vmem:[%s5 + $0x290] sm:$0xf]
    %v5831 = vld [vmem:[%s5 + $0x294] sm:$0xff]
    %v5832 = vld [vmem:[%s5 + $0x29c] sm:$0xf]
    %v5833 = vld [vmem:[%s5 + $0x2a0] sm:$0xff]
    %v5834 = vld [vmem:[%s5 + $0x2a8] sm:$0xf]
    %v5835 = vld [vmem:[%s5 + $0x2ac] sm:$0xff]
    %v5836 = vld [vmem:[%s5 + $0x2b4] sm:$0xf]
    %v5837 = vld [vmem:[%s5 + $0x2b8] sm:$0xff]
    %v5838 = vld [vmem:[%s5 + $0x2c0] sm:$0xf]
    %v5839 = vld [vmem:[%s5 + $0x2c4] sm:$0xff]
    %v5840 = vld [vmem:[%s5 + $0x2cc] sm:$0xf]
    %v5841 = vld [vmem:[%s5 + $0x2d0] sm:$0xff]
    %v5842 = vld [vmem:[%s5 + $0x2d8] sm:$0xf]
    %v5843 = vld [vmem:[%s5 + $0x2dc] sm:$0xff]
    %v5844 = vld [vmem:[%s5 + $0x2e4] sm:$0xf]
    %v5845 = vld [vmem:[%s5 + $0x2e8] sm:$0xff]
    %v5846 = vld [vmem:[%s5 + $0x2f0] sm:$0xf]
    %v5847 = vld [vmem:[%s5 + $0x2f4] sm:$0xff]
    %v5848 = vld [vmem:[%s5 + $0x2fc] sm:$0xf]
    %v5849 = vld [vmem:[%s5 + $0x300] sm:$0xff]
    %v5850 = vld [vmem:[%s5 + $0x308] sm:$0xf]
    %v5851 = vld [vmem:[%s5 + $0x30c] sm:$0xff]
    %v5852 = vld [vmem:[%s5 + $0x314] sm:$0xf]
    %v5853 = vld [vmem:[%s5 + $0x318] sm:$0xff]
    %v5854 = vld [vmem:[%s5 + $0x320] sm:$0xf]
    %v5855 = vld [vmem:[%s5 + $0x324] sm:$0xff]
    %v5856 = vld [vmem:[%s5 + $0x32c] sm:$0xf]
    %v5857 = vld [vmem:[%s5 + $0x330] sm:$0xff]
    %v5858 = vld [vmem:[%s5 + $0x338] sm:$0xf]
    %v5859 = vld [vmem:[%s5 + $0x33c] sm:$0xff]
    %v5860 = vld [vmem:[%s5 + $0x344] sm:$0xf]
    %v5861 = vld [vmem:[%s5 + $0x348] sm:$0xff]
    %v5862 = vld [vmem:[%s5 + $0x350] sm:$0xf]
    %v5863 = vld [vmem:[%s5 + $0x354] sm:$0xff]
    %v5864 = vld [vmem:[%s5 + $0x35c] sm:$0xf]
    %v5865 = vld [vmem:[%s5 + $0x360] sm:$0xff]
    %v5866 = vld [vmem:[%s5 + $0x368] sm:$0xf]
    %v5867 = vld [vmem:[%s5 + $0x36c] sm:$0xff]
    %v5868 = vld [vmem:[%s5 + $0x374] sm:$0xf]
    %v5869 = vld [vmem:[%s5 + $0x378] sm:$0xff]
    %v5870 = vld [vmem:[%s5 + $0x380] sm:$0xf]
    %v5871 = vld [vmem:[%s5 + $0x384] sm:$0xff]
    %v5872 = vld [vmem:[%s5 + $0x38c] sm:$0xf]
    %v5873 = vld [vmem:[%s5 + $0x390] sm:$0xff]
    %v5874 = vld [vmem:[%s5 + $0x398] sm:$0xf]
    %v5875 = vld [vmem:[%s5 + $0x39c] sm:$0xff]
    %v5876 = vld [vmem:[%s5 + $0x3a4] sm:$0xf]
    %v5877 = vld [vmem:[%s5 + $0x3a8] sm:$0xff]
    %v5878 = vld [vmem:[%s5 + $0x3b0] sm:$0xf]
    %v5879 = vld [vmem:[%s5 + $0x3b4] sm:$0xff]
    %v5880 = vld [vmem:[%s5 + $0x3bc] sm:$0xf]
    %v5881 = vld [vmem:[%s5 + $0x3c0] sm:$0xff]
    %v5882 = vld [vmem:[%s5 + $0x3c8] sm:$0xf]
    %v5883 = vld [vmem:[%s5 + $0x3cc] sm:$0xff]
    %v5884 = vld [vmem:[%s5 + $0x3d4] sm:$0xf]
    %v5885 = vld [vmem:[%s5 + $0x3d8] sm:$0xff]
    %v5886 = vld [vmem:[%s5 + $0x3e0] sm:$0xf]
    %v5887 = vld [vmem:[%s5 + $0x3e4] sm:$0xff]
    %v5888 = vld [vmem:[%s5 + $0x3ec] sm:$0xf]
    %v5889 = vld [vmem:[%s5 + $0x3f0] sm:$0xff]
    %v5890 = vld [vmem:[%s5 + $0x3f8] sm:$0xf]
    %v5891 = vld [vmem:[%s5 + $0x3fc] sm:$0xff]
    %v5892 = vld [vmem:[%s5 + $0x404] sm:$0xf]
    %v5893 = vld [vmem:[%s5 + $0x408] sm:$0xff]
    %v5894 = vld [vmem:[%s5 + $0x410] sm:$0xf]
    %v5895 = vld [vmem:[%s5 + $0x414] sm:$0xff]
    %v5896 = vld [vmem:[%s5 + $0x41c] sm:$0xf]
    %v5897 = vld [vmem:[%s5 + $0x420] sm:$0xff]
    %v5898 = vld [vmem:[%s5 + $0x428] sm:$0xf]
    %v5899 = vld [vmem:[%s5 + $0x42c] sm:$0xff]
    %v5900 = vld [vmem:[%s5 + $0x434] sm:$0xf]
    %v5901 = vld [vmem:[%s5 + $0x438] sm:$0xff]
    %v5902 = vld [vmem:[%s5 + $0x440] sm:$0xf]
    %v5903 = vld [vmem:[%s5 + $0x444] sm:$0xff]
    %v5904 = vld [vmem:[%s5 + $0x44c] sm:$0xf]
    %v5905 = vld [vmem:[%s5 + $0x450] sm:$0xff]
    %v5906 = vld [vmem:[%s5 + $0x458] sm:$0xf]
    %v5907 = vld [vmem:[%s5 + $0x45c] sm:$0xff]
    %v5908 = vld [vmem:[%s5 + $0x464] sm:$0xf]
    %v5909 = vld [vmem:[%s5 + $0x468] sm:$0xff]
    %v5910 = vld [vmem:[%s5 + $0x470] sm:$0xf]
    %v5911 = vld [vmem:[%s5 + $0x474] sm:$0xff]
    %v5912 = vld [vmem:[%s5 + $0x47c] sm:$0xf]
    %v5913 = vld [vmem:[%s6] sm:$0xff]
    %v5914 = vld [vmem:[%s6 + $0x8] sm:$0xf]
    %v5915 = vld [vmem:[%s6 + $0xc] sm:$0xff]
    %v5916 = vld [vmem:[%s6 + $0x14] sm:$0xf]
    %v5917 = vld [vmem:[%s6 + $0x18] sm:$0xff]
    %v5918 = vld [vmem:[%s6 + $0x20] sm:$0xf]
    %v5919 = vld [vmem:[%s6 + $0x24] sm:$0xff]
    %v5920 = vld [vmem:[%s6 + $0x2c] sm:$0xf]
    %v5921 = vld [vmem:[%s6 + $0x30] sm:$0xff]
    %v5922 = vld [vmem:[%s6 + $0x38] sm:$0xf]
    %v5923 = vld [vmem:[%s6 + $0x3c] sm:$0xff]
    %v5924 = vld [vmem:[%s6 + $0x44] sm:$0xf]
    %v5925 = vld [vmem:[%s6 + $0x48] sm:$0xff]
    %v5926 = vld [vmem:[%s6 + $0x50] sm:$0xf]
    %v5927 = vld [vmem:[%s6 + $0x54] sm:$0xff]
    %v5928 = vld [vmem:[%s6 + $0x5c] sm:$0xf]
    %v5929 = vld [vmem:[%s6 + $0x60] sm:$0xff]
    %v5930 = vld [vmem:[%s6 + $0x68] sm:$0xf]
    %v5931 = vld [vmem:[%s6 + $0x6c] sm:$0xff]
    %v5932 = vld [vmem:[%s6 + $0x74] sm:$0xf]
    %v5933 = vld [vmem:[%s6 + $0x78] sm:$0xff]
    %v5934 = vld [vmem:[%s6 + $0x80] sm:$0xf]
    %v5935 = vld [vmem:[%s6 + $0x84] sm:$0xff]
    %v5936 = vld [vmem:[%s6 + $0x8c] sm:$0xf]
    %v5937 = vld [vmem:[%s6 + $0x90] sm:$0xff]
    %v5938 = vld [vmem:[%s6 + $0x98] sm:$0xf]
    %v5939 = vld [vmem:[%s6 + $0x9c] sm:$0xff]
    %v5940 = vld [vmem:[%s6 + $0xa4] sm:$0xf]
    %v5941 = vld [vmem:[%s6 + $0xa8] sm:$0xff]
    %v5942 = vld [vmem:[%s6 + $0xb0] sm:$0xf]
    %v5943 = vld [vmem:[%s6 + $0xb4] sm:$0xff]
    %v5944 = vld [vmem:[%s6 + $0xbc] sm:$0xf]
    %v5945 = vld [vmem:[%s6 + $0xc0] sm:$0xff]
    %v5946 = vld [vmem:[%s6 + $0xc8] sm:$0xf]
    %v5947 = vld [vmem:[%s6 + $0xcc] sm:$0xff]
    %v5948 = vld [vmem:[%s6 + $0xd4] sm:$0xf]
    %v5949 = vld [vmem:[%s6 + $0xd8] sm:$0xff]
    %v5950 = vld [vmem:[%s6 + $0xe0] sm:$0xf]
    %v5951 = vld [vmem:[%s6 + $0xe4] sm:$0xff]
    %v5952 = vld [vmem:[%s6 + $0xec] sm:$0xf]
    %v5953 = vld [vmem:[%s6 + $0xf0] sm:$0xff]
    %v5954 = vld [vmem:[%s6 + $0xf8] sm:$0xf]
    %v5955 = vld [vmem:[%s6 + $0xfc] sm:$0xff]
    %v5956 = vld [vmem:[%s6 + $0x104] sm:$0xf]
    %v5957 = vld [vmem:[%s6 + $0x108] sm:$0xff]
    %v5958 = vld [vmem:[%s6 + $0x110] sm:$0xf]
    %v5959 = vld [vmem:[%s6 + $0x114] sm:$0xff]
    %v5960 = vld [vmem:[%s6 + $0x11c] sm:$0xf]
    %v5961 = vld [vmem:[%s6 + $0x120] sm:$0xff]
    %v5962 = vld [vmem:[%s6 + $0x128] sm:$0xf]
    %v5963 = vld [vmem:[%s6 + $0x12c] sm:$0xff]
    %v5964 = vld [vmem:[%s6 + $0x134] sm:$0xf]
    %v5965 = vld [vmem:[%s6 + $0x138] sm:$0xff]
    %v5966 = vld [vmem:[%s6 + $0x140] sm:$0xf]
    %v5967 = vld [vmem:[%s6 + $0x144] sm:$0xff]
    %v5968 = vld [vmem:[%s6 + $0x14c] sm:$0xf]
    %v5969 = vld [vmem:[%s6 + $0x150] sm:$0xff]
    %v5970 = vld [vmem:[%s6 + $0x158] sm:$0xf]
    %v5971 = vld [vmem:[%s6 + $0x15c] sm:$0xff]
    %v5972 = vld [vmem:[%s6 + $0x164] sm:$0xf]
    %v5973 = vld [vmem:[%s6 + $0x168] sm:$0xff]
    %v5974 = vld [vmem:[%s6 + $0x170] sm:$0xf]
    %v5975 = vld [vmem:[%s6 + $0x174] sm:$0xff]
    %v5976 = vld [vmem:[%s6 + $0x17c] sm:$0xf]
    %v5977 = vld [vmem:[%s6 + $0x180] sm:$0xff]
    %v5978 = vld [vmem:[%s6 + $0x188] sm:$0xf]
    %v5979 = vld [vmem:[%s6 + $0x18c] sm:$0xff]
    %v5980 = vld [vmem:[%s6 + $0x194] sm:$0xf]
    %v5981 = vld [vmem:[%s6 + $0x198] sm:$0xff]
    %v5982 = vld [vmem:[%s6 + $0x1a0] sm:$0xf]
    %v5983 = vld [vmem:[%s6 + $0x1a4] sm:$0xff]
    %v5984 = vld [vmem:[%s6 + $0x1ac] sm:$0xf]
    %v5985 = vld [vmem:[%s6 + $0x1b0] sm:$0xff]
    %v5986 = vld [vmem:[%s6 + $0x1b8] sm:$0xf]
    %v5987 = vld [vmem:[%s6 + $0x1bc] sm:$0xff]
    %v5988 = vld [vmem:[%s6 + $0x1c4] sm:$0xf]
    %v5989 = vld [vmem:[%s6 + $0x1c8] sm:$0xff]
    %v5990 = vld [vmem:[%s6 + $0x1d0] sm:$0xf]
    %v5991 = vld [vmem:[%s6 + $0x1d4] sm:$0xff]
    %v5992 = vld [vmem:[%s6 + $0x1dc] sm:$0xf]
    %v5993 = vld [vmem:[%s6 + $0x1e0] sm:$0xff]
    %v5994 = vld [vmem:[%s6 + $0x1e8] sm:$0xf]
    %v5995 = vld [vmem:[%s6 + $0x1ec] sm:$0xff]
    %v5996 = vld [vmem:[%s6 + $0x1f4] sm:$0xf]
    %v5997 = vld [vmem:[%s6 + $0x1f8] sm:$0xff]
    %v5998 = vld [vmem:[%s6 + $0x200] sm:$0xf]
    %v5999 = vld [vmem:[%s6 + $0x204] sm:$0xff]
    %v6000 = vld [vmem:[%s6 + $0x20c] sm:$0xf]
    %v6001 = vld [vmem:[%s6 + $0x210] sm:$0xff]
    %v6002 = vld [vmem:[%s6 + $0x218] sm:$0xf]
    %v6003 = vld [vmem:[%s6 + $0x21c] sm:$0xff]
    %v6004 = vld [vmem:[%s6 + $0x224] sm:$0xf]
    %v6005 = vld [vmem:[%s6 + $0x228] sm:$0xff]
    %v6006 = vld [vmem:[%s6 + $0x230] sm:$0xf]
    %v6007 = vld [vmem:[%s6 + $0x234] sm:$0xff]
    %v6008 = vld [vmem:[%s6 + $0x23c] sm:$0xf]
    %v6009 = vld [vmem:[%s6 + $0x240] sm:$0xff]
    %v6010 = vld [vmem:[%s6 + $0x248] sm:$0xf]
    %v6011 = vld [vmem:[%s6 + $0x24c] sm:$0xff]
    %v6012 = vld [vmem:[%s6 + $0x254] sm:$0xf]
    %v6013 = vld [vmem:[%s6 + $0x258] sm:$0xff]
    %v6014 = vld [vmem:[%s6 + $0x260] sm:$0xf]
    %v6015 = vld [vmem:[%s6 + $0x264] sm:$0xff]
    %v6016 = vld [vmem:[%s6 + $0x26c] sm:$0xf]
    %v6017 = vld [vmem:[%s6 + $0x270] sm:$0xff]
    %v6018 = vld [vmem:[%s6 + $0x278] sm:$0xf]
    %v6019 = vld [vmem:[%s6 + $0x27c] sm:$0xff]
    %v6020 = vld [vmem:[%s6 + $0x284] sm:$0xf]
    %v6021 = vld [vmem:[%s6 + $0x288] sm:$0xff]
    %v6022 = vld [vmem:[%s6 + $0x290] sm:$0xf]
    %v6023 = vld [vmem:[%s6 + $0x294] sm:$0xff]
    %v6024 = vld [vmem:[%s6 + $0x29c] sm:$0xf]
    %v6025 = vld [vmem:[%s6 + $0x2a0] sm:$0xff]
    %v6026 = vld [vmem:[%s6 + $0x2a8] sm:$0xf]
    %v6027 = vld [vmem:[%s6 + $0x2ac] sm:$0xff]
    %v6028 = vld [vmem:[%s6 + $0x2b4] sm:$0xf]
    %v6029 = vld [vmem:[%s6 + $0x2b8] sm:$0xff]
    %v6030 = vld [vmem:[%s6 + $0x2c0] sm:$0xf]
    %v6031 = vld [vmem:[%s6 + $0x2c4] sm:$0xff]
    %v6032 = vld [vmem:[%s6 + $0x2cc] sm:$0xf]
    %v6033 = vld [vmem:[%s6 + $0x2d0] sm:$0xff]
    %v6034 = vld [vmem:[%s6 + $0x2d8] sm:$0xf]
    %v6035 = vld [vmem:[%s6 + $0x2dc] sm:$0xff]
    %v6036 = vld [vmem:[%s6 + $0x2e4] sm:$0xf]
    %v6037 = vld [vmem:[%s6 + $0x2e8] sm:$0xff]
    %v6038 = vld [vmem:[%s6 + $0x2f0] sm:$0xf]
    %v6039 = vld [vmem:[%s6 + $0x2f4] sm:$0xff]
    %v6040 = vld [vmem:[%s6 + $0x2fc] sm:$0xf]
    %v6041 = vld [vmem:[%s6 + $0x300] sm:$0xff]
    %v6042 = vld [vmem:[%s6 + $0x308] sm:$0xf]
    %v6043 = vld [vmem:[%s6 + $0x30c] sm:$0xff]
    %v6044 = vld [vmem:[%s6 + $0x314] sm:$0xf]
    %v6045 = vld [vmem:[%s6 + $0x318] sm:$0xff]
    %v6046 = vld [vmem:[%s6 + $0x320] sm:$0xf]
    %v6047 = vld [vmem:[%s6 + $0x324] sm:$0xff]
    %v6048 = vld [vmem:[%s6 + $0x32c] sm:$0xf]
    %v6049 = vld [vmem:[%s6 + $0x330] sm:$0xff]
    %v6050 = vld [vmem:[%s6 + $0x338] sm:$0xf]
    %v6051 = vld [vmem:[%s6 + $0x33c] sm:$0xff]
    %v6052 = vld [vmem:[%s6 + $0x344] sm:$0xf]
    %v6053 = vld [vmem:[%s6 + $0x348] sm:$0xff]
    %v6054 = vld [vmem:[%s6 + $0x350] sm:$0xf]
    %v6055 = vld [vmem:[%s6 + $0x354] sm:$0xff]
    %v6056 = vld [vmem:[%s6 + $0x35c] sm:$0xf]
    %v6057 = vld [vmem:[%s6 + $0x360] sm:$0xff]
    %v6058 = vld [vmem:[%s6 + $0x368] sm:$0xf]
    %v6059 = vld [vmem:[%s6 + $0x36c] sm:$0xff]
    %v6060 = vld [vmem:[%s6 + $0x374] sm:$0xf]
    %v6061 = vld [vmem:[%s6 + $0x378] sm:$0xff]
    %v6062 = vld [vmem:[%s6 + $0x380] sm:$0xf]
    %v6063 = vld [vmem:[%s6 + $0x384] sm:$0xff]
    %v6064 = vld [vmem:[%s6 + $0x38c] sm:$0xf]
    %v6065 = vld [vmem:[%s6 + $0x390] sm:$0xff]
    %v6066 = vld [vmem:[%s6 + $0x398] sm:$0xf]
    %v6067 = vld [vmem:[%s6 + $0x39c] sm:$0xff]
    %v6068 = vld [vmem:[%s6 + $0x3a4] sm:$0xf]
    %v6069 = vld [vmem:[%s6 + $0x3a8] sm:$0xff]
    %v6070 = vld [vmem:[%s6 + $0x3b0] sm:$0xf]
    %v6071 = vld [vmem:[%s6 + $0x3b4] sm:$0xff]
    %v6072 = vld [vmem:[%s6 + $0x3bc] sm:$0xf]
    %v6073 = vld [vmem:[%s6 + $0x3c0] sm:$0xff]
    %v6074 = vld [vmem:[%s6 + $0x3c8] sm:$0xf]
    %v6075 = vld [vmem:[%s6 + $0x3cc] sm:$0xff]
    %v6076 = vld [vmem:[%s6 + $0x3d4] sm:$0xf]
    %v6077 = vld [vmem:[%s6 + $0x3d8] sm:$0xff]
    %v6078 = vld [vmem:[%s6 + $0x3e0] sm:$0xf]
    %v6079 = vld [vmem:[%s6 + $0x3e4] sm:$0xff]
    %v6080 = vld [vmem:[%s6 + $0x3ec] sm:$0xf]
    %v6081 = vld [vmem:[%s6 + $0x3f0] sm:$0xff]
    %v6082 = vld [vmem:[%s6 + $0x3f8] sm:$0xf]
    %v6083 = vld [vmem:[%s6 + $0x3fc] sm:$0xff]
    %v6084 = vld [vmem:[%s6 + $0x404] sm:$0xf]
    %v6085 = vld [vmem:[%s6 + $0x408] sm:$0xff]
    %v6086 = vld [vmem:[%s6 + $0x410] sm:$0xf]
    %v6087 = vld [vmem:[%s6 + $0x414] sm:$0xff]
    %v6088 = vld [vmem:[%s6 + $0x41c] sm:$0xf]
    %v6089 = vld [vmem:[%s6 + $0x420] sm:$0xff]
    %v6090 = vld [vmem:[%s6 + $0x428] sm:$0xf]
    %v6091 = vld [vmem:[%s6 + $0x42c] sm:$0xff]
    %v6092 = vld [vmem:[%s6 + $0x434] sm:$0xf]
    %v6093 = vld [vmem:[%s6 + $0x438] sm:$0xff]
    %v6094 = vld [vmem:[%s6 + $0x440] sm:$0xf]
    %v6095 = vld [vmem:[%s6 + $0x444] sm:$0xff]
    %v6096 = vld [vmem:[%s6 + $0x44c] sm:$0xf]
    %v6097 = vld [vmem:[%s6 + $0x450] sm:$0xff]
    %v6098 = vld [vmem:[%s6 + $0x458] sm:$0xf]
    %v6099 = vld [vmem:[%s6 + $0x45c] sm:$0xff]
    %v6100 = vld [vmem:[%s6 + $0x464] sm:$0xf]
    %v6101 = vld [vmem:[%s6 + $0x468] sm:$0xff]
    %v6102 = vld [vmem:[%s6 + $0x470] sm:$0xf]
    %v6103 = vld [vmem:[%s6 + $0x474] sm:$0xff]
    %v6104 = vld [vmem:[%s6 + $0x47c] sm:$0xf]
    %v6105 = vld [vmem:[%s7] sm:$0x1]
    %vm6118 = vcmask 1043456
    %v6119 = vrot.slane %v5681, 4
    %v6120 = vrot.slane %v5701, 4
    %v6121 = vsel %vm6118, %v6119, %v6120
    %v6122 = vrot.slane %v5683, 4
    %v6123 = vrot.slane %v5704, 4
    %v6124 = vsel %vm6118, %v6122, %v6123
    %v6125 = vrot.slane %v5687, 4
    %v6126 = vrot.slane %v5708, 4
    %v6127 = vsel %vm6118, %v6125, %v6126
    %v6128 = vrot.slane %v5691, 4
    %v6129 = vrot.slane %v5712, 4
    %v6130 = vsel %vm6118, %v6128, %v6129
    %v6131 = vrot.slane %v5693, 4
    %v6132 = vrot.slane %v5715, 4
    %v6133 = vsel %vm6118, %v6131, %v6132
    %v6134 = vrot.slane %v5697, 4
    %v6135 = vrot.slane %v5719, 4
    %v6136 = vsel %vm6118, %v6134, %v6135
    %v6137 = vrot.slane %v5652, 4
    %v6138 = vsel %vm6118, %v6120, %v6137
    %v6139 = vrot.slane %v5676, 4
    %v6140 = vsel %vm6118, %v6123, %v6139
    %v6141 = vrot.slane %v5677, 4
    %v6142 = vsel %vm6118, %v6126, %v6141
    %v6143 = vsel %vm6118, %v6129, %v6141
    %v6144 = vrot.slane %v5678, 4
    %v6145 = vsel %vm6118, %v6132, %v6144
    %v6146 = vsel %vm6118, %v6135, %v6141
    %v6351 = vunpack.c.l.b16 %v5913
    %v6352 = vunpack.c.h.b16 %v5913
    %v6353 = vunpack.c.l.b16 %v5914
    %v6354 = vunpack.c.l.b16 %v5915
    %v6355 = vunpack.c.h.b16 %v5915
    %v6356 = vunpack.c.l.b16 %v5916
    %v6357 = vunpack.c.l.b16 %v5917
    %v6358 = vunpack.c.h.b16 %v5917
    %v6359 = vunpack.c.l.b16 %v5918
    %v6360 = vunpack.c.l.b16 %v5919
    %v6361 = vunpack.c.h.b16 %v5919
    %v6362 = vunpack.c.l.b16 %v5920
    %v6363 = vunpack.c.l.b16 %v5921
    %v6364 = vunpack.c.h.b16 %v5921
    %v6365 = vunpack.c.l.b16 %v5922
    %v6366 = vunpack.c.l.b16 %v5923
    %v6367 = vunpack.c.h.b16 %v5923
    %v6368 = vunpack.c.l.b16 %v5924
    %v6369 = vunpack.c.l.b16 %v5925
    %v6370 = vunpack.c.h.b16 %v5925
    %v6371 = vunpack.c.l.b16 %v5926
    %v6372 = vunpack.c.l.b16 %v5927
    %v6373 = vunpack.c.h.b16 %v5927
    %v6374 = vunpack.c.l.b16 %v5928
    %v6375 = vunpack.c.l.b16 %v5929
    %v6376 = vunpack.c.h.b16 %v5929
    %v6377 = vunpack.c.l.b16 %v5930
    %v6378 = vunpack.c.l.b16 %v5931
    %v6379 = vunpack.c.h.b16 %v5931
    %v6380 = vunpack.c.l.b16 %v5932
    %v6381 = vunpack.c.l.b16 %v5933
    %v6382 = vunpack.c.h.b16 %v5933
    %v6383 = vunpack.c.l.b16 %v5934
    %v6384 = vunpack.c.l.b16 %v5935
    %v6385 = vunpack.c.h.b16 %v5935
    %v6386 = vunpack.c.l.b16 %v5936
    %v6387 = vunpack.c.l.b16 %v5937
    %v6388 = vunpack.c.h.b16 %v5937
    %v6389 = vunpack.c.l.b16 %v5938
    %v6390 = vunpack.c.l.b16 %v5939
    %v6391 = vunpack.c.h.b16 %v5939
    %v6392 = vunpack.c.l.b16 %v5940
    %v6393 = vunpack.c.l.b16 %v5941
    %v6394 = vunpack.c.h.b16 %v5941
    %v6395 = vunpack.c.l.b16 %v5942
    %v6396 = vunpack.c.l.b16 %v5943
    %v6397 = vunpack.c.h.b16 %v5943
    %v6398 = vunpack.c.l.b16 %v5944
    %v6399 = vunpack.c.l.b16 %v5945
    %v6400 = vunpack.c.h.b16 %v5945
    %v6401 = vunpack.c.l.b16 %v5946
    %v6402 = vunpack.c.l.b16 %v5947
    %v6403 = vunpack.c.h.b16 %v5947
    %v6404 = vunpack.c.l.b16 %v5948
    %v6405 = vunpack.c.l.b16 %v5949
    %v6406 = vunpack.c.h.b16 %v5949
    %v6407 = vunpack.c.l.b16 %v5950
    %v6408 = vunpack.c.l.b16 %v5951
    %v6409 = vunpack.c.h.b16 %v5951
    %v6410 = vunpack.c.l.b16 %v5952
    %v6411 = vunpack.c.l.b16 %v5953
    %v6412 = vunpack.c.h.b16 %v5953
    %v6413 = vunpack.c.l.b16 %v5954
    %v6414 = vunpack.c.l.b16 %v5955
    %v6415 = vunpack.c.h.b16 %v5955
    %v6416 = vunpack.c.l.b16 %v5956
    %v6417 = vunpack.c.l.b16 %v5957
    %v6418 = vunpack.c.h.b16 %v5957
    %v6419 = vunpack.c.l.b16 %v5958
    %v6420 = vunpack.c.l.b16 %v5959
    %v6421 = vunpack.c.h.b16 %v5959
    %v6422 = vunpack.c.l.b16 %v5960
    %v6423 = vunpack.c.l.b16 %v5961
    %v6424 = vunpack.c.h.b16 %v5961
    %v6425 = vunpack.c.l.b16 %v5962
    %v6426 = vunpack.c.l.b16 %v5963
    %v6427 = vunpack.c.h.b16 %v5963
    %v6428 = vunpack.c.l.b16 %v5964
    %v6429 = vunpack.c.l.b16 %v5965
    %v6430 = vunpack.c.h.b16 %v5965
    %v6431 = vunpack.c.l.b16 %v5966
    %v6432 = vunpack.c.l.b16 %v5967
    %v6433 = vunpack.c.h.b16 %v5967
    %v6434 = vunpack.c.l.b16 %v5968
    %v6435 = vunpack.c.l.b16 %v5969
    %v6436 = vunpack.c.h.b16 %v5969
    %v6437 = vunpack.c.l.b16 %v5970
    %v6438 = vunpack.c.l.b16 %v5971
    %v6439 = vunpack.c.h.b16 %v5971
    %v6440 = vunpack.c.l.b16 %v5972
    %v6441 = vunpack.c.l.b16 %v5973
    %v6442 = vunpack.c.h.b16 %v5973
    %v6443 = vunpack.c.l.b16 %v5974
    %v6444 = vunpack.c.l.b16 %v5975
    %v6445 = vunpack.c.h.b16 %v5975
    %v6446 = vunpack.c.l.b16 %v5976
    %v6447 = vunpack.c.l.b16 %v5977
    %v6448 = vunpack.c.h.b16 %v5977
    %v6449 = vunpack.c.l.b16 %v5978
    %v6450 = vunpack.c.l.b16 %v5979
    %v6451 = vunpack.c.h.b16 %v5979
    %v6452 = vunpack.c.l.b16 %v5980
    %v6453 = vunpack.c.l.b16 %v5981
    %v6454 = vunpack.c.h.b16 %v5981
    %v6455 = vunpack.c.l.b16 %v5982
    %v6456 = vunpack.c.l.b16 %v5983
    %v6457 = vunpack.c.h.b16 %v5983
    %v6458 = vunpack.c.l.b16 %v5984
    %v6459 = vunpack.c.l.b16 %v5985
    %v6460 = vunpack.c.h.b16 %v5985
    %v6461 = vunpack.c.l.b16 %v5986
    %v6462 = vunpack.c.l.b16 %v5987
    %v6463 = vunpack.c.h.b16 %v5987
    %v6464 = vunpack.c.l.b16 %v5988
    %v6465 = vunpack.c.l.b16 %v5989
    %v6466 = vunpack.c.h.b16 %v5989
    %v6467 = vunpack.c.l.b16 %v5990
    %v6468 = vunpack.c.l.b16 %v5991
    %v6469 = vunpack.c.h.b16 %v5991
    %v6470 = vunpack.c.l.b16 %v5992
    %v6471 = vunpack.c.l.b16 %v5993
    %v6472 = vunpack.c.h.b16 %v5993
    %v6473 = vunpack.c.l.b16 %v5994
    %v6474 = vunpack.c.l.b16 %v5995
    %v6475 = vunpack.c.h.b16 %v5995
    %v6476 = vunpack.c.l.b16 %v5996
    %v6477 = vunpack.c.l.b16 %v5997
    %v6478 = vunpack.c.h.b16 %v5997
    %v6479 = vunpack.c.l.b16 %v5998
    %v6480 = vunpack.c.l.b16 %v5999
    %v6481 = vunpack.c.h.b16 %v5999
    %v6482 = vunpack.c.l.b16 %v6000
    %v6483 = vunpack.c.l.b16 %v6001
    %v6484 = vunpack.c.h.b16 %v6001
    %v6485 = vunpack.c.l.b16 %v6002
    %v6486 = vunpack.c.l.b16 %v6003
    %v6487 = vunpack.c.h.b16 %v6003
    %v6488 = vunpack.c.l.b16 %v6004
    %v6489 = vunpack.c.l.b16 %v6005
    %v6490 = vunpack.c.h.b16 %v6005
    %v6491 = vunpack.c.l.b16 %v6006
    %v6492 = vunpack.c.l.b16 %v6007
    %v6493 = vunpack.c.h.b16 %v6007
    %v6494 = vunpack.c.l.b16 %v6008
    %v6495 = vunpack.c.l.b16 %v6009
    %v6496 = vunpack.c.h.b16 %v6009
    %v6497 = vunpack.c.l.b16 %v6010
    %v6498 = vunpack.c.l.b16 %v6011
    %v6499 = vunpack.c.h.b16 %v6011
    %v6500 = vunpack.c.l.b16 %v6012
    %v6501 = vunpack.c.l.b16 %v6013
    %v6502 = vunpack.c.h.b16 %v6013
    %v6503 = vunpack.c.l.b16 %v6014
    %v6504 = vunpack.c.l.b16 %v6015
    %v6505 = vunpack.c.h.b16 %v6015
    %v6506 = vunpack.c.l.b16 %v6016
    %v6507 = vunpack.c.l.b16 %v6017
    %v6508 = vunpack.c.h.b16 %v6017
    %v6509 = vunpack.c.l.b16 %v6018
    %v6510 = vunpack.c.l.b16 %v6019
    %v6511 = vunpack.c.h.b16 %v6019
    %v6512 = vunpack.c.l.b16 %v6020
    %v6513 = vunpack.c.l.b16 %v6021
    %v6514 = vunpack.c.h.b16 %v6021
    %v6515 = vunpack.c.l.b16 %v6022
    %v6516 = vunpack.c.l.b16 %v6023
    %v6517 = vunpack.c.h.b16 %v6023
    %v6518 = vunpack.c.l.b16 %v6024
    %v6519 = vunpack.c.l.b16 %v6025
    %v6520 = vunpack.c.h.b16 %v6025
    %v6521 = vunpack.c.l.b16 %v6026
    %v6522 = vunpack.c.l.b16 %v6027
    %v6523 = vunpack.c.h.b16 %v6027
    %v6524 = vunpack.c.l.b16 %v6028
    %v6525 = vunpack.c.l.b16 %v6029
    %v6526 = vunpack.c.h.b16 %v6029
    %v6527 = vunpack.c.l.b16 %v6030
    %v6528 = vunpack.c.l.b16 %v6031
    %v6529 = vunpack.c.h.b16 %v6031
    %v6530 = vunpack.c.l.b16 %v6032
    %v6531 = vunpack.c.l.b16 %v6033
    %v6532 = vunpack.c.h.b16 %v6033
    %v6533 = vunpack.c.l.b16 %v6034
    %v6534 = vunpack.c.l.b16 %v6035
    %v6535 = vunpack.c.h.b16 %v6035
    %v6536 = vunpack.c.l.b16 %v6036
    %v6537 = vunpack.c.l.b16 %v6037
    %v6538 = vunpack.c.h.b16 %v6037
    %v6539 = vunpack.c.l.b16 %v6038
    %v6540 = vunpack.c.l.b16 %v6039
    %v6541 = vunpack.c.h.b16 %v6039
    %v6542 = vunpack.c.l.b16 %v6040
    %v6543 = vunpack.c.l.b16 %v6041
    %v6544 = vunpack.c.h.b16 %v6041
    %v6545 = vunpack.c.l.b16 %v6042
    %v6546 = vunpack.c.l.b16 %v6043
    %v6547 = vunpack.c.h.b16 %v6043
    %v6548 = vunpack.c.l.b16 %v6044
    %v6549 = vunpack.c.l.b16 %v6045
    %v6550 = vunpack.c.h.b16 %v6045
    %v6551 = vunpack.c.l.b16 %v6046
    %v6552 = vunpack.c.l.b16 %v6047
    %v6553 = vunpack.c.h.b16 %v6047
    %v6554 = vunpack.c.l.b16 %v6048
    %v6555 = vunpack.c.l.b16 %v6049
    %v6556 = vunpack.c.h.b16 %v6049
    %v6557 = vunpack.c.l.b16 %v6050
    %v6558 = vunpack.c.l.b16 %v6051
    %v6559 = vunpack.c.h.b16 %v6051
    %v6560 = vunpack.c.l.b16 %v6052
    %v6561 = vunpack.c.l.b16 %v6053
    %v6562 = vunpack.c.h.b16 %v6053
    %v6563 = vunpack.c.l.b16 %v6054
    %v6564 = vunpack.c.l.b16 %v6055
    %v6565 = vunpack.c.h.b16 %v6055
    %v6566 = vunpack.c.l.b16 %v6056
    %v6567 = vunpack.c.l.b16 %v6057
    %v6568 = vunpack.c.h.b16 %v6057
    %v6569 = vunpack.c.l.b16 %v6058
    %v6570 = vunpack.c.l.b16 %v6059
    %v6571 = vunpack.c.h.b16 %v6059
    %v6572 = vunpack.c.l.b16 %v6060
    %v6573 = vunpack.c.l.b16 %v6061
    %v6574 = vunpack.c.h.b16 %v6061
    %v6575 = vunpack.c.l.b16 %v6062
    %v6576 = vunpack.c.l.b16 %v6063
    %v6577 = vunpack.c.h.b16 %v6063
    %v6578 = vunpack.c.l.b16 %v6064
    %v6579 = vunpack.c.l.b16 %v6065
    %v6580 = vunpack.c.h.b16 %v6065
    %v6581 = vunpack.c.l.b16 %v6066
    %v6582 = vunpack.c.l.b16 %v6067
    %v6583 = vunpack.c.h.b16 %v6067
    %v6584 = vunpack.c.l.b16 %v6068
    %v6585 = vunpack.c.l.b16 %v6069
    %v6586 = vunpack.c.h.b16 %v6069
    %v6587 = vunpack.c.l.b16 %v6070
    %v6588 = vunpack.c.l.b16 %v6071
    %v6589 = vunpack.c.h.b16 %v6071
    %v6590 = vunpack.c.l.b16 %v6072
    %v6591 = vunpack.c.l.b16 %v6073
    %v6592 = vunpack.c.h.b16 %v6073
    %v6593 = vunpack.c.l.b16 %v6074
    %v6594 = vunpack.c.l.b16 %v6075
    %v6595 = vunpack.c.h.b16 %v6075
    %v6596 = vunpack.c.l.b16 %v6076
    %v6597 = vunpack.c.l.b16 %v6077
    %v6598 = vunpack.c.h.b16 %v6077
    %v6599 = vunpack.c.l.b16 %v6078
    %v6600 = vunpack.c.l.b16 %v6079
    %v6601 = vunpack.c.h.b16 %v6079
    %v6602 = vunpack.c.l.b16 %v6080
    %v6603 = vunpack.c.l.b16 %v6081
    %v6604 = vunpack.c.h.b16 %v6081
    %v6605 = vunpack.c.l.b16 %v6082
    %v6606 = vunpack.c.l.b16 %v6083
    %v6607 = vunpack.c.h.b16 %v6083
    %v6608 = vunpack.c.l.b16 %v6084
    %v6609 = vunpack.c.l.b16 %v6085
    %v6610 = vunpack.c.h.b16 %v6085
    %v6611 = vunpack.c.l.b16 %v6086
    %v6612 = vunpack.c.l.b16 %v6087
    %v6613 = vunpack.c.h.b16 %v6087
    %v6614 = vunpack.c.l.b16 %v6088
    %v6615 = vunpack.c.l.b16 %v6089
    %v6616 = vunpack.c.h.b16 %v6089
    %v6617 = vunpack.c.l.b16 %v6090
    %v6618 = vunpack.c.l.b16 %v6091
    %v6619 = vunpack.c.h.b16 %v6091
    %v6620 = vunpack.c.l.b16 %v6092
    %v6621 = vunpack.c.l.b16 %v6093
    %v6622 = vunpack.c.h.b16 %v6093
    %v6623 = vunpack.c.l.b16 %v6094
    %v6624 = vunpack.c.l.b16 %v6095
    %v6625 = vunpack.c.h.b16 %v6095
    %v6626 = vunpack.c.l.b16 %v6096
    %v6627 = vunpack.c.l.b16 %v6097
    %v6628 = vunpack.c.h.b16 %v6097
    %v6629 = vunpack.c.l.b16 %v6098
    %v6630 = vunpack.c.l.b16 %v6099
    %v6631 = vunpack.c.h.b16 %v6099
    %v6632 = vunpack.c.l.b16 %v6100
    %v6633 = vunpack.c.l.b16 %v6101
    %v6634 = vunpack.c.h.b16 %v6101
    %v6635 = vunpack.c.l.b16 %v6102
    %v6636 = vunpack.c.l.b16 %v6103
    %v6637 = vunpack.c.h.b16 %v6103
    %v6638 = vunpack.c.l.b16 %v6104
    %v6639 = vpack.c.b16 %v6354, %v6351
    %v6640 = vpack.c.b16 %v6355, %v6352
    %v6641 = vpack.c.b16 %v6356, %v6353
    %v6642 = vpack.c.b16 %v6360, %v6357
    %v6643 = vpack.c.b16 %v6361, %v6358
    %v6644 = vpack.c.b16 %v6362, %v6359
    %v6645 = vpack.c.b16 %v6366, %v6363
    %v6646 = vpack.c.b16 %v6367, %v6364
    %v6647 = vpack.c.b16 %v6368, %v6365
    %v6648 = vpack.c.b16 %v6372, %v6369
    %v6649 = vpack.c.b16 %v6373, %v6370
    %v6650 = vpack.c.b16 %v6374, %v6371
    %v6651 = vpack.c.b16 %v6378, %v6375
    %v6652 = vpack.c.b16 %v6379, %v6376
    %v6653 = vpack.c.b16 %v6380, %v6377
    %v6654 = vpack.c.b16 %v6384, %v6381
    %v6655 = vpack.c.b16 %v6385, %v6382
    %v6656 = vpack.c.b16 %v6386, %v6383
    %v6657 = vpack.c.b16 %v6390, %v6387
    %v6658 = vpack.c.b16 %v6391, %v6388
    %v6659 = vpack.c.b16 %v6392, %v6389
    %v6660 = vpack.c.b16 %v6396, %v6393
    %v6661 = vpack.c.b16 %v6397, %v6394
    %v6662 = vpack.c.b16 %v6398, %v6395
    %v6663 = vpack.c.b16 %v6402, %v6399
    %v6664 = vpack.c.b16 %v6403, %v6400
    %v6665 = vpack.c.b16 %v6404, %v6401
    %v6666 = vpack.c.b16 %v6408, %v6405
    %v6667 = vpack.c.b16 %v6409, %v6406
    %v6668 = vpack.c.b16 %v6410, %v6407
    %v6669 = vpack.c.b16 %v6414, %v6411
    %v6670 = vpack.c.b16 %v6415, %v6412
    %v6671 = vpack.c.b16 %v6416, %v6413
    %v6672 = vpack.c.b16 %v6420, %v6417
    %v6673 = vpack.c.b16 %v6421, %v6418
    %v6674 = vpack.c.b16 %v6422, %v6419
    %v6675 = vpack.c.b16 %v6426, %v6423
    %v6676 = vpack.c.b16 %v6427, %v6424
    %v6677 = vpack.c.b16 %v6428, %v6425
    %v6678 = vpack.c.b16 %v6432, %v6429
    %v6679 = vpack.c.b16 %v6433, %v6430
    %v6680 = vpack.c.b16 %v6434, %v6431
    %v6681 = vpack.c.b16 %v6438, %v6435
    %v6682 = vpack.c.b16 %v6439, %v6436
    %v6683 = vpack.c.b16 %v6440, %v6437
    %v6684 = vpack.c.b16 %v6444, %v6441
    %v6685 = vpack.c.b16 %v6445, %v6442
    %v6686 = vpack.c.b16 %v6446, %v6443
    %v6687 = vpack.c.b16 %v6450, %v6447
    %v6688 = vpack.c.b16 %v6451, %v6448
    %v6689 = vpack.c.b16 %v6452, %v6449
    %v6690 = vpack.c.b16 %v6456, %v6453
    %v6691 = vpack.c.b16 %v6457, %v6454
    %v6692 = vpack.c.b16 %v6458, %v6455
    %v6693 = vpack.c.b16 %v6462, %v6459
    %v6694 = vpack.c.b16 %v6463, %v6460
    %v6695 = vpack.c.b16 %v6464, %v6461
    %v6696 = vpack.c.b16 %v6468, %v6465
    %v6697 = vpack.c.b16 %v6469, %v6466
    %v6698 = vpack.c.b16 %v6470, %v6467
    %v6699 = vpack.c.b16 %v6474, %v6471
    %v6700 = vpack.c.b16 %v6475, %v6472
    %v6701 = vpack.c.b16 %v6476, %v6473
    %v6702 = vpack.c.b16 %v6480, %v6477
    %v6703 = vpack.c.b16 %v6481, %v6478
    %v6704 = vpack.c.b16 %v6482, %v6479
    %v6705 = vpack.c.b16 %v6486, %v6483
    %v6706 = vpack.c.b16 %v6487, %v6484
    %v6707 = vpack.c.b16 %v6488, %v6485
    %v6708 = vpack.c.b16 %v6492, %v6489
    %v6709 = vpack.c.b16 %v6493, %v6490
    %v6710 = vpack.c.b16 %v6494, %v6491
    %v6711 = vpack.c.b16 %v6498, %v6495
    %v6712 = vpack.c.b16 %v6499, %v6496
    %v6713 = vpack.c.b16 %v6500, %v6497
    %v6714 = vpack.c.b16 %v6504, %v6501
    %v6715 = vpack.c.b16 %v6505, %v6502
    %v6716 = vpack.c.b16 %v6506, %v6503
    %v6717 = vpack.c.b16 %v6510, %v6507
    %v6718 = vpack.c.b16 %v6511, %v6508
    %v6719 = vpack.c.b16 %v6512, %v6509
    %v6720 = vpack.c.b16 %v6516, %v6513
    %v6721 = vpack.c.b16 %v6517, %v6514
    %v6722 = vpack.c.b16 %v6518, %v6515
    %v6723 = vpack.c.b16 %v6522, %v6519
    %v6724 = vpack.c.b16 %v6523, %v6520
    %v6725 = vpack.c.b16 %v6524, %v6521
    %v6726 = vpack.c.b16 %v6528, %v6525
    %v6727 = vpack.c.b16 %v6529, %v6526
    %v6728 = vpack.c.b16 %v6530, %v6527
    %v6729 = vpack.c.b16 %v6534, %v6531
    %v6730 = vpack.c.b16 %v6535, %v6532
    %v6731 = vpack.c.b16 %v6536, %v6533
    %v6732 = vpack.c.b16 %v6540, %v6537
    %v6733 = vpack.c.b16 %v6541, %v6538
    %v6734 = vpack.c.b16 %v6542, %v6539
    %v6735 = vpack.c.b16 %v6546, %v6543
    %v6736 = vpack.c.b16 %v6547, %v6544
    %v6737 = vpack.c.b16 %v6548, %v6545
    %v6738 = vpack.c.b16 %v6552, %v6549
    %v6739 = vpack.c.b16 %v6553, %v6550
    %v6740 = vpack.c.b16 %v6554, %v6551
    %v6741 = vpack.c.b16 %v6558, %v6555
    %v6742 = vpack.c.b16 %v6559, %v6556
    %v6743 = vpack.c.b16 %v6560, %v6557
    %v6744 = vpack.c.b16 %v6564, %v6561
    %v6745 = vpack.c.b16 %v6565, %v6562
    %v6746 = vpack.c.b16 %v6566, %v6563
    %v6747 = vpack.c.b16 %v6570, %v6567
    %v6748 = vpack.c.b16 %v6571, %v6568
    %v6749 = vpack.c.b16 %v6572, %v6569
    %v6750 = vpack.c.b16 %v6576, %v6573
    %v6751 = vpack.c.b16 %v6577, %v6574
    %v6752 = vpack.c.b16 %v6578, %v6575
    %v6753 = vpack.c.b16 %v6582, %v6579
    %v6754 = vpack.c.b16 %v6583, %v6580
    %v6755 = vpack.c.b16 %v6584, %v6581
    %v6756 = vpack.c.b16 %v6588, %v6585
    %v6757 = vpack.c.b16 %v6589, %v6586
    %v6758 = vpack.c.b16 %v6590, %v6587
    %v6759 = vpack.c.b16 %v6594, %v6591
    %v6760 = vpack.c.b16 %v6595, %v6592
    %v6761 = vpack.c.b16 %v6596, %v6593
    %v6762 = vpack.c.b16 %v6600, %v6597
    %v6763 = vpack.c.b16 %v6601, %v6598
    %v6764 = vpack.c.b16 %v6602, %v6599
    %v6765 = vpack.c.b16 %v6606, %v6603
    %v6766 = vpack.c.b16 %v6607, %v6604
    %v6767 = vpack.c.b16 %v6608, %v6605
    %v6768 = vpack.c.b16 %v6612, %v6609
    %v6769 = vpack.c.b16 %v6613, %v6610
    %v6770 = vpack.c.b16 %v6614, %v6611
    %v6771 = vpack.c.b16 %v6618, %v6615
    %v6772 = vpack.c.b16 %v6619, %v6616
    %v6773 = vpack.c.b16 %v6620, %v6617
    %v6774 = vpack.c.b16 %v6624, %v6621
    %v6775 = vpack.c.b16 %v6625, %v6622
    %v6776 = vpack.c.b16 %v6626, %v6623
    %v6777 = vpack.c.b16 %v6630, %v6627
    %v6778 = vpack.c.b16 %v6631, %v6628
    %v6779 = vpack.c.b16 %v6632, %v6629
    %v6780 = vpack.c.b16 %v6636, %v6633
    %v6781 = vpack.c.b16 %v6637, %v6634
    %v6782 = vpack.c.b16 %v6638, %v6635
    %6927 = vmatprep.subr.bf16.mxu0 %v6640
    %6928 = vmatpush1.bf16.msra.mxu0 %v6639
    %6929 = vmatprep.subr.bf16.mxu0 %v6643
    %6930 = vmatpush1.bf16.msra.mxu0 %v6642
    %6931 = vmatprep.subr.bf16.mxu0 %v6646
    %6932 = vmatpush1.bf16.msra.mxu0 %v6645
    %6933 = vmatprep.subr.bf16.mxu0 %v6649
    %6934 = vmatpush1.bf16.msra.mxu0 %v6648
    %6935 = vmatprep.subr.bf16.mxu0 %v6652
    %6936 = vmatpush1.bf16.msra.mxu0 %v6651
    %6937 = vmatprep.subr.bf16.mxu0 %v6655
    %6938 = vmatpush1.bf16.msra.mxu0 %v6654
    %6939 = vmatprep.subr.bf16.mxu0 %v6658
    %6940 = vmatpush1.bf16.msra.mxu0 %v6657
    %6941 = vmatprep.subr.bf16.mxu0 %v6661
    %6942 = vmatpush1.bf16.msra.mxu0 %v6660
    %6943 = vmatprep.subr.bf16.mxu0 %v6664
    %6944 = vmatpush1.bf16.msra.mxu0 %v6663
    %6945 = vmatprep.subr.bf16.mxu0 %v6667
    %6946 = vmatpush1.bf16.msra.mxu0 %v6666
    %6947 = vmatprep.subr.bf16.mxu0 %v6670
    %6948 = vmatpush1.bf16.msra.mxu0 %v6669
    %6949 = vmatprep.subr.bf16.mxu0 %v6673
    %6950 = vmatpush1.bf16.msra.mxu0 %v6672
    %6951 = vmatprep.subr.bf16.mxu0 %v6676
    %6952 = vmatpush1.bf16.msra.mxu0 %v6675
    %6953 = vmatprep.subr.bf16.mxu0 %v6679
    %6954 = vmatpush1.bf16.msra.mxu0 %v6678
    %6955 = vmatprep.subr.bf16.mxu0 %v6682
    %6956 = vmatpush1.bf16.msra.mxu0 %v6681
    %6957 = vmatprep.subr.bf16.mxu0 %v6685
    %6958 = vmatpush1.bf16.msra.mxu0 %v6684
    %6959 = vmatprep.mubr.bf16.mxu0 %v6124
    %6960 = vmatmul.mubr.bf16.gmra.mrb[0].mxu0 %v6121
    %v6961 = vpop.f32.mrb[0].mxu0
    %v6962 = vadd.f32 0.0, %v6961
    %v6963 = vpop.f32.mrb[0].mxu0
    %v6964 = vadd.f32 0.0, %v6963
    %v6965 = vpop.f32.mrb[0].mxu0
    %v6966 = vadd.f32 0.0, %v6965
    %v6967 = vpop.f32.mrb[0].mxu0
    %v6968 = vadd.f32 0.0, %v6967
    %6969 = vmatprep.mubr.bf16.mxu0 %v6140
    %6970 = vmatmul.mubr.bf16.gmra.mrb[0].mxu0 %v6138
    %v6971 = vpop.f32.mrb[0].mxu0
    %v6972 = vadd.f32 0.0, %v6971
    %v6973 = vpop.f32.mrb[0].mxu0
    %v6974 = vadd.f32 0.0, %v6973
    %v6975 = vpop.f32.mrb[0].mxu0
    %v6976 = vadd.f32 0.0, %v6975
    %v6977 = vpop.f32.mrb[0].mxu0
    %v6978 = vadd.f32 0.0, %v6977
    %6979 = vdwg.mxu0
    %6980 = vmatprep.subr.bf16.mxu0 %v6688
    %6981 = vmatpush1.bf16.msra.mxu0 %v6687
    %6982 = vmatprep.subr.bf16.mxu0 %v6691
    %6983 = vmatpush1.bf16.msra.mxu0 %v6690
    %6984 = vmatprep.subr.bf16.mxu0 %v6694
    %6985 = vmatpush1.bf16.msra.mxu0 %v6693
    %6986 = vmatprep.subr.bf16.mxu0 %v6697
    %6987 = vmatpush1.bf16.msra.mxu0 %v6696
    %6988 = vmatprep.subr.bf16.mxu0 %v6700
    %6989 = vmatpush1.bf16.msra.mxu0 %v6699
    %6990 = vmatprep.subr.bf16.mxu0 %v6703
    %6991 = vmatpush1.bf16.msra.mxu0 %v6702
    %6992 = vmatprep.subr.bf16.mxu0 %v6706
    %6993 = vmatpush1.bf16.msra.mxu0 %v6705
    %6994 = vmatprep.subr.bf16.mxu0 %v6709
    %6995 = vmatpush1.bf16.msra.mxu0 %v6708
    %6996 = vmatprep.subr.bf16.mxu0 %v6712
    %6997 = vmatpush1.bf16.msra.mxu0 %v6711
    %6998 = vmatprep.subr.bf16.mxu0 %v6715
    %6999 = vmatpush1.bf16.msra.mxu0 %v6714
    %7000 = vmatprep.subr.bf16.mxu0 %v6718
    %7001 = vmatpush1.bf16.msra.mxu0 %v6717
    %7002 = vmatprep.subr.bf16.mxu0 %v6721
    %7003 = vmatpush1.bf16.msra.mxu0 %v6720
    %7004 = vmatprep.subr.bf16.mxu0 %v6724
    %7005 = vmatpush1.bf16.msra.mxu0 %v6723
    %7006 = vmatprep.subr.bf16.mxu0 %v6727
    %7007 = vmatpush1.bf16.msra.mxu0 %v6726
    %7008 = vmatprep.subr.bf16.mxu0 %v6730
    %7009 = vmatpush1.bf16.msra.mxu0 %v6729
    %7010 = vmatprep.subr.bf16.mxu0 %v6733
    %7011 = vmatpush1.bf16.msra.mxu0 %v6732
    %7012 = vmatprep.mubr.bf16.mxu0 %v6130
    %7013 = vmatmul.mubr.bf16.gmra.mrb[0].mxu0 %v6127
    %v7014 = vpop.f32.mrb[0].mxu0
    %v7015 = vadd.f32 %v6962, %v7014
    %v7016 = vpop.f32.mrb[0].mxu0
    %v7017 = vadd.f32 %v6964, %v7016
    %v7018 = vpop.f32.mrb[0].mxu0
    %v7019 = vadd.f32 %v6966, %v7018
    %v7020 = vpop.f32.mrb[0].mxu0
    %v7021 = vadd.f32 %v6968, %v7020
    %7022 = vmatprep.mubr.bf16.mxu0 %v6143
    %7023 = vmatmul.mubr.bf16.gmra.mrb[0].mxu0 %v6142
    %v7024 = vpop.f32.mrb[0].mxu0
    %v7025 = vadd.f32 %v6972, %v7024
    %v7026 = vpop.f32.mrb[0].mxu0
    %v7027 = vadd.f32 %v6974, %v7026
    %v7028 = vpop.f32.mrb[0].mxu0
    %v7029 = vadd.f32 %v6976, %v7028
    %v7030 = vpop.f32.mrb[0].mxu0
    %v7031 = vadd.f32 %v6978, %v7030
    %7032 = vdwg.mxu0
    %7033 = vmatprep.subr.bf16.mxu0 %v6736
    %7034 = vmatpush1.bf16.msra.mxu0 %v6735
    %7035 = vmatprep.subr.bf16.mxu0 %v6739
    %7036 = vmatpush1.bf16.msra.mxu0 %v6738
    %7037 = vmatprep.subr.bf16.mxu0 %v6742
    %7038 = vmatpush1.bf16.msra.mxu0 %v6741
    %7039 = vmatprep.subr.bf16.mxu0 %v6745
    %7040 = vmatpush1.bf16.msra.mxu0 %v6744
    %7041 = vmatprep.subr.bf16.mxu0 %v6748
    %7042 = vmatpush1.bf16.msra.mxu0 %v6747
    %7043 = vmatprep.subr.bf16.mxu0 %v6751
    %7044 = vmatpush1.bf16.msra.mxu0 %v6750
    %7045 = vmatprep.subr.bf16.mxu0 %v6754
    %7046 = vmatpush1.bf16.msra.mxu0 %v6753
    %7047 = vmatprep.subr.bf16.mxu0 %v6757
    %7048 = vmatpush1.bf16.msra.mxu0 %v6756
    %7049 = vmatprep.subr.bf16.mxu0 %v6760
    %7050 = vmatpush1.bf16.msra.mxu0 %v6759
    %7051 = vmatprep.subr.bf16.mxu0 %v6763
    %7052 = vmatpush1.bf16.msra.mxu0 %v6762
    %7053 = vmatprep.subr.bf16.mxu0 %v6766
    %7054 = vmatpush1.bf16.msra.mxu0 %v6765
    %7055 = vmatprep.subr.bf16.mxu0 %v6769
    %7056 = vmatpush1.bf16.msra.mxu0 %v6768
    %7057 = vmatprep.subr.bf16.mxu0 %v6772
    %7058 = vmatpush1.bf16.msra.mxu0 %v6771
    %7059 = vmatprep.subr.bf16.mxu0 %v6775
    %7060 = vmatpush1.bf16.msra.mxu0 %v6774
    %7061 = vmatprep.subr.bf16.mxu0 %v6778
    %7062 = vmatpush1.bf16.msra.mxu0 %v6777
    %7063 = vmatprep.subr.bf16.mxu0 %v6781
    %7064 = vmatpush1.bf16.msra.mxu0 %v6780
    %7065 = vmatprep.mubr.bf16.mxu0 %v6136
    %7066 = vmatmul.mubr.bf16.gmra.mrb[0].mxu0 %v6133
    %v7067 = vpop.f32.mrb[0].mxu0
    %v7068 = vadd.f32 %v7015, %v7067
    %v7069 = vpop.f32.mrb[0].mxu0
    %v7070 = vadd.f32 %v7017, %v7069
    %v7071 = vpop.f32.mrb[0].mxu0
    %v7072 = vadd.f32 %v7019, %v7071
    %v7073 = vpop.f32.mrb[0].mxu0
    %v7074 = vadd.f32 %v7021, %v7073
    %7075 = vmatprep.mubr.bf16.mxu0 %v6146
    %7076 = vmatmul.mubr.bf16.gmra.mrb[0].mxu0 %v6145
    %v7077 = vpop.f32.mrb[0].mxu0
    %v7078 = vadd.f32 %v7025, %v7077
    %v7079 = vpop.f32.mrb[0].mxu0
    %v7080 = vadd.f32 %v7027, %v7079
    %v7081 = vpop.f32.mrb[0].mxu0
    %v7082 = vadd.f32 %v7029, %v7081
    %v7083 = vpop.f32.mrb[0].mxu0
    %v7084 = vadd.f32 %v7031, %v7083
    %7085 = vdwg.mxu0
    %7086 = vmatprep.subr.bf16.mxu0 0
    %7087 = vmatpush1.bf16.msra.mxu0 %v6641
    %7088 = vmatprep.subr.bf16.mxu0 0
    %7089 = vmatpush1.bf16.msra.mxu0 %v6644
    %7090 = vmatprep.subr.bf16.mxu0 0
    %7091 = vmatpush1.bf16.msra.mxu0 %v6647
    %7092 = vmatprep.subr.bf16.mxu0 0
    %7093 = vmatpush1.bf16.msra.mxu0 %v6650
    %7094 = vmatprep.subr.bf16.mxu0 0
    %7095 = vmatpush1.bf16.msra.mxu0 %v6653
    %7096 = vmatprep.subr.bf16.mxu0 0
    %7097 = vmatpush1.bf16.msra.mxu0 %v6656
    %7098 = vmatprep.subr.bf16.mxu0 0
    %7099 = vmatpush1.bf16.msra.mxu0 %v6659
    %7100 = vmatprep.subr.bf16.mxu0 0
    %7101 = vmatpush1.bf16.msra.mxu0 %v6662
    %7102 = vmatprep.subr.bf16.mxu0 0
    %7103 = vmatpush1.bf16.msra.mxu0 %v6665
    %7104 = vmatprep.subr.bf16.mxu0 0
    %7105 = vmatpush1.bf16.msra.mxu0 %v6668
    %7106 = vmatprep.subr.bf16.mxu0 0
    %7107 = vmatpush1.bf16.msra.mxu0 %v6671
    %7108 = vmatprep.subr.bf16.mxu0 0
    %7109 = vmatpush1.bf16.msra.mxu0 %v6674
    %7110 = vmatprep.subr.bf16.mxu0 0
    %7111 = vmatpush1.bf16.msra.mxu0 %v6677
    %7112 = vmatprep.subr.bf16.mxu0 0
    %7113 = vmatpush1.bf16.msra.mxu0 %v6680
    %7114 = vmatprep.subr.bf16.mxu0 0
    %7115 = vmatpush1.bf16.msra.mxu0 %v6683
    %7116 = vmatprep.subr.bf16.mxu0 0
    %7117 = vmatpush1.bf16.msra.mxu0 %v6686
    %7118 = vmatprep.mubr.bf16.mxu0 %v6124
    %7119 = vmatmul.mubr.bf16.gmra.mrb[0].mxu0 %v6121
    %v7120 = vpop.f32.mrb[0].mxu0
    %v7121 = vadd.f32 0.0, %v7120
    %v7122 = vpop.f32.mrb[0].mxu0
    %v7123 = vpop.f32.mrb[0].mxu0
    %v7124 = vadd.f32 0.0, %v7123
    %v7125 = vpop.f32.mrb[0].mxu0
    %7126 = vmatprep.mubr.bf16.mxu0 %v6140
    %7127 = vmatmul.mubr.bf16.gmra.mrb[0].mxu0 %v6138
    %v7128 = vpop.f32.mrb[0].mxu0
    %v7129 = vadd.f32 0.0, %v7128
    %v7130 = vpop.f32.mrb[0].mxu0
    %v7131 = vpop.f32.mrb[0].mxu0
    %v7132 = vadd.f32 0.0, %v7131
    %v7133 = vpop.f32.mrb[0].mxu0
    %7134 = vdwg.mxu0
    %7135 = vmatprep.subr.bf16.mxu0 0
    %7136 = vmatpush1.bf16.msra.mxu0 %v6689
    %7137 = vmatprep.subr.bf16.mxu0 0
    %7138 = vmatpush1.bf16.msra.mxu0 %v6692
    %7139 = vmatprep.subr.bf16.mxu0 0
    %7140 = vmatpush1.bf16.msra.mxu0 %v6695
    %7141 = vmatprep.subr.bf16.mxu0 0
    %7142 = vmatpush1.bf16.msra.mxu0 %v6698
    %7143 = vmatprep.subr.bf16.mxu0 0
    %7144 = vmatpush1.bf16.msra.mxu0 %v6701
    %7145 = vmatprep.subr.bf16.mxu0 0
    %7146 = vmatpush1.bf16.msra.mxu0 %v6704
    %7147 = vmatprep.subr.bf16.mxu0 0
    %7148 = vmatpush1.bf16.msra.mxu0 %v6707
    %7149 = vmatprep.subr.bf16.mxu0 0
    %7150 = vmatpush1.bf16.msra.mxu0 %v6710
    %7151 = vmatprep.subr.bf16.mxu0 0
    %7152 = vmatpush1.bf16.msra.mxu0 %v6713
    %7153 = vmatprep.subr.bf16.mxu0 0
    %7154 = vmatpush1.bf16.msra.mxu0 %v6716
    %7155 = vmatprep.subr.bf16.mxu0 0
    %7156 = vmatpush1.bf16.msra.mxu0 %v6719
    %7157 = vmatprep.subr.bf16.mxu0 0
    %7158 = vmatpush1.bf16.msra.mxu0 %v6722
    %7159 = vmatprep.subr.bf16.mxu0 0
    %7160 = vmatpush1.bf16.msra.mxu0 %v6725
    %7161 = vmatprep.subr.bf16.mxu0 0
    %7162 = vmatpush1.bf16.msra.mxu0 %v6728
    %7163 = vmatprep.subr.bf16.mxu0 0
    %7164 = vmatpush1.bf16.msra.mxu0 %v6731
    %7165 = vmatprep.subr.bf16.mxu0 0
    %7166 = vmatpush1.bf16.msra.mxu0 %v6734
    %7167 = vmatprep.mubr.bf16.mxu0 %v6130
    %7168 = vmatmul.mubr.bf16.gmra.mrb[0].mxu0 %v6127
    %v7169 = vpop.f32.mrb[0].mxu0
    %v7170 = vadd.f32 %v7121, %v7169
    %v7171 = vpop.f32.mrb[0].mxu0
    %v7172 = vpop.f32.mrb[0].mxu0
    %v7173 = vadd.f32 %v7124, %v7172
    %v7174 = vpop.f32.mrb[0].mxu0
    %7175 = vmatprep.mubr.bf16.mxu0 %v6143
    %7176 = vmatmul.mubr.bf16.gmra.mrb[0].mxu0 %v6142
    %v7177 = vpop.f32.mrb[0].mxu0
    %v7178 = vadd.f32 %v7129, %v7177
    %v7179 = vpop.f32.mrb[0].mxu0
    %v7180 = vpop.f32.mrb[0].mxu0
    %v7181 = vadd.f32 %v7132, %v7180
    %v7182 = vpop.f32.mrb[0].mxu0
    %7183 = vdwg.mxu0
    %7184 = vmatprep.subr.bf16.mxu0 0
    %7185 = vmatpush1.bf16.msra.mxu0 %v6737
    %7186 = vmatprep.subr.bf16.mxu0 0
    %7187 = vmatpush1.bf16.msra.mxu0 %v6740
    %7188 = vmatprep.subr.bf16.mxu0 0
    %7189 = vmatpush1.bf16.msra.mxu0 %v6743
    %7190 = vmatprep.subr.bf16.mxu0 0
    %7191 = vmatpush1.bf16.msra.mxu0 %v6746
    %7192 = vmatprep.subr.bf16.mxu0 0
    %7193 = vmatpush1.bf16.msra.mxu0 %v6749
    %7194 = vmatprep.subr.bf16.mxu0 0
    %7195 = vmatpush1.bf16.msra.mxu0 %v6752
    %7196 = vmatprep.subr.bf16.mxu0 0
    %7197 = vmatpush1.bf16.msra.mxu0 %v6755
    %7198 = vmatprep.subr.bf16.mxu0 0
    %7199 = vmatpush1.bf16.msra.mxu0 %v6758
    %7200 = vmatprep.subr.bf16.mxu0 0
    %7201 = vmatpush1.bf16.msra.mxu0 %v6761
    %7202 = vmatprep.subr.bf16.mxu0 0
    %7203 = vmatpush1.bf16.msra.mxu0 %v6764
    %7204 = vmatprep.subr.bf16.mxu0 0
    %7205 = vmatpush1.bf16.msra.mxu0 %v6767
    %7206 = vmatprep.subr.bf16.mxu0 0
    %7207 = vmatpush1.bf16.msra.mxu0 %v6770
    %7208 = vmatprep.subr.bf16.mxu0 0
    %7209 = vmatpush1.bf16.msra.mxu0 %v6773
    %7210 = vmatprep.subr.bf16.mxu0 0
    %7211 = vmatpush1.bf16.msra.mxu0 %v6776
    %7212 = vmatprep.subr.bf16.mxu0 0
    %7213 = vmatpush1.bf16.msra.mxu0 %v6779
    %7214 = vmatprep.subr.bf16.mxu0 0
    %7215 = vmatpush1.bf16.msra.mxu0 %v6782
    %7216 = vmatprep.mubr.bf16.mxu0 %v6136
    %7217 = vmatmul.mubr.bf16.gmra.mrb[0].mxu0 %v6133
    %v7218 = vpop.f32.mrb[0].mxu0
    %v7219 = vadd.f32 %v7170, %v7218
    %v7220 = vpop.f32.mrb[0].mxu0
    %v7221 = vpop.f32.mrb[0].mxu0
    %v7222 = vadd.f32 %v7173, %v7221
    %v7223 = vpop.f32.mrb[0].mxu0
    %7224 = vmatprep.mubr.bf16.mxu0 %v6146
    %7225 = vmatmul.mubr.bf16.gmra.mrb[0].mxu0 %v6145
    %v7226 = vpop.f32.mrb[0].mxu0
    %v7227 = vadd.f32 %v7178, %v7226
    %v7228 = vpop.f32.mrb[0].mxu0
    %v7229 = vpop.f32.mrb[0].mxu0
    %v7230 = vadd.f32 %v7181, %v7229
    %v7231 = vpop.f32.mrb[0].mxu0
    %7232 = vdwg.mxu0
    %v7425 = vunpack.c.l.b16 %v5721
    %v7426 = vunpack.c.h.b16 %v5721
    %v7427 = vunpack.c.l.b16 %v5722
    %v7428 = vunpack.c.l.b16 %v5723
    %v7429 = vunpack.c.h.b16 %v5723
    %v7430 = vunpack.c.l.b16 %v5724
    %v7431 = vunpack.c.l.b16 %v5725
    %v7432 = vunpack.c.h.b16 %v5725
    %v7433 = vunpack.c.l.b16 %v5726
    %v7434 = vunpack.c.l.b16 %v5727
    %v7435 = vunpack.c.h.b16 %v5727
    %v7436 = vunpack.c.l.b16 %v5728
    %v7437 = vunpack.c.l.b16 %v5729
    %v7438 = vunpack.c.h.b16 %v5729
    %v7439 = vunpack.c.l.b16 %v5730
    %v7440 = vunpack.c.l.b16 %v5731
    %v7441 = vunpack.c.h.b16 %v5731
    %v7442 = vunpack.c.l.b16 %v5732
    %v7443 = vunpack.c.l.b16 %v5733
    %v7444 = vunpack.c.h.b16 %v5733
    %v7445 = vunpack.c.l.b16 %v5734
    %v7446 = vunpack.c.l.b16 %v5735
    %v7447 = vunpack.c.h.b16 %v5735
    %v7448 = vunpack.c.l.b16 %v5736
    %v7449 = vunpack.c.l.b16 %v5737
    %v7450 = vunpack.c.h.b16 %v5737
    %v7451 = vunpack.c.l.b16 %v5738
    %v7452 = vunpack.c.l.b16 %v5739
    %v7453 = vunpack.c.h.b16 %v5739
    %v7454 = vunpack.c.l.b16 %v5740
    %v7455 = vunpack.c.l.b16 %v5741
    %v7456 = vunpack.c.h.b16 %v5741
    %v7457 = vunpack.c.l.b16 %v5742
    %v7458 = vunpack.c.l.b16 %v5743
    %v7459 = vunpack.c.h.b16 %v5743
    %v7460 = vunpack.c.l.b16 %v5744
    %v7461 = vunpack.c.l.b16 %v5745
    %v7462 = vunpack.c.h.b16 %v5745
    %v7463 = vunpack.c.l.b16 %v5746
    %v7464 = vunpack.c.l.b16 %v5747
    %v7465 = vunpack.c.h.b16 %v5747
    %v7466 = vunpack.c.l.b16 %v5748
    %v7467 = vunpack.c.l.b16 %v5749
    %v7468 = vunpack.c.h.b16 %v5749
    %v7469 = vunpack.c.l.b16 %v5750
    %v7470 = vunpack.c.l.b16 %v5751
    %v7471 = vunpack.c.h.b16 %v5751
    %v7472 = vunpack.c.l.b16 %v5752
    %v7473 = vunpack.c.l.b16 %v5753
    %v7474 = vunpack.c.h.b16 %v5753
    %v7475 = vunpack.c.l.b16 %v5754
    %v7476 = vunpack.c.l.b16 %v5755
    %v7477 = vunpack.c.h.b16 %v5755
    %v7478 = vunpack.c.l.b16 %v5756
    %v7479 = vunpack.c.l.b16 %v5757
    %v7480 = vunpack.c.h.b16 %v5757
    %v7481 = vunpack.c.l.b16 %v5758
    %v7482 = vunpack.c.l.b16 %v5759
    %v7483 = vunpack.c.h.b16 %v5759
    %v7484 = vunpack.c.l.b16 %v5760
    %v7485 = vunpack.c.l.b16 %v5761
    %v7486 = vunpack.c.h.b16 %v5761
    %v7487 = vunpack.c.l.b16 %v5762
    %v7488 = vunpack.c.l.b16 %v5763
    %v7489 = vunpack.c.h.b16 %v5763
    %v7490 = vunpack.c.l.b16 %v5764
    %v7491 = vunpack.c.l.b16 %v5765
    %v7492 = vunpack.c.h.b16 %v5765
    %v7493 = vunpack.c.l.b16 %v5766
    %v7494 = vunpack.c.l.b16 %v5767
    %v7495 = vunpack.c.h.b16 %v5767
    %v7496 = vunpack.c.l.b16 %v5768
    %v7497 = vunpack.c.l.b16 %v5769
    %v7498 = vunpack.c.h.b16 %v5769
    %v7499 = vunpack.c.l.b16 %v5770
    %v7500 = vunpack.c.l.b16 %v5771
    %v7501 = vunpack.c.h.b16 %v5771
    %v7502 = vunpack.c.l.b16 %v5772
    %v7503 = vunpack.c.l.b16 %v5773
    %v7504 = vunpack.c.h.b16 %v5773
    %v7505 = vunpack.c.l.b16 %v5774
    %v7506 = vunpack.c.l.b16 %v5775
    %v7507 = vunpack.c.h.b16 %v5775
    %v7508 = vunpack.c.l.b16 %v5776
    %v7509 = vunpack.c.l.b16 %v5777
    %v7510 = vunpack.c.h.b16 %v5777
    %v7511 = vunpack.c.l.b16 %v5778
    %v7512 = vunpack.c.l.b16 %v5779
    %v7513 = vunpack.c.h.b16 %v5779
    %v7514 = vunpack.c.l.b16 %v5780
    %v7515 = vunpack.c.l.b16 %v5781
    %v7516 = vunpack.c.h.b16 %v5781
    %v7517 = vunpack.c.l.b16 %v5782
    %v7518 = vunpack.c.l.b16 %v5783
    %v7519 = vunpack.c.h.b16 %v5783
    %v7520 = vunpack.c.l.b16 %v5784
    %v7521 = vunpack.c.l.b16 %v5785
    %v7522 = vunpack.c.h.b16 %v5785
    %v7523 = vunpack.c.l.b16 %v5786
    %v7524 = vunpack.c.l.b16 %v5787
    %v7525 = vunpack.c.h.b16 %v5787
    %v7526 = vunpack.c.l.b16 %v5788
    %v7527 = vunpack.c.l.b16 %v5789
    %v7528 = vunpack.c.h.b16 %v5789
    %v7529 = vunpack.c.l.b16 %v5790
    %v7530 = vunpack.c.l.b16 %v5791
    %v7531 = vunpack.c.h.b16 %v5791
    %v7532 = vunpack.c.l.b16 %v5792
    %v7533 = vunpack.c.l.b16 %v5793
    %v7534 = vunpack.c.h.b16 %v5793
    %v7535 = vunpack.c.l.b16 %v5794
    %v7536 = vunpack.c.l.b16 %v5795
    %v7537 = vunpack.c.h.b16 %v5795
    %v7538 = vunpack.c.l.b16 %v5796
    %v7539 = vunpack.c.l.b16 %v5797
    %v7540 = vunpack.c.h.b16 %v5797
    %v7541 = vunpack.c.l.b16 %v5798
    %v7542 = vunpack.c.l.b16 %v5799
    %v7543 = vunpack.c.h.b16 %v5799
    %v7544 = vunpack.c.l.b16 %v5800
    %v7545 = vunpack.c.l.b16 %v5801
    %v7546 = vunpack.c.h.b16 %v5801
    %v7547 = vunpack.c.l.b16 %v5802
    %v7548 = vunpack.c.l.b16 %v5803
    %v7549 = vunpack.c.h.b16 %v5803
    %v7550 = vunpack.c.l.b16 %v5804
    %v7551 = vunpack.c.l.b16 %v5805
    %v7552 = vunpack.c.h.b16 %v5805
    %v7553 = vunpack.c.l.b16 %v5806
    %v7554 = vunpack.c.l.b16 %v5807
    %v7555 = vunpack.c.h.b16 %v5807
    %v7556 = vunpack.c.l.b16 %v5808
    %v7557 = vunpack.c.l.b16 %v5809
    %v7558 = vunpack.c.h.b16 %v5809
    %v7559 = vunpack.c.l.b16 %v5810
    %v7560 = vunpack.c.l.b16 %v5811
    %v7561 = vunpack.c.h.b16 %v5811
    %v7562 = vunpack.c.l.b16 %v5812
    %v7563 = vunpack.c.l.b16 %v5813
    %v7564 = vunpack.c.h.b16 %v5813
    %v7565 = vunpack.c.l.b16 %v5814
    %v7566 = vunpack.c.l.b16 %v5815
    %v7567 = vunpack.c.h.b16 %v5815
    %v7568 = vunpack.c.l.b16 %v5816
    %v7569 = vunpack.c.l.b16 %v5817
    %v7570 = vunpack.c.h.b16 %v5817
    %v7571 = vunpack.c.l.b16 %v5818
    %v7572 = vunpack.c.l.b16 %v5819
    %v7573 = vunpack.c.h.b16 %v5819
    %v7574 = vunpack.c.l.b16 %v5820
    %v7575 = vunpack.c.l.b16 %v5821
    %v7576 = vunpack.c.h.b16 %v5821
    %v7577 = vunpack.c.l.b16 %v5822
    %v7578 = vunpack.c.l.b16 %v5823
    %v7579 = vunpack.c.h.b16 %v5823
    %v7580 = vunpack.c.l.b16 %v5824
    %v7581 = vunpack.c.l.b16 %v5825
    %v7582 = vunpack.c.h.b16 %v5825
    %v7583 = vunpack.c.l.b16 %v5826
    %v7584 = vunpack.c.l.b16 %v5827
    %v7585 = vunpack.c.h.b16 %v5827
    %v7586 = vunpack.c.l.b16 %v5828
    %v7587 = vunpack.c.l.b16 %v5829
    %v7588 = vunpack.c.h.b16 %v5829
    %v7589 = vunpack.c.l.b16 %v5830
    %v7590 = vunpack.c.l.b16 %v5831
    %v7591 = vunpack.c.h.b16 %v5831
    %v7592 = vunpack.c.l.b16 %v5832
    %v7593 = vunpack.c.l.b16 %v5833
    %v7594 = vunpack.c.h.b16 %v5833
    %v7595 = vunpack.c.l.b16 %v5834
    %v7596 = vunpack.c.l.b16 %v5835
    %v7597 = vunpack.c.h.b16 %v5835
    %v7598 = vunpack.c.l.b16 %v5836
    %v7599 = vunpack.c.l.b16 %v5837
    %v7600 = vunpack.c.h.b16 %v5837
    %v7601 = vunpack.c.l.b16 %v5838
    %v7602 = vunpack.c.l.b16 %v5839
    %v7603 = vunpack.c.h.b16 %v5839
    %v7604 = vunpack.c.l.b16 %v5840
    %v7605 = vunpack.c.l.b16 %v5841
    %v7606 = vunpack.c.h.b16 %v5841
    %v7607 = vunpack.c.l.b16 %v5842
    %v7608 = vunpack.c.l.b16 %v5843
    %v7609 = vunpack.c.h.b16 %v5843
    %v7610 = vunpack.c.l.b16 %v5844
    %v7611 = vunpack.c.l.b16 %v5845
    %v7612 = vunpack.c.h.b16 %v5845
    %v7613 = vunpack.c.l.b16 %v5846
    %v7614 = vunpack.c.l.b16 %v5847
    %v7615 = vunpack.c.h.b16 %v5847
    %v7616 = vunpack.c.l.b16 %v5848
    %v7617 = vunpack.c.l.b16 %v5849
    %v7618 = vunpack.c.h.b16 %v5849
    %v7619 = vunpack.c.l.b16 %v5850
    %v7620 = vunpack.c.l.b16 %v5851
    %v7621 = vunpack.c.h.b16 %v5851
    %v7622 = vunpack.c.l.b16 %v5852
    %v7623 = vunpack.c.l.b16 %v5853
    %v7624 = vunpack.c.h.b16 %v5853
    %v7625 = vunpack.c.l.b16 %v5854
    %v7626 = vunpack.c.l.b16 %v5855
    %v7627 = vunpack.c.h.b16 %v5855
    %v7628 = vunpack.c.l.b16 %v5856
    %v7629 = vunpack.c.l.b16 %v5857
    %v7630 = vunpack.c.h.b16 %v5857
    %v7631 = vunpack.c.l.b16 %v5858
    %v7632 = vunpack.c.l.b16 %v5859
    %v7633 = vunpack.c.h.b16 %v5859
    %v7634 = vunpack.c.l.b16 %v5860
    %v7635 = vunpack.c.l.b16 %v5861
    %v7636 = vunpack.c.h.b16 %v5861
    %v7637 = vunpack.c.l.b16 %v5862
    %v7638 = vunpack.c.l.b16 %v5863
    %v7639 = vunpack.c.h.b16 %v5863
    %v7640 = vunpack.c.l.b16 %v5864
    %v7641 = vunpack.c.l.b16 %v5865
    %v7642 = vunpack.c.h.b16 %v5865
    %v7643 = vunpack.c.l.b16 %v5866
    %v7644 = vunpack.c.l.b16 %v5867
    %v7645 = vunpack.c.h.b16 %v5867
    %v7646 = vunpack.c.l.b16 %v5868
    %v7647 = vunpack.c.l.b16 %v5869
    %v7648 = vunpack.c.h.b16 %v5869
    %v7649 = vunpack.c.l.b16 %v5870
    %v7650 = vunpack.c.l.b16 %v5871
    %v7651 = vunpack.c.h.b16 %v5871
    %v7652 = vunpack.c.l.b16 %v5872
    %v7653 = vunpack.c.l.b16 %v5873
    %v7654 = vunpack.c.h.b16 %v5873
    %v7655 = vunpack.c.l.b16 %v5874
    %v7656 = vunpack.c.l.b16 %v5875
    %v7657 = vunpack.c.h.b16 %v5875
    %v7658 = vunpack.c.l.b16 %v5876
    %v7659 = vunpack.c.l.b16 %v5877
    %v7660 = vunpack.c.h.b16 %v5877
    %v7661 = vunpack.c.l.b16 %v5878
    %v7662 = vunpack.c.l.b16 %v5879
    %v7663 = vunpack.c.h.b16 %v5879
    %v7664 = vunpack.c.l.b16 %v5880
    %v7665 = vunpack.c.l.b16 %v5881
    %v7666 = vunpack.c.h.b16 %v5881
    %v7667 = vunpack.c.l.b16 %v5882
    %v7668 = vunpack.c.l.b16 %v5883
    %v7669 = vunpack.c.h.b16 %v5883
    %v7670 = vunpack.c.l.b16 %v5884
    %v7671 = vunpack.c.l.b16 %v5885
    %v7672 = vunpack.c.h.b16 %v5885
    %v7673 = vunpack.c.l.b16 %v5886
    %v7674 = vunpack.c.l.b16 %v5887
    %v7675 = vunpack.c.h.b16 %v5887
    %v7676 = vunpack.c.l.b16 %v5888
    %v7677 = vunpack.c.l.b16 %v5889
    %v7678 = vunpack.c.h.b16 %v5889
    %v7679 = vunpack.c.l.b16 %v5890
    %v7680 = vunpack.c.l.b16 %v5891
    %v7681 = vunpack.c.h.b16 %v5891
    %v7682 = vunpack.c.l.b16 %v5892
    %v7683 = vunpack.c.l.b16 %v5893
    %v7684 = vunpack.c.h.b16 %v5893
    %v7685 = vunpack.c.l.b16 %v5894
    %v7686 = vunpack.c.l.b16 %v5895
    %v7687 = vunpack.c.h.b16 %v5895
    %v7688 = vunpack.c.l.b16 %v5896
    %v7689 = vunpack.c.l.b16 %v5897
    %v7690 = vunpack.c.h.b16 %v5897
    %v7691 = vunpack.c.l.b16 %v5898
    %v7692 = vunpack.c.l.b16 %v5899
    %v7693 = vunpack.c.h.b16 %v5899
    %v7694 = vunpack.c.l.b16 %v5900
    %v7695 = vunpack.c.l.b16 %v5901
    %v7696 = vunpack.c.h.b16 %v5901
    %v7697 = vunpack.c.l.b16 %v5902
    %v7698 = vunpack.c.l.b16 %v5903
    %v7699 = vunpack.c.h.b16 %v5903
    %v7700 = vunpack.c.l.b16 %v5904
    %v7701 = vunpack.c.l.b16 %v5905
    %v7702 = vunpack.c.h.b16 %v5905
    %v7703 = vunpack.c.l.b16 %v5906
    %v7704 = vunpack.c.l.b16 %v5907
    %v7705 = vunpack.c.h.b16 %v5907
    %v7706 = vunpack.c.l.b16 %v5908
    %v7707 = vunpack.c.l.b16 %v5909
    %v7708 = vunpack.c.h.b16 %v5909
    %v7709 = vunpack.c.l.b16 %v5910
    %v7710 = vunpack.c.l.b16 %v5911
    %v7711 = vunpack.c.h.b16 %v5911
    %v7712 = vunpack.c.l.b16 %v5912
    %v7713 = vpack.c.b16 %v7428, %v7425
    %v7714 = vpack.c.b16 %v7429, %v7426
    %v7715 = vpack.c.b16 %v7430, %v7427
    %v7716 = vpack.c.b16 %v7434, %v7431
    %v7717 = vpack.c.b16 %v7435, %v7432
    %v7718 = vpack.c.b16 %v7436, %v7433
    %v7719 = vpack.c.b16 %v7440, %v7437
    %v7720 = vpack.c.b16 %v7441, %v7438
    %v7721 = vpack.c.b16 %v7442, %v7439
    %v7722 = vpack.c.b16 %v7446, %v7443
    %v7723 = vpack.c.b16 %v7447, %v7444
    %v7724 = vpack.c.b16 %v7448, %v7445
    %v7725 = vpack.c.b16 %v7452, %v7449
    %v7726 = vpack.c.b16 %v7453, %v7450
    %v7727 = vpack.c.b16 %v7454, %v7451
    %v7728 = vpack.c.b16 %v7458, %v7455
    %v7729 = vpack.c.b16 %v7459, %v7456
    %v7730 = vpack.c.b16 %v7460, %v7457
    %v7731 = vpack.c.b16 %v7464, %v7461
    %v7732 = vpack.c.b16 %v7465, %v7462
    %v7733 = vpack.c.b16 %v7466, %v7463
    %v7734 = vpack.c.b16 %v7470, %v7467
    %v7735 = vpack.c.b16 %v7471, %v7468
    %v7736 = vpack.c.b16 %v7472, %v7469
    %v7737 = vpack.c.b16 %v7476, %v7473
    %v7738 = vpack.c.b16 %v7477, %v7474
    %v7739 = vpack.c.b16 %v7478, %v7475
    %v7740 = vpack.c.b16 %v7482, %v7479
    %v7741 = vpack.c.b16 %v7483, %v7480
    %v7742 = vpack.c.b16 %v7484, %v7481
    %v7743 = vpack.c.b16 %v7488, %v7485
    %v7744 = vpack.c.b16 %v7489, %v7486
    %v7745 = vpack.c.b16 %v7490, %v7487
    %v7746 = vpack.c.b16 %v7494, %v7491
    %v7747 = vpack.c.b16 %v7495, %v7492
    %v7748 = vpack.c.b16 %v7496, %v7493
    %v7749 = vpack.c.b16 %v7500, %v7497
    %v7750 = vpack.c.b16 %v7501, %v7498
    %v7751 = vpack.c.b16 %v7502, %v7499
    %v7752 = vpack.c.b16 %v7506, %v7503
    %v7753 = vpack.c.b16 %v7507, %v7504
    %v7754 = vpack.c.b16 %v7508, %v7505
    %v7755 = vpack.c.b16 %v7512, %v7509
    %v7756 = vpack.c.b16 %v7513, %v7510
    %v7757 = vpack.c.b16 %v7514, %v7511
    %v7758 = vpack.c.b16 %v7518, %v7515
    %v7759 = vpack.c.b16 %v7519, %v7516
    %v7760 = vpack.c.b16 %v7520, %v7517
    %v7761 = vpack.c.b16 %v7524, %v7521
    %v7762 = vpack.c.b16 %v7525, %v7522
    %v7763 = vpack.c.b16 %v7526, %v7523
    %v7764 = vpack.c.b16 %v7530, %v7527
    %v7765 = vpack.c.b16 %v7531, %v7528
    %v7766 = vpack.c.b16 %v7532, %v7529
    %v7767 = vpack.c.b16 %v7536, %v7533
    %v7768 = vpack.c.b16 %v7537, %v7534
    %v7769 = vpack.c.b16 %v7538, %v7535
    %v7770 = vpack.c.b16 %v7542, %v7539
    %v7771 = vpack.c.b16 %v7543, %v7540
    %v7772 = vpack.c.b16 %v7544, %v7541
    %v7773 = vpack.c.b16 %v7548, %v7545
    %v7774 = vpack.c.b16 %v7549, %v7546
    %v7775 = vpack.c.b16 %v7550, %v7547
    %v7776 = vpack.c.b16 %v7554, %v7551
    %v7777 = vpack.c.b16 %v7555, %v7552
    %v7778 = vpack.c.b16 %v7556, %v7553
    %v7779 = vpack.c.b16 %v7560, %v7557
    %v7780 = vpack.c.b16 %v7561, %v7558
    %v7781 = vpack.c.b16 %v7562, %v7559
    %v7782 = vpack.c.b16 %v7566, %v7563
    %v7783 = vpack.c.b16 %v7567, %v7564
    %v7784 = vpack.c.b16 %v7568, %v7565
    %v7785 = vpack.c.b16 %v7572, %v7569
    %v7786 = vpack.c.b16 %v7573, %v7570
    %v7787 = vpack.c.b16 %v7574, %v7571
    %v7788 = vpack.c.b16 %v7578, %v7575
    %v7789 = vpack.c.b16 %v7579, %v7576
    %v7790 = vpack.c.b16 %v7580, %v7577
    %v7791 = vpack.c.b16 %v7584, %v7581
    %v7792 = vpack.c.b16 %v7585, %v7582
    %v7793 = vpack.c.b16 %v7586, %v7583
    %v7794 = vpack.c.b16 %v7590, %v7587
    %v7795 = vpack.c.b16 %v7591, %v7588
    %v7796 = vpack.c.b16 %v7592, %v7589
    %v7797 = vpack.c.b16 %v7596, %v7593
    %v7798 = vpack.c.b16 %v7597, %v7594
    %v7799 = vpack.c.b16 %v7598, %v7595
    %v7800 = vpack.c.b16 %v7602, %v7599
    %v7801 = vpack.c.b16 %v7603, %v7600
    %v7802 = vpack.c.b16 %v7604, %v7601
    %v7803 = vpack.c.b16 %v7608, %v7605
    %v7804 = vpack.c.b16 %v7609, %v7606
    %v7805 = vpack.c.b16 %v7610, %v7607
    %v7806 = vpack.c.b16 %v7614, %v7611
    %v7807 = vpack.c.b16 %v7615, %v7612
    %v7808 = vpack.c.b16 %v7616, %v7613
    %v7809 = vpack.c.b16 %v7620, %v7617
    %v7810 = vpack.c.b16 %v7621, %v7618
    %v7811 = vpack.c.b16 %v7622, %v7619
    %v7812 = vpack.c.b16 %v7626, %v7623
    %v7813 = vpack.c.b16 %v7627, %v7624
    %v7814 = vpack.c.b16 %v7628, %v7625
    %v7815 = vpack.c.b16 %v7632, %v7629
    %v7816 = vpack.c.b16 %v7633, %v7630
    %v7817 = vpack.c.b16 %v7634, %v7631
    %v7818 = vpack.c.b16 %v7638, %v7635
    %v7819 = vpack.c.b16 %v7639, %v7636
    %v7820 = vpack.c.b16 %v7640, %v7637
    %v7821 = vpack.c.b16 %v7644, %v7641
    %v7822 = vpack.c.b16 %v7645, %v7642
    %v7823 = vpack.c.b16 %v7646, %v7643
    %v7824 = vpack.c.b16 %v7650, %v7647
    %v7825 = vpack.c.b16 %v7651, %v7648
    %v7826 = vpack.c.b16 %v7652, %v7649
    %v7827 = vpack.c.b16 %v7656, %v7653
    %v7828 = vpack.c.b16 %v7657, %v7654
    %v7829 = vpack.c.b16 %v7658, %v7655
    %v7830 = vpack.c.b16 %v7662, %v7659
    %v7831 = vpack.c.b16 %v7663, %v7660
    %v7832 = vpack.c.b16 %v7664, %v7661
    %v7833 = vpack.c.b16 %v7668, %v7665
    %v7834 = vpack.c.b16 %v7669, %v7666
    %v7835 = vpack.c.b16 %v7670, %v7667
    %v7836 = vpack.c.b16 %v7674, %v7671
    %v7837 = vpack.c.b16 %v7675, %v7672
    %v7838 = vpack.c.b16 %v7676, %v7673
    %v7839 = vpack.c.b16 %v7680, %v7677
    %v7840 = vpack.c.b16 %v7681, %v7678
    %v7841 = vpack.c.b16 %v7682, %v7679
    %v7842 = vpack.c.b16 %v7686, %v7683
    %v7843 = vpack.c.b16 %v7687, %v7684
    %v7844 = vpack.c.b16 %v7688, %v7685
    %v7845 = vpack.c.b16 %v7692, %v7689
    %v7846 = vpack.c.b16 %v7693, %v7690
    %v7847 = vpack.c.b16 %v7694, %v7691
    %v7848 = vpack.c.b16 %v7698, %v7695
    %v7849 = vpack.c.b16 %v7699, %v7696
    %v7850 = vpack.c.b16 %v7700, %v7697
    %v7851 = vpack.c.b16 %v7704, %v7701
    %v7852 = vpack.c.b16 %v7705, %v7702
    %v7853 = vpack.c.b16 %v7706, %v7703
    %v7854 = vpack.c.b16 %v7710, %v7707
    %v7855 = vpack.c.b16 %v7711, %v7708
    %v7856 = vpack.c.b16 %v7712, %v7709
    %8001 = vmatprep.subr.bf16.mxu0 %v7714
    %8002 = vmatpush1.bf16.msra.mxu0 %v7713
    %8003 = vmatprep.subr.bf16.mxu0 %v7717
    %8004 = vmatpush1.bf16.msra.mxu0 %v7716
    %8005 = vmatprep.subr.bf16.mxu0 %v7720
    %8006 = vmatpush1.bf16.msra.mxu0 %v7719
    %8007 = vmatprep.subr.bf16.mxu0 %v7723
    %8008 = vmatpush1.bf16.msra.mxu0 %v7722
    %8009 = vmatprep.subr.bf16.mxu0 %v7726
    %8010 = vmatpush1.bf16.msra.mxu0 %v7725
    %8011 = vmatprep.subr.bf16.mxu0 %v7729
    %8012 = vmatpush1.bf16.msra.mxu0 %v7728
    %8013 = vmatprep.subr.bf16.mxu0 %v7732
    %8014 = vmatpush1.bf16.msra.mxu0 %v7731
    %8015 = vmatprep.subr.bf16.mxu0 %v7735
    %8016 = vmatpush1.bf16.msra.mxu0 %v7734
    %8017 = vmatprep.subr.bf16.mxu0 %v7738
    %8018 = vmatpush1.bf16.msra.mxu0 %v7737
    %8019 = vmatprep.subr.bf16.mxu0 %v7741
    %8020 = vmatpush1.bf16.msra.mxu0 %v7740
    %8021 = vmatprep.subr.bf16.mxu0 %v7744
    %8022 = vmatpush1.bf16.msra.mxu0 %v7743
    %8023 = vmatprep.subr.bf16.mxu0 %v7747
    %8024 = vmatpush1.bf16.msra.mxu0 %v7746
    %8025 = vmatprep.subr.bf16.mxu0 %v7750
    %8026 = vmatpush1.bf16.msra.mxu0 %v7749
    %8027 = vmatprep.subr.bf16.mxu0 %v7753
    %8028 = vmatpush1.bf16.msra.mxu0 %v7752
    %8029 = vmatprep.subr.bf16.mxu0 %v7756
    %8030 = vmatpush1.bf16.msra.mxu0 %v7755
    %8031 = vmatprep.subr.bf16.mxu0 %v7759
    %8032 = vmatpush1.bf16.msra.mxu0 %v7758
    %8033 = vmatprep.mubr.bf16.mxu0 %v5683
    %8034 = vmatmul.mubr.bf16.gmra.mrb[0].mxu0 %v5681
    %v8035 = vpop.f32.mrb[0].mxu0
    %v8036 = vadd.f32 %v7068, %v8035
    %v8037 = vpop.f32.mrb[0].mxu0
    %v8038 = vadd.f32 %v7070, %v8037
    %v8039 = vpop.f32.mrb[0].mxu0
    %v8040 = vadd.f32 %v7072, %v8039
    %v8041 = vpop.f32.mrb[0].mxu0
    %v8042 = vadd.f32 %v7074, %v8041
    %8043 = vmatprep.mubr.bf16.mxu0 %v5704
    %8044 = vmatmul.mubr.bf16.gmra.mrb[0].mxu0 %v5701
    %v8045 = vpop.f32.mrb[0].mxu0
    %v8046 = vadd.f32 %v7078, %v8045
    %v8047 = vpop.f32.mrb[0].mxu0
    %v8048 = vadd.f32 %v7080, %v8047
    %v8049 = vpop.f32.mrb[0].mxu0
    %v8050 = vadd.f32 %v7082, %v8049
    %v8051 = vpop.f32.mrb[0].mxu0
    %v8052 = vadd.f32 %v7084, %v8051
    %8053 = vdwg.mxu0
    %8054 = vmatprep.subr.bf16.mxu0 %v7762
    %8055 = vmatpush1.bf16.msra.mxu0 %v7761
    %8056 = vmatprep.subr.bf16.mxu0 %v7765
    %8057 = vmatpush1.bf16.msra.mxu0 %v7764
    %8058 = vmatprep.subr.bf16.mxu0 %v7768
    %8059 = vmatpush1.bf16.msra.mxu0 %v7767
    %8060 = vmatprep.subr.bf16.mxu0 %v7771
    %8061 = vmatpush1.bf16.msra.mxu0 %v7770
    %8062 = vmatprep.subr.bf16.mxu0 %v7774
    %8063 = vmatpush1.bf16.msra.mxu0 %v7773
    %8064 = vmatprep.subr.bf16.mxu0 %v7777
    %8065 = vmatpush1.bf16.msra.mxu0 %v7776
    %8066 = vmatprep.subr.bf16.mxu0 %v7780
    %8067 = vmatpush1.bf16.msra.mxu0 %v7779
    %8068 = vmatprep.subr.bf16.mxu0 %v7783
    %8069 = vmatpush1.bf16.msra.mxu0 %v7782
    %8070 = vmatprep.subr.bf16.mxu0 %v7786
    %8071 = vmatpush1.bf16.msra.mxu0 %v7785
    %8072 = vmatprep.subr.bf16.mxu0 %v7789
    %8073 = vmatpush1.bf16.msra.mxu0 %v7788
    %8074 = vmatprep.subr.bf16.mxu0 %v7792
    %8075 = vmatpush1.bf16.msra.mxu0 %v7791
    %8076 = vmatprep.subr.bf16.mxu0 %v7795
    %8077 = vmatpush1.bf16.msra.mxu0 %v7794
    %8078 = vmatprep.subr.bf16.mxu0 %v7798
    %8079 = vmatpush1.bf16.msra.mxu0 %v7797
    %8080 = vmatprep.subr.bf16.mxu0 %v7801
    %8081 = vmatpush1.bf16.msra.mxu0 %v7800
    %8082 = vmatprep.subr.bf16.mxu0 %v7804
    %8083 = vmatpush1.bf16.msra.mxu0 %v7803
    %8084 = vmatprep.subr.bf16.mxu0 %v7807
    %8085 = vmatpush1.bf16.msra.mxu0 %v7806
    %8086 = vmatprep.mubr.bf16.mxu0 %v5691
    %8087 = vmatmul.mubr.bf16.gmra.mrb[0].mxu0 %v5687
    %v8088 = vpop.f32.mrb[0].mxu0
    %v8089 = vadd.f32 %v8036, %v8088
    %v8090 = vpop.f32.mrb[0].mxu0
    %v8091 = vadd.f32 %v8038, %v8090
    %v8092 = vpop.f32.mrb[0].mxu0
    %v8093 = vadd.f32 %v8040, %v8092
    %v8094 = vpop.f32.mrb[0].mxu0
    %v8095 = vadd.f32 %v8042, %v8094
    %8096 = vmatprep.mubr.bf16.mxu0 %v5712
    %8097 = vmatmul.mubr.bf16.gmra.mrb[0].mxu0 %v5708
    %v8098 = vpop.f32.mrb[0].mxu0
    %v8099 = vadd.f32 %v8046, %v8098
    %v8100 = vpop.f32.mrb[0].mxu0
    %v8101 = vadd.f32 %v8048, %v8100
    %v8102 = vpop.f32.mrb[0].mxu0
    %v8103 = vadd.f32 %v8050, %v8102
    %v8104 = vpop.f32.mrb[0].mxu0
    %v8105 = vadd.f32 %v8052, %v8104
    %8106 = vdwg.mxu0
    %8107 = vmatprep.subr.bf16.mxu0 %v7810
    %8108 = vmatpush1.bf16.msra.mxu0 %v7809
    %8109 = vmatprep.subr.bf16.mxu0 %v7813
    %8110 = vmatpush1.bf16.msra.mxu0 %v7812
    %8111 = vmatprep.subr.bf16.mxu0 %v7816
    %8112 = vmatpush1.bf16.msra.mxu0 %v7815
    %8113 = vmatprep.subr.bf16.mxu0 %v7819
    %8114 = vmatpush1.bf16.msra.mxu0 %v7818
    %8115 = vmatprep.subr.bf16.mxu0 %v7822
    %8116 = vmatpush1.bf16.msra.mxu0 %v7821
    %8117 = vmatprep.subr.bf16.mxu0 %v7825
    %8118 = vmatpush1.bf16.msra.mxu0 %v7824
    %8119 = vmatprep.subr.bf16.mxu0 %v7828
    %8120 = vmatpush1.bf16.msra.mxu0 %v7827
    %8121 = vmatprep.subr.bf16.mxu0 %v7831
    %8122 = vmatpush1.bf16.msra.mxu0 %v7830
    %8123 = vmatprep.subr.bf16.mxu0 %v7834
    %8124 = vmatpush1.bf16.msra.mxu0 %v7833
    %8125 = vmatprep.subr.bf16.mxu0 %v7837
    %8126 = vmatpush1.bf16.msra.mxu0 %v7836
    %8127 = vmatprep.subr.bf16.mxu0 %v7840
    %8128 = vmatpush1.bf16.msra.mxu0 %v7839
    %8129 = vmatprep.subr.bf16.mxu0 %v7843
    %8130 = vmatpush1.bf16.msra.mxu0 %v7842
    %8131 = vmatprep.subr.bf16.mxu0 %v7846
    %8132 = vmatpush1.bf16.msra.mxu0 %v7845
    %8133 = vmatprep.subr.bf16.mxu0 %v7849
    %8134 = vmatpush1.bf16.msra.mxu0 %v7848
    %8135 = vmatprep.subr.bf16.mxu0 %v7852
    %8136 = vmatpush1.bf16.msra.mxu0 %v7851
    %8137 = vmatprep.subr.bf16.mxu0 %v7855
    %8138 = vmatpush1.bf16.msra.mxu0 %v7854
    %8139 = vmatprep.mubr.bf16.mxu0 %v5697
    %8140 = vmatmul.mubr.bf16.gmra.mrb[0].mxu0 %v5693
    %v8141 = vpop.f32.mrb[0].mxu0
    %v8142 = vadd.f32 %v8089, %v8141
    %v8143 = vpop.f32.mrb[0].mxu0
    %v8144 = vadd.f32 %v8091, %v8143
    %v8145 = vpop.f32.mrb[0].mxu0
    %v8146 = vadd.f32 %v8093, %v8145
    %v8147 = vpop.f32.mrb[0].mxu0
    %v8148 = vadd.f32 %v8095, %v8147
    %8149 = vmatprep.mubr.bf16.mxu0 %v5719
    %8150 = vmatmul.mubr.bf16.gmra.mrb[0].mxu0 %v5715
    %v8151 = vpop.f32.mrb[0].mxu0
    %v8152 = vadd.f32 %v8099, %v8151
    %v8153 = vpop.f32.mrb[0].mxu0
    %v8154 = vadd.f32 %v8101, %v8153
    %v8155 = vpop.f32.mrb[0].mxu0
    %v8156 = vadd.f32 %v8103, %v8155
    %v8157 = vpop.f32.mrb[0].mxu0
    %v8158 = vadd.f32 %v8105, %v8157
    %8159 = vdwg.mxu0
    %8160 = vmatprep.subr.bf16.mxu0 0
    %8161 = vmatpush1.bf16.msra.mxu0 %v7715
    %8162 = vmatprep.subr.bf16.mxu0 0
    %8163 = vmatpush1.bf16.msra.mxu0 %v7718
    %8164 = vmatprep.subr.bf16.mxu0 0
    %8165 = vmatpush1.bf16.msra.mxu0 %v7721
    %8166 = vmatprep.subr.bf16.mxu0 0
    %8167 = vmatpush1.bf16.msra.mxu0 %v7724
    %8168 = vmatprep.subr.bf16.mxu0 0
    %8169 = vmatpush1.bf16.msra.mxu0 %v7727
    %8170 = vmatprep.subr.bf16.mxu0 0
    %8171 = vmatpush1.bf16.msra.mxu0 %v7730
    %8172 = vmatprep.subr.bf16.mxu0 0
    %8173 = vmatpush1.bf16.msra.mxu0 %v7733
    %8174 = vmatprep.subr.bf16.mxu0 0
    %8175 = vmatpush1.bf16.msra.mxu0 %v7736
    %8176 = vmatprep.subr.bf16.mxu0 0
    %8177 = vmatpush1.bf16.msra.mxu0 %v7739
    %8178 = vmatprep.subr.bf16.mxu0 0
    %8179 = vmatpush1.bf16.msra.mxu0 %v7742
    %8180 = vmatprep.subr.bf16.mxu0 0
    %8181 = vmatpush1.bf16.msra.mxu0 %v7745
    %8182 = vmatprep.subr.bf16.mxu0 0
    %8183 = vmatpush1.bf16.msra.mxu0 %v7748
    %8184 = vmatprep.subr.bf16.mxu0 0
    %8185 = vmatpush1.bf16.msra.mxu0 %v7751
    %8186 = vmatprep.subr.bf16.mxu0 0
    %8187 = vmatpush1.bf16.msra.mxu0 %v7754
    %8188 = vmatprep.subr.bf16.mxu0 0
    %8189 = vmatpush1.bf16.msra.mxu0 %v7757
    %8190 = vmatprep.subr.bf16.mxu0 0
    %8191 = vmatpush1.bf16.msra.mxu0 %v7760
    %8192 = vmatprep.mubr.bf16.mxu0 %v5683
    %8193 = vmatmul.mubr.bf16.gmra.mrb[0].mxu0 %v5681
    %v8194 = vpop.f32.mrb[0].mxu0
    %v8195 = vadd.f32 %v7219, %v8194
    %v8196 = vpop.f32.mrb[0].mxu0
    %v8197 = vpop.f32.mrb[0].mxu0
    %v8198 = vadd.f32 %v7222, %v8197
    %v8199 = vpop.f32.mrb[0].mxu0
    %8200 = vmatprep.mubr.bf16.mxu0 %v5704
    %8201 = vmatmul.mubr.bf16.gmra.mrb[0].mxu0 %v5701
    %v8202 = vpop.f32.mrb[0].mxu0
    %v8203 = vadd.f32 %v7227, %v8202
    %v8204 = vpop.f32.mrb[0].mxu0
    %v8205 = vpop.f32.mrb[0].mxu0
    %v8206 = vadd.f32 %v7230, %v8205
    %v8207 = vpop.f32.mrb[0].mxu0
    %8208 = vdwg.mxu0
    %8209 = vmatprep.subr.bf16.mxu0 0
    %8210 = vmatpush1.bf16.msra.mxu0 %v7763
    %8211 = vmatprep.subr.bf16.mxu0 0
    %8212 = vmatpush1.bf16.msra.mxu0 %v7766
    %8213 = vmatprep.subr.bf16.mxu0 0
    %8214 = vmatpush1.bf16.msra.mxu0 %v7769
    %8215 = vmatprep.subr.bf16.mxu0 0
    %8216 = vmatpush1.bf16.msra.mxu0 %v7772
    %8217 = vmatprep.subr.bf16.mxu0 0
    %8218 = vmatpush1.bf16.msra.mxu0 %v7775
    %8219 = vmatprep.subr.bf16.mxu0 0
    %8220 = vmatpush1.bf16.msra.mxu0 %v7778
    %8221 = vmatprep.subr.bf16.mxu0 0
    %8222 = vmatpush1.bf16.msra.mxu0 %v7781
    %8223 = vmatprep.subr.bf16.mxu0 0
    %8224 = vmatpush1.bf16.msra.mxu0 %v7784
    %8225 = vmatprep.subr.bf16.mxu0 0
    %8226 = vmatpush1.bf16.msra.mxu0 %v7787
    %8227 = vmatprep.subr.bf16.mxu0 0
    %8228 = vmatpush1.bf16.msra.mxu0 %v7790
    %8229 = vmatprep.subr.bf16.mxu0 0
    %8230 = vmatpush1.bf16.msra.mxu0 %v7793
    %8231 = vmatprep.subr.bf16.mxu0 0
    %8232 = vmatpush1.bf16.msra.mxu0 %v7796
    %8233 = vmatprep.subr.bf16.mxu0 0
    %8234 = vmatpush1.bf16.msra.mxu0 %v7799
    %8235 = vmatprep.subr.bf16.mxu0 0
    %8236 = vmatpush1.bf16.msra.mxu0 %v7802
    %8237 = vmatprep.subr.bf16.mxu0 0
    %8238 = vmatpush1.bf16.msra.mxu0 %v7805
    %8239 = vmatprep.subr.bf16.mxu0 0
    %8240 = vmatpush1.bf16.msra.mxu0 %v7808
    %8241 = vmatprep.mubr.bf16.mxu0 %v5691
    %8242 = vmatmul.mubr.bf16.gmra.mrb[0].mxu0 %v5687
    %v8243 = vpop.f32.mrb[0].mxu0
    %v8244 = vadd.f32 %v8195, %v8243
    %v8245 = vpop.f32.mrb[0].mxu0
    %v8246 = vpop.f32.mrb[0].mxu0
    %v8247 = vadd.f32 %v8198, %v8246
    %v8248 = vpop.f32.mrb[0].mxu0
    %8249 = vmatprep.mubr.bf16.mxu0 %v5712
    %8250 = vmatmul.mubr.bf16.gmra.mrb[0].mxu0 %v5708
    %v8251 = vpop.f32.mrb[0].mxu0
    %v8252 = vadd.f32 %v8203, %v8251
    %v8253 = vpop.f32.mrb[0].mxu0
    %v8254 = vpop.f32.mrb[0].mxu0
    %v8255 = vadd.f32 %v8206, %v8254
    %v8256 = vpop.f32.mrb[0].mxu0
    %8257 = vdwg.mxu0
    %8258 = vmatprep.subr.bf16.mxu0 0
    %8259 = vmatpush1.bf16.msra.mxu0 %v7811
    %8260 = vmatprep.subr.bf16.mxu0 0
    %8261 = vmatpush1.bf16.msra.mxu0 %v7814
    %8262 = vmatprep.subr.bf16.mxu0 0
    %8263 = vmatpush1.bf16.msra.mxu0 %v7817
    %8264 = vmatprep.subr.bf16.mxu0 0
    %8265 = vmatpush1.bf16.msra.mxu0 %v7820
    %8266 = vmatprep.subr.bf16.mxu0 0
    %8267 = vmatpush1.bf16.msra.mxu0 %v7823
    %8268 = vmatprep.subr.bf16.mxu0 0
    %8269 = vmatpush1.bf16.msra.mxu0 %v7826
    %8270 = vmatprep.subr.bf16.mxu0 0
    %8271 = vmatpush1.bf16.msra.mxu0 %v7829
    %8272 = vmatprep.subr.bf16.mxu0 0
    %8273 = vmatpush1.bf16.msra.mxu0 %v7832
    %8274 = vmatprep.subr.bf16.mxu0 0
    %8275 = vmatpush1.bf16.msra.mxu0 %v7835
    %8276 = vmatprep.subr.bf16.mxu0 0
    %8277 = vmatpush1.bf16.msra.mxu0 %v7838
    %8278 = vmatprep.subr.bf16.mxu0 0
    %8279 = vmatpush1.bf16.msra.mxu0 %v7841
    %8280 = vmatprep.subr.bf16.mxu0 0
    %8281 = vmatpush1.bf16.msra.mxu0 %v7844
    %8282 = vmatprep.subr.bf16.mxu0 0
    %8283 = vmatpush1.bf16.msra.mxu0 %v7847
    %8284 = vmatprep.subr.bf16.mxu0 0
    %8285 = vmatpush1.bf16.msra.mxu0 %v7850
    %8286 = vmatprep.subr.bf16.mxu0 0
    %8287 = vmatpush1.bf16.msra.mxu0 %v7853
    %8288 = vmatprep.subr.bf16.mxu0 0
    %8289 = vmatpush1.bf16.msra.mxu0 %v7856
    %8290 = vmatprep.mubr.bf16.mxu0 %v5697
    %8291 = vmatmul.mubr.bf16.gmra.mrb[0].mxu0 %v5693
    %v8292 = vpop.f32.mrb[0].mxu0
    %v8293 = vadd.f32 %v8244, %v8292
    %v8294 = vpop.f32.mrb[0].mxu0
    %v8295 = vpop.f32.mrb[0].mxu0
    %v8296 = vadd.f32 %v8247, %v8295
    %v8297 = vpop.f32.mrb[0].mxu0
    %8298 = vmatprep.mubr.bf16.mxu0 %v5719
    %8299 = vmatmul.mubr.bf16.gmra.mrb[0].mxu0 %v5715
    %v8300 = vpop.f32.mrb[0].mxu0
    %v8301 = vadd.f32 %v8252, %v8300
    %v8302 = vpop.f32.mrb[0].mxu0
    %v8303 = vpop.f32.mrb[0].mxu0
    %v8304 = vadd.f32 %v8255, %v8303
    %v8305 = vpop.f32.mrb[0].mxu0
    %8306 = vdwg.mxu0
    %8315 = vrot.lane.b32.xlu0 %v8142, 32
    %v8316 = vpop.permute.xlu0 %8315
    %8317 = vrot.lane.b32.xlu0 %v8144, 32
    %v8318 = vpop.permute.xlu0 %8317
    %8319 = vrot.lane.b32.xlu0 %v8146, 32
    %v8320 = vpop.permute.xlu0 %8319
    %8321 = vrot.lane.b32.xlu0 %v8148, 32
    %v8322 = vpop.permute.xlu0 %8321
    %8323 = vrot.lane.b32.xlu0 %v8152, 32
    %v8324 = vpop.permute.xlu0 %8323
    %8325 = vrot.lane.b32.xlu0 %v8154, 32
    %v8326 = vpop.permute.xlu0 %8325
    %8327 = vrot.lane.b32.xlu0 %v8156, 32
    %v8328 = vpop.permute.xlu0 %8327
    %8329 = vrot.lane.b32.xlu0 %v8158, 32
    %v8330 = vpop.permute.xlu0 %8329
    %vm8331 = vcmask 261120
    %v8332 = vsel %vm8331, %v8316, %v8318
    %v8333 = vsel %vm8331, %v8320, %v8322
    %v8334 = vsel %vm8331, %v8324, %v8326
    %v8335 = vsel %vm8331, %v8328, %v8330
    %v8340 = vmax.f32 %v8142, %v8332
    %v8341 = vmax.f32 %v8146, %v8333
    %v8342 = vmax.f32 %v8152, %v8334
    %v8343 = vmax.f32 %v8156, %v8335
    %8348 = vrot.lane.b32.xlu0 %v8293, 32
    %v8349 = vpop.permute.xlu0 %8348
    %8350 = vrot.lane.b32.xlu0 %v8296, 32
    %v8351 = vpop.permute.xlu0 %8350
    %8352 = vrot.lane.b32.xlu0 %v8301, 32
    %v8353 = vpop.permute.xlu0 %8352
    %8354 = vrot.lane.b32.xlu0 %v8304, 32
    %v8355 = vpop.permute.xlu0 %8354
    %v8360 = vmax.f32 %v8144, %v8349
    %v8361 = vmax.f32 %v8293, %v8349
    %v8362 = vmax.f32 %v8148, %v8351
    %v8363 = vmax.f32 %v8296, %v8351
    %v8364 = vmax.f32 %v8154, %v8353
    %v8365 = vmax.f32 %v8301, %v8353
    %v8366 = vmax.f32 %v8158, %v8355
    %v8367 = vmax.f32 %v8304, %v8355
    %8376 = vrot.lane.b32.xlu0 %v8360, 64
    %v8377 = vpop.permute.xlu0 %8376
    %8378 = vrot.lane.b32.xlu0 %v8361, 64
    %v8379 = vpop.permute.xlu0 %8378
    %8380 = vrot.lane.b32.xlu0 %v8362, 64
    %v8381 = vpop.permute.xlu0 %8380
    %8382 = vrot.lane.b32.xlu0 %v8363, 64
    %v8383 = vpop.permute.xlu0 %8382
    %8384 = vrot.lane.b32.xlu0 %v8364, 64
    %v8385 = vpop.permute.xlu0 %8384
    %8386 = vrot.lane.b32.xlu0 %v8365, 64
    %v8387 = vpop.permute.xlu0 %8386
    %8388 = vrot.lane.b32.xlu0 %v8366, 64
    %v8389 = vpop.permute.xlu0 %8388
    %8390 = vrot.lane.b32.xlu0 %v8367, 64
    %v8391 = vpop.permute.xlu0 %8390
    %v8392 = vsel %vm1852, %v8377, %v8379
    %v8393 = vsel %vm1852, %v8381, %v8383
    %v8394 = vsel %vm1852, %v8385, %v8387
    %v8395 = vsel %vm1852, %v8389, %v8391
    %v8400 = vmax.f32 %v8340, %v8392
    %v8401 = vmax.f32 %v8341, %v8393
    %v8402 = vmax.f32 %v8342, %v8394
    %v8403 = vmax.f32 %v8343, %v8395
    %v8405 = vlaneseq
    %v8406 = vshrl.u32 %v8405, 7
    %v8407 = vsub.s32 0, %v8406
    %v8408 = vrot.slane %v6105, %v8407
    %v8410 = vadd.f32 %v8400, %v8408
    %v8411 = vadd.f32 %v8401, %v8408
    %v8412 = vadd.f32 %v8402, %v8408
    %v8413 = vadd.f32 %v8403, %v8408
    %v8414 = vmax.f32 %v8410, 0.0
    %v8415 = vmax.f32 %v8411, 0.0
    %v8416 = vmax.f32 %v8412, 0.0
    %v8417 = vmax.f32 %v8413, 0.0
    %v8418 = vpack.c.bf16 %v8415, %v8414
    %v8419 = vpack.c.bf16 %v8417, %v8416
    %8421 = vrot.lane.b32.xlu0 %v8418, 96
    %v8422 = vpop.permute.xlu0 %8421
    %v8423 = vrot.slane %v8418, 4
    %8424 = vrot.lane.b32.xlu0 %v8423, 64
    %v8425 = vpop.permute.xlu0 %8424
    %8427 = vrot.lane.b32.xlu0 %v8419, 32
    %v8428 = vpop.permute.xlu0 %8427
    %vm8429 = vcmask 785408
    %v8431 = vsel %vm8429, 0, %v8422
    %v8433 = vsel %vm1852, %v8422, %v8425
    %v8435 = vsel %vm8331, %v8425, %v8428
    %v8437 = vsel %vm8429, %v8419, 0
    %v8438 = vsel %vm5679, %v8431, %v8437
    %v8440 = vsel %vm5679, %v8433, 0
    %v8442 = vsel %vm5679, %v8435, 0
    %v8444 = vld [vmem:[%s8] sm:$0xf]
    %v8445 = vld [vmem:[%s8 + $0x4] sm:$0xf]
    %v8446 = vld [vmem:[%s8 + $0x8] sm:$0xf]
    %v8447 = vld [vmem:[%s8 + $0xc] sm:$0xf]
    %v8448 = vld [vmem:[%s8 + $0x10] sm:$0xf]
    %v8449 = vld [vmem:[%s8 + $0x14] sm:$0xf]
    %v8450 = vld [vmem:[%s8 + $0x18] sm:$0xf]
    %v8451 = vld [vmem:[%s8 + $0x1c] sm:$0xf]
    %v8452 = vld [vmem:[%s8 + $0x20] sm:$0xf]
    %v8453 = vld [vmem:[%s8 + $0x24] sm:$0xf]
    %v8454 = vld [vmem:[%s8 + $0x28] sm:$0xf]
    %v8455 = vld [vmem:[%s8 + $0x2c] sm:$0xf]
    %v8456 = vld [vmem:[%s8 + $0x30] sm:$0xf]
    %v8457 = vld [vmem:[%s8 + $0x34] sm:$0xf]
    %v8458 = vld [vmem:[%s8 + $0x38] sm:$0xf]
    %v8459 = vld [vmem:[%s8 + $0x3c] sm:$0xf]
    %v8460 = vld [vmem:[%s8 + $0x40] sm:$0xf]
    %v8461 = vld [vmem:[%s8 + $0x44] sm:$0xf]
    %v8462 = vld [vmem:[%s8 + $0x48] sm:$0xf]
    %v8463 = vld [vmem:[%s8 + $0x4c] sm:$0xf]
    %v8464 = vld [vmem:[%s8 + $0x50] sm:$0xf]
    %v8465 = vld [vmem:[%s8 + $0x54] sm:$0xf]
    %v8466 = vld [vmem:[%s8 + $0x58] sm:$0xf]
    %v8467 = vld [vmem:[%s8 + $0x5c] sm:$0xf]
    %v8468 = vld [vmem:[%s8 + $0x60] sm:$0xf]
    %v8469 = vld [vmem:[%s8 + $0x64] sm:$0xf]
    %v8470 = vld [vmem:[%s8 + $0x68] sm:$0xf]
    %v8471 = vld [vmem:[%s8 + $0x6c] sm:$0xf]
    %v8472 = vld [vmem:[%s8 + $0x70] sm:$0xf]
    %v8473 = vld [vmem:[%s8 + $0x74] sm:$0xf]
    %v8474 = vld [vmem:[%s8 + $0x78] sm:$0xf]
    %v8475 = vld [vmem:[%s8 + $0x7c] sm:$0xf]
    %v8476 = vld [vmem:[%s8 + $0x80] sm:$0xf]
    %v8477 = vld [vmem:[%s8 + $0x84] sm:$0xf]
    %v8478 = vld [vmem:[%s8 + $0x88] sm:$0xf]
    %v8479 = vld [vmem:[%s8 + $0x8c] sm:$0xf]
    %v8480 = vld [vmem:[%s8 + $0x90] sm:$0xf]
    %v8481 = vld [vmem:[%s8 + $0x94] sm:$0xf]
    %v8482 = vld [vmem:[%s8 + $0x98] sm:$0xf]
    %v8483 = vld [vmem:[%s8 + $0x9c] sm:$0xf]
    %v8484 = vld [vmem:[%s8 + $0xa0] sm:$0xf]
    %v8485 = vld [vmem:[%s8 + $0xa4] sm:$0xf]
    %v8486 = vld [vmem:[%s8 + $0xa8] sm:$0xf]
    %v8487 = vld [vmem:[%s8 + $0xac] sm:$0xf]
    %v8488 = vld [vmem:[%s8 + $0xb0] sm:$0xf]
    %v8489 = vld [vmem:[%s8 + $0xb4] sm:$0xf]
    %v8490 = vld [vmem:[%s8 + $0xb8] sm:$0xf]
    %v8491 = vld [vmem:[%s8 + $0xbc] sm:$0xf]
    %v8492 = vld [vmem:[%s9] sm:$0xf]
    %v8493 = vld [vmem:[%s9 + $0x4] sm:$0xf]
    %v8494 = vld [vmem:[%s9 + $0x8] sm:$0xf]
    %v8495 = vld [vmem:[%s9 + $0xc] sm:$0xf]
    %v8496 = vld [vmem:[%s9 + $0x10] sm:$0xf]
    %v8497 = vld [vmem:[%s9 + $0x14] sm:$0xf]
    %v8498 = vld [vmem:[%s9 + $0x18] sm:$0xf]
    %v8499 = vld [vmem:[%s9 + $0x1c] sm:$0xf]
    %v8500 = vld [vmem:[%s9 + $0x20] sm:$0xf]
    %v8501 = vld [vmem:[%s9 + $0x24] sm:$0xf]
    %v8502 = vld [vmem:[%s9 + $0x28] sm:$0xf]
    %v8503 = vld [vmem:[%s9 + $0x2c] sm:$0xf]
    %v8504 = vld [vmem:[%s9 + $0x30] sm:$0xf]
    %v8505 = vld [vmem:[%s9 + $0x34] sm:$0xf]
    %v8506 = vld [vmem:[%s9 + $0x38] sm:$0xf]
    %v8507 = vld [vmem:[%s9 + $0x3c] sm:$0xf]
    %v8508 = vld [vmem:[%s9 + $0x40] sm:$0xf]
    %v8509 = vld [vmem:[%s9 + $0x44] sm:$0xf]
    %v8510 = vld [vmem:[%s9 + $0x48] sm:$0xf]
    %v8511 = vld [vmem:[%s9 + $0x4c] sm:$0xf]
    %v8512 = vld [vmem:[%s9 + $0x50] sm:$0xf]
    %v8513 = vld [vmem:[%s9 + $0x54] sm:$0xf]
    %v8514 = vld [vmem:[%s9 + $0x58] sm:$0xf]
    %v8515 = vld [vmem:[%s9 + $0x5c] sm:$0xf]
    %v8516 = vld [vmem:[%s9 + $0x60] sm:$0xf]
    %v8517 = vld [vmem:[%s9 + $0x64] sm:$0xf]
    %v8518 = vld [vmem:[%s9 + $0x68] sm:$0xf]
    %v8519 = vld [vmem:[%s9 + $0x6c] sm:$0xf]
    %v8520 = vld [vmem:[%s9 + $0x70] sm:$0xf]
    %v8521 = vld [vmem:[%s9 + $0x74] sm:$0xf]
    %v8522 = vld [vmem:[%s9 + $0x78] sm:$0xf]
    %v8523 = vld [vmem:[%s9 + $0x7c] sm:$0xf]
    %v8524 = vld [vmem:[%s9 + $0x80] sm:$0xf]
    %v8525 = vld [vmem:[%s9 + $0x84] sm:$0xf]
    %v8526 = vld [vmem:[%s9 + $0x88] sm:$0xf]
    %v8527 = vld [vmem:[%s9 + $0x8c] sm:$0xf]
    %v8528 = vld [vmem:[%s9 + $0x90] sm:$0xf]
    %v8529 = vld [vmem:[%s9 + $0x94] sm:$0xf]
    %v8530 = vld [vmem:[%s9 + $0x98] sm:$0xf]
    %v8531 = vld [vmem:[%s9 + $0x9c] sm:$0xf]
    %v8532 = vld [vmem:[%s9 + $0xa0] sm:$0xf]
    %v8533 = vld [vmem:[%s9 + $0xa4] sm:$0xf]
    %v8534 = vld [vmem:[%s9 + $0xa8] sm:$0xf]
    %v8535 = vld [vmem:[%s9 + $0xac] sm:$0xf]
    %v8536 = vld [vmem:[%s9 + $0xb0] sm:$0xf]
    %v8537 = vld [vmem:[%s9 + $0xb4] sm:$0xf]
    %v8538 = vld [vmem:[%s9 + $0xb8] sm:$0xf]
    %v8539 = vld [vmem:[%s9 + $0xbc] sm:$0xf]
    %v8540 = vld [vmem:[%s10] sm:$0x1]
    %v8544 = vrot.slane %v8438, 4
    %v8545 = vrot.slane %v8440, 4
    %v8546 = vrot.slane %v8442, 4
    %v8598 = vunpack.c.l.b16 %v8492
    %v8599 = vunpack.c.l.b16 %v8493
    %v8600 = vunpack.c.l.b16 %v8494
    %v8601 = vunpack.c.l.b16 %v8495
    %v8602 = vunpack.c.l.b16 %v8496
    %v8603 = vunpack.c.l.b16 %v8497
    %v8604 = vunpack.c.l.b16 %v8498
    %v8605 = vunpack.c.l.b16 %v8499
    %v8606 = vunpack.c.l.b16 %v8500
    %v8607 = vunpack.c.l.b16 %v8501
    %v8608 = vunpack.c.l.b16 %v8502
    %v8609 = vunpack.c.l.b16 %v8503
    %v8610 = vunpack.c.l.b16 %v8504
    %v8611 = vunpack.c.l.b16 %v8505
    %v8612 = vunpack.c.l.b16 %v8506
    %v8613 = vunpack.c.l.b16 %v8507
    %v8614 = vunpack.c.l.b16 %v8508
    %v8615 = vunpack.c.l.b16 %v8509
    %v8616 = vunpack.c.l.b16 %v8510
    %v8617 = vunpack.c.l.b16 %v8511
    %v8618 = vunpack.c.l.b16 %v8512
    %v8619 = vunpack.c.l.b16 %v8513
    %v8620 = vunpack.c.l.b16 %v8514
    %v8621 = vunpack.c.l.b16 %v8515
    %v8622 = vunpack.c.l.b16 %v8516
    %v8623 = vunpack.c.l.b16 %v8517
    %v8624 = vunpack.c.l.b16 %v8518
    %v8625 = vunpack.c.l.b16 %v8519
    %v8626 = vunpack.c.l.b16 %v8520
    %v8627 = vunpack.c.l.b16 %v8521
    %v8628 = vunpack.c.l.b16 %v8522
    %v8629 = vunpack.c.l.b16 %v8523
    %v8630 = vunpack.c.l.b16 %v8524
    %v8631 = vunpack.c.l.b16 %v8525
    %v8632 = vunpack.c.l.b16 %v8526
    %v8633 = vunpack.c.l.b16 %v8527
    %v8634 = vunpack.c.l.b16 %v8528
    %v8635 = vunpack.c.l.b16 %v8529
    %v8636 = vunpack.c.l.b16 %v8530
    %v8637 = vunpack.c.l.b16 %v8531
    %v8638 = vunpack.c.l.b16 %v8532
    %v8639 = vunpack.c.l.b16 %v8533
    %v8640 = vunpack.c.l.b16 %v8534
    %v8641 = vunpack.c.l.b16 %v8535
    %v8642 = vunpack.c.l.b16 %v8536
    %v8643 = vunpack.c.l.b16 %v8537
    %v8644 = vunpack.c.l.b16 %v8538
    %v8645 = vunpack.c.l.b16 %v8539
    %v8646 = vpack.c.b16 %v8599, %v8598
    %v8647 = vpack.c.b16 %v8601, %v8600
    %v8648 = vpack.c.b16 %v8603, %v8602
    %v8649 = vpack.c.b16 %v8605, %v8604
    %v8650 = vpack.c.b16 %v8607, %v8606
    %v8651 = vpack.c.b16 %v8609, %v8608
    %v8652 = vpack.c.b16 %v8611, %v8610
    %v8653 = vpack.c.b16 %v8613, %v8612
    %v8654 = vpack.c.b16 %v8615, %v8614
    %v8655 = vpack.c.b16 %v8617, %v8616
    %v8656 = vpack.c.b16 %v8619, %v8618
    %v8657 = vpack.c.b16 %v8621, %v8620
    %v8658 = vpack.c.b16 %v8623, %v8622
    %v8659 = vpack.c.b16 %v8625, %v8624
    %v8660 = vpack.c.b16 %v8627, %v8626
    %v8661 = vpack.c.b16 %v8629, %v8628
    %v8662 = vpack.c.b16 %v8631, %v8630
    %v8663 = vpack.c.b16 %v8633, %v8632
    %v8664 = vpack.c.b16 %v8635, %v8634
    %v8665 = vpack.c.b16 %v8637, %v8636
    %v8666 = vpack.c.b16 %v8639, %v8638
    %v8667 = vpack.c.b16 %v8641, %v8640
    %v8668 = vpack.c.b16 %v8643, %v8642
    %v8669 = vpack.c.b16 %v8645, %v8644
    %8694 = vmatprep.subr.bf16.mxu0 0
    %8695 = vmatpush1.bf16.msra.mxu0 %v8646
    %8696 = vmatprep.subr.bf16.mxu0 0
    %8697 = vmatpush1.bf16.msra.mxu0 %v8647
    %8698 = vmatprep.subr.bf16.mxu0 0
    %8699 = vmatpush1.bf16.msra.mxu0 %v8648
    %8700 = vmatprep.subr.bf16.mxu0 0
    %8701 = vmatpush1.bf16.msra.mxu0 %v8649
    %8702 = vmatprep.subr.bf16.mxu0 0
    %8703 = vmatpush1.bf16.msra.mxu0 %v8650
    %8704 = vmatprep.subr.bf16.mxu0 0
    %8705 = vmatpush1.bf16.msra.mxu0 %v8651
    %8706 = vmatprep.subr.bf16.mxu0 0
    %8707 = vmatpush1.bf16.msra.mxu0 %v8652
    %8708 = vmatprep.subr.bf16.mxu0 0
    %8709 = vmatpush1.bf16.msra.mxu0 %v8653
    %8710 = vmatprep.subr.bf16.mxu0 0
    %8711 = vmatpush1.bf16.msra.mxu0 %v8654
    %8712 = vmatprep.subr.bf16.mxu0 0
    %8713 = vmatpush1.bf16.msra.mxu0 %v8655
    %8714 = vmatprep.subr.bf16.mxu0 0
    %8715 = vmatpush1.bf16.msra.mxu0 %v8656
    %8716 = vmatprep.subr.bf16.mxu0 0
    %8717 = vmatpush1.bf16.msra.mxu0 %v8657
    %8718 = vmatprep.subr.bf16.mxu0 0
    %8719 = vmatpush1.bf16.msra.mxu0 %v8658
    %8720 = vmatprep.subr.bf16.mxu0 0
    %8721 = vmatpush1.bf16.msra.mxu0 %v8659
    %8722 = vmatprep.subr.bf16.mxu0 0
    %8723 = vmatpush1.bf16.msra.mxu0 %v8660
    %8724 = vmatprep.subr.bf16.mxu0 0
    %8725 = vmatpush1.bf16.msra.mxu0 %v8661
    %8726 = vmatprep.mubr.bf16.mxu0 %v8545
    %8727 = vmatmul.mubr.bf16.gmra.mrb[0].mxu0 %v8544
    %v8728 = vpop.f32.mrb[0].mxu0
    %v8729 = vadd.f32 0.0, %v8728
    %v8730 = vpop.f32.mrb[0].mxu0
    %v8731 = vpop.f32.mrb[0].mxu0
    %v8732 = vpop.f32.mrb[0].mxu0
    %8733 = vdwg.mxu0
    %8734 = vmatprep.subr.bf16.mxu0 0
    %8735 = vmatpush1.bf16.msra.mxu0 %v8662
    %8736 = vmatprep.subr.bf16.mxu0 0
    %8737 = vmatpush1.bf16.msra.mxu0 %v8663
    %8738 = vmatprep.subr.bf16.mxu0 0
    %8739 = vmatpush1.bf16.msra.mxu0 %v8664
    %8740 = vmatprep.subr.bf16.mxu0 0
    %8741 = vmatpush1.bf16.msra.mxu0 %v8665
    %8742 = vmatprep.subr.bf16.mxu0 0
    %8743 = vmatpush1.bf16.msra.mxu0 %v8666
    %8744 = vmatprep.subr.bf16.mxu0 0
    %8745 = vmatpush1.bf16.msra.mxu0 %v8667
    %8746 = vmatprep.subr.bf16.mxu0 0
    %8747 = vmatpush1.bf16.msra.mxu0 %v8668
    %8748 = vmatprep.subr.bf16.mxu0 0
    %8749 = vmatpush1.bf16.msra.mxu0 %v8669
    %8750 = vmatprep.subr.bf16.mxu0 0
    %8751 = vmatpush1.bf16.msra.mxu0 0
    %8752 = vmatprep.subr.bf16.mxu0 0
    %8753 = vmatpush1.bf16.msra.mxu0 0
    %8754 = vmatprep.subr.bf16.mxu0 0
    %8755 = vmatpush1.bf16.msra.mxu0 0
    %8756 = vmatprep.subr.bf16.mxu0 0
    %8757 = vmatpush1.bf16.msra.mxu0 0
    %8758 = vmatprep.subr.bf16.mxu0 0
    %8759 = vmatpush1.bf16.msra.mxu0 0
    %8760 = vmatprep.subr.bf16.mxu0 0
    %8761 = vmatpush1.bf16.msra.mxu0 0
    %8762 = vmatprep.subr.bf16.mxu0 0
    %8763 = vmatpush1.bf16.msra.mxu0 0
    %8764 = vmatprep.subr.bf16.mxu0 0
    %8765 = vmatpush1.bf16.msra.mxu0 0
    %8766 = vmatprep.mubr.bf16.mxu0 0
    %8767 = vmatmul.mubr.bf16.gmra.mrb[0].mxu0 %v8546
    %v8768 = vpop.f32.mrb[0].mxu0
    %v8769 = vadd.f32 %v8729, %v8768
    %v8770 = vpop.f32.mrb[0].mxu0
    %v8771 = vpop.f32.mrb[0].mxu0
    %v8772 = vpop.f32.mrb[0].mxu0
    %8773 = vdwg.mxu0
    %v8822 = vunpack.c.l.b16 %v8444
    %v8823 = vunpack.c.l.b16 %v8445
    %v8824 = vunpack.c.l.b16 %v8446
    %v8825 = vunpack.c.l.b16 %v8447
    %v8826 = vunpack.c.l.b16 %v8448
    %v8827 = vunpack.c.l.b16 %v8449
    %v8828 = vunpack.c.l.b16 %v8450
    %v8829 = vunpack.c.l.b16 %v8451
    %v8830 = vunpack.c.l.b16 %v8452
    %v8831 = vunpack.c.l.b16 %v8453
    %v8832 = vunpack.c.l.b16 %v8454
    %v8833 = vunpack.c.l.b16 %v8455
    %v8834 = vunpack.c.l.b16 %v8456
    %v8835 = vunpack.c.l.b16 %v8457
    %v8836 = vunpack.c.l.b16 %v8458
    %v8837 = vunpack.c.l.b16 %v8459
    %v8838 = vunpack.c.l.b16 %v8460
    %v8839 = vunpack.c.l.b16 %v8461
    %v8840 = vunpack.c.l.b16 %v8462
    %v8841 = vunpack.c.l.b16 %v8463
    %v8842 = vunpack.c.l.b16 %v8464
    %v8843 = vunpack.c.l.b16 %v8465
    %v8844 = vunpack.c.l.b16 %v8466
    %v8845 = vunpack.c.l.b16 %v8467
    %v8846 = vunpack.c.l.b16 %v8468
    %v8847 = vunpack.c.l.b16 %v8469
    %v8848 = vunpack.c.l.b16 %v8470
    %v8849 = vunpack.c.l.b16 %v8471
    %v8850 = vunpack.c.l.b16 %v8472
    %v8851 = vunpack.c.l.b16 %v8473
    %v8852 = vunpack.c.l.b16 %v8474
    %v8853 = vunpack.c.l.b16 %v8475
    %v8854 = vunpack.c.l.b16 %v8476
    %v8855 = vunpack.c.l.b16 %v8477
    %v8856 = vunpack.c.l.b16 %v8478
    %v8857 = vunpack.c.l.b16 %v8479
    %v8858 = vunpack.c.l.b16 %v8480
    %v8859 = vunpack.c.l.b16 %v8481
    %v8860 = vunpack.c.l.b16 %v8482
    %v8861 = vunpack.c.l.b16 %v8483
    %v8862 = vunpack.c.l.b16 %v8484
    %v8863 = vunpack.c.l.b16 %v8485
    %v8864 = vunpack.c.l.b16 %v8486
    %v8865 = vunpack.c.l.b16 %v8487
    %v8866 = vunpack.c.l.b16 %v8488
    %v8867 = vunpack.c.l.b16 %v8489
    %v8868 = vunpack.c.l.b16 %v8490
    %v8869 = vunpack.c.l.b16 %v8491
    %v8870 = vpack.c.b16 %v8823, %v8822
    %v8871 = vpack.c.b16 %v8825, %v8824
    %v8872 = vpack.c.b16 %v8827, %v8826
    %v8873 = vpack.c.b16 %v8829, %v8828
    %v8874 = vpack.c.b16 %v8831, %v8830
    %v8875 = vpack.c.b16 %v8833, %v8832
    %v8876 = vpack.c.b16 %v8835, %v8834
    %v8877 = vpack.c.b16 %v8837, %v8836
    %v8878 = vpack.c.b16 %v8839, %v8838
    %v8879 = vpack.c.b16 %v8841, %v8840
    %v8880 = vpack.c.b16 %v8843, %v8842
    %v8881 = vpack.c.b16 %v8845, %v8844
    %v8882 = vpack.c.b16 %v8847, %v8846
    %v8883 = vpack.c.b16 %v8849, %v8848
    %v8884 = vpack.c.b16 %v8851, %v8850
    %v8885 = vpack.c.b16 %v8853, %v8852
    %v8886 = vpack.c.b16 %v8855, %v8854
    %v8887 = vpack.c.b16 %v8857, %v8856
    %v8888 = vpack.c.b16 %v8859, %v8858
    %v8889 = vpack.c.b16 %v8861, %v8860
    %v8890 = vpack.c.b16 %v8863, %v8862
    %v8891 = vpack.c.b16 %v8865, %v8864
    %v8892 = vpack.c.b16 %v8867, %v8866
    %v8893 = vpack.c.b16 %v8869, %v8868
    %8918 = vmatprep.subr.bf16.mxu0 0
    %8919 = vmatpush1.bf16.msra.mxu0 %v8870
    %8920 = vmatprep.subr.bf16.mxu0 0
    %8921 = vmatpush1.bf16.msra.mxu0 %v8871
    %8922 = vmatprep.subr.bf16.mxu0 0
    %8923 = vmatpush1.bf16.msra.mxu0 %v8872
    %8924 = vmatprep.subr.bf16.mxu0 0
    %8925 = vmatpush1.bf16.msra.mxu0 %v8873
    %8926 = vmatprep.subr.bf16.mxu0 0
    %8927 = vmatpush1.bf16.msra.mxu0 %v8874
    %8928 = vmatprep.subr.bf16.mxu0 0
    %8929 = vmatpush1.bf16.msra.mxu0 %v8875
    %8930 = vmatprep.subr.bf16.mxu0 0
    %8931 = vmatpush1.bf16.msra.mxu0 %v8876
    %8932 = vmatprep.subr.bf16.mxu0 0
    %8933 = vmatpush1.bf16.msra.mxu0 %v8877
    %8934 = vmatprep.subr.bf16.mxu0 0
    %8935 = vmatpush1.bf16.msra.mxu0 %v8878
    %8936 = vmatprep.subr.bf16.mxu0 0
    %8937 = vmatpush1.bf16.msra.mxu0 %v8879
    %8938 = vmatprep.subr.bf16.mxu0 0
    %8939 = vmatpush1.bf16.msra.mxu0 %v8880
    %8940 = vmatprep.subr.bf16.mxu0 0
    %8941 = vmatpush1.bf16.msra.mxu0 %v8881
    %8942 = vmatprep.subr.bf16.mxu0 0
    %8943 = vmatpush1.bf16.msra.mxu0 %v8882
    %8944 = vmatprep.subr.bf16.mxu0 0
    %8945 = vmatpush1.bf16.msra.mxu0 %v8883
    %8946 = vmatprep.subr.bf16.mxu0 0
    %8947 = vmatpush1.bf16.msra.mxu0 %v8884
    %8948 = vmatprep.subr.bf16.mxu0 0
    %8949 = vmatpush1.bf16.msra.mxu0 %v8885
    %8950 = vmatprep.mubr.bf16.mxu0 %v8440
    %8951 = vmatmul.mubr.bf16.gmra.mrb[0].mxu0 %v8438
    %v8952 = vpop.f32.mrb[0].mxu0
    %v8953 = vadd.f32 %v8769, %v8952
    %v8954 = vpop.f32.mrb[0].mxu0
    %v8955 = vpop.f32.mrb[0].mxu0
    %v8956 = vpop.f32.mrb[0].mxu0
    %8957 = vdwg.mxu0
    %8958 = vmatprep.subr.bf16.mxu0 0
    %8959 = vmatpush1.bf16.msra.mxu0 %v8886
    %8960 = vmatprep.subr.bf16.mxu0 0
    %8961 = vmatpush1.bf16.msra.mxu0 %v8887
    %8962 = vmatprep.subr.bf16.mxu0 0
    %8963 = vmatpush1.bf16.msra.mxu0 %v8888
    %8964 = vmatprep.subr.bf16.mxu0 0
    %8965 = vmatpush1.bf16.msra.mxu0 %v8889
    %8966 = vmatprep.subr.bf16.mxu0 0
    %8967 = vmatpush1.bf16.msra.mxu0 %v8890
    %8968 = vmatprep.subr.bf16.mxu0 0
    %8969 = vmatpush1.bf16.msra.mxu0 %v8891
    %8970 = vmatprep.subr.bf16.mxu0 0
    %8971 = vmatpush1.bf16.msra.mxu0 %v8892
    %8972 = vmatprep.subr.bf16.mxu0 0
    %8973 = vmatpush1.bf16.msra.mxu0 %v8893
    %8974 = vmatprep.subr.bf16.mxu0 0
    %8975 = vmatpush1.bf16.msra.mxu0 0
    %8976 = vmatprep.subr.bf16.mxu0 0
    %8977 = vmatpush1.bf16.msra.mxu0 0
    %8978 = vmatprep.subr.bf16.mxu0 0
    %8979 = vmatpush1.bf16.msra.mxu0 0
    %8980 = vmatprep.subr.bf16.mxu0 0
    %8981 = vmatpush1.bf16.msra.mxu0 0
    %8982 = vmatprep.subr.bf16.mxu0 0
    %8983 = vmatpush1.bf16.msra.mxu0 0
    %8984 = vmatprep.subr.bf16.mxu0 0
    %8985 = vmatpush1.bf16.msra.mxu0 0
    %8986 = vmatprep.subr.bf16.mxu0 0
    %8987 = vmatpush1.bf16.msra.mxu0 0
    %8988 = vmatprep.subr.bf16.mxu0 0
    %8989 = vmatpush1.bf16.msra.mxu0 0
    %8990 = vmatprep.mubr.bf16.mxu0 0
    %8991 = vmatmul.mubr.bf16.gmra.mrb[0].mxu0 %v8442
    %v8992 = vpop.f32.mrb[0].mxu0
    %v8993 = vadd.f32 %v8953, %v8992
    %v8994 = vpop.f32.mrb[0].mxu0
    %v8995 = vpop.f32.mrb[0].mxu0
    %v8996 = vpop.f32.mrb[0].mxu0
    %8997 = vdwg.mxu0
    %8999 = vrot.lane.b32.xlu0 %v8993, 96
    %v9000 = vpop.permute.xlu0 %8999
    %v9002 = vmax.f32 %v8993, %v9000
    %9004 = vrot.lane.b32.xlu0 %v9002, 64
    %v9005 = vpop.permute.xlu0 %9004
    %v9007 = vmax.f32 %v9002, %v9005
    %v9009 = vlaneseq
    %v9010 = vshrl.u32 %v9009, 7
    %v9011 = vsub.s32 0, %v9010
    %v9012 = vrot.slane %v8540, %v9011
    %v9014 = vadd.f32 %v9007, %v9012
    %v9015 = vmax.f32 %v9014, 0.0
    %v9016 = vpack.c.bf16 %v9015, %v9015
    %v9017 = vld [vmem:[%s11] sm:$0xf]
    %v9018 = vld [vmem:[%s11 + $0x4] sm:$0xf]
    %v9019 = vld [vmem:[%s11 + $0x8] sm:$0xf]
    %v9020 = vld [vmem:[%s11 + $0xc] sm:$0xf]
    %v9021 = vld [vmem:[%s12] sm:$0x1]
    %v9023 = vlaneseq
    %v9024 = vshrl.u32 %v9023, 7
    %v9025 = vsub.s32 0, %v9024
    %v9026 = vrot.slane %v9021, %v9025
    %v9032 = vunpack.c.l.b16 %v9017
    %v9033 = vunpack.c.l.b16 %v9018
    %v9034 = vunpack.c.l.b16 %v9019
    %v9035 = vunpack.c.l.b16 %v9020
    %v9036 = vpack.c.b16 %v9033, %v9032
    %v9037 = vpack.c.b16 %v9035, %v9034
    %v9041 = vsel %vm8331, %v9016, 0
    %9043 = vmatprep.subr.bf16.mxu0 0
    %9044 = vmatpush1.bf16.msra.mxu0 %v9036
    %9045 = vmatprep.subr.bf16.mxu0 0
    %9046 = vmatpush1.bf16.msra.mxu0 %v9037
    %9047 = vmatprep.subr.bf16.mxu0 0
    %9048 = vmatpush1.bf16.msra.mxu0 0
    %9049 = vmatprep.subr.bf16.mxu0 0
    %9050 = vmatpush1.bf16.msra.mxu0 0
    %9051 = vmatprep.subr.bf16.mxu0 0
    %9052 = vmatpush1.bf16.msra.mxu0 0
    %9053 = vmatprep.subr.bf16.mxu0 0
    %9054 = vmatpush1.bf16.msra.mxu0 0
    %9055 = vmatprep.subr.bf16.mxu0 0
    %9056 = vmatpush1.bf16.msra.mxu0 0
    %9057 = vmatprep.subr.bf16.mxu0 0
    %9058 = vmatpush1.bf16.msra.mxu0 0
    %9059 = vmatprep.subr.bf16.mxu0 0
    %9060 = vmatpush1.bf16.msra.mxu0 0
    %9061 = vmatprep.subr.bf16.mxu0 0
    %9062 = vmatpush1.bf16.msra.mxu0 0
    %9063 = vmatprep.subr.bf16.mxu0 0
    %9064 = vmatpush1.bf16.msra.mxu0 0
    %9065 = vmatprep.subr.bf16.mxu0 0
    %9066 = vmatpush1.bf16.msra.mxu0 0
    %9067 = vmatprep.subr.bf16.mxu0 0
    %9068 = vmatpush1.bf16.msra.mxu0 0
    %9069 = vmatprep.subr.bf16.mxu0 0
    %9070 = vmatpush1.bf16.msra.mxu0 0
    %9071 = vmatprep.subr.bf16.mxu0 0
    %9072 = vmatpush1.bf16.msra.mxu0 0
    %9073 = vmatprep.subr.bf16.mxu0 0
    %9074 = vmatpush1.bf16.msra.mxu0 0
    %9075 = vmatprep.mubr.bf16.mxu0 0
    %9076 = vmatmul.mubr.bf16.gmra.mrb[0].mxu0 %v9041
    %v9077 = vpop.f32.mrb[0].mxu0
    %v9078 = vadd.f32 %v9026, %v9077
    %v9079 = vpop.f32.mrb[0].mxu0
    %v9080 = vpop.f32.mrb[0].mxu0
    %v9081 = vpop.f32.mrb[0].mxu0
    %9082 = vdwg.mxu0
    %v9083 = vsel %vm8331, %v9078, 0.0
    %9084 = vadd.xlane.f32.xlu0 %v9083
    %v9085 = vpop.xlane.xlu0 %9084
    %v9086 = vrcp.pop 32.0
    %v9087 = vmul.f32 %v9085, %v9086
    %v9088 = vsub.f32 %v9078, %v9087
    %v9089 = vmul.f32 %v9088, %v9088
    %v9090 = vsel %vm8331, %v9089, 0.0
    %9091 = vadd.xlane.f32.xlu0 %v9090
    %v9092 = vpop.xlane.xlu0 %9091
    %v9093 = vmul.f32 %v9092, %v9086
    %v9094 = vadd.f32 %v9093, 1e-05
    %v9095 = vrsqrt.pop %v9094
    %v9096 = vmul.f32 %v9088, %v9095
    %v9097 = vld [vmem:[%s13] sm:$0x1]
    %v9099 = vlaneseq
    %v9100 = vshrl.u32 %v9099, 7
    %v9101 = vsub.s32 0, %v9100
    %v9102 = vrot.slane %v9097, %v9101
    %v9104 = vmul.f32 %v9096, %v9102
    %v9105 = vld [vmem:[%s14] sm:$0x1]
    %v9107 = vlaneseq
    %v9108 = vshrl.u32 %v9107, 7
    %v9109 = vsub.s32 0, %v9108
    %v9110 = vrot.slane %v9105, %v9109
    %v9112 = vadd.f32 %v9104, %v9110
    %v9113 = vpack.c.bf16 %v9112, %v9112
    %v9114 = vld [vmem:[%s15] sm:$0xf]
    %v9115 = vld [vmem:[%s15 + $0x4] sm:$0xf]
    %v9116 = vld [vmem:[%s15 + $0x8] sm:$0xf]
    %v9117 = vld [vmem:[%s15 + $0xc] sm:$0xf]
    %v9118 = vld [vmem:[%s17] sm:$0x1]
    %v9120 = vlaneseq
    %v9121 = vshrl.u32 %v9120, 7
    %v9122 = vsub.s32 0, %v9121
    %v9123 = vrot.slane %v9118, %v9122
    %v9129 = vunpack.c.l.b16 %v9114
    %v9130 = vunpack.c.l.b16 %v9115
    %v9131 = vunpack.c.l.b16 %v9116
    %v9132 = vunpack.c.l.b16 %v9117
    %v9133 = vpack.c.b16 %v9130, %v9129
    %v9134 = vpack.c.b16 %v9132, %v9131
    %v9138 = vsel %vm8331, %v9113, 0
    %9140 = vmatprep.subr.bf16.mxu0 0
    %9141 = vmatpush1.bf16.msra.mxu0 %v9133
    %9142 = vmatprep.subr.bf16.mxu0 0
    %9143 = vmatpush1.bf16.msra.mxu0 %v9134
    %9144 = vmatprep.subr.bf16.mxu0 0
    %9145 = vmatpush1.bf16.msra.mxu0 0
    %9146 = vmatprep.subr.bf16.mxu0 0
    %9147 = vmatpush1.bf16.msra.mxu0 0
    %9148 = vmatprep.subr.bf16.mxu0 0
    %9149 = vmatpush1.bf16.msra.mxu0 0
    %9150 = vmatprep.subr.bf16.mxu0 0
    %9151 = vmatpush1.bf16.msra.mxu0 0
    %9152 = vmatprep.subr.bf16.mxu0 0
    %9153 = vmatpush1.bf16.msra.mxu0 0
    %9154 = vmatprep.subr.bf16.mxu0 0
    %9155 = vmatpush1.bf16.msra.mxu0 0
    %9156 = vmatprep.subr.bf16.mxu0 0
    %9157 = vmatpush1.bf16.msra.mxu0 0
    %9158 = vmatprep.subr.bf16.mxu0 0
    %9159 = vmatpush1.bf16.msra.mxu0 0
    %9160 = vmatprep.subr.bf16.mxu0 0
    %9161 = vmatpush1.bf16.msra.mxu0 0
    %9162 = vmatprep.subr.bf16.mxu0 0
    %9163 = vmatpush1.bf16.msra.mxu0 0
    %9164 = vmatprep.subr.bf16.mxu0 0
    %9165 = vmatpush1.bf16.msra.mxu0 0
    %9166 = vmatprep.subr.bf16.mxu0 0
    %9167 = vmatpush1.bf16.msra.mxu0 0
    %9168 = vmatprep.subr.bf16.mxu0 0
    %9169 = vmatpush1.bf16.msra.mxu0 0
    %9170 = vmatprep.subr.bf16.mxu0 0
    %9171 = vmatpush1.bf16.msra.mxu0 0
    %9172 = vmatprep.mubr.bf16.mxu0 0
    %9173 = vmatmul.mubr.bf16.gmra.mrb[0].mxu0 %v9138
    %v9174 = vpop.f32.mrb[0].mxu0
    %v9175 = vadd.f32 %v9123, %v9174
    %v9176 = vpop.f32.mrb[0].mxu0
    %v9177 = vpop.f32.mrb[0].mxu0
    %v9178 = vpop.f32.mrb[0].mxu0
    %9179 = vdwg.mxu0
    %v9180 = vld [vmem:[%s16] sm:$0xf]
    %v9181 = vld [vmem:[%s16 + $0x4] sm:$0xf]
    %v9182 = vld [vmem:[%s16 + $0x8] sm:$0xf]
    %v9183 = vld [vmem:[%s16 + $0xc] sm:$0xf]
    %v9188 = vunpack.c.l.b16 %v9180
    %v9189 = vunpack.c.l.b16 %v9181
    %v9190 = vunpack.c.l.b16 %v9182
    %v9191 = vunpack.c.l.b16 %v9183
    %v9192 = vpack.c.b16 %v9189, %v9188
    %v9193 = vpack.c.b16 %v9191, %v9190
    %v9196 = vsel %vm8331, 0, 0
    %9198 = vmatprep.subr.bf16.mxu0 0
    %9199 = vmatpush1.bf16.msra.mxu0 %v9192
    %9200 = vmatprep.subr.bf16.mxu0 0
    %9201 = vmatpush1.bf16.msra.mxu0 %v9193
    %9202 = vmatprep.subr.bf16.mxu0 0
    %9203 = vmatpush1.bf16.msra.mxu0 0
    %9204 = vmatprep.subr.bf16.mxu0 0
    %9205 = vmatpush1.bf16.msra.mxu0 0
    %9206 = vmatprep.subr.bf16.mxu0 0
    %9207 = vmatpush1.bf16.msra.mxu0 0
    %9208 = vmatprep.subr.bf16.mxu0 0
    %9209 = vmatpush1.bf16.msra.mxu0 0
    %9210 = vmatprep.subr.bf16.mxu0 0
    %9211 = vmatpush1.bf16.msra.mxu0 0
    %9212 = vmatprep.subr.bf16.mxu0 0
    %9213 = vmatpush1.bf16.msra.mxu0 0
    %9214 = vmatprep.subr.bf16.mxu0 0
    %9215 = vmatpush1.bf16.msra.mxu0 0
    %9216 = vmatprep.subr.bf16.mxu0 0
    %9217 = vmatpush1.bf16.msra.mxu0 0
    %9218 = vmatprep.subr.bf16.mxu0 0
    %9219 = vmatpush1.bf16.msra.mxu0 0
    %9220 = vmatprep.subr.bf16.mxu0 0
    %9221 = vmatpush1.bf16.msra.mxu0 0
    %9222 = vmatprep.subr.bf16.mxu0 0
    %9223 = vmatpush1.bf16.msra.mxu0 0
    %9224 = vmatprep.subr.bf16.mxu0 0
    %9225 = vmatpush1.bf16.msra.mxu0 0
    %9226 = vmatprep.subr.bf16.mxu0 0
    %9227 = vmatpush1.bf16.msra.mxu0 0
    %9228 = vmatprep.subr.bf16.mxu0 0
    %9229 = vmatpush1.bf16.msra.mxu0 0
    %9230 = vmatprep.mubr.bf16.mxu0 0
    %9231 = vmatmul.mubr.bf16.gmra.mrb[0].mxu0 %v9196
    %v9232 = vpop.f32.mrb[0].mxu0
    %v9233 = vadd.f32 0.0, %v9232
    %v9234 = vpop.f32.mrb[0].mxu0
    %v9235 = vpop.f32.mrb[0].mxu0
    %v9236 = vpop.f32.mrb[0].mxu0
    %9237 = vdwg.mxu0
    %v9238 = vadd.f32 %v9175, %v9233
    %v9239 = vxor.u32 %v9238, 2147483648
    %v9240 = vmul.f32 %v9239, 1.442695
    %v9241 = vpow.pop %v9240
    %v9242 = vadd.f32 %v9241, 1.0
    %v9243 = vrcp.pop %v9242
    %v9244 = vmul.f32 1.0, %v9243
    %v9245 = vtanh.pop %v9238
    %v9246 = vmul.f32 %v9244, 0.0
    %9248 = vrot.lane.b32.xlu0 %v9245, 64
    %v9249 = vpop.permute.xlu0 %9248
    %v9251 = vmul.f32 %v9244, %v9249
    %9253 = vrot.lane.b32.xlu0 %v9251, 32
    %v9254 = vpop.permute.xlu0 %9253
    %v9256 = vadd.f32 %v9246, %v9254
    %v9257 = vtanh.pop %v9256
    %9259 = vrot.lane.b32.xlu0 %v9257, 64
    %v9260 = vpop.permute.xlu0 %9259
    %v9262 = vmul.f32 %v9244, %v9260
    %v9263 = vpack.c.bf16 %v9262, %v9262
    %9265 = vrot.lane.b32.xlu0 %v9263, 32
    %v9266 = vpop.permute.xlu0 %9265
    %v9268 = vsel %vm8331, %v9266, 0
    %9270 = vmatprep.subr.bf16.mxu0 0
    %9271 = vmatpush1.bf16.msra.mxu0 %v9192
    %9272 = vmatprep.subr.bf16.mxu0 0
    %9273 = vmatpush1.bf16.msra.mxu0 %v9193
    %9274 = vmatprep.subr.bf16.mxu0 0
    %9275 = vmatpush1.bf16.msra.mxu0 0
    %9276 = vmatprep.subr.bf16.mxu0 0
    %9277 = vmatpush1.bf16.msra.mxu0 0
    %9278 = vmatprep.subr.bf16.mxu0 0
    %9279 = vmatpush1.bf16.msra.mxu0 0
    %9280 = vmatprep.subr.bf16.mxu0 0
    %9281 = vmatpush1.bf16.msra.mxu0 0
    %9282 = vmatprep.subr.bf16.mxu0 0
    %9283 = vmatpush1.bf16.msra.mxu0 0
    %9284 = vmatprep.subr.bf16.mxu0 0
    %9285 = vmatpush1.bf16.msra.mxu0 0
    %9286 = vmatprep.subr.bf16.mxu0 0
    %9287 = vmatpush1.bf16.msra.mxu0 0
    %9288 = vmatprep.subr.bf16.mxu0 0
    %9289 = vmatpush1.bf16.msra.mxu0 0
    %9290 = vmatprep.subr.bf16.mxu0 0
    %9291 = vmatpush1.bf16.msra.mxu0 0
    %9292 = vmatprep.subr.bf16.mxu0 0
    %9293 = vmatpush1.bf16.msra.mxu0 0
    %9294 = vmatprep.subr.bf16.mxu0 0
    %9295 = vmatpush1.bf16.msra.mxu0 0
    %9296 = vmatprep.subr.bf16.mxu0 0
    %9297 = vmatpush1.bf16.msra.mxu0 0
    %9298 = vmatprep.subr.bf16.mxu0 0
    %9299 = vmatpush1.bf16.msra.mxu0 0
    %9300 = vmatprep.subr.bf16.mxu0 0
    %9301 = vmatpush1.bf16.msra.mxu0 0
    %9302 = vmatprep.mubr.bf16.mxu0 0
    %9303 = vmatmul.mubr.bf16.gmra.mrb[0].mxu0 %v9268
    %v9304 = vpop.f32.mrb[0].mxu0
    %v9305 = vadd.f32 0.0, %v9304
    %v9306 = vpop.f32.mrb[0].mxu0
    %v9307 = vpop.f32.mrb[0].mxu0
    %v9308 = vpop.f32.mrb[0].mxu0
    %9309 = vdwg.mxu0
    %v9311 = vrot.slane %v9305, 6
    %v9313 = vadd.f32 %v9175, %v9311
    %v9314 = vxor.u32 %v9313, 2147483648
    %v9315 = vmul.f32 %v9314, 1.442695
    %v9316 = vpow.pop %v9315
    %v9317 = vadd.f32 %v9316, 1.0
    %v9318 = vrcp.pop %v9317
    %v9319 = vmul.f32 1.0, %v9318
    %v9320 = vtanh.pop %v9313
    %v9322 = vrot.slane %v9256, 6
    %v9324 = vmul.f32 %v9319, %v9322
    %9326 = vrot.lane.b32.xlu0 %v9320, 64
    %v9327 = vpop.permute.xlu0 %9326
    %v9329 = vmul.f32 %v9319, %v9327
    %9331 = vrot.lane.b32.xlu0 %v9329, 32
    %v9332 = vpop.permute.xlu0 %9331
    %v9334 = vadd.f32 %v9324, %v9332
    %v9335 = vtanh.pop %v9334
    %9337 = vrot.lane.b32.xlu0 %v9335, 64
    %v9338 = vpop.permute.xlu0 %9337
    %v9340 = vmul.f32 %v9319, %v9338
    %v9341 = vpack.c.bf16 %v9340, %v9340
    %v9343 = vrot.slane %v9341, 1
    %9344 = vrot.lane.b32.xlu0 %v9343, 32
    %v9345 = vpop.permute.xlu0 %9344
    %v9347 = vsel %vm8331, %v9345, 0
    %9349 = vmatprep.subr.bf16.mxu0 0
    %9350 = vmatpush1.bf16.msra.mxu0 %v9192
    %9351 = vmatprep.subr.bf16.mxu0 0
    %9352 = vmatpush1.bf16.msra.mxu0 %v9193
    %9353 = vmatprep.subr.bf16.mxu0 0
    %9354 = vmatpush1.bf16.msra.mxu0 0
    %9355 = vmatprep.subr.bf16.mxu0 0
    %9356 = vmatpush1.bf16.msra.mxu0 0
    %9357 = vmatprep.subr.bf16.mxu0 0
    %9358 = vmatpush1.bf16.msra.mxu0 0
    %9359 = vmatprep.subr.bf16.mxu0 0
    %9360 = vmatpush1.bf16.msra.mxu0 0
    %9361 = vmatprep.subr.bf16.mxu0 0
    %9362 = vmatpush1.bf16.msra.mxu0 0
    %9363 = vmatprep.subr.bf16.mxu0 0
    %9364 = vmatpush1.bf16.msra.mxu0 0
    %9365 = vmatprep.subr.bf16.mxu0 0
    %9366 = vmatpush1.bf16.msra.mxu0 0
    %9367 = vmatprep.subr.bf16.mxu0 0
    %9368 = vmatpush1.bf16.msra.mxu0 0
    %9369 = vmatprep.subr.bf16.mxu0 0
    %9370 = vmatpush1.bf16.msra.mxu0 0
    %9371 = vmatprep.subr.bf16.mxu0 0
    %9372 = vmatpush1.bf16.msra.mxu0 0
    %9373 = vmatprep.subr.bf16.mxu0 0
    %9374 = vmatpush1.bf16.msra.mxu0 0
    %9375 = vmatprep.subr.bf16.mxu0 0
    %9376 = vmatpush1.bf16.msra.mxu0 0
    %9377 = vmatprep.subr.bf16.mxu0 0
    %9378 = vmatpush1.bf16.msra.mxu0 0
    %9379 = vmatprep.subr.bf16.mxu0 0
    %9380 = vmatpush1.bf16.msra.mxu0 0
    %9381 = vmatprep.mubr.bf16.mxu0 0
    %9382 = vmatmul.mubr.bf16.gmra.mrb[0].mxu0 %v9347
    %v9383 = vpop.f32.mrb[0].mxu0
    %v9384 = vadd.f32 0.0, %v9383
    %v9385 = vpop.f32.mrb[0].mxu0
    %v9386 = vpop.f32.mrb[0].mxu0
    %v9387 = vpop.f32.mrb[0].mxu0
    %9388 = vdwg.mxu0
    %v9390 = vrot.slane %v9384, 4
    %v9392 = vadd.f32 %v9175, %v9390
    %v9393 = vxor.u32 %v9392, 2147483648
    %v9394 = vmul.f32 %v9393, 1.442695
    %v9395 = vpow.pop %v9394
    %v9396 = vadd.f32 %v9395, 1.0
    %v9397 = vrcp.pop %v9396
    %v9398 = vmul.f32 1.0, %v9397
    %v9399 = vtanh.pop %v9392
    %v9401 = vrot.slane %v9334, 6
    %v9403 = vmul.f32 %v9398, %v9401
    %9405 = vrot.lane.b32.xlu0 %v9399, 64
    %v9406 = vpop.permute.xlu0 %9405
    %v9408 = vmul.f32 %v9398, %v9406
    %9410 = vrot.lane.b32.xlu0 %v9408, 32
    %v9411 = vpop.permute.xlu0 %9410
    %v9413 = vadd.f32 %v9403, %v9411
    %v9414 = vtanh.pop %v9413
    %9416 = vrot.lane.b32.xlu0 %v9414, 64
    %v9417 = vpop.permute.xlu0 %9416
    %v9419 = vmul.f32 %v9398, %v9417
    %v9420 = vpack.c.bf16 %v9419, %v9419
    %v9422 = vrot.slane %v9420, 2
    %9423 = vrot.lane.b32.xlu0 %v9422, 32
    %v9424 = vpop.permute.xlu0 %9423
    %v9426 = vsel %vm8331, %v9424, 0
    %9428 = vmatprep.subr.bf16.mxu0 0
    %9429 = vmatpush1.bf16.msra.mxu0 %v9192
    %9430 = vmatprep.subr.bf16.mxu0 0
    %9431 = vmatpush1.bf16.msra.mxu0 %v9193
    %9432 = vmatprep.subr.bf16.mxu0 0
    %9433 = vmatpush1.bf16.msra.mxu0 0
    %9434 = vmatprep.subr.bf16.mxu0 0
    %9435 = vmatpush1.bf16.msra.mxu0 0
    %9436 = vmatprep.subr.bf16.mxu0 0
    %9437 = vmatpush1.bf16.msra.mxu0 0
    %9438 = vmatprep.subr.bf16.mxu0 0
    %9439 = vmatpush1.bf16.msra.mxu0 0
    %9440 = vmatprep.subr.bf16.mxu0 0
    %9441 = vmatpush1.bf16.msra.mxu0 0
    %9442 = vmatprep.subr.bf16.mxu0 0
    %9443 = vmatpush1.bf16.msra.mxu0 0
    %9444 = vmatprep.subr.bf16.mxu0 0
    %9445 = vmatpush1.bf16.msra.mxu0 0
    %9446 = vmatprep.subr.bf16.mxu0 0
    %9447 = vmatpush1.bf16.msra.mxu0 0
    %9448 = vmatprep.subr.bf16.mxu0 0
    %9449 = vmatpush1.bf16.msra.mxu0 0
    %9450 = vmatprep.subr.bf16.mxu0 0
    %9451 = vmatpush1.bf16.msra.mxu0 0
    %9452 = vmatprep.subr.bf16.mxu0 0
    %9453 = vmatpush1.bf16.msra.mxu0 0
    %9454 = vmatprep.subr.bf16.mxu0 0
    %9455 = vmatpush1.bf16.msra.mxu0 0
    %9456 = vmatprep.subr.bf16.mxu0 0
    %9457 = vmatpush1.bf16.msra.mxu0 0
    %9458 = vmatprep.subr.bf16.mxu0 0
    %9459 = vmatpush1.bf16.msra.mxu0 0
    %9460 = vmatprep.mubr.bf16.mxu0 0
    %9461 = vmatmul.mubr.bf16.gmra.mrb[0].mxu0 %v9426
    %v9462 = vpop.f32.mrb[0].mxu0
    %v9463 = vadd.f32 0.0, %v9462
    %v9464 = vpop.f32.mrb[0].mxu0
    %v9465 = vpop.f32.mrb[0].mxu0
    %v9466 = vpop.f32.mrb[0].mxu0
    %9467 = vdwg.mxu0
    %v9469 = vrot.slane %v9463, 2
    %v9471 = vadd.f32 %v9175, %v9469
    %v9472 = vxor.u32 %v9471, 2147483648
    %v9473 = vmul.f32 %v9472, 1.442695
    %v9474 = vpow.pop %v9473
    %v9475 = vadd.f32 %v9474, 1.0
    %v9476 = vrcp.pop %v9475
    %v9477 = vmul.f32 1.0, %v9476
    %v9478 = vtanh.pop %v9471
    %v9480 = vrot.slane %v9413, 6
    %v9482 = vmul.f32 %v9477, %v9480
    %9484 = vrot.lane.b32.xlu0 %v9478, 64
    %v9485 = vpop.permute.xlu0 %9484
    %v9487 = vmul.f32 %v9477, %v9485
    %9489 = vrot.lane.b32.xlu0 %v9487, 32
    %v9490 = vpop.permute.xlu0 %9489
    %v9492 = vadd.f32 %v9482, %v9490
    %v9493 = vtanh.pop %v9492
    %9495 = vrot.lane.b32.xlu0 %v9493, 64
    %v9496 = vpop.permute.xlu0 %9495
    %v9498 = vmul.f32 %v9477, %v9496
    %9500 = vrot.lane.b32.xlu0 %v9498, 32
    %v9501 = vpop.permute.xlu0 %9500
    %vm9503 = vcmask 261126
    %9504 = vst.msk [vmem:[#allocation3 - $0x6] sm:$0xc0] %vm9503, %v9501
    %9506 = vrot.lane.b32.xlu0 %v9492, 96
    %v9507 = vpop.permute.xlu0 %9506
    %9509 = vst.msk [vmem:[#allocation5 - $0x6] sm:$0xc0] %vm9503, %v9507
    %v9510 = vpack.c.bf16 %v9498, %v9498
    %v9511 = vld [vmem:[%s18] sm:$0xf]
    %v9512 = vld [vmem:[%s18 + $0x4] sm:$0xf]
    %v9513 = vld [vmem:[%s18 + $0x8] sm:$0xf]
    %v9514 = vld [vmem:[%s18 + $0xc] sm:$0xf]
    %v9515 = vld [vmem:[%s1] sm:$0x3]
    %v9516 = vpack.c.bf16 %v9515, %v9515
    %v9517 = vld [vmem:[%s19] sm:$0x3]
    %vm9518 = vcmask 31744
    %v9520 = vsel %vm9518, %v9516, 0
    %vm9522 = vcmask 1041408
    %v9524 = vsel %vm9522, %v9517, 0
    %9526 = vmatprep.subr.bf16.mxu0 0
    %9527 = vmatpush1.bf16.msra.mxu0 %v9524
    %9528 = vmatprep.subr.bf16.mxu0 0
    %9529 = vmatpush1.bf16.msra.mxu0 0
    %9530 = vmatprep.subr.bf16.mxu0 0
    %9531 = vmatpush1.bf16.msra.mxu0 0
    %9532 = vmatprep.subr.bf16.mxu0 0
    %9533 = vmatpush1.bf16.msra.mxu0 0
    %9534 = vmatprep.subr.bf16.mxu0 0
    %9535 = vmatpush1.bf16.msra.mxu0 0
    %9536 = vmatprep.subr.bf16.mxu0 0
    %9537 = vmatpush1.bf16.msra.mxu0 0
    %9538 = vmatprep.subr.bf16.mxu0 0
    %9539 = vmatpush1.bf16.msra.mxu0 0
    %9540 = vmatprep.subr.bf16.mxu0 0
    %9541 = vmatpush1.bf16.msra.mxu0 0
    %9542 = vmatprep.subr.bf16.mxu0 0
    %9543 = vmatpush1.bf16.msra.mxu0 0
    %9544 = vmatprep.subr.bf16.mxu0 0
    %9545 = vmatpush1.bf16.msra.mxu0 0
    %9546 = vmatprep.subr.bf16.mxu0 0
    %9547 = vmatpush1.bf16.msra.mxu0 0
    %9548 = vmatprep.subr.bf16.mxu0 0
    %9549 = vmatpush1.bf16.msra.mxu0 0
    %9550 = vmatprep.subr.bf16.mxu0 0
    %9551 = vmatpush1.bf16.msra.mxu0 0
    %9552 = vmatprep.subr.bf16.mxu0 0
    %9553 = vmatpush1.bf16.msra.mxu0 0
    %9554 = vmatprep.subr.bf16.mxu0 0
    %9555 = vmatpush1.bf16.msra.mxu0 0
    %9556 = vmatprep.subr.bf16.mxu0 0
    %9557 = vmatpush1.bf16.msra.mxu0 0
    %9558 = vmatprep.mubr.bf16.mxu0 0
    %9559 = vmatmul.mubr.bf16.gmra.mrb[0].mxu0 %v9520
    %v9560 = vpop.f32.mrb[0].mxu0
    %v9561 = vadd.f32 0.0, %v9560
    %v9562 = vpop.f32.mrb[0].mxu0
    %v9563 = vpop.f32.mrb[0].mxu0
    %v9564 = vpop.f32.mrb[0].mxu0
    %9565 = vdwg.mxu0
    %v9567 = vrot.slane %v9510, 3
    %9568 = vrot.lane.b32.xlu0 %v9567, 32
    %v9569 = vpop.permute.xlu0 %9568
    %v9574 = vunpack.c.l.b16 %v9511
    %v9575 = vunpack.c.l.b16 %v9512
    %v9576 = vunpack.c.l.b16 %v9513
    %v9577 = vunpack.c.l.b16 %v9514
    %v9578 = vpack.c.b16 %v9575, %v9574
    %v9579 = vpack.c.b16 %v9577, %v9576
    %v9583 = vsel %vm8331, %v9569, 0
    %9585 = vmatprep.subr.bf16.mxu0 0
    %9586 = vmatpush1.bf16.msra.mxu0 %v9578
    %9587 = vmatprep.subr.bf16.mxu0 0
    %9588 = vmatpush1.bf16.msra.mxu0 %v9579
    %9589 = vmatprep.subr.bf16.mxu0 0
    %9590 = vmatpush1.bf16.msra.mxu0 0
    %9591 = vmatprep.subr.bf16.mxu0 0
    %9592 = vmatpush1.bf16.msra.mxu0 0
    %9593 = vmatprep.subr.bf16.mxu0 0
    %9594 = vmatpush1.bf16.msra.mxu0 0
    %9595 = vmatprep.subr.bf16.mxu0 0
    %9596 = vmatpush1.bf16.msra.mxu0 0
    %9597 = vmatprep.subr.bf16.mxu0 0
    %9598 = vmatpush1.bf16.msra.mxu0 0
    %9599 = vmatprep.subr.bf16.mxu0 0
    %9600 = vmatpush1.bf16.msra.mxu0 0
    %9601 = vmatprep.subr.bf16.mxu0 0
    %9602 = vmatpush1.bf16.msra.mxu0 0
    %9603 = vmatprep.subr.bf16.mxu0 0
    %9604 = vmatpush1.bf16.msra.mxu0 0
    %9605 = vmatprep.subr.bf16.mxu0 0
    %9606 = vmatpush1.bf16.msra.mxu0 0
    %9607 = vmatprep.subr.bf16.mxu0 0
    %9608 = vmatpush1.bf16.msra.mxu0 0
    %9609 = vmatprep.subr.bf16.mxu0 0
    %9610 = vmatpush1.bf16.msra.mxu0 0
    %9611 = vmatprep.subr.bf16.mxu0 0
    %9612 = vmatpush1.bf16.msra.mxu0 0
    %9613 = vmatprep.subr.bf16.mxu0 0
    %9614 = vmatpush1.bf16.msra.mxu0 0
    %9615 = vmatprep.subr.bf16.mxu0 0
    %9616 = vmatpush1.bf16.msra.mxu0 0
    %9617 = vmatprep.mubr.bf16.mxu0 0
    %9618 = vmatmul.mubr.bf16.gmra.mrb[0].mxu0 %v9583
    %v9619 = vpop.f32.mrb[0].mxu0
    %v9620 = vadd.f32 %v9561, %v9619
    %v9621 = vpop.f32.mrb[0].mxu0
    %v9622 = vpop.f32.mrb[0].mxu0
    %v9623 = vpop.f32.mrb[0].mxu0
    %9624 = vdwg.mxu0
    %v9625 = vld [vmem:[%s20] sm:$0x1]
    %v9627 = vlaneseq
    %v9628 = vshrl.u32 %v9627, 7
    %v9629 = vsub.s32 0, %v9628
    %v9630 = vrot.slane %v9625, %v9629
    %v9632 = vadd.f32 %v9620, %v9630
    %v9633 = vmax.f32 %v9632, 0.0
    %v9634 = vpack.c.bf16 %v9633, %v9633
    %v9635 = vld [vmem:[%s21] sm:$0xf]
    %v9636 = vld [vmem:[%s21 + $0x4] sm:$0xf]
    %v9637 = vld [vmem:[%s21 + $0x8] sm:$0xf]
    %v9638 = vld [vmem:[%s21 + $0xc] sm:$0xf]
    %v9639 = vld [vmem:[%s22] sm:$0x1]
    %v9641 = vlaneseq
    %v9642 = vshrl.u32 %v9641, 7
    %v9643 = vsub.s32 0, %v9642
    %v9644 = vrot.slane %v9639, %v9643
    %v9650 = vunpack.c.l.b16 %v9635
    %v9651 = vunpack.c.l.b16 %v9636
    %v9652 = vunpack.c.l.b16 %v9637
    %v9653 = vunpack.c.l.b16 %v9638
    %v9654 = vpack.c.b16 %v9651, %v9650
    %v9655 = vpack.c.b16 %v9653, %v9652
    %v9659 = vsel %vm8331, %v9634, 0
    %9661 = vmatprep.subr.bf16.mxu0 0
    %9662 = vmatpush1.bf16.msra.mxu0 %v9654
    %9663 = vmatprep.subr.bf16.mxu0 0
    %9664 = vmatpush1.bf16.msra.mxu0 %v9655
    %9665 = vmatprep.subr.bf16.mxu0 0
    %9666 = vmatpush1.bf16.msra.mxu0 0
    %9667 = vmatprep.subr.bf16.mxu0 0
    %9668 = vmatpush1.bf16.msra.mxu0 0
    %9669 = vmatprep.subr.bf16.mxu0 0
    %9670 = vmatpush1.bf16.msra.mxu0 0
    %9671 = vmatprep.subr.bf16.mxu0 0
    %9672 = vmatpush1.bf16.msra.mxu0 0
    %9673 = vmatprep.subr.bf16.mxu0 0
    %9674 = vmatpush1.bf16.msra.mxu0 0
    %9675 = vmatprep.subr.bf16.mxu0 0
    %9676 = vmatpush1.bf16.msra.mxu0 0
    %9677 = vmatprep.subr.bf16.mxu0 0
    %9678 = vmatpush1.bf16.msra.mxu0 0
    %9679 = vmatprep.subr.bf16.mxu0 0
    %9680 = vmatpush1.bf16.msra.mxu0 0
    %9681 = vmatprep.subr.bf16.mxu0 0
    %9682 = vmatpush1.bf16.msra.mxu0 0
    %9683 = vmatprep.subr.bf16.mxu0 0
    %9684 = vmatpush1.bf16.msra.mxu0 0
    %9685 = vmatprep.subr.bf16.mxu0 0
    %9686 = vmatpush1.bf16.msra.mxu0 0
    %9687 = vmatprep.subr.bf16.mxu0 0
    %9688 = vmatpush1.bf16.msra.mxu0 0
    %9689 = vmatprep.subr.bf16.mxu0 0
    %9690 = vmatpush1.bf16.msra.mxu0 0
    %9691 = vmatprep.subr.bf16.mxu0 0
    %9692 = vmatpush1.bf16.msra.mxu0 0
    %9693 = vmatprep.mubr.bf16.mxu0 0
    %9694 = vmatmul.mubr.bf16.gmra.mrb[0].mxu0 %v9659
    %v9695 = vpop.f32.mrb[0].mxu0
    %v9696 = vadd.f32 %v9644, %v9695
    %v9697 = vpop.f32.mrb[0].mxu0
    %v9698 = vpop.f32.mrb[0].mxu0
    %v9699 = vpop.f32.mrb[0].mxu0
    %9700 = vdwg.mxu0
    %v9701 = vmax.f32 %v9696, 0.0
    %v9702 = vpack.c.bf16 %v9701, %v9701
    %v9703 = vld [vmem:[%s23] sm:$0xf]
    %v9704 = vld [vmem:[%s23 + $0x4] sm:$0xf]
    %v9705 = vld [vmem:[#allocation2] sm:$0x1]
    %v9707 = vlaneseq
    %v9708 = vshrl.u32 %v9707, 7
    %v9709 = vsub.s32 0, %v9708
    %v9710 = vrot.slane %v9705, %v9709
    %v9714 = vunpack.c.l.b16 %v9703
    %v9715 = vunpack.c.l.b16 %v9704
    %v9716 = vpack.c.b16 %v9715, %v9714
    %vm9718 = vcmask 130048
    %v9720 = vsel %vm9718, %v9702, 0
    %9722 = vmatprep.subr.bf16.mxu0 0
    %9723 = vmatpush1.bf16.msra.mxu0 %v9716
    %9724 = vmatprep.subr.bf16.mxu0 0
    %9725 = vmatpush1.bf16.msra.mxu0 0
    %9726 = vmatprep.subr.bf16.mxu0 0
    %9727 = vmatpush1.bf16.msra.mxu0 0
    %9728 = vmatprep.subr.bf16.mxu0 0
    %9729 = vmatpush1.bf16.msra.mxu0 0
    %9730 = vmatprep.subr.bf16.mxu0 0
    %9731 = vmatpush1.bf16.msra.mxu0 0
    %9732 = vmatprep.subr.bf16.mxu0 0
    %9733 = vmatpush1.bf16.msra.mxu0 0
    %9734 = vmatprep.subr.bf16.mxu0 0
    %9735 = vmatpush1.bf16.msra.mxu0 0
    %9736 = vmatprep.subr.bf16.mxu0 0
    %9737 = vmatpush1.bf16.msra.mxu0 0
    %9738 = vmatprep.subr.bf16.mxu0 0
    %9739 = vmatpush1.bf16.msra.mxu0 0
    %9740 = vmatprep.subr.bf16.mxu0 0
    %9741 = vmatpush1.bf16.msra.mxu0 0
    %9742 = vmatprep.subr.bf16.mxu0 0
    %9743 = vmatpush1.bf16.msra.mxu0 0
    %9744 = vmatprep.subr.bf16.mxu0 0
    %9745 = vmatpush1.bf16.msra.mxu0 0
    %9746 = vmatprep.subr.bf16.mxu0 0
    %9747 = vmatpush1.bf16.msra.mxu0 0
    %9748 = vmatprep.subr.bf16.mxu0 0
    %9749 = vmatpush1.bf16.msra.mxu0 0
    %9750 = vmatprep.subr.bf16.mxu0 0
    %9751 = vmatpush1.bf16.msra.mxu0 0
    %9752 = vmatprep.subr.bf16.mxu0 0
    %9753 = vmatpush1.bf16.msra.mxu0 0
    %9754 = vmatprep.mubr.bf16.mxu0 0
    %9755 = vmatmul.mubr.bf16.gmra.mrb[0].mxu0 %v9720
    %v9756 = vpop.f32.mrb[0].mxu0
    %v9757 = vadd.f32 %v9710, %v9756
    %v9758 = vpop.f32.mrb[0].mxu0
    %v9759 = vpop.f32.mrb[0].mxu0
    %v9760 = vpop.f32.mrb[0].mxu0
    %9761 = vdwg.mxu0
    %vm9762 = vcmask 1024
    %9763 = vst.msk [vmem:[%s25] sm:$0x3] %vm9762, %v9757
    // Predicated region
    $region102: #{critic_forward.1} parent=1 // pred_check
      _
    $region103: #{critic_forward.1} parent=1 // pred_check_branch
      %9765 = sbr.rel (0) target = $region105
    $region104: #{critic_forward.1} parent=1 // pred_region
      _
    $region105: #{critic_forward.1} parent=1 // pred_fallthru
      _
    // Predicated region
    $region106: #{critic_forward.1} parent=1 // pred_check
      _
    $region107: #{critic_forward.1} parent=1 // pred_check_branch
      %9767 = sbr.rel (0) target = $region109
    $region108: #{critic_forward.1} parent=1 // pred_region
      %s9769 = ssub.s32 32, 32
      %9770 = vsyncadd [#allocation4], %s9769
      %s9772 = sshll.u32 [#allocation3], 4
      %s9773 = int_to_ptr.vmem [resolvable:$true] %s9772
      %9775 = dma.vmem_to_hbm [thread:$0]  %s9773, 32, %s26, [#allocation4]
    $region109: #{critic_forward.1} parent=1 // pred_fallthru
      _
    // Predicated region
    $region110: #{critic_forward.1} parent=1 // pred_check
      _
    $region111: #{critic_forward.1} parent=1 // pred_check_branch
      %9777 = sbr.rel (0) target = $region113
    $region112: #{critic_forward.1} parent=1 // pred_region
      %s9779 = ssub.s32 32, 32
      %9780 = vsyncadd [#allocation6], %s9779
      %s9782 = sshll.u32 [#allocation5], 4
      %s9783 = int_to_ptr.vmem [resolvable:$true] %s9782
      %9785 = dma.vmem_to_hbm [thread:$0]  %s9783, 32, %s27, [#allocation6]
    $region113: #{critic_forward.1} parent=1 // pred_fallthru
      _
    // Predicated region
    $region114: #{critic_forward.1} parent=1 // pred_check
      _
    $region115: #{critic_forward.1} parent=1 // pred_check_branch
      %9787 = sbr.rel (0) target = $region117
    $region116: #{critic_forward.1} parent=1 // pred_region
      _
    $region117: #{critic_forward.1} parent=1 // pred_fallthru
      _
    // Predicated region
    $region118: #{critic_forward.1} parent=1 // pred_check
      _
    $region119: #{critic_forward.1} parent=1 // pred_check_branch
      %9789 = sbr.rel (0) target = $region121
    $region120: #{critic_forward.1} parent=1 // pred_region
      %9790 = dma.done [#allocation4], 32
    $region121: #{critic_forward.1} parent=1 // pred_fallthru
      _
    // Predicated region
    $region122: #{critic_forward.1} parent=1 // pred_check
      _
    $region123: #{critic_forward.1} parent=1 // pred_check_branch
      %9792 = sbr.rel (0) target = $region125
    $region124: #{critic_forward.1} parent=1 // pred_region
      %9793 = dma.done [#allocation6], 32
    $region125: #{critic_forward.1} parent=1 // pred_fallthru
      _
    %9794 = vsyncpa [#allocation4], 1
    %9795 = vsyncpa [#allocation6], 1

</llo_original>
